<compile_context>
chip_gen: v5e
topology: v5e:2x2
jax: 0.10.0
libtpu: 0.0.40
codegen_flags: <defaults>
</compile_context>

<pallas_src>
import functools

import jax
import jax.numpy as jnp
from jax.experimental import pallas as pl
from jax.experimental.pallas import tpu as pltpu


def _semseg_head_kernel(x_ref,
                        w1_ref, b1_ref,
                        w2_ref, b2_ref,
                        w3_ref, b3_ref,
                        w4_ref, b4_ref,
                        o_ref):
    # x_ref : (1, C_in, tn) f32/bf16 tile of points in native NCW layout.
    # wN_ref: (Cout, Cin) bf16 weights (eval-mode BN scale already folded in).
    # bN_ref: (Cout, 1) f32 biases (conv bias + BN shift folded).
    # o_ref : (1, num_classes, tn) f32 -- lane-dense (points on the lane axis).
    x = x_ref[0].astype(jnp.bfloat16)                                 # (C_in, tn)

    # conv1 + bn1 + relu
    h = jnp.dot(w1_ref[...], x, preferred_element_type=jnp.float32)   # (512, tn)
    h = jnp.maximum(h + b1_ref[...], 0.0)

    # conv2 + bn2 + relu
    h = jnp.dot(w2_ref[...], h.astype(jnp.bfloat16),
                preferred_element_type=jnp.float32)                   # (256, tn)
    h = jnp.maximum(h + b2_ref[...], 0.0)

    # conv3 + bn3 + relu
    h = jnp.dot(w3_ref[...], h.astype(jnp.bfloat16),
                preferred_element_type=jnp.float32)                   # (128, tn)
    h = jnp.maximum(h + b3_ref[...], 0.0)

    # conv4 (no bn, no relu)
    h = jnp.dot(w4_ref[...], h.astype(jnp.bfloat16),
                preferred_element_type=jnp.float32)                   # (nc, tn)
    o_ref[0] = (h + b4_ref[...]).astype(o_ref.dtype)


def _const_spec(arr):
    """Whole-array block, constant index map (never re-fetched), single-buffered."""
    nd = arr.ndim
    return pl.BlockSpec(arr.shape, lambda *_: (0,) * nd,
                        pipeline_mode=pl.Buffered(1))


def _hw_budget():
    """(max point tile, scoped-VMEM limit, has 2 TensorCores) per chip generation."""
    try:
        kind = jax.devices()[0].device_kind.lower()
    except Exception:  # pragma: no cover
        kind = ""
    if "v7" in kind:                    # 64 MiB physical VMEM, 2 TCs
        return 2048, 48 << 20, True
    if "v5" in kind or "v6" in kind:    # 128 MiB physical VMEM, 1 TC
        return 4096, 96 << 20, False
    return 1024, 32 << 20, False        # conservative fallback


def _pick_tile(n_pad, batch, max_tile, two_cores):
    """Largest 128-multiple tile dividing n_pad (<= max_tile); on dual-TC chips
    prefer a tile whose total grid size is even and >= 2 for megacore balance."""
    start = max(128, min(max_tile, n_pad))
    cands = [c for c in range(start, 127, -128) if n_pad % c == 0]
    if not cands:
        return n_pad
    if two_cores:
        for c in cands:
            total = batch * (n_pad // c)
            if total >= 2 and total % 2 == 0:
                return c
    return cands[0]


@functools.partial(jax.jit, static_argnames=("tile_n", "vmem_limit"))
def _forward(x, params, *, tile_n, vmem_limit):
    B, c_in, N = x.shape
    (w1, b1, w2, b2, w3, b3, w4, b4) = params
    num_classes = w4.shape[0]

    # Keep the output lane-dense: pad points to a multiple of 128, slice after.
    n_pad = -(-N // 128) * 128
    x_p = jnp.pad(x, ((0, 0), (0, 0), (0, n_pad - N))) if n_pad != N else x

    grid = (B, n_pad // tile_n)

    dims = (c_in, w1.shape[0], w2.shape[0], w3.shape[0], num_classes)
    flops = 2 * B * n_pad * sum(dims[i] * dims[i + 1] for i in range(4))
    bytes_accessed = (int(x_p.size) * x_p.dtype.itemsize
                      + sum(int(p.size) * p.dtype.itemsize for p in params)
                      + B * num_classes * n_pad * 4)
    cost = pl.CostEstimate(flops=flops, transcendentals=0,
                           bytes_accessed=bytes_accessed)

    out = pl.pallas_call(
        _semseg_head_kernel,
        out_shape=jax.ShapeDtypeStruct((B, num_classes, n_pad), jnp.float32),
        grid_spec=pltpu.PrefetchScalarGridSpec(
            num_scalar_prefetch=0,
            grid=grid,
            in_specs=[
                pl.BlockSpec((1, c_in, tile_n), lambda b, j: (b, 0, j)),
                _const_spec(w1), _const_spec(b1),
                _const_spec(w2), _const_spec(b2),
                _const_spec(w3), _const_spec(b3),
                _const_spec(w4), _const_spec(b4),
            ],
            out_specs=pl.BlockSpec((1, num_classes, tile_n),
                                   lambda b, j: (b, 0, j)),
        ),
        compiler_params=pltpu.CompilerParams(
            dimension_semantics=("parallel", "parallel"),
            vmem_limit_bytes=vmem_limit,
        ),
        cost_estimate=cost,
    )(x_p, w1, b1, w2, b2, w3, b3, w4, b4)

    # (B, nc, n_pad) -> (B, N, nc) -> (B*N, nc). Only the tiny logits tensor
    # (~num_classes/C_in of the input traffic) is transposed; row order matches
    # torch's transpose(2,1).contiguous().view(-1, num_classes).
    return jnp.transpose(out, (0, 2, 1))[:, :N, :].reshape(B * N, num_classes)


def pointnet_semseg_head(x, params, *, tile_n=None):
    """x: (B, C_in, N) f32 or bf16, native NCW layout. Returns (B*N, num_classes) f32."""
    B, _, N = x.shape
    max_tile, vmem_limit, two_cores = _hw_budget()
    if tile_n is not None:
        max_tile = max(128, (int(tile_n) // 128) * 128)
    n_pad = -(-N // 128) * 128
    tn = _pick_tile(n_pad, B, max_tile, two_cores)
    return _forward(x, params, tile_n=tn, vmem_limit=vmem_limit)


def init_params(key, input_dim=1088, num_classes=13, eps=1e-5):
    """Deterministic synthetic parameters matching the module's shapes.

    Conv1d(k=1) weights are stored transposed as (Cout, Cin) in bf16 with the
    eval-mode BatchNorm scale folded in:
        scale = gamma / sqrt(running_var + eps)
        w_eff = w * scale (per output channel);  bias_eff = conv_b*scale + beta - mean*scale
    Biases stay f32 with shape (Cout, 1) for the channel-major kernel layout.
    """
    dims = [input_dim, 512, 256, 128, num_classes]
    keys = jax.random.split(key, 24)
    ki = iter(range(24))

    params = []
    for layer in range(4):
        cin, cout = dims[layer], dims[layer + 1]
        bound = float(1.0 / (cin ** 0.5))
        w = jax.random.uniform(keys[next(ki)], (cin, cout), jnp.float32, -bound, bound)
        conv_b = jax.random.uniform(keys[next(ki)], (cout,), jnp.float32, -bound, bound)
        if layer < 3:  # has BatchNorm
            gamma = jax.random.uniform(keys[next(ki)], (cout,), jnp.float32, 0.5, 1.5)
            beta = jax.random.uniform(keys[next(ki)], (cout,), jnp.float32, -0.5, 0.5)
            run_mean = jax.random.uniform(keys[next(ki)], (cout,), jnp.float32, -0.1, 0.1)
            run_var = jax.random.uniform(keys[next(ki)], (cout,), jnp.float32, 0.5, 1.5)
            scale = gamma / jnp.sqrt(run_var + eps)
            shift = beta - run_mean * scale
            w_eff = w * scale[None, :]
            bias_eff = conv_b * scale + shift
        else:
            w_eff = w
            bias_eff = conv_b
        params += [jnp.transpose(w_eff).astype(jnp.bfloat16),        # (cout, cin)
                   bias_eff.reshape(cout, 1).astype(jnp.float32)]    # (cout, 1)
    return tuple(params)


def reference_forward(x, params):
    """Pure-JAX reference mirroring the kernel math (bf16 matmuls, f32 accumulation,
    f32 epilogue; eval-mode BN folded into weights/bias)."""
    (w1, b1, w2, b2, w3, b3, w4, b4) = params
    B, c_in, N = x.shape
    h = jnp.transpose(x, (0, 2, 1)).reshape(B * N, c_in).astype(jnp.float32)

    def layer(h, w, b, relu):
        y = jnp.dot(h.astype(jnp.bfloat16), w.T,
                    preferred_element_type=jnp.float32) + b.reshape(1, -1)
        return jnp.maximum(y, 0.0) if relu else y

    h = layer(h, w1, b1, True)
    h = layer(h, w2, b2, True)
    h = layer(h, w3, b3, True)
    return layer(h, w4, b4, False)


if __name__ == "__main__":
    INPUT_DIM = 1088   # module default
    NUM_CLASSES = 13   # module default
    B, N = 2, 256      # small point cloud; B*N = 512 rows of logits

    key = jax.random.PRNGKey(0)
    k_x, k_p = jax.random.split(key)
    # Upstream PointNet backbone is assumed to emit bf16 features (the kernel's
    # pre-MXU cast then becomes a no-op and the dominant HBM stream is halved).
    x = jax.random.normal(k_x, (B, INPUT_DIM, N), dtype=jnp.float32).astype(jnp.bfloat16)
    params = init_params(k_p, INPUT_DIM, NUM_CLASSES)

    out = pointnet_semseg_head(x, params)
    out = jax.block_until_ready(out)

    assert out.shape == (B * N, NUM_CLASSES)
    ref = reference_forward(x, params)
    # bf16-weight/bf16-input compute: relaxed tolerance vs. a pure-f32 check.
    assert jnp.allclose(out, ref, atol=2e-2, rtol=2e-2), float(jnp.max(jnp.abs(out - ref)))

    print("KERNEL_OK")
</pallas_src>

<mosaic_0001>
module attributes {stable_mosaic.version = 11 : i64} {
  func.func @_semseg_head_kernel(%arg0: i32, %arg1: i32, %arg2: memref<1x1088x256xbf16, #tpu.memory_space<vmem>>, %arg3: memref<512x1088xbf16, #tpu.memory_space<vmem>>, %arg4: memref<512x1xf32, #tpu.memory_space<vmem>>, %arg5: memref<256x512xbf16, #tpu.memory_space<vmem>>, %arg6: memref<256x1xf32, #tpu.memory_space<vmem>>, %arg7: memref<128x256xbf16, #tpu.memory_space<vmem>>, %arg8: memref<128x1xf32, #tpu.memory_space<vmem>>, %arg9: memref<13x128xbf16, #tpu.memory_space<vmem>>, %arg10: memref<13x1xf32, #tpu.memory_space<vmem>>, %arg11: memref<1x13x256xf32, #tpu.memory_space<vmem>>) attributes {dimension_semantics = [#tpu.dimension_semantics<parallel>, #tpu.dimension_semantics<parallel>], iteration_bounds = array<i64: 2, 1>, scalar_prefetch = 0 : i64, scratch_operands = 0 : i64, tpu.core_type = #tpu.core_type<tc>, window_params = [{transform_indices = @transform_0, window_bounds = array<i64: 1, 1088, 256>}, {pipeline_mode = #tpu.pipeline_mode<synchronous>, transform_indices = @transform_1, window_bounds = array<i64: 512, 1088>}, {pipeline_mode = #tpu.pipeline_mode<synchronous>, transform_indices = @transform_2, window_bounds = array<i64: 512, 1>}, {pipeline_mode = #tpu.pipeline_mode<synchronous>, transform_indices = @transform_3, window_bounds = array<i64: 256, 512>}, {pipeline_mode = #tpu.pipeline_mode<synchronous>, transform_indices = @transform_4, window_bounds = array<i64: 256, 1>}, {pipeline_mode = #tpu.pipeline_mode<synchronous>, transform_indices = @transform_5, window_bounds = array<i64: 128, 256>}, {pipeline_mode = #tpu.pipeline_mode<synchronous>, transform_indices = @transform_6, window_bounds = array<i64: 128, 1>}, {pipeline_mode = #tpu.pipeline_mode<synchronous>, transform_indices = @transform_7, window_bounds = array<i64: 13, 128>}, {pipeline_mode = #tpu.pipeline_mode<synchronous>, transform_indices = @transform_8, window_bounds = array<i64: 13, 1>}, {transform_indices = @transform_9, window_bounds = array<i64: 1, 13, 256>}]} {
    %c0 = arith.constant 0 : index
    %c0_0 = arith.constant 0 : index
    %c0_1 = arith.constant 0 : index
    %0 = vector.load %arg2[%c0, %c0_0, %c0_1] : memref<1x1088x256xbf16, #tpu.memory_space<vmem>>, vector<1x1088x256xbf16>
    %1 = vector.shape_cast %0 : vector<1x1088x256xbf16> to vector<1088x256xbf16>
    %c0_2 = arith.constant 0 : index
    %c0_3 = arith.constant 0 : index
    %2 = vector.load %arg3[%c0_2, %c0_3] : memref<512x1088xbf16, #tpu.memory_space<vmem>>, vector<512x1088xbf16>
    %cst = arith.constant dense<0.000000e+00> : vector<512x256xf32>
    %3 = tpu.matmul %2, %1, %cst {dimension_numbers = #tpu.dot_dimension_numbers<[1], [0], [0], [1], [0, 0, 1, 1], [], []>} : vector<512x1088xbf16>, vector<1088x256xbf16>, vector<512x256xf32> -> vector<512x256xf32>
    %c0_4 = arith.constant 0 : index
    %c0_5 = arith.constant 0 : index
    %4 = vector.load %arg4[%c0_4, %c0_5] : memref<512x1xf32, #tpu.memory_space<vmem>>, vector<512x1xf32>
    %5 = vector.broadcast %4 : vector<512x1xf32> to vector<512x256xf32>
    %6 = arith.addf %3, %5 : vector<512x256xf32>
    %cst_6 = arith.constant 0.000000e+00 : f32
    %7 = vector.broadcast %cst_6 : f32 to vector<512x256xf32>
    %8 = arith.maximumf %6, %7 : vector<512x256xf32>
    %c0_7 = arith.constant 0 : index
    %c0_8 = arith.constant 0 : index
    %9 = vector.load %arg5[%c0_7, %c0_8] : memref<256x512xbf16, #tpu.memory_space<vmem>>, vector<256x512xbf16>
    %10 = arith.truncf %8 : vector<512x256xf32> to vector<512x256xbf16>
    %cst_9 = arith.constant dense<0.000000e+00> : vector<256x256xf32>
    %11 = tpu.matmul %9, %10, %cst_9 {dimension_numbers = #tpu.dot_dimension_numbers<[1], [0], [0], [1], [0, 0, 1, 1], [], []>} : vector<256x512xbf16>, vector<512x256xbf16>, vector<256x256xf32> -> vector<256x256xf32>
    %c0_10 = arith.constant 0 : index
    %c0_11 = arith.constant 0 : index
    %12 = vector.load %arg6[%c0_10, %c0_11] : memref<256x1xf32, #tpu.memory_space<vmem>>, vector<256x1xf32>
    %13 = vector.broadcast %12 : vector<256x1xf32> to vector<256x256xf32>
    %14 = arith.addf %11, %13 : vector<256x256xf32>
    %cst_12 = arith.constant 0.000000e+00 : f32
    %15 = vector.broadcast %cst_12 : f32 to vector<256x256xf32>
    %16 = arith.maximumf %14, %15 : vector<256x256xf32>
    %c0_13 = arith.constant 0 : index
    %c0_14 = arith.constant 0 : index
    %17 = vector.load %arg7[%c0_13, %c0_14] : memref<128x256xbf16, #tpu.memory_space<vmem>>, vector<128x256xbf16>
    %18 = arith.truncf %16 : vector<256x256xf32> to vector<256x256xbf16>
    %cst_15 = arith.constant dense<0.000000e+00> : vector<128x256xf32>
    %19 = tpu.matmul %17, %18, %cst_15 {dimension_numbers = #tpu.dot_dimension_numbers<[1], [0], [0], [1], [0, 0, 1, 1], [], []>} : vector<128x256xbf16>, vector<256x256xbf16>, vector<128x256xf32> -> vector<128x256xf32>
    %c0_16 = arith.constant 0 : index
    %c0_17 = arith.constant 0 : index
    %20 = vector.load %arg8[%c0_16, %c0_17] : memref<128x1xf32, #tpu.memory_space<vmem>>, vector<128x1xf32>
    %21 = vector.broadcast %20 : vector<128x1xf32> to vector<128x256xf32>
    %22 = arith.addf %19, %21 : vector<128x256xf32>
    %cst_18 = arith.constant 0.000000e+00 : f32
    %23 = vector.broadcast %cst_18 : f32 to vector<128x256xf32>
    %24 = arith.maximumf %22, %23 : vector<128x256xf32>
    %c0_19 = arith.constant 0 : index
    %c0_20 = arith.constant 0 : index
    %25 = vector.load %arg9[%c0_19, %c0_20] : memref<13x128xbf16, #tpu.memory_space<vmem>>, vector<13x128xbf16>
    %26 = arith.truncf %24 : vector<128x256xf32> to vector<128x256xbf16>
    %cst_21 = arith.constant dense<0.000000e+00> : vector<13x256xf32>
    %27 = tpu.matmul %25, %26, %cst_21 {dimension_numbers = #tpu.dot_dimension_numbers<[1], [0], [0], [1], [0, 0, 1, 1], [], []>} : vector<13x128xbf16>, vector<128x256xbf16>, vector<13x256xf32> -> vector<13x256xf32>
    %c0_22 = arith.constant 0 : index
    %c0_23 = arith.constant 0 : index
    %28 = vector.load %arg10[%c0_22, %c0_23] : memref<13x1xf32, #tpu.memory_space<vmem>>, vector<13x1xf32>
    %29 = vector.broadcast %28 : vector<13x1xf32> to vector<13x256xf32>
    %30 = arith.addf %27, %29 : vector<13x256xf32>
    %c0_24 = arith.constant 0 : index
    %c0_25 = arith.constant 0 : index
    %c0_26 = arith.constant 0 : index
    %31 = vector.load %arg11[%c0_24, %c0_25, %c0_26] : memref<1x13x256xf32, #tpu.memory_space<vmem>>, vector<1x13x256xf32>
    %32 = vector.shape_cast %31 : vector<1x13x256xf32> to vector<13x256xf32>
    %33 = vector.shape_cast %30 : vector<13x256xf32> to vector<1x13x256xf32>
    tpu.vector_store %arg11[%c0_24, %c0_25, %c0_26], %33 {strides = array<i32>} : memref<1x13x256xf32, #tpu.memory_space<vmem>>, vector<1x13x256xf32>,
    return
  }
  func.func @transform_0(%arg0: i32, %arg1: i32) -> (i32, i32, i32) {
    %c0_i32 = arith.constant 0 : i32
    %c0_i32_0 = arith.constant 0 : i32
    return %arg0, %c0_i32, %arg1 : i32, i32, i32
  }
  func.func @transform_1(%arg0: i32, %arg1: i32) -> (i32, i32) {
    %c0_i32 = arith.constant 0 : i32
    %c0_i32_0 = arith.constant 0 : i32
    %c0_i32_1 = arith.constant 0 : i32
    return %c0_i32, %c0_i32_0 : i32, i32
  }
  func.func @transform_2(%arg0: i32, %arg1: i32) -> (i32, i32) {
    %c0_i32 = arith.constant 0 : i32
    %c0_i32_0 = arith.constant 0 : i32
    %c0_i32_1 = arith.constant 0 : i32
    return %c0_i32, %c0_i32_0 : i32, i32
  }
  func.func @transform_3(%arg0: i32, %arg1: i32) -> (i32, i32) {
    %c0_i32 = arith.constant 0 : i32
    %c0_i32_0 = arith.constant 0 : i32
    %c0_i32_1 = arith.constant 0 : i32
    return %c0_i32, %c0_i32_0 : i32, i32
  }
  func.func @transform_4(%arg0: i32, %arg1: i32) -> (i32, i32) {
    %c0_i32 = arith.constant 0 : i32
    %c0_i32_0 = arith.constant 0 : i32
    %c0_i32_1 = arith.constant 0 : i32
    return %c0_i32, %c0_i32_0 : i32, i32
  }
  func.func @transform_5(%arg0: i32, %arg1: i32) -> (i32, i32) {
    %c0_i32 = arith.constant 0 : i32
    %c0_i32_0 = arith.constant 0 : i32
    %c0_i32_1 = arith.constant 0 : i32
    return %c0_i32, %c0_i32_0 : i32, i32
  }
  func.func @transform_6(%arg0: i32, %arg1: i32) -> (i32, i32) {
    %c0_i32 = arith.constant 0 : i32
    %c0_i32_0 = arith.constant 0 : i32
    %c0_i32_1 = arith.constant 0 : i32
    return %c0_i32, %c0_i32_0 : i32, i32
  }
  func.func @transform_7(%arg0: i32, %arg1: i32) -> (i32, i32) {
    %c0_i32 = arith.constant 0 : i32
    %c0_i32_0 = arith.constant 0 : i32
    %c0_i32_1 = arith.constant 0 : i32
    return %c0_i32, %c0_i32_0 : i32, i32
  }
  func.func @transform_8(%arg0: i32, %arg1: i32) -> (i32, i32) {
    %c0_i32 = arith.constant 0 : i32
    %c0_i32_0 = arith.constant 0 : i32
    %c0_i32_1 = arith.constant 0 : i32
    return %c0_i32, %c0_i32_0 : i32, i32
  }
  func.func @transform_9(%arg0: i32, %arg1: i32) -> (i32, i32, i32) {
    %c0_i32 = arith.constant 0 : i32
    %c0_i32_0 = arith.constant 0 : i32
    return %arg0, %c0_i32, %arg1 : i32, i32, i32
  }
}

</mosaic_0001>

<llo_original>
// kernel: _forward.1
$region0: #{_forward.1}
  #allocation0 [shape = 'u32[]', space=smem, size = 0x4, offset = 0x4, fixed_abs, tag = 'smem constant byte address 0x4 - core index']
  #allocation1 [shape = 'u32[72,128]{1,0:T(1,128)}', space=vmem, size = 0x9000, scoped, tag = 'internal scratch']
  %s0 = inlined_call_operand.vmem [shape: bf16[2,1088,256], index: 0, kind: input, shape index: {}]
  %s1 = inlined_call_operand.vmem [shape: bf16[512,1088], index: 1, kind: input, shape index: {}]
  %s2 = inlined_call_operand.vmem [shape: f32[512,1], index: 2, kind: input, shape index: {}]
  %s3 = inlined_call_operand.vmem [shape: bf16[256,512], index: 3, kind: input, shape index: {}]
  %s4 = inlined_call_operand.vmem [shape: f32[256,1], index: 4, kind: input, shape index: {}]
  %s5 = inlined_call_operand.vmem [shape: bf16[128,256], index: 5, kind: input, shape index: {}]
  %s6 = inlined_call_operand.vmem [shape: f32[128,1], index: 6, kind: input, shape index: {}]
  %s7 = inlined_call_operand.vmem [shape: bf16[13,128], index: 7, kind: input, shape index: {}]
  %s8 = inlined_call_operand.vmem [shape: f32[13,1], index: 8, kind: input, shape index: {}]
  %s9 = inlined_call_operand.vmem [shape: f32[2,13,256], index: 9, kind: output, shape index: {}]
  %s10 = sld [smem:[#allocation0]]
  $region69: #{_forward.1} parent=0
    _
  %s12 = ssub.s32 1, %s10
  %s13 = scalar_select 0, %s12, %s10
  loop: start=0, step=1, limit=4
  $region2: #{_forward.1} parent=0 // loop_pre_header
    _
  $region3: #{_forward.1} parent=0 // loop_header
    %s15 = sphi 0, %s19
    %p16 = scmp.ge.s32.totalorder %s15, 4
    %s22 = sphi 0, %s34
    %s23 = sphi 0, %s30
    %s24 = sphi 0, %s22
    %s25 = sphi 0, %s23
    %s26 = sphi 0, %s24
    %s27 = sphi 0, %s25
    %s39 = sphi 0, %s41
    %s42 = sphi 0, %s39
    %s43 = sphi 0, %s42
    %s59 = sphi 0, %s43
    %s63 = sphi 0, %s63
    %s65 = sphi 0, %s63
    %s66 = sphi 0, %s65
    %s80 = sphi 0, %s66
    %s84 = sphi 0, %s84
    %s86 = sphi 0, %s84
    %s87 = sphi 0, %s86
    %s101 = sphi 0, %s87
    %s105 = sphi 0, %s105
    %s107 = sphi 0, %s105
    %s108 = sphi 0, %s107
    %s122 = sphi 0, %s108
    %s126 = sphi 0, %s126
    %s128 = sphi 0, %s126
    %s129 = sphi 0, %s128
    %s143 = sphi 0, %s129
    %s147 = sphi 0, %s147
    %s149 = sphi 0, %s147
    %s150 = sphi 0, %s149
    %s164 = sphi 0, %s150
    %s168 = sphi 0, %s168
    %s170 = sphi 0, %s168
    %s171 = sphi 0, %s170
    %s185 = sphi 0, %s171
    %s189 = sphi 0, %s189
    %s191 = sphi 0, %s189
    %s192 = sphi 0, %s191
    %s206 = sphi 0, %s192
    %s210 = sphi 0, %s210
    %s212 = sphi 0, %s210
    %s213 = sphi 0, %s212
    %s227 = sphi 0, %s213
    %s235 = sphi 0, %s237
    %s238 = sphi 0, %s235
    %s239 = sphi 0, %s238
    %s255 = sphi 0, %s239
  $region4: #{_forward.1} parent=0 // loop_header_branch
    %18 = sbr.rel (%p16) target = $region8
  $region5: #{_forward.1} parent=0 // loop_body
    %s20 = ssub.s32 %s15, 1
    %s21 = ssub.s32 %s15, 2
    %s28 = sadd.s32 1, %s23
    %p29 = scmp.ge.s32.totalorder %s28, 1
    %s30 = scalar_select %p29, 0, %s28
    %s31 = sadd.s32 1, %s22
    %s32 = scalar_select %p29, %s31, %s22
    %p33 = scmp.ge.s32.totalorder %s32, 2
    %s34 = scalar_select %p33, 0, %s32
    %s35 = ssub.s32 %s22, %s34
    %s36 = ssub.s32 %s23, %s30
    %s37 = sor.u32 %s35, %s36
    %p38 = scmp.eq.s32.totalorder %s37, 0
    %s40 = sadd.s32 %s39, 1
    %s41 = scalar_select %p38, %s39, %s40
    %p44 = pneg %p38
    %p45 = scmp.eq.s32.totalorder %s15, 1
    %p46 = por %p44, %p45
    %p47 = scmp.ne.s32.totalorder %s39, %s42
    %p48 = scmp.eq.s32.totalorder %s15, 0
    %p49 = por %p47, %p48
    %p50 = scmp.ne.s32.totalorder %s39, %s42
    %p51 = scmp.eq.s32.totalorder %s20, 1
    %p52 = por %p50, %p51
    %p53 = scmp.ne.s32.totalorder %s42, %s43
    %p54 = scmp.eq.s32.totalorder %s20, 0
    %p55 = por %p53, %p54
    %p56 = scmp.ne.s32.totalorder %s42, %s43
    %p57 = scmp.eq.s32.totalorder %s21, 1
    %p58 = por %p56, %p57
    %p60 = scmp.ne.s32.totalorder %s43, %s59
    %p61 = scmp.eq.s32.totalorder %s21, 0
    %p62 = por %p60, %p61
    %s64 = sadd.s32 %s63, 1
    %p67 = scmp.eq.s32.totalorder %s15, 1
    %p68 = scmp.ne.s32.totalorder %s63, %s65
    %p69 = scmp.eq.s32.totalorder %s15, 0
    %p70 = por %p68, %p69
    %p71 = scmp.ne.s32.totalorder %s63, %s65
    %p72 = scmp.eq.s32.totalorder %s20, 1
    %p73 = por %p71, %p72
    %p74 = scmp.ne.s32.totalorder %s65, %s66
    %p75 = scmp.eq.s32.totalorder %s20, 0
    %p76 = por %p74, %p75
    %p77 = scmp.ne.s32.totalorder %s65, %s66
    %p78 = scmp.eq.s32.totalorder %s21, 1
    %p79 = por %p77, %p78
    %p81 = scmp.ne.s32.totalorder %s66, %s80
    %p82 = scmp.eq.s32.totalorder %s21, 0
    %p83 = por %p81, %p82
    %s85 = sadd.s32 %s84, 1
    %p88 = scmp.eq.s32.totalorder %s15, 1
    %p89 = scmp.ne.s32.totalorder %s84, %s86
    %p90 = scmp.eq.s32.totalorder %s15, 0
    %p91 = por %p89, %p90
    %p92 = scmp.ne.s32.totalorder %s84, %s86
    %p93 = scmp.eq.s32.totalorder %s20, 1
    %p94 = por %p92, %p93
    %p95 = scmp.ne.s32.totalorder %s86, %s87
    %p96 = scmp.eq.s32.totalorder %s20, 0
    %p97 = por %p95, %p96
    %p98 = scmp.ne.s32.totalorder %s86, %s87
    %p99 = scmp.eq.s32.totalorder %s21, 1
    %p100 = por %p98, %p99
    %p102 = scmp.ne.s32.totalorder %s87, %s101
    %p103 = scmp.eq.s32.totalorder %s21, 0
    %p104 = por %p102, %p103
    %s106 = sadd.s32 %s105, 1
    %p109 = scmp.eq.s32.totalorder %s15, 1
    %p110 = scmp.ne.s32.totalorder %s105, %s107
    %p111 = scmp.eq.s32.totalorder %s15, 0
    %p112 = por %p110, %p111
    %p113 = scmp.ne.s32.totalorder %s105, %s107
    %p114 = scmp.eq.s32.totalorder %s20, 1
    %p115 = por %p113, %p114
    %p116 = scmp.ne.s32.totalorder %s107, %s108
    %p117 = scmp.eq.s32.totalorder %s20, 0
    %p118 = por %p116, %p117
    %p119 = scmp.ne.s32.totalorder %s107, %s108
    %p120 = scmp.eq.s32.totalorder %s21, 1
    %p121 = por %p119, %p120
    %p123 = scmp.ne.s32.totalorder %s108, %s122
    %p124 = scmp.eq.s32.totalorder %s21, 0
    %p125 = por %p123, %p124
    %s127 = sadd.s32 %s126, 1
    %p130 = scmp.eq.s32.totalorder %s15, 1
    %p131 = scmp.ne.s32.totalorder %s126, %s128
    %p132 = scmp.eq.s32.totalorder %s15, 0
    %p133 = por %p131, %p132
    %p134 = scmp.ne.s32.totalorder %s126, %s128
    %p135 = scmp.eq.s32.totalorder %s20, 1
    %p136 = por %p134, %p135
    %p137 = scmp.ne.s32.totalorder %s128, %s129
    %p138 = scmp.eq.s32.totalorder %s20, 0
    %p139 = por %p137, %p138
    %p140 = scmp.ne.s32.totalorder %s128, %s129
    %p141 = scmp.eq.s32.totalorder %s21, 1
    %p142 = por %p140, %p141
    %p144 = scmp.ne.s32.totalorder %s129, %s143
    %p145 = scmp.eq.s32.totalorder %s21, 0
    %p146 = por %p144, %p145
    %s148 = sadd.s32 %s147, 1
    %p151 = scmp.eq.s32.totalorder %s15, 1
    %p152 = scmp.ne.s32.totalorder %s147, %s149
    %p153 = scmp.eq.s32.totalorder %s15, 0
    %p154 = por %p152, %p153
    %p155 = scmp.ne.s32.totalorder %s147, %s149
    %p156 = scmp.eq.s32.totalorder %s20, 1
    %p157 = por %p155, %p156
    %p158 = scmp.ne.s32.totalorder %s149, %s150
    %p159 = scmp.eq.s32.totalorder %s20, 0
    %p160 = por %p158, %p159
    %p161 = scmp.ne.s32.totalorder %s149, %s150
    %p162 = scmp.eq.s32.totalorder %s21, 1
    %p163 = por %p161, %p162
    %p165 = scmp.ne.s32.totalorder %s150, %s164
    %p166 = scmp.eq.s32.totalorder %s21, 0
    %p167 = por %p165, %p166
    %s169 = sadd.s32 %s168, 1
    %p172 = scmp.eq.s32.totalorder %s15, 1
    %p173 = scmp.ne.s32.totalorder %s168, %s170
    %p174 = scmp.eq.s32.totalorder %s15, 0
    %p175 = por %p173, %p174
    %p176 = scmp.ne.s32.totalorder %s168, %s170
    %p177 = scmp.eq.s32.totalorder %s20, 1
    %p178 = por %p176, %p177
    %p179 = scmp.ne.s32.totalorder %s170, %s171
    %p180 = scmp.eq.s32.totalorder %s20, 0
    %p181 = por %p179, %p180
    %p182 = scmp.ne.s32.totalorder %s170, %s171
    %p183 = scmp.eq.s32.totalorder %s21, 1
    %p184 = por %p182, %p183
    %p186 = scmp.ne.s32.totalorder %s171, %s185
    %p187 = scmp.eq.s32.totalorder %s21, 0
    %p188 = por %p186, %p187
    %s190 = sadd.s32 %s189, 1
    %p193 = scmp.eq.s32.totalorder %s15, 1
    %p194 = scmp.ne.s32.totalorder %s189, %s191
    %p195 = scmp.eq.s32.totalorder %s15, 0
    %p196 = por %p194, %p195
    %p197 = scmp.ne.s32.totalorder %s189, %s191
    %p198 = scmp.eq.s32.totalorder %s20, 1
    %p199 = por %p197, %p198
    %p200 = scmp.ne.s32.totalorder %s191, %s192
    %p201 = scmp.eq.s32.totalorder %s20, 0
    %p202 = por %p200, %p201
    %p203 = scmp.ne.s32.totalorder %s191, %s192
    %p204 = scmp.eq.s32.totalorder %s21, 1
    %p205 = por %p203, %p204
    %p207 = scmp.ne.s32.totalorder %s192, %s206
    %p208 = scmp.eq.s32.totalorder %s21, 0
    %p209 = por %p207, %p208
    %s211 = sadd.s32 %s210, 1
    %p214 = scmp.eq.s32.totalorder %s15, 1
    %p215 = scmp.ne.s32.totalorder %s210, %s212
    %p216 = scmp.eq.s32.totalorder %s15, 0
    %p217 = por %p215, %p216
    %p218 = scmp.ne.s32.totalorder %s210, %s212
    %p219 = scmp.eq.s32.totalorder %s20, 1
    %p220 = por %p218, %p219
    %p221 = scmp.ne.s32.totalorder %s212, %s213
    %p222 = scmp.eq.s32.totalorder %s20, 0
    %p223 = por %p221, %p222
    %p224 = scmp.ne.s32.totalorder %s212, %s213
    %p225 = scmp.eq.s32.totalorder %s21, 1
    %p226 = por %p224, %p225
    %p228 = scmp.ne.s32.totalorder %s213, %s227
    %p229 = scmp.eq.s32.totalorder %s21, 0
    %p230 = por %p228, %p229
    %s231 = ssub.s32 %s22, %s34
    %s232 = ssub.s32 %s23, %s30
    %s233 = sor.u32 %s231, %s232
    %p234 = scmp.eq.s32.totalorder %s233, 0
    %s236 = sadd.s32 %s235, 1
    %s237 = scalar_select %p234, %s235, %s236
    %p240 = pneg %p234
    %p241 = scmp.eq.s32.totalorder %s15, 1
    %p242 = por %p240, %p241
    %p243 = scmp.ne.s32.totalorder %s235, %s238
    %p244 = scmp.eq.s32.totalorder %s15, 0
    %p245 = por %p243, %p244
    %p246 = scmp.ne.s32.totalorder %s235, %s238
    %p247 = scmp.eq.s32.totalorder %s20, 1
    %p248 = por %p246, %p247
    %p249 = scmp.ne.s32.totalorder %s238, %s239
    %p250 = scmp.eq.s32.totalorder %s20, 0
    %p251 = por %p249, %p250
    %p252 = scmp.ne.s32.totalorder %s238, %s239
    %p253 = scmp.eq.s32.totalorder %s21, 1
    %p254 = por %p252, %p253
    %p256 = scmp.ne.s32.totalorder %s239, %s255
    %p257 = scmp.eq.s32.totalorder %s21, 0
    %p258 = por %p256, %p257
    %p259 = scmp.le.s32.totalorder 1, %s15
    %p260 = scmp.lt.s32.totalorder %s15, 3
    %p261 = pnand %p259, %p260
    %p262 = pneg %p261
    // Predicated region
    $region9: #{_forward.1} parent=5 // pred_check
      _
    $region10: #{_forward.1} parent=5 // pred_check_branch
      %264 = sbr.rel (%p261) target = $region12
    $region11: #{_forward.1} parent=5 // pred_region
      %s265 = ssub.s32 %s15, 1
      // Predicated region
      $region13: #{_forward.1} parent=11 // pred_check
        %p266 = pneg %p76
      $region14: #{_forward.1} parent=11 // pred_check_branch
        %268 = sbr.rel (%p266) target = $region16
      $region15: #{_forward.1} parent=11 // pred_region
        _
      $region16: #{_forward.1} parent=11 // pred_fallthru
        _
      // Predicated region
      $region17: #{_forward.1} parent=11 // pred_check
        %p269 = pneg %p97
      $region18: #{_forward.1} parent=11 // pred_check_branch
        %271 = sbr.rel (%p269) target = $region20
      $region19: #{_forward.1} parent=11 // pred_region
        _
      $region20: #{_forward.1} parent=11 // pred_fallthru
        _
      // Predicated region
      $region21: #{_forward.1} parent=11 // pred_check
        %p272 = pneg %p118
      $region22: #{_forward.1} parent=11 // pred_check_branch
        %274 = sbr.rel (%p272) target = $region24
      $region23: #{_forward.1} parent=11 // pred_region
        _
      $region24: #{_forward.1} parent=11 // pred_fallthru
        _
      // Predicated region
      $region25: #{_forward.1} parent=11 // pred_check
        %p275 = pneg %p139
      $region26: #{_forward.1} parent=11 // pred_check_branch
        %277 = sbr.rel (%p275) target = $region28
      $region27: #{_forward.1} parent=11 // pred_region
        _
      $region28: #{_forward.1} parent=11 // pred_fallthru
        _
      // Predicated region
      $region29: #{_forward.1} parent=11 // pred_check
        %p278 = pneg %p160
      $region30: #{_forward.1} parent=11 // pred_check_branch
        %280 = sbr.rel (%p278) target = $region32
      $region31: #{_forward.1} parent=11 // pred_region
        _
      $region32: #{_forward.1} parent=11 // pred_fallthru
        _
      // Predicated region
      $region33: #{_forward.1} parent=11 // pred_check
        %p281 = pneg %p181
      $region34: #{_forward.1} parent=11 // pred_check_branch
        %283 = sbr.rel (%p281) target = $region36
      $region35: #{_forward.1} parent=11 // pred_region
        _
      $region36: #{_forward.1} parent=11 // pred_fallthru
        _
      // Predicated region
      $region37: #{_forward.1} parent=11 // pred_check
        %p284 = pneg %p202
      $region38: #{_forward.1} parent=11 // pred_check_branch
        %286 = sbr.rel (%p284) target = $region40
      $region39: #{_forward.1} parent=11 // pred_region
        _
      $region40: #{_forward.1} parent=11 // pred_fallthru
        _
      // Predicated region
      $region41: #{_forward.1} parent=11 // pred_check
        %p287 = pneg %p223
      $region42: #{_forward.1} parent=11 // pred_check_branch
        %289 = sbr.rel (%p287) target = $region44
      $region43: #{_forward.1} parent=11 // pred_region
        _
      $region44: #{_forward.1} parent=11 // pred_fallthru
        _
    $region12: #{_forward.1} parent=5 // pred_fallthru
      _
    %p290 = scmp.lt.s32.totalorder %s15, 2
    // Predicated region
    $region45: #{_forward.1} parent=5 // pred_check
      %p291 = pneg %p290
    $region46: #{_forward.1} parent=5 // pred_check_branch
      %293 = sbr.rel (%p291) target = $region48
    $region47: #{_forward.1} parent=5 // pred_region
      // Predicated region
      $region49: #{_forward.1} parent=47 // pred_check
        %p294 = pneg %p49
      $region50: #{_forward.1} parent=47 // pred_check_branch
        %296 = sbr.rel (%p294) target = $region52
      $region51: #{_forward.1} parent=47 // pred_region
        %s297 = smul.u32 2, %s23
        %p298 = scmp.lt.s32.totalorder %s22, 1
        %s299 = scalar_select %p298, %s22, 1
        %p300 = scmp.lt.s32.totalorder %s297, 1
        %s301 = scalar_select %p300, %s297, 1
        %s302 = smul.addr %s299, 272
        %s303 = sadd.s32 %s301, %s302
        %s304 = smul.addr %s303, 4
        %s305 = scalar_lea.vmem %s0, %s304
        %s306 = smul.u32 2, %s23
      $region52: #{_forward.1} parent=47 // pred_fallthru
        _
    $region48: #{_forward.1} parent=5 // pred_fallthru
      _
    %p307 = scmp.le.s32.totalorder 1, %s15
    %p308 = scmp.lt.s32.totalorder %s15, 3
    %p309 = pnand %p307, %p308
    %p310 = pneg %p309
    // Predicated region
    $region53: #{_forward.1} parent=5 // pred_check
      _
    $region54: #{_forward.1} parent=5 // pred_check_branch
      %312 = sbr.rel (%p309) target = $region56
    $region55: #{_forward.1} parent=5 // pred_region
      %s313 = ssub.s32 %s15, 1
      %s314 = smul.u32 2, %s25
      %p315 = scmp.lt.s32.totalorder %s24, 1
      %s316 = scalar_select %p315, %s24, 1
      %p317 = scmp.lt.s32.totalorder %s314, 1
      %s318 = scalar_select %p317, %s314, 1
      %s319 = smul.addr %s316, 272
      %s320 = sadd.s32 %s318, %s319
      %s321 = smul.addr %s320, 4
      %s322 = scalar_lea.vmem %s0, %s321
      %p323 = pneg %p55
      %p324 = pneg %p52
      %p325 = pneg %p76
      %p326 = pneg %p73
      %p327 = pneg %p97
      %p328 = pneg %p94
      %p329 = pneg %p118
      %p330 = pneg %p115
      %p331 = pneg %p139
      %p332 = pneg %p136
      %p333 = pneg %p160
      %p334 = pneg %p157
      %p335 = pneg %p181
      %p336 = pneg %p178
      %p337 = pneg %p202
      %p338 = pneg %p199
      %p339 = pneg %p223
      %p340 = pneg %p220
      %p341 = pneg %p251
      %p342 = pneg %p248
      %s343 = smul.u32 2, %s25
      %p344 = scmp.lt.s32.totalorder %s24, 1
      %s345 = scalar_select %p344, %s24, 1
      %p346 = scmp.lt.s32.totalorder %s343, 1
      %s347 = scalar_select %p346, %s343, 1
      %s348 = smul.addr %s345, 4
      %s349 = sadd.s32 %s347, %s348
      %s350 = smul.addr %s349, 8
      %s351 = scalar_lea.vmem %s9, %s350
      %s352 = smul.u32 2, %s25
      %p353 = scmp.lt.s32.totalorder %s24, 1
      %s354 = scalar_select %p353, %s24, 1
      %p355 = scmp.lt.s32.totalorder %s352, 1
      %s356 = scalar_select %p355, %s352, 1
      %s357 = smul.addr %s354, 272
      %s358 = sadd.s32 %s356, %s357
      %s359 = smul.addr %s358, 4
      %s360 = scalar_lea.vmem %s0, %s359
      %s361 = smul.u32 2, %s25
      %s362 = smul.u32 2, %s25
      %p363 = scmp.lt.s32.totalorder %s24, 1
      %s364 = scalar_select %p363, %s24, 1
      %p365 = scmp.lt.s32.totalorder %s362, 1
      %s366 = scalar_select %p365, %s362, 1
      %s367 = smul.addr %s364, 4
      %s368 = sadd.s32 %s366, %s367
      %s369 = smul.addr %s368, 8
      %s370 = scalar_lea.vmem %s9, %s369
      %s371 = smul.u32 2, %s25
      %v373 = vld [vmem:[%s360] sm:$0xff]
      %v374 = vld [vmem:[%s360 + $0x8] sm:$0xff]
      %v375 = vld [vmem:[%s360 + $0x10] sm:$0xff]
      %v376 = vld [vmem:[%s360 + $0x18] sm:$0xff]
      %v377 = vld [vmem:[%s360 + $0x20] sm:$0xff]
      %v378 = vld [vmem:[%s360 + $0x28] sm:$0xff]
      %v379 = vld [vmem:[%s360 + $0x30] sm:$0xff]
      %v380 = vld [vmem:[%s360 + $0x38] sm:$0xff]
      %v381 = vld [vmem:[%s360 + $0x40] sm:$0xff]
      %v382 = vld [vmem:[%s360 + $0x48] sm:$0xff]
      %v383 = vld [vmem:[%s360 + $0x50] sm:$0xff]
      %v384 = vld [vmem:[%s360 + $0x58] sm:$0xff]
      %v385 = vld [vmem:[%s360 + $0x60] sm:$0xff]
      %v386 = vld [vmem:[%s360 + $0x68] sm:$0xff]
      %v387 = vld [vmem:[%s360 + $0x70] sm:$0xff]
      %v388 = vld [vmem:[%s360 + $0x78] sm:$0xff]
      %v389 = vld [vmem:[%s360 + $0x80] sm:$0xff]
      %v390 = vld [vmem:[%s360 + $0x88] sm:$0xff]
      %v391 = vld [vmem:[%s360 + $0x90] sm:$0xff]
      %v392 = vld [vmem:[%s360 + $0x98] sm:$0xff]
      %v393 = vld [vmem:[%s360 + $0xa0] sm:$0xff]
      %v394 = vld [vmem:[%s360 + $0xa8] sm:$0xff]
      %v395 = vld [vmem:[%s360 + $0xb0] sm:$0xff]
      %v396 = vld [vmem:[%s360 + $0xb8] sm:$0xff]
      %v397 = vld [vmem:[%s360 + $0xc0] sm:$0xff]
      %v398 = vld [vmem:[%s360 + $0xc8] sm:$0xff]
      %v399 = vld [vmem:[%s360 + $0xd0] sm:$0xff]
      %v400 = vld [vmem:[%s360 + $0xd8] sm:$0xff]
      %v401 = vld [vmem:[%s360 + $0xe0] sm:$0xff]
      %v402 = vld [vmem:[%s360 + $0xe8] sm:$0xff]
      %v403 = vld [vmem:[%s360 + $0xf0] sm:$0xff]
      %v404 = vld [vmem:[%s360 + $0xf8] sm:$0xff]
      %v405 = vld [vmem:[%s360 + $0x100] sm:$0xff]
      %v406 = vld [vmem:[%s360 + $0x108] sm:$0xff]
      %v407 = vld [vmem:[%s360 + $0x110] sm:$0xff]
      %v408 = vld [vmem:[%s360 + $0x118] sm:$0xff]
      %v409 = vld [vmem:[%s360 + $0x120] sm:$0xff]
      %v410 = vld [vmem:[%s360 + $0x128] sm:$0xff]
      %v411 = vld [vmem:[%s360 + $0x130] sm:$0xff]
      %v412 = vld [vmem:[%s360 + $0x138] sm:$0xff]
      %v413 = vld [vmem:[%s360 + $0x140] sm:$0xff]
      %v414 = vld [vmem:[%s360 + $0x148] sm:$0xff]
      %v415 = vld [vmem:[%s360 + $0x150] sm:$0xff]
      %v416 = vld [vmem:[%s360 + $0x158] sm:$0xff]
      %v417 = vld [vmem:[%s360 + $0x160] sm:$0xff]
      %v418 = vld [vmem:[%s360 + $0x168] sm:$0xff]
      %v419 = vld [vmem:[%s360 + $0x170] sm:$0xff]
      %v420 = vld [vmem:[%s360 + $0x178] sm:$0xff]
      %v421 = vld [vmem:[%s360 + $0x180] sm:$0xff]
      %v422 = vld [vmem:[%s360 + $0x188] sm:$0xff]
      %v423 = vld [vmem:[%s360 + $0x190] sm:$0xff]
      %v424 = vld [vmem:[%s360 + $0x198] sm:$0xff]
      %v425 = vld [vmem:[%s360 + $0x1a0] sm:$0xff]
      %v426 = vld [vmem:[%s360 + $0x1a8] sm:$0xff]
      %v427 = vld [vmem:[%s360 + $0x1b0] sm:$0xff]
      %v428 = vld [vmem:[%s360 + $0x1b8] sm:$0xff]
      %v429 = vld [vmem:[%s360 + $0x1c0] sm:$0xff]
      %v430 = vld [vmem:[%s360 + $0x1c8] sm:$0xff]
      %v431 = vld [vmem:[%s360 + $0x1d0] sm:$0xff]
      %v432 = vld [vmem:[%s360 + $0x1d8] sm:$0xff]
      %v433 = vld [vmem:[%s360 + $0x1e0] sm:$0xff]
      %v434 = vld [vmem:[%s360 + $0x1e8] sm:$0xff]
      %v435 = vld [vmem:[%s360 + $0x1f0] sm:$0xff]
      %v436 = vld [vmem:[%s360 + $0x1f8] sm:$0xff]
      %v437 = vld [vmem:[%s360 + $0x200] sm:$0xff]
      %v438 = vld [vmem:[%s360 + $0x208] sm:$0xff]
      %v439 = vld [vmem:[%s360 + $0x210] sm:$0xff]
      %v440 = vld [vmem:[%s360 + $0x218] sm:$0xff]
      %v441 = vld [vmem:[%s360 + $0x220] sm:$0xff]
      %v442 = vld [vmem:[%s360 + $0x228] sm:$0xff]
      %v443 = vld [vmem:[%s360 + $0x230] sm:$0xff]
      %v444 = vld [vmem:[%s360 + $0x238] sm:$0xff]
      %v445 = vld [vmem:[%s360 + $0x240] sm:$0xff]
      %v446 = vld [vmem:[%s360 + $0x248] sm:$0xff]
      %v447 = vld [vmem:[%s360 + $0x250] sm:$0xff]
      %v448 = vld [vmem:[%s360 + $0x258] sm:$0xff]
      %v449 = vld [vmem:[%s360 + $0x260] sm:$0xff]
      %v450 = vld [vmem:[%s360 + $0x268] sm:$0xff]
      %v451 = vld [vmem:[%s360 + $0x270] sm:$0xff]
      %v452 = vld [vmem:[%s360 + $0x278] sm:$0xff]
      %v453 = vld [vmem:[%s360 + $0x280] sm:$0xff]
      %v454 = vld [vmem:[%s360 + $0x288] sm:$0xff]
      %v455 = vld [vmem:[%s360 + $0x290] sm:$0xff]
      %v456 = vld [vmem:[%s360 + $0x298] sm:$0xff]
      %v457 = vld [vmem:[%s360 + $0x2a0] sm:$0xff]
      %v458 = vld [vmem:[%s360 + $0x2a8] sm:$0xff]
      %v459 = vld [vmem:[%s360 + $0x2b0] sm:$0xff]
      %v460 = vld [vmem:[%s360 + $0x2b8] sm:$0xff]
      %v461 = vld [vmem:[%s360 + $0x2c0] sm:$0xff]
      %v462 = vld [vmem:[%s360 + $0x2c8] sm:$0xff]
      %v463 = vld [vmem:[%s360 + $0x2d0] sm:$0xff]
      %v464 = vld [vmem:[%s360 + $0x2d8] sm:$0xff]
      %v465 = vld [vmem:[%s360 + $0x2e0] sm:$0xff]
      %v466 = vld [vmem:[%s360 + $0x2e8] sm:$0xff]
      %v467 = vld [vmem:[%s360 + $0x2f0] sm:$0xff]
      %v468 = vld [vmem:[%s360 + $0x2f8] sm:$0xff]
      %v469 = vld [vmem:[%s360 + $0x300] sm:$0xff]
      %v470 = vld [vmem:[%s360 + $0x308] sm:$0xff]
      %v471 = vld [vmem:[%s360 + $0x310] sm:$0xff]
      %v472 = vld [vmem:[%s360 + $0x318] sm:$0xff]
      %v473 = vld [vmem:[%s360 + $0x320] sm:$0xff]
      %v474 = vld [vmem:[%s360 + $0x328] sm:$0xff]
      %v475 = vld [vmem:[%s360 + $0x330] sm:$0xff]
      %v476 = vld [vmem:[%s360 + $0x338] sm:$0xff]
      %v477 = vld [vmem:[%s360 + $0x340] sm:$0xff]
      %v478 = vld [vmem:[%s360 + $0x348] sm:$0xff]
      %v479 = vld [vmem:[%s360 + $0x350] sm:$0xff]
      %v480 = vld [vmem:[%s360 + $0x358] sm:$0xff]
      %v481 = vld [vmem:[%s360 + $0x360] sm:$0xff]
      %v482 = vld [vmem:[%s360 + $0x368] sm:$0xff]
      %v483 = vld [vmem:[%s360 + $0x370] sm:$0xff]
      %v484 = vld [vmem:[%s360 + $0x378] sm:$0xff]
      %v485 = vld [vmem:[%s360 + $0x380] sm:$0xff]
      %v486 = vld [vmem:[%s360 + $0x388] sm:$0xff]
      %v487 = vld [vmem:[%s360 + $0x390] sm:$0xff]
      %v488 = vld [vmem:[%s360 + $0x398] sm:$0xff]
      %v489 = vld [vmem:[%s360 + $0x3a0] sm:$0xff]
      %v490 = vld [vmem:[%s360 + $0x3a8] sm:$0xff]
      %v491 = vld [vmem:[%s360 + $0x3b0] sm:$0xff]
      %v492 = vld [vmem:[%s360 + $0x3b8] sm:$0xff]
      %v493 = vld [vmem:[%s360 + $0x3c0] sm:$0xff]
      %v494 = vld [vmem:[%s360 + $0x3c8] sm:$0xff]
      %v495 = vld [vmem:[%s360 + $0x3d0] sm:$0xff]
      %v496 = vld [vmem:[%s360 + $0x3d8] sm:$0xff]
      %v497 = vld [vmem:[%s360 + $0x3e0] sm:$0xff]
      %v498 = vld [vmem:[%s360 + $0x3e8] sm:$0xff]
      %v499 = vld [vmem:[%s360 + $0x3f0] sm:$0xff]
      %v500 = vld [vmem:[%s360 + $0x3f8] sm:$0xff]
      %v501 = vld [vmem:[%s360 + $0x400] sm:$0xff]
      %v502 = vld [vmem:[%s360 + $0x408] sm:$0xff]
      %v503 = vld [vmem:[%s360 + $0x410] sm:$0xff]
      %v504 = vld [vmem:[%s360 + $0x418] sm:$0xff]
      %v505 = vld [vmem:[%s360 + $0x420] sm:$0xff]
      %v506 = vld [vmem:[%s360 + $0x428] sm:$0xff]
      %v507 = vld [vmem:[%s360 + $0x430] sm:$0xff]
      %v508 = vld [vmem:[%s360 + $0x438] sm:$0xff]
      %v509 = vld [vmem:[%s1] sm:$0xff]
      %v510 = vld [vmem:[%s1 + $0x8] sm:$0xff]
      %v511 = vld [vmem:[%s1 + $0x10] sm:$0xff]
      %v512 = vld [vmem:[%s1 + $0x18] sm:$0xff]
      %v513 = vld [vmem:[%s1 + $0x20] sm:$0xf]
      %v514 = vld [vmem:[%s1 + $0x24] sm:$0xff]
      %v515 = vld [vmem:[%s1 + $0x2c] sm:$0xff]
      %v516 = vld [vmem:[%s1 + $0x34] sm:$0xff]
      %v517 = vld [vmem:[%s1 + $0x3c] sm:$0xff]
      %v518 = vld [vmem:[%s1 + $0x44] sm:$0xf]
      %v519 = vld [vmem:[%s1 + $0x48] sm:$0xff]
      %v520 = vld [vmem:[%s1 + $0x50] sm:$0xff]
      %v521 = vld [vmem:[%s1 + $0x58] sm:$0xff]
      %v522 = vld [vmem:[%s1 + $0x60] sm:$0xff]
      %v523 = vld [vmem:[%s1 + $0x68] sm:$0xf]
      %v524 = vld [vmem:[%s1 + $0x6c] sm:$0xff]
      %v525 = vld [vmem:[%s1 + $0x74] sm:$0xff]
      %v526 = vld [vmem:[%s1 + $0x7c] sm:$0xff]
      %v527 = vld [vmem:[%s1 + $0x84] sm:$0xff]
      %v528 = vld [vmem:[%s1 + $0x8c] sm:$0xf]
      %v529 = vld [vmem:[%s1 + $0x90] sm:$0xff]
      %v530 = vld [vmem:[%s1 + $0x98] sm:$0xff]
      %v531 = vld [vmem:[%s1 + $0xa0] sm:$0xff]
      %v532 = vld [vmem:[%s1 + $0xa8] sm:$0xff]
      %v533 = vld [vmem:[%s1 + $0xb0] sm:$0xf]
      %v534 = vld [vmem:[%s1 + $0xb4] sm:$0xff]
      %v535 = vld [vmem:[%s1 + $0xbc] sm:$0xff]
      %v536 = vld [vmem:[%s1 + $0xc4] sm:$0xff]
      %v537 = vld [vmem:[%s1 + $0xcc] sm:$0xff]
      %v538 = vld [vmem:[%s1 + $0xd4] sm:$0xf]
      %v539 = vld [vmem:[%s1 + $0xd8] sm:$0xff]
      %v540 = vld [vmem:[%s1 + $0xe0] sm:$0xff]
      %v541 = vld [vmem:[%s1 + $0xe8] sm:$0xff]
      %v542 = vld [vmem:[%s1 + $0xf0] sm:$0xff]
      %v543 = vld [vmem:[%s1 + $0xf8] sm:$0xf]
      %v544 = vld [vmem:[%s1 + $0xfc] sm:$0xff]
      %v545 = vld [vmem:[%s1 + $0x104] sm:$0xff]
      %v546 = vld [vmem:[%s1 + $0x10c] sm:$0xff]
      %v547 = vld [vmem:[%s1 + $0x114] sm:$0xff]
      %v548 = vld [vmem:[%s1 + $0x11c] sm:$0xf]
      %v549 = vld [vmem:[%s1 + $0x120] sm:$0xff]
      %v550 = vld [vmem:[%s1 + $0x128] sm:$0xff]
      %v551 = vld [vmem:[%s1 + $0x130] sm:$0xff]
      %v552 = vld [vmem:[%s1 + $0x138] sm:$0xff]
      %v553 = vld [vmem:[%s1 + $0x140] sm:$0xf]
      %v554 = vld [vmem:[%s1 + $0x144] sm:$0xff]
      %v555 = vld [vmem:[%s1 + $0x14c] sm:$0xff]
      %v556 = vld [vmem:[%s1 + $0x154] sm:$0xff]
      %v557 = vld [vmem:[%s1 + $0x15c] sm:$0xff]
      %v558 = vld [vmem:[%s1 + $0x164] sm:$0xf]
      %v559 = vld [vmem:[%s1 + $0x168] sm:$0xff]
      %v560 = vld [vmem:[%s1 + $0x170] sm:$0xff]
      %v561 = vld [vmem:[%s1 + $0x178] sm:$0xff]
      %v562 = vld [vmem:[%s1 + $0x180] sm:$0xff]
      %v563 = vld [vmem:[%s1 + $0x188] sm:$0xf]
      %v564 = vld [vmem:[%s1 + $0x18c] sm:$0xff]
      %v565 = vld [vmem:[%s1 + $0x194] sm:$0xff]
      %v566 = vld [vmem:[%s1 + $0x19c] sm:$0xff]
      %v567 = vld [vmem:[%s1 + $0x1a4] sm:$0xff]
      %v568 = vld [vmem:[%s1 + $0x1ac] sm:$0xf]
      %v569 = vld [vmem:[%s1 + $0x1b0] sm:$0xff]
      %v570 = vld [vmem:[%s1 + $0x1b8] sm:$0xff]
      %v571 = vld [vmem:[%s1 + $0x1c0] sm:$0xff]
      %v572 = vld [vmem:[%s1 + $0x1c8] sm:$0xff]
      %v573 = vld [vmem:[%s1 + $0x1d0] sm:$0xf]
      %v574 = vld [vmem:[%s1 + $0x1d4] sm:$0xff]
      %v575 = vld [vmem:[%s1 + $0x1dc] sm:$0xff]
      %v576 = vld [vmem:[%s1 + $0x1e4] sm:$0xff]
      %v577 = vld [vmem:[%s1 + $0x1ec] sm:$0xff]
      %v578 = vld [vmem:[%s1 + $0x1f4] sm:$0xf]
      %v579 = vld [vmem:[%s1 + $0x1f8] sm:$0xff]
      %v580 = vld [vmem:[%s1 + $0x200] sm:$0xff]
      %v581 = vld [vmem:[%s1 + $0x208] sm:$0xff]
      %v582 = vld [vmem:[%s1 + $0x210] sm:$0xff]
      %v583 = vld [vmem:[%s1 + $0x218] sm:$0xf]
      %v584 = vld [vmem:[%s1 + $0x21c] sm:$0xff]
      %v585 = vld [vmem:[%s1 + $0x224] sm:$0xff]
      %v586 = vld [vmem:[%s1 + $0x22c] sm:$0xff]
      %v587 = vld [vmem:[%s1 + $0x234] sm:$0xff]
      %v588 = vld [vmem:[%s1 + $0x23c] sm:$0xf]
      %v589 = vld [vmem:[%s1 + $0x240] sm:$0xff]
      %v590 = vld [vmem:[%s1 + $0x248] sm:$0xff]
      %v591 = vld [vmem:[%s1 + $0x250] sm:$0xff]
      %v592 = vld [vmem:[%s1 + $0x258] sm:$0xff]
      %v593 = vld [vmem:[%s1 + $0x260] sm:$0xf]
      %v594 = vld [vmem:[%s1 + $0x264] sm:$0xff]
      %v595 = vld [vmem:[%s1 + $0x26c] sm:$0xff]
      %v596 = vld [vmem:[%s1 + $0x274] sm:$0xff]
      %v597 = vld [vmem:[%s1 + $0x27c] sm:$0xff]
      %v598 = vld [vmem:[%s1 + $0x284] sm:$0xf]
      %v599 = vld [vmem:[%s1 + $0x288] sm:$0xff]
      %v600 = vld [vmem:[%s1 + $0x290] sm:$0xff]
      %v601 = vld [vmem:[%s1 + $0x298] sm:$0xff]
      %v602 = vld [vmem:[%s1 + $0x2a0] sm:$0xff]
      %v603 = vld [vmem:[%s1 + $0x2a8] sm:$0xf]
      %v604 = vld [vmem:[%s1 + $0x2ac] sm:$0xff]
      %v605 = vld [vmem:[%s1 + $0x2b4] sm:$0xff]
      %v606 = vld [vmem:[%s1 + $0x2bc] sm:$0xff]
      %v607 = vld [vmem:[%s1 + $0x2c4] sm:$0xff]
      %v608 = vld [vmem:[%s1 + $0x2cc] sm:$0xf]
      %v609 = vld [vmem:[%s1 + $0x2d0] sm:$0xff]
      %v610 = vld [vmem:[%s1 + $0x2d8] sm:$0xff]
      %v611 = vld [vmem:[%s1 + $0x2e0] sm:$0xff]
      %v612 = vld [vmem:[%s1 + $0x2e8] sm:$0xff]
      %v613 = vld [vmem:[%s1 + $0x2f0] sm:$0xf]
      %v614 = vld [vmem:[%s1 + $0x2f4] sm:$0xff]
      %v615 = vld [vmem:[%s1 + $0x2fc] sm:$0xff]
      %v616 = vld [vmem:[%s1 + $0x304] sm:$0xff]
      %v617 = vld [vmem:[%s1 + $0x30c] sm:$0xff]
      %v618 = vld [vmem:[%s1 + $0x314] sm:$0xf]
      %v619 = vld [vmem:[%s1 + $0x318] sm:$0xff]
      %v620 = vld [vmem:[%s1 + $0x320] sm:$0xff]
      %v621 = vld [vmem:[%s1 + $0x328] sm:$0xff]
      %v622 = vld [vmem:[%s1 + $0x330] sm:$0xff]
      %v623 = vld [vmem:[%s1 + $0x338] sm:$0xf]
      %v624 = vld [vmem:[%s1 + $0x33c] sm:$0xff]
      %v625 = vld [vmem:[%s1 + $0x344] sm:$0xff]
      %v626 = vld [vmem:[%s1 + $0x34c] sm:$0xff]
      %v627 = vld [vmem:[%s1 + $0x354] sm:$0xff]
      %v628 = vld [vmem:[%s1 + $0x35c] sm:$0xf]
      %v629 = vld [vmem:[%s1 + $0x360] sm:$0xff]
      %v630 = vld [vmem:[%s1 + $0x368] sm:$0xff]
      %v631 = vld [vmem:[%s1 + $0x370] sm:$0xff]
      %v632 = vld [vmem:[%s1 + $0x378] sm:$0xff]
      %v633 = vld [vmem:[%s1 + $0x380] sm:$0xf]
      %v634 = vld [vmem:[%s1 + $0x384] sm:$0xff]
      %v635 = vld [vmem:[%s1 + $0x38c] sm:$0xff]
      %v636 = vld [vmem:[%s1 + $0x394] sm:$0xff]
      %v637 = vld [vmem:[%s1 + $0x39c] sm:$0xff]
      %v638 = vld [vmem:[%s1 + $0x3a4] sm:$0xf]
      %v639 = vld [vmem:[%s1 + $0x3a8] sm:$0xff]
      %v640 = vld [vmem:[%s1 + $0x3b0] sm:$0xff]
      %v641 = vld [vmem:[%s1 + $0x3b8] sm:$0xff]
      %v642 = vld [vmem:[%s1 + $0x3c0] sm:$0xff]
      %v643 = vld [vmem:[%s1 + $0x3c8] sm:$0xf]
      %v644 = vld [vmem:[%s1 + $0x3cc] sm:$0xff]
      %v645 = vld [vmem:[%s1 + $0x3d4] sm:$0xff]
      %v646 = vld [vmem:[%s1 + $0x3dc] sm:$0xff]
      %v647 = vld [vmem:[%s1 + $0x3e4] sm:$0xff]
      %v648 = vld [vmem:[%s1 + $0x3ec] sm:$0xf]
      %v649 = vld [vmem:[%s1 + $0x3f0] sm:$0xff]
      %v650 = vld [vmem:[%s1 + $0x3f8] sm:$0xff]
      %v651 = vld [vmem:[%s1 + $0x400] sm:$0xff]
      %v652 = vld [vmem:[%s1 + $0x408] sm:$0xff]
      %v653 = vld [vmem:[%s1 + $0x410] sm:$0xf]
      %v654 = vld [vmem:[%s1 + $0x414] sm:$0xff]
      %v655 = vld [vmem:[%s1 + $0x41c] sm:$0xff]
      %v656 = vld [vmem:[%s1 + $0x424] sm:$0xff]
      %v657 = vld [vmem:[%s1 + $0x42c] sm:$0xff]
      %v658 = vld [vmem:[%s1 + $0x434] sm:$0xf]
      %v659 = vld [vmem:[%s1 + $0x438] sm:$0xff]
      %v660 = vld [vmem:[%s1 + $0x440] sm:$0xff]
      %v661 = vld [vmem:[%s1 + $0x448] sm:$0xff]
      %v662 = vld [vmem:[%s1 + $0x450] sm:$0xff]
      %v663 = vld [vmem:[%s1 + $0x458] sm:$0xf]
      %v664 = vld [vmem:[%s1 + $0x45c] sm:$0xff]
      %v665 = vld [vmem:[%s1 + $0x464] sm:$0xff]
      %v666 = vld [vmem:[%s1 + $0x46c] sm:$0xff]
      %v667 = vld [vmem:[%s1 + $0x474] sm:$0xff]
      %v668 = vld [vmem:[%s1 + $0x47c] sm:$0xf]
      %v669 = vld [vmem:[%s1 + $0x480] sm:$0xff]
      %v670 = vld [vmem:[%s1 + $0x488] sm:$0xff]
      %v671 = vld [vmem:[%s1 + $0x490] sm:$0xff]
      %v672 = vld [vmem:[%s1 + $0x498] sm:$0xff]
      %v673 = vld [vmem:[%s1 + $0x4a0] sm:$0xf]
      %v674 = vld [vmem:[%s1 + $0x4a4] sm:$0xff]
      %v675 = vld [vmem:[%s1 + $0x4ac] sm:$0xff]
      %v676 = vld [vmem:[%s1 + $0x4b4] sm:$0xff]
      %v677 = vld [vmem:[%s1 + $0x4bc] sm:$0xff]
      %v678 = vld [vmem:[%s1 + $0x4c4] sm:$0xf]
      %v679 = vld [vmem:[%s1 + $0x4c8] sm:$0xff]
      %v680 = vld [vmem:[%s1 + $0x4d0] sm:$0xff]
      %v681 = vld [vmem:[%s1 + $0x4d8] sm:$0xff]
      %v682 = vld [vmem:[%s1 + $0x4e0] sm:$0xff]
      %v683 = vld [vmem:[%s1 + $0x4e8] sm:$0xf]
      %v684 = vld [vmem:[%s1 + $0x4ec] sm:$0xff]
      %v685 = vld [vmem:[%s1 + $0x4f4] sm:$0xff]
      %v686 = vld [vmem:[%s1 + $0x4fc] sm:$0xff]
      %v687 = vld [vmem:[%s1 + $0x504] sm:$0xff]
      %v688 = vld [vmem:[%s1 + $0x50c] sm:$0xf]
      %v689 = vld [vmem:[%s1 + $0x510] sm:$0xff]
      %v690 = vld [vmem:[%s1 + $0x518] sm:$0xff]
      %v691 = vld [vmem:[%s1 + $0x520] sm:$0xff]
      %v692 = vld [vmem:[%s1 + $0x528] sm:$0xff]
      %v693 = vld [vmem:[%s1 + $0x530] sm:$0xf]
      %v694 = vld [vmem:[%s1 + $0x534] sm:$0xff]
      %v695 = vld [vmem:[%s1 + $0x53c] sm:$0xff]
      %v696 = vld [vmem:[%s1 + $0x544] sm:$0xff]
      %v697 = vld [vmem:[%s1 + $0x54c] sm:$0xff]
      %v698 = vld [vmem:[%s1 + $0x554] sm:$0xf]
      %v699 = vld [vmem:[%s1 + $0x558] sm:$0xff]
      %v700 = vld [vmem:[%s1 + $0x560] sm:$0xff]
      %v701 = vld [vmem:[%s1 + $0x568] sm:$0xff]
      %v702 = vld [vmem:[%s1 + $0x570] sm:$0xff]
      %v703 = vld [vmem:[%s1 + $0x578] sm:$0xf]
      %v704 = vld [vmem:[%s1 + $0x57c] sm:$0xff]
      %v705 = vld [vmem:[%s1 + $0x584] sm:$0xff]
      %v706 = vld [vmem:[%s1 + $0x58c] sm:$0xff]
      %v707 = vld [vmem:[%s1 + $0x594] sm:$0xff]
      %v708 = vld [vmem:[%s1 + $0x59c] sm:$0xf]
      %v709 = vld [vmem:[%s1 + $0x5a0] sm:$0xff]
      %v710 = vld [vmem:[%s1 + $0x5a8] sm:$0xff]
      %v711 = vld [vmem:[%s1 + $0x5b0] sm:$0xff]
      %v712 = vld [vmem:[%s1 + $0x5b8] sm:$0xff]
      %v713 = vld [vmem:[%s1 + $0x5c0] sm:$0xf]
      %v714 = vld [vmem:[%s1 + $0x5c4] sm:$0xff]
      %v715 = vld [vmem:[%s1 + $0x5cc] sm:$0xff]
      %v716 = vld [vmem:[%s1 + $0x5d4] sm:$0xff]
      %v717 = vld [vmem:[%s1 + $0x5dc] sm:$0xff]
      %v718 = vld [vmem:[%s1 + $0x5e4] sm:$0xf]
      %v719 = vld [vmem:[%s1 + $0x5e8] sm:$0xff]
      %v720 = vld [vmem:[%s1 + $0x5f0] sm:$0xff]
      %v721 = vld [vmem:[%s1 + $0x5f8] sm:$0xff]
      %v722 = vld [vmem:[%s1 + $0x600] sm:$0xff]
      %v723 = vld [vmem:[%s1 + $0x608] sm:$0xf]
      %v724 = vld [vmem:[%s1 + $0x60c] sm:$0xff]
      %v725 = vld [vmem:[%s1 + $0x614] sm:$0xff]
      %v726 = vld [vmem:[%s1 + $0x61c] sm:$0xff]
      %v727 = vld [vmem:[%s1 + $0x624] sm:$0xff]
      %v728 = vld [vmem:[%s1 + $0x62c] sm:$0xf]
      %v729 = vld [vmem:[%s1 + $0x630] sm:$0xff]
      %v730 = vld [vmem:[%s1 + $0x638] sm:$0xff]
      %v731 = vld [vmem:[%s1 + $0x640] sm:$0xff]
      %v732 = vld [vmem:[%s1 + $0x648] sm:$0xff]
      %v733 = vld [vmem:[%s1 + $0x650] sm:$0xf]
      %v734 = vld [vmem:[%s1 + $0x654] sm:$0xff]
      %v735 = vld [vmem:[%s1 + $0x65c] sm:$0xff]
      %v736 = vld [vmem:[%s1 + $0x664] sm:$0xff]
      %v737 = vld [vmem:[%s1 + $0x66c] sm:$0xff]
      %v738 = vld [vmem:[%s1 + $0x674] sm:$0xf]
      %v739 = vld [vmem:[%s1 + $0x678] sm:$0xff]
      %v740 = vld [vmem:[%s1 + $0x680] sm:$0xff]
      %v741 = vld [vmem:[%s1 + $0x688] sm:$0xff]
      %v742 = vld [vmem:[%s1 + $0x690] sm:$0xff]
      %v743 = vld [vmem:[%s1 + $0x698] sm:$0xf]
      %v744 = vld [vmem:[%s1 + $0x69c] sm:$0xff]
      %v745 = vld [vmem:[%s1 + $0x6a4] sm:$0xff]
      %v746 = vld [vmem:[%s1 + $0x6ac] sm:$0xff]
      %v747 = vld [vmem:[%s1 + $0x6b4] sm:$0xff]
      %v748 = vld [vmem:[%s1 + $0x6bc] sm:$0xf]
      %v749 = vld [vmem:[%s1 + $0x6c0] sm:$0xff]
      %v750 = vld [vmem:[%s1 + $0x6c8] sm:$0xff]
      %v751 = vld [vmem:[%s1 + $0x6d0] sm:$0xff]
      %v752 = vld [vmem:[%s1 + $0x6d8] sm:$0xff]
      %v753 = vld [vmem:[%s1 + $0x6e0] sm:$0xf]
      %v754 = vld [vmem:[%s1 + $0x6e4] sm:$0xff]
      %v755 = vld [vmem:[%s1 + $0x6ec] sm:$0xff]
      %v756 = vld [vmem:[%s1 + $0x6f4] sm:$0xff]
      %v757 = vld [vmem:[%s1 + $0x6fc] sm:$0xff]
      %v758 = vld [vmem:[%s1 + $0x704] sm:$0xf]
      %v759 = vld [vmem:[%s1 + $0x708] sm:$0xff]
      %v760 = vld [vmem:[%s1 + $0x710] sm:$0xff]
      %v761 = vld [vmem:[%s1 + $0x718] sm:$0xff]
      %v762 = vld [vmem:[%s1 + $0x720] sm:$0xff]
      %v763 = vld [vmem:[%s1 + $0x728] sm:$0xf]
      %v764 = vld [vmem:[%s1 + $0x72c] sm:$0xff]
      %v765 = vld [vmem:[%s1 + $0x734] sm:$0xff]
      %v766 = vld [vmem:[%s1 + $0x73c] sm:$0xff]
      %v767 = vld [vmem:[%s1 + $0x744] sm:$0xff]
      %v768 = vld [vmem:[%s1 + $0x74c] sm:$0xf]
      %v769 = vld [vmem:[%s1 + $0x750] sm:$0xff]
      %v770 = vld [vmem:[%s1 + $0x758] sm:$0xff]
      %v771 = vld [vmem:[%s1 + $0x760] sm:$0xff]
      %v772 = vld [vmem:[%s1 + $0x768] sm:$0xff]
      %v773 = vld [vmem:[%s1 + $0x770] sm:$0xf]
      %v774 = vld [vmem:[%s1 + $0x774] sm:$0xff]
      %v775 = vld [vmem:[%s1 + $0x77c] sm:$0xff]
      %v776 = vld [vmem:[%s1 + $0x784] sm:$0xff]
      %v777 = vld [vmem:[%s1 + $0x78c] sm:$0xff]
      %v778 = vld [vmem:[%s1 + $0x794] sm:$0xf]
      %v779 = vld [vmem:[%s1 + $0x798] sm:$0xff]
      %v780 = vld [vmem:[%s1 + $0x7a0] sm:$0xff]
      %v781 = vld [vmem:[%s1 + $0x7a8] sm:$0xff]
      %v782 = vld [vmem:[%s1 + $0x7b0] sm:$0xff]
      %v783 = vld [vmem:[%s1 + $0x7b8] sm:$0xf]
      %v784 = vld [vmem:[%s1 + $0x7bc] sm:$0xff]
      %v785 = vld [vmem:[%s1 + $0x7c4] sm:$0xff]
      %v786 = vld [vmem:[%s1 + $0x7cc] sm:$0xff]
      %v787 = vld [vmem:[%s1 + $0x7d4] sm:$0xff]
      %v788 = vld [vmem:[%s1 + $0x7dc] sm:$0xf]
      %v789 = vld [vmem:[%s1 + $0x7e0] sm:$0xff]
      %v790 = vld [vmem:[%s1 + $0x7e8] sm:$0xff]
      %v791 = vld [vmem:[%s1 + $0x7f0] sm:$0xff]
      %v792 = vld [vmem:[%s1 + $0x7f8] sm:$0xff]
      %v793 = vld [vmem:[%s1 + $0x800] sm:$0xf]
      %v794 = vld [vmem:[%s1 + $0x804] sm:$0xff]
      %v795 = vld [vmem:[%s1 + $0x80c] sm:$0xff]
      %v796 = vld [vmem:[%s1 + $0x814] sm:$0xff]
      %v797 = vld [vmem:[%s1 + $0x81c] sm:$0xff]
      %v798 = vld [vmem:[%s1 + $0x824] sm:$0xf]
      %v799 = vld [vmem:[%s1 + $0x828] sm:$0xff]
      %v800 = vld [vmem:[%s1 + $0x830] sm:$0xff]
      %v801 = vld [vmem:[%s1 + $0x838] sm:$0xff]
      %v802 = vld [vmem:[%s1 + $0x840] sm:$0xff]
      %v803 = vld [vmem:[%s1 + $0x848] sm:$0xf]
      %v804 = vld [vmem:[%s1 + $0x84c] sm:$0xff]
      %v805 = vld [vmem:[%s1 + $0x854] sm:$0xff]
      %v806 = vld [vmem:[%s1 + $0x85c] sm:$0xff]
      %v807 = vld [vmem:[%s1 + $0x864] sm:$0xff]
      %v808 = vld [vmem:[%s1 + $0x86c] sm:$0xf]
      %v809 = vld [vmem:[%s1 + $0x870] sm:$0xff]
      %v810 = vld [vmem:[%s1 + $0x878] sm:$0xff]
      %v811 = vld [vmem:[%s1 + $0x880] sm:$0xff]
      %v812 = vld [vmem:[%s1 + $0x888] sm:$0xff]
      %v813 = vld [vmem:[%s1 + $0x890] sm:$0xf]
      %v814 = vld [vmem:[%s1 + $0x894] sm:$0xff]
      %v815 = vld [vmem:[%s1 + $0x89c] sm:$0xff]
      %v816 = vld [vmem:[%s1 + $0x8a4] sm:$0xff]
      %v817 = vld [vmem:[%s1 + $0x8ac] sm:$0xff]
      %v818 = vld [vmem:[%s1 + $0x8b4] sm:$0xf]
      %v819 = vld [vmem:[%s1 + $0x8b8] sm:$0xff]
      %v820 = vld [vmem:[%s1 + $0x8c0] sm:$0xff]
      %v821 = vld [vmem:[%s1 + $0x8c8] sm:$0xff]
      %v822 = vld [vmem:[%s1 + $0x8d0] sm:$0xff]
      %v823 = vld [vmem:[%s1 + $0x8d8] sm:$0xf]
      %v824 = vld [vmem:[%s1 + $0x8dc] sm:$0xff]
      %v825 = vld [vmem:[%s1 + $0x8e4] sm:$0xff]
      %v826 = vld [vmem:[%s1 + $0x8ec] sm:$0xff]
      %v827 = vld [vmem:[%s1 + $0x8f4] sm:$0xff]
      %v828 = vld [vmem:[%s1 + $0x8fc] sm:$0xf]
      %v829 = vld [vmem:[%s2] sm:$0xff]
      %v830 = vld [vmem:[%s2 + $0x8] sm:$0xff]
      %v831 = vld [vmem:[%s2 + $0x10] sm:$0xff]
      %v832 = vld [vmem:[%s2 + $0x18] sm:$0xff]
      %v833 = vld [vmem:[%s2 + $0x20] sm:$0xff]
      %v834 = vld [vmem:[%s2 + $0x28] sm:$0xff]
      %v835 = vld [vmem:[%s2 + $0x30] sm:$0xff]
      %v836 = vld [vmem:[%s2 + $0x38] sm:$0xff]
      %v837 = vld [vmem:[%s2 + $0x40] sm:$0xff]
      %v838 = vld [vmem:[%s2 + $0x48] sm:$0xff]
      %v839 = vld [vmem:[%s2 + $0x50] sm:$0xff]
      %v840 = vld [vmem:[%s2 + $0x58] sm:$0xff]
      %v841 = vld [vmem:[%s2 + $0x60] sm:$0xff]
      %v842 = vld [vmem:[%s2 + $0x68] sm:$0xff]
      %v843 = vld [vmem:[%s2 + $0x70] sm:$0xff]
      %v844 = vld [vmem:[%s2 + $0x78] sm:$0xff]
      %v845 = vld [vmem:[%s2 + $0x80] sm:$0xff]
      %v846 = vld [vmem:[%s2 + $0x88] sm:$0xff]
      %v847 = vld [vmem:[%s2 + $0x90] sm:$0xff]
      %v848 = vld [vmem:[%s2 + $0x98] sm:$0xff]
      %v849 = vld [vmem:[%s2 + $0xa0] sm:$0xff]
      %v850 = vld [vmem:[%s2 + $0xa8] sm:$0xff]
      %v851 = vld [vmem:[%s2 + $0xb0] sm:$0xff]
      %v852 = vld [vmem:[%s2 + $0xb8] sm:$0xff]
      %v853 = vld [vmem:[%s2 + $0xc0] sm:$0xff]
      %v854 = vld [vmem:[%s2 + $0xc8] sm:$0xff]
      %v855 = vld [vmem:[%s2 + $0xd0] sm:$0xff]
      %v856 = vld [vmem:[%s2 + $0xd8] sm:$0xff]
      %v857 = vld [vmem:[%s2 + $0xe0] sm:$0xff]
      %v858 = vld [vmem:[%s2 + $0xe8] sm:$0xff]
      %v859 = vld [vmem:[%s2 + $0xf0] sm:$0xff]
      %v860 = vld [vmem:[%s2 + $0xf8] sm:$0xff]
      %v861 = vld [vmem:[%s2 + $0x100] sm:$0xff]
      %v862 = vld [vmem:[%s2 + $0x108] sm:$0xff]
      %v863 = vld [vmem:[%s2 + $0x110] sm:$0xff]
      %v864 = vld [vmem:[%s2 + $0x118] sm:$0xff]
      %v865 = vld [vmem:[%s2 + $0x120] sm:$0xff]
      %v866 = vld [vmem:[%s2 + $0x128] sm:$0xff]
      %v867 = vld [vmem:[%s2 + $0x130] sm:$0xff]
      %v868 = vld [vmem:[%s2 + $0x138] sm:$0xff]
      %v869 = vld [vmem:[%s2 + $0x140] sm:$0xff]
      %v870 = vld [vmem:[%s2 + $0x148] sm:$0xff]
      %v871 = vld [vmem:[%s2 + $0x150] sm:$0xff]
      %v872 = vld [vmem:[%s2 + $0x158] sm:$0xff]
      %v873 = vld [vmem:[%s2 + $0x160] sm:$0xff]
      %v874 = vld [vmem:[%s2 + $0x168] sm:$0xff]
      %v875 = vld [vmem:[%s2 + $0x170] sm:$0xff]
      %v876 = vld [vmem:[%s2 + $0x178] sm:$0xff]
      %v877 = vld [vmem:[%s2 + $0x180] sm:$0xff]
      %v878 = vld [vmem:[%s2 + $0x188] sm:$0xff]
      %v879 = vld [vmem:[%s2 + $0x190] sm:$0xff]
      %v880 = vld [vmem:[%s2 + $0x198] sm:$0xff]
      %v881 = vld [vmem:[%s2 + $0x1a0] sm:$0xff]
      %v882 = vld [vmem:[%s2 + $0x1a8] sm:$0xff]
      %v883 = vld [vmem:[%s2 + $0x1b0] sm:$0xff]
      %v884 = vld [vmem:[%s2 + $0x1b8] sm:$0xff]
      %v885 = vld [vmem:[%s2 + $0x1c0] sm:$0xff]
      %v886 = vld [vmem:[%s2 + $0x1c8] sm:$0xff]
      %v887 = vld [vmem:[%s2 + $0x1d0] sm:$0xff]
      %v888 = vld [vmem:[%s2 + $0x1d8] sm:$0xff]
      %v889 = vld [vmem:[%s2 + $0x1e0] sm:$0xff]
      %v890 = vld [vmem:[%s2 + $0x1e8] sm:$0xff]
      %v891 = vld [vmem:[%s2 + $0x1f0] sm:$0xff]
      %v892 = vld [vmem:[%s2 + $0x1f8] sm:$0xff]
      %894 = vset.pattern.permute.xlu0 0
      %895 = vperm.xlu0 %894, %v829
      %v896 = vpop.permute.xlu0 %895
      %899 = vset.pattern.permute.xlu0 0
      %900 = vperm.xlu0 %899, %v830
      %v901 = vpop.permute.xlu0 %900
      %904 = vset.pattern.permute.xlu0 0
      %905 = vperm.xlu0 %904, %v831
      %v906 = vpop.permute.xlu0 %905
      %909 = vset.pattern.permute.xlu0 0
      %910 = vperm.xlu0 %909, %v832
      %v911 = vpop.permute.xlu0 %910
      %914 = vset.pattern.permute.xlu0 0
      %915 = vperm.xlu0 %914, %v833
      %v916 = vpop.permute.xlu0 %915
      %919 = vset.pattern.permute.xlu0 0
      %920 = vperm.xlu0 %919, %v834
      %v921 = vpop.permute.xlu0 %920
      %924 = vset.pattern.permute.xlu0 0
      %925 = vperm.xlu0 %924, %v835
      %v926 = vpop.permute.xlu0 %925
      %929 = vset.pattern.permute.xlu0 0
      %930 = vperm.xlu0 %929, %v836
      %v931 = vpop.permute.xlu0 %930
      %934 = vset.pattern.permute.xlu0 0
      %935 = vperm.xlu0 %934, %v837
      %v936 = vpop.permute.xlu0 %935
      %939 = vset.pattern.permute.xlu0 0
      %940 = vperm.xlu0 %939, %v838
      %v941 = vpop.permute.xlu0 %940
      %944 = vset.pattern.permute.xlu0 0
      %945 = vperm.xlu0 %944, %v839
      %v946 = vpop.permute.xlu0 %945
      %949 = vset.pattern.permute.xlu0 0
      %950 = vperm.xlu0 %949, %v840
      %v951 = vpop.permute.xlu0 %950
      %954 = vset.pattern.permute.xlu0 0
      %955 = vperm.xlu0 %954, %v841
      %v956 = vpop.permute.xlu0 %955
      %959 = vset.pattern.permute.xlu0 0
      %960 = vperm.xlu0 %959, %v842
      %v961 = vpop.permute.xlu0 %960
      %964 = vset.pattern.permute.xlu0 0
      %965 = vperm.xlu0 %964, %v843
      %v966 = vpop.permute.xlu0 %965
      %969 = vset.pattern.permute.xlu0 0
      %970 = vperm.xlu0 %969, %v844
      %v971 = vpop.permute.xlu0 %970
      %974 = vset.pattern.permute.xlu0 0
      %975 = vperm.xlu0 %974, %v845
      %v976 = vpop.permute.xlu0 %975
      %979 = vset.pattern.permute.xlu0 0
      %980 = vperm.xlu0 %979, %v846
      %v981 = vpop.permute.xlu0 %980
      %984 = vset.pattern.permute.xlu0 0
      %985 = vperm.xlu0 %984, %v847
      %v986 = vpop.permute.xlu0 %985
      %989 = vset.pattern.permute.xlu0 0
      %990 = vperm.xlu0 %989, %v848
      %v991 = vpop.permute.xlu0 %990
      %994 = vset.pattern.permute.xlu0 0
      %995 = vperm.xlu0 %994, %v849
      %v996 = vpop.permute.xlu0 %995
      %999 = vset.pattern.permute.xlu0 0
      %1000 = vperm.xlu0 %999, %v850
      %v1001 = vpop.permute.xlu0 %1000
      %1004 = vset.pattern.permute.xlu0 0
      %1005 = vperm.xlu0 %1004, %v851
      %v1006 = vpop.permute.xlu0 %1005
      %1009 = vset.pattern.permute.xlu0 0
      %1010 = vperm.xlu0 %1009, %v852
      %v1011 = vpop.permute.xlu0 %1010
      %1014 = vset.pattern.permute.xlu0 0
      %1015 = vperm.xlu0 %1014, %v853
      %v1016 = vpop.permute.xlu0 %1015
      %1019 = vset.pattern.permute.xlu0 0
      %1020 = vperm.xlu0 %1019, %v854
      %v1021 = vpop.permute.xlu0 %1020
      %1024 = vset.pattern.permute.xlu0 0
      %1025 = vperm.xlu0 %1024, %v855
      %v1026 = vpop.permute.xlu0 %1025
      %1029 = vset.pattern.permute.xlu0 0
      %1030 = vperm.xlu0 %1029, %v856
      %v1031 = vpop.permute.xlu0 %1030
      %1034 = vset.pattern.permute.xlu0 0
      %1035 = vperm.xlu0 %1034, %v857
      %v1036 = vpop.permute.xlu0 %1035
      %1039 = vset.pattern.permute.xlu0 0
      %1040 = vperm.xlu0 %1039, %v858
      %v1041 = vpop.permute.xlu0 %1040
      %1044 = vset.pattern.permute.xlu0 0
      %1045 = vperm.xlu0 %1044, %v859
      %v1046 = vpop.permute.xlu0 %1045
      %1049 = vset.pattern.permute.xlu0 0
      %1050 = vperm.xlu0 %1049, %v860
      %v1051 = vpop.permute.xlu0 %1050
      %1054 = vset.pattern.permute.xlu0 0
      %1055 = vperm.xlu0 %1054, %v861
      %v1056 = vpop.permute.xlu0 %1055
      %1059 = vset.pattern.permute.xlu0 0
      %1060 = vperm.xlu0 %1059, %v862
      %v1061 = vpop.permute.xlu0 %1060
      %1064 = vset.pattern.permute.xlu0 0
      %1065 = vperm.xlu0 %1064, %v863
      %v1066 = vpop.permute.xlu0 %1065
      %1069 = vset.pattern.permute.xlu0 0
      %1070 = vperm.xlu0 %1069, %v864
      %v1071 = vpop.permute.xlu0 %1070
      %1074 = vset.pattern.permute.xlu0 0
      %1075 = vperm.xlu0 %1074, %v865
      %v1076 = vpop.permute.xlu0 %1075
      %1079 = vset.pattern.permute.xlu0 0
      %1080 = vperm.xlu0 %1079, %v866
      %v1081 = vpop.permute.xlu0 %1080
      %1084 = vset.pattern.permute.xlu0 0
      %1085 = vperm.xlu0 %1084, %v867
      %v1086 = vpop.permute.xlu0 %1085
      %1089 = vset.pattern.permute.xlu0 0
      %1090 = vperm.xlu0 %1089, %v868
      %v1091 = vpop.permute.xlu0 %1090
      %1094 = vset.pattern.permute.xlu0 0
      %1095 = vperm.xlu0 %1094, %v869
      %v1096 = vpop.permute.xlu0 %1095
      %1099 = vset.pattern.permute.xlu0 0
      %1100 = vperm.xlu0 %1099, %v870
      %v1101 = vpop.permute.xlu0 %1100
      %1104 = vset.pattern.permute.xlu0 0
      %1105 = vperm.xlu0 %1104, %v871
      %v1106 = vpop.permute.xlu0 %1105
      %1109 = vset.pattern.permute.xlu0 0
      %1110 = vperm.xlu0 %1109, %v872
      %v1111 = vpop.permute.xlu0 %1110
      %1114 = vset.pattern.permute.xlu0 0
      %1115 = vperm.xlu0 %1114, %v873
      %v1116 = vpop.permute.xlu0 %1115
      %1119 = vset.pattern.permute.xlu0 0
      %1120 = vperm.xlu0 %1119, %v874
      %v1121 = vpop.permute.xlu0 %1120
      %1124 = vset.pattern.permute.xlu0 0
      %1125 = vperm.xlu0 %1124, %v875
      %v1126 = vpop.permute.xlu0 %1125
      %1129 = vset.pattern.permute.xlu0 0
      %1130 = vperm.xlu0 %1129, %v876
      %v1131 = vpop.permute.xlu0 %1130
      %1134 = vset.pattern.permute.xlu0 0
      %1135 = vperm.xlu0 %1134, %v877
      %v1136 = vpop.permute.xlu0 %1135
      %1139 = vset.pattern.permute.xlu0 0
      %1140 = vperm.xlu0 %1139, %v878
      %v1141 = vpop.permute.xlu0 %1140
      %1144 = vset.pattern.permute.xlu0 0
      %1145 = vperm.xlu0 %1144, %v879
      %v1146 = vpop.permute.xlu0 %1145
      %1149 = vset.pattern.permute.xlu0 0
      %1150 = vperm.xlu0 %1149, %v880
      %v1151 = vpop.permute.xlu0 %1150
      %1154 = vset.pattern.permute.xlu0 0
      %1155 = vperm.xlu0 %1154, %v881
      %v1156 = vpop.permute.xlu0 %1155
      %1159 = vset.pattern.permute.xlu0 0
      %1160 = vperm.xlu0 %1159, %v882
      %v1161 = vpop.permute.xlu0 %1160
      %1164 = vset.pattern.permute.xlu0 0
      %1165 = vperm.xlu0 %1164, %v883
      %v1166 = vpop.permute.xlu0 %1165
      %1169 = vset.pattern.permute.xlu0 0
      %1170 = vperm.xlu0 %1169, %v884
      %v1171 = vpop.permute.xlu0 %1170
      %1174 = vset.pattern.permute.xlu0 0
      %1175 = vperm.xlu0 %1174, %v885
      %v1176 = vpop.permute.xlu0 %1175
      %1179 = vset.pattern.permute.xlu0 0
      %1180 = vperm.xlu0 %1179, %v886
      %v1181 = vpop.permute.xlu0 %1180
      %1184 = vset.pattern.permute.xlu0 0
      %1185 = vperm.xlu0 %1184, %v887
      %v1186 = vpop.permute.xlu0 %1185
      %1189 = vset.pattern.permute.xlu0 0
      %1190 = vperm.xlu0 %1189, %v888
      %v1191 = vpop.permute.xlu0 %1190
      %1194 = vset.pattern.permute.xlu0 0
      %1195 = vperm.xlu0 %1194, %v889
      %v1196 = vpop.permute.xlu0 %1195
      %1199 = vset.pattern.permute.xlu0 0
      %1200 = vperm.xlu0 %1199, %v890
      %v1201 = vpop.permute.xlu0 %1200
      %1204 = vset.pattern.permute.xlu0 0
      %1205 = vperm.xlu0 %1204, %v891
      %v1206 = vpop.permute.xlu0 %1205
      %1209 = vset.pattern.permute.xlu0 0
      %1210 = vperm.xlu0 %1209, %v892
      %v1211 = vpop.permute.xlu0 %1210
      %v1533 = vunpack.c.l.b16 %v509
      %v1534 = vunpack.c.h.b16 %v509
      %v1535 = vunpack.c.l.b16 %v510
      %v1536 = vunpack.c.h.b16 %v510
      %v1537 = vunpack.c.l.b16 %v511
      %v1538 = vunpack.c.h.b16 %v511
      %v1539 = vunpack.c.l.b16 %v512
      %v1540 = vunpack.c.h.b16 %v512
      %v1541 = vunpack.c.l.b16 %v513
      %v1542 = vunpack.c.l.b16 %v514
      %v1543 = vunpack.c.h.b16 %v514
      %v1544 = vunpack.c.l.b16 %v515
      %v1545 = vunpack.c.h.b16 %v515
      %v1546 = vunpack.c.l.b16 %v516
      %v1547 = vunpack.c.h.b16 %v516
      %v1548 = vunpack.c.l.b16 %v517
      %v1549 = vunpack.c.h.b16 %v517
      %v1550 = vunpack.c.l.b16 %v518
      %v1551 = vunpack.c.l.b16 %v519
      %v1552 = vunpack.c.h.b16 %v519
      %v1553 = vunpack.c.l.b16 %v520
      %v1554 = vunpack.c.h.b16 %v520
      %v1555 = vunpack.c.l.b16 %v521
      %v1556 = vunpack.c.h.b16 %v521
      %v1557 = vunpack.c.l.b16 %v522
      %v1558 = vunpack.c.h.b16 %v522
      %v1559 = vunpack.c.l.b16 %v523
      %v1560 = vunpack.c.l.b16 %v524
      %v1561 = vunpack.c.h.b16 %v524
      %v1562 = vunpack.c.l.b16 %v525
      %v1563 = vunpack.c.h.b16 %v525
      %v1564 = vunpack.c.l.b16 %v526
      %v1565 = vunpack.c.h.b16 %v526
      %v1566 = vunpack.c.l.b16 %v527
      %v1567 = vunpack.c.h.b16 %v527
      %v1568 = vunpack.c.l.b16 %v528
      %v1569 = vunpack.c.l.b16 %v529
      %v1570 = vunpack.c.h.b16 %v529
      %v1571 = vunpack.c.l.b16 %v530
      %v1572 = vunpack.c.h.b16 %v530
      %v1573 = vunpack.c.l.b16 %v531
      %v1574 = vunpack.c.h.b16 %v531
      %v1575 = vunpack.c.l.b16 %v532
      %v1576 = vunpack.c.h.b16 %v532
      %v1577 = vunpack.c.l.b16 %v533
      %v1578 = vunpack.c.l.b16 %v534
      %v1579 = vunpack.c.h.b16 %v534
      %v1580 = vunpack.c.l.b16 %v535
      %v1581 = vunpack.c.h.b16 %v535
      %v1582 = vunpack.c.l.b16 %v536
      %v1583 = vunpack.c.h.b16 %v536
      %v1584 = vunpack.c.l.b16 %v537
      %v1585 = vunpack.c.h.b16 %v537
      %v1586 = vunpack.c.l.b16 %v538
      %v1587 = vunpack.c.l.b16 %v539
      %v1588 = vunpack.c.h.b16 %v539
      %v1589 = vunpack.c.l.b16 %v540
      %v1590 = vunpack.c.h.b16 %v540
      %v1591 = vunpack.c.l.b16 %v541
      %v1592 = vunpack.c.h.b16 %v541
      %v1593 = vunpack.c.l.b16 %v542
      %v1594 = vunpack.c.h.b16 %v542
      %v1595 = vunpack.c.l.b16 %v543
      %v1596 = vunpack.c.l.b16 %v544
      %v1597 = vunpack.c.h.b16 %v544
      %v1598 = vunpack.c.l.b16 %v545
      %v1599 = vunpack.c.h.b16 %v545
      %v1600 = vunpack.c.l.b16 %v546
      %v1601 = vunpack.c.h.b16 %v546
      %v1602 = vunpack.c.l.b16 %v547
      %v1603 = vunpack.c.h.b16 %v547
      %v1604 = vunpack.c.l.b16 %v548
      %v1605 = vunpack.c.l.b16 %v549
      %v1606 = vunpack.c.h.b16 %v549
      %v1607 = vunpack.c.l.b16 %v550
      %v1608 = vunpack.c.h.b16 %v550
      %v1609 = vunpack.c.l.b16 %v551
      %v1610 = vunpack.c.h.b16 %v551
      %v1611 = vunpack.c.l.b16 %v552
      %v1612 = vunpack.c.h.b16 %v552
      %v1613 = vunpack.c.l.b16 %v553
      %v1614 = vunpack.c.l.b16 %v554
      %v1615 = vunpack.c.h.b16 %v554
      %v1616 = vunpack.c.l.b16 %v555
      %v1617 = vunpack.c.h.b16 %v555
      %v1618 = vunpack.c.l.b16 %v556
      %v1619 = vunpack.c.h.b16 %v556
      %v1620 = vunpack.c.l.b16 %v557
      %v1621 = vunpack.c.h.b16 %v557
      %v1622 = vunpack.c.l.b16 %v558
      %v1623 = vunpack.c.l.b16 %v559
      %v1624 = vunpack.c.h.b16 %v559
      %v1625 = vunpack.c.l.b16 %v560
      %v1626 = vunpack.c.h.b16 %v560
      %v1627 = vunpack.c.l.b16 %v561
      %v1628 = vunpack.c.h.b16 %v561
      %v1629 = vunpack.c.l.b16 %v562
      %v1630 = vunpack.c.h.b16 %v562
      %v1631 = vunpack.c.l.b16 %v563
      %v1632 = vunpack.c.l.b16 %v564
      %v1633 = vunpack.c.h.b16 %v564
      %v1634 = vunpack.c.l.b16 %v565
      %v1635 = vunpack.c.h.b16 %v565
      %v1636 = vunpack.c.l.b16 %v566
      %v1637 = vunpack.c.h.b16 %v566
      %v1638 = vunpack.c.l.b16 %v567
      %v1639 = vunpack.c.h.b16 %v567
      %v1640 = vunpack.c.l.b16 %v568
      %v1641 = vunpack.c.l.b16 %v569
      %v1642 = vunpack.c.h.b16 %v569
      %v1643 = vunpack.c.l.b16 %v570
      %v1644 = vunpack.c.h.b16 %v570
      %v1645 = vunpack.c.l.b16 %v571
      %v1646 = vunpack.c.h.b16 %v571
      %v1647 = vunpack.c.l.b16 %v572
      %v1648 = vunpack.c.h.b16 %v572
      %v1649 = vunpack.c.l.b16 %v573
      %v1650 = vunpack.c.l.b16 %v574
      %v1651 = vunpack.c.h.b16 %v574
      %v1652 = vunpack.c.l.b16 %v575
      %v1653 = vunpack.c.h.b16 %v575
      %v1654 = vunpack.c.l.b16 %v576
      %v1655 = vunpack.c.h.b16 %v576
      %v1656 = vunpack.c.l.b16 %v577
      %v1657 = vunpack.c.h.b16 %v577
      %v1658 = vunpack.c.l.b16 %v578
      %v1659 = vunpack.c.l.b16 %v579
      %v1660 = vunpack.c.h.b16 %v579
      %v1661 = vunpack.c.l.b16 %v580
      %v1662 = vunpack.c.h.b16 %v580
      %v1663 = vunpack.c.l.b16 %v581
      %v1664 = vunpack.c.h.b16 %v581
      %v1665 = vunpack.c.l.b16 %v582
      %v1666 = vunpack.c.h.b16 %v582
      %v1667 = vunpack.c.l.b16 %v583
      %v1668 = vunpack.c.l.b16 %v584
      %v1669 = vunpack.c.h.b16 %v584
      %v1670 = vunpack.c.l.b16 %v585
      %v1671 = vunpack.c.h.b16 %v585
      %v1672 = vunpack.c.l.b16 %v586
      %v1673 = vunpack.c.h.b16 %v586
      %v1674 = vunpack.c.l.b16 %v587
      %v1675 = vunpack.c.h.b16 %v587
      %v1676 = vunpack.c.l.b16 %v588
      %v1677 = vunpack.c.l.b16 %v589
      %v1678 = vunpack.c.h.b16 %v589
      %v1679 = vunpack.c.l.b16 %v590
      %v1680 = vunpack.c.h.b16 %v590
      %v1681 = vunpack.c.l.b16 %v591
      %v1682 = vunpack.c.h.b16 %v591
      %v1683 = vunpack.c.l.b16 %v592
      %v1684 = vunpack.c.h.b16 %v592
      %v1685 = vunpack.c.l.b16 %v593
      %v1686 = vunpack.c.l.b16 %v594
      %v1687 = vunpack.c.h.b16 %v594
      %v1688 = vunpack.c.l.b16 %v595
      %v1689 = vunpack.c.h.b16 %v595
      %v1690 = vunpack.c.l.b16 %v596
      %v1691 = vunpack.c.h.b16 %v596
      %v1692 = vunpack.c.l.b16 %v597
      %v1693 = vunpack.c.h.b16 %v597
      %v1694 = vunpack.c.l.b16 %v598
      %v1695 = vunpack.c.l.b16 %v599
      %v1696 = vunpack.c.h.b16 %v599
      %v1697 = vunpack.c.l.b16 %v600
      %v1698 = vunpack.c.h.b16 %v600
      %v1699 = vunpack.c.l.b16 %v601
      %v1700 = vunpack.c.h.b16 %v601
      %v1701 = vunpack.c.l.b16 %v602
      %v1702 = vunpack.c.h.b16 %v602
      %v1703 = vunpack.c.l.b16 %v603
      %v1704 = vunpack.c.l.b16 %v604
      %v1705 = vunpack.c.h.b16 %v604
      %v1706 = vunpack.c.l.b16 %v605
      %v1707 = vunpack.c.h.b16 %v605
      %v1708 = vunpack.c.l.b16 %v606
      %v1709 = vunpack.c.h.b16 %v606
      %v1710 = vunpack.c.l.b16 %v607
      %v1711 = vunpack.c.h.b16 %v607
      %v1712 = vunpack.c.l.b16 %v608
      %v1713 = vunpack.c.l.b16 %v609
      %v1714 = vunpack.c.h.b16 %v609
      %v1715 = vunpack.c.l.b16 %v610
      %v1716 = vunpack.c.h.b16 %v610
      %v1717 = vunpack.c.l.b16 %v611
      %v1718 = vunpack.c.h.b16 %v611
      %v1719 = vunpack.c.l.b16 %v612
      %v1720 = vunpack.c.h.b16 %v612
      %v1721 = vunpack.c.l.b16 %v613
      %v1722 = vunpack.c.l.b16 %v614
      %v1723 = vunpack.c.h.b16 %v614
      %v1724 = vunpack.c.l.b16 %v615
      %v1725 = vunpack.c.h.b16 %v615
      %v1726 = vunpack.c.l.b16 %v616
      %v1727 = vunpack.c.h.b16 %v616
      %v1728 = vunpack.c.l.b16 %v617
      %v1729 = vunpack.c.h.b16 %v617
      %v1730 = vunpack.c.l.b16 %v618
      %v1731 = vunpack.c.l.b16 %v619
      %v1732 = vunpack.c.h.b16 %v619
      %v1733 = vunpack.c.l.b16 %v620
      %v1734 = vunpack.c.h.b16 %v620
      %v1735 = vunpack.c.l.b16 %v621
      %v1736 = vunpack.c.h.b16 %v621
      %v1737 = vunpack.c.l.b16 %v622
      %v1738 = vunpack.c.h.b16 %v622
      %v1739 = vunpack.c.l.b16 %v623
      %v1740 = vunpack.c.l.b16 %v624
      %v1741 = vunpack.c.h.b16 %v624
      %v1742 = vunpack.c.l.b16 %v625
      %v1743 = vunpack.c.h.b16 %v625
      %v1744 = vunpack.c.l.b16 %v626
      %v1745 = vunpack.c.h.b16 %v626
      %v1746 = vunpack.c.l.b16 %v627
      %v1747 = vunpack.c.h.b16 %v627
      %v1748 = vunpack.c.l.b16 %v628
      %v1749 = vunpack.c.l.b16 %v629
      %v1750 = vunpack.c.h.b16 %v629
      %v1751 = vunpack.c.l.b16 %v630
      %v1752 = vunpack.c.h.b16 %v630
      %v1753 = vunpack.c.l.b16 %v631
      %v1754 = vunpack.c.h.b16 %v631
      %v1755 = vunpack.c.l.b16 %v632
      %v1756 = vunpack.c.h.b16 %v632
      %v1757 = vunpack.c.l.b16 %v633
      %v1758 = vunpack.c.l.b16 %v634
      %v1759 = vunpack.c.h.b16 %v634
      %v1760 = vunpack.c.l.b16 %v635
      %v1761 = vunpack.c.h.b16 %v635
      %v1762 = vunpack.c.l.b16 %v636
      %v1763 = vunpack.c.h.b16 %v636
      %v1764 = vunpack.c.l.b16 %v637
      %v1765 = vunpack.c.h.b16 %v637
      %v1766 = vunpack.c.l.b16 %v638
      %v1767 = vunpack.c.l.b16 %v639
      %v1768 = vunpack.c.h.b16 %v639
      %v1769 = vunpack.c.l.b16 %v640
      %v1770 = vunpack.c.h.b16 %v640
      %v1771 = vunpack.c.l.b16 %v641
      %v1772 = vunpack.c.h.b16 %v641
      %v1773 = vunpack.c.l.b16 %v642
      %v1774 = vunpack.c.h.b16 %v642
      %v1775 = vunpack.c.l.b16 %v643
      %v1776 = vunpack.c.l.b16 %v644
      %v1777 = vunpack.c.h.b16 %v644
      %v1778 = vunpack.c.l.b16 %v645
      %v1779 = vunpack.c.h.b16 %v645
      %v1780 = vunpack.c.l.b16 %v646
      %v1781 = vunpack.c.h.b16 %v646
      %v1782 = vunpack.c.l.b16 %v647
      %v1783 = vunpack.c.h.b16 %v647
      %v1784 = vunpack.c.l.b16 %v648
      %v1785 = vunpack.c.l.b16 %v649
      %v1786 = vunpack.c.h.b16 %v649
      %v1787 = vunpack.c.l.b16 %v650
      %v1788 = vunpack.c.h.b16 %v650
      %v1789 = vunpack.c.l.b16 %v651
      %v1790 = vunpack.c.h.b16 %v651
      %v1791 = vunpack.c.l.b16 %v652
      %v1792 = vunpack.c.h.b16 %v652
      %v1793 = vunpack.c.l.b16 %v653
      %v1794 = vunpack.c.l.b16 %v654
      %v1795 = vunpack.c.h.b16 %v654
      %v1796 = vunpack.c.l.b16 %v655
      %v1797 = vunpack.c.h.b16 %v655
      %v1798 = vunpack.c.l.b16 %v656
      %v1799 = vunpack.c.h.b16 %v656
      %v1800 = vunpack.c.l.b16 %v657
      %v1801 = vunpack.c.h.b16 %v657
      %v1802 = vunpack.c.l.b16 %v658
      %v1803 = vunpack.c.l.b16 %v659
      %v1804 = vunpack.c.h.b16 %v659
      %v1805 = vunpack.c.l.b16 %v660
      %v1806 = vunpack.c.h.b16 %v660
      %v1807 = vunpack.c.l.b16 %v661
      %v1808 = vunpack.c.h.b16 %v661
      %v1809 = vunpack.c.l.b16 %v662
      %v1810 = vunpack.c.h.b16 %v662
      %v1811 = vunpack.c.l.b16 %v663
      %v1812 = vunpack.c.l.b16 %v664
      %v1813 = vunpack.c.h.b16 %v664
      %v1814 = vunpack.c.l.b16 %v665
      %v1815 = vunpack.c.h.b16 %v665
      %v1816 = vunpack.c.l.b16 %v666
      %v1817 = vunpack.c.h.b16 %v666
      %v1818 = vunpack.c.l.b16 %v667
      %v1819 = vunpack.c.h.b16 %v667
      %v1820 = vunpack.c.l.b16 %v668
      %v1821 = vunpack.c.l.b16 %v669
      %v1822 = vunpack.c.h.b16 %v669
      %v1823 = vunpack.c.l.b16 %v670
      %v1824 = vunpack.c.h.b16 %v670
      %v1825 = vunpack.c.l.b16 %v671
      %v1826 = vunpack.c.h.b16 %v671
      %v1827 = vunpack.c.l.b16 %v672
      %v1828 = vunpack.c.h.b16 %v672
      %v1829 = vunpack.c.l.b16 %v673
      %v1830 = vunpack.c.l.b16 %v674
      %v1831 = vunpack.c.h.b16 %v674
      %v1832 = vunpack.c.l.b16 %v675
      %v1833 = vunpack.c.h.b16 %v675
      %v1834 = vunpack.c.l.b16 %v676
      %v1835 = vunpack.c.h.b16 %v676
      %v1836 = vunpack.c.l.b16 %v677
      %v1837 = vunpack.c.h.b16 %v677
      %v1838 = vunpack.c.l.b16 %v678
      %v1839 = vunpack.c.l.b16 %v679
      %v1840 = vunpack.c.h.b16 %v679
      %v1841 = vunpack.c.l.b16 %v680
      %v1842 = vunpack.c.h.b16 %v680
      %v1843 = vunpack.c.l.b16 %v681
      %v1844 = vunpack.c.h.b16 %v681
      %v1845 = vunpack.c.l.b16 %v682
      %v1846 = vunpack.c.h.b16 %v682
      %v1847 = vunpack.c.l.b16 %v683
      %v1848 = vunpack.c.l.b16 %v684
      %v1849 = vunpack.c.h.b16 %v684
      %v1850 = vunpack.c.l.b16 %v685
      %v1851 = vunpack.c.h.b16 %v685
      %v1852 = vunpack.c.l.b16 %v686
      %v1853 = vunpack.c.h.b16 %v686
      %v1854 = vunpack.c.l.b16 %v687
      %v1855 = vunpack.c.h.b16 %v687
      %v1856 = vunpack.c.l.b16 %v688
      %v1857 = vunpack.c.l.b16 %v689
      %v1858 = vunpack.c.h.b16 %v689
      %v1859 = vunpack.c.l.b16 %v690
      %v1860 = vunpack.c.h.b16 %v690
      %v1861 = vunpack.c.l.b16 %v691
      %v1862 = vunpack.c.h.b16 %v691
      %v1863 = vunpack.c.l.b16 %v692
      %v1864 = vunpack.c.h.b16 %v692
      %v1865 = vunpack.c.l.b16 %v693
      %v1866 = vunpack.c.l.b16 %v694
      %v1867 = vunpack.c.h.b16 %v694
      %v1868 = vunpack.c.l.b16 %v695
      %v1869 = vunpack.c.h.b16 %v695
      %v1870 = vunpack.c.l.b16 %v696
      %v1871 = vunpack.c.h.b16 %v696
      %v1872 = vunpack.c.l.b16 %v697
      %v1873 = vunpack.c.h.b16 %v697
      %v1874 = vunpack.c.l.b16 %v698
      %v1875 = vunpack.c.l.b16 %v699
      %v1876 = vunpack.c.h.b16 %v699
      %v1877 = vunpack.c.l.b16 %v700
      %v1878 = vunpack.c.h.b16 %v700
      %v1879 = vunpack.c.l.b16 %v701
      %v1880 = vunpack.c.h.b16 %v701
      %v1881 = vunpack.c.l.b16 %v702
      %v1882 = vunpack.c.h.b16 %v702
      %v1883 = vunpack.c.l.b16 %v703
      %v1884 = vunpack.c.l.b16 %v704
      %v1885 = vunpack.c.h.b16 %v704
      %v1886 = vunpack.c.l.b16 %v705
      %v1887 = vunpack.c.h.b16 %v705
      %v1888 = vunpack.c.l.b16 %v706
      %v1889 = vunpack.c.h.b16 %v706
      %v1890 = vunpack.c.l.b16 %v707
      %v1891 = vunpack.c.h.b16 %v707
      %v1892 = vunpack.c.l.b16 %v708
      %v1893 = vunpack.c.l.b16 %v709
      %v1894 = vunpack.c.h.b16 %v709
      %v1895 = vunpack.c.l.b16 %v710
      %v1896 = vunpack.c.h.b16 %v710
      %v1897 = vunpack.c.l.b16 %v711
      %v1898 = vunpack.c.h.b16 %v711
      %v1899 = vunpack.c.l.b16 %v712
      %v1900 = vunpack.c.h.b16 %v712
      %v1901 = vunpack.c.l.b16 %v713
      %v1902 = vunpack.c.l.b16 %v714
      %v1903 = vunpack.c.h.b16 %v714
      %v1904 = vunpack.c.l.b16 %v715
      %v1905 = vunpack.c.h.b16 %v715
      %v1906 = vunpack.c.l.b16 %v716
      %v1907 = vunpack.c.h.b16 %v716
      %v1908 = vunpack.c.l.b16 %v717
      %v1909 = vunpack.c.h.b16 %v717
      %v1910 = vunpack.c.l.b16 %v718
      %v1911 = vunpack.c.l.b16 %v719
      %v1912 = vunpack.c.h.b16 %v719
      %v1913 = vunpack.c.l.b16 %v720
      %v1914 = vunpack.c.h.b16 %v720
      %v1915 = vunpack.c.l.b16 %v721
      %v1916 = vunpack.c.h.b16 %v721
      %v1917 = vunpack.c.l.b16 %v722
      %v1918 = vunpack.c.h.b16 %v722
      %v1919 = vunpack.c.l.b16 %v723
      %v1920 = vunpack.c.l.b16 %v724
      %v1921 = vunpack.c.h.b16 %v724
      %v1922 = vunpack.c.l.b16 %v725
      %v1923 = vunpack.c.h.b16 %v725
      %v1924 = vunpack.c.l.b16 %v726
      %v1925 = vunpack.c.h.b16 %v726
      %v1926 = vunpack.c.l.b16 %v727
      %v1927 = vunpack.c.h.b16 %v727
      %v1928 = vunpack.c.l.b16 %v728
      %v1929 = vunpack.c.l.b16 %v729
      %v1930 = vunpack.c.h.b16 %v729
      %v1931 = vunpack.c.l.b16 %v730
      %v1932 = vunpack.c.h.b16 %v730
      %v1933 = vunpack.c.l.b16 %v731
      %v1934 = vunpack.c.h.b16 %v731
      %v1935 = vunpack.c.l.b16 %v732
      %v1936 = vunpack.c.h.b16 %v732
      %v1937 = vunpack.c.l.b16 %v733
      %v1938 = vunpack.c.l.b16 %v734
      %v1939 = vunpack.c.h.b16 %v734
      %v1940 = vunpack.c.l.b16 %v735
      %v1941 = vunpack.c.h.b16 %v735
      %v1942 = vunpack.c.l.b16 %v736
      %v1943 = vunpack.c.h.b16 %v736
      %v1944 = vunpack.c.l.b16 %v737
      %v1945 = vunpack.c.h.b16 %v737
      %v1946 = vunpack.c.l.b16 %v738
      %v1947 = vunpack.c.l.b16 %v739
      %v1948 = vunpack.c.h.b16 %v739
      %v1949 = vunpack.c.l.b16 %v740
      %v1950 = vunpack.c.h.b16 %v740
      %v1951 = vunpack.c.l.b16 %v741
      %v1952 = vunpack.c.h.b16 %v741
      %v1953 = vunpack.c.l.b16 %v742
      %v1954 = vunpack.c.h.b16 %v742
      %v1955 = vunpack.c.l.b16 %v743
      %v1956 = vunpack.c.l.b16 %v744
      %v1957 = vunpack.c.h.b16 %v744
      %v1958 = vunpack.c.l.b16 %v745
      %v1959 = vunpack.c.h.b16 %v745
      %v1960 = vunpack.c.l.b16 %v746
      %v1961 = vunpack.c.h.b16 %v746
      %v1962 = vunpack.c.l.b16 %v747
      %v1963 = vunpack.c.h.b16 %v747
      %v1964 = vunpack.c.l.b16 %v748
      %v1965 = vunpack.c.l.b16 %v749
      %v1966 = vunpack.c.h.b16 %v749
      %v1967 = vunpack.c.l.b16 %v750
      %v1968 = vunpack.c.h.b16 %v750
      %v1969 = vunpack.c.l.b16 %v751
      %v1970 = vunpack.c.h.b16 %v751
      %v1971 = vunpack.c.l.b16 %v752
      %v1972 = vunpack.c.h.b16 %v752
      %v1973 = vunpack.c.l.b16 %v753
      %v1974 = vunpack.c.l.b16 %v754
      %v1975 = vunpack.c.h.b16 %v754
      %v1976 = vunpack.c.l.b16 %v755
      %v1977 = vunpack.c.h.b16 %v755
      %v1978 = vunpack.c.l.b16 %v756
      %v1979 = vunpack.c.h.b16 %v756
      %v1980 = vunpack.c.l.b16 %v757
      %v1981 = vunpack.c.h.b16 %v757
      %v1982 = vunpack.c.l.b16 %v758
      %v1983 = vunpack.c.l.b16 %v759
      %v1984 = vunpack.c.h.b16 %v759
      %v1985 = vunpack.c.l.b16 %v760
      %v1986 = vunpack.c.h.b16 %v760
      %v1987 = vunpack.c.l.b16 %v761
      %v1988 = vunpack.c.h.b16 %v761
      %v1989 = vunpack.c.l.b16 %v762
      %v1990 = vunpack.c.h.b16 %v762
      %v1991 = vunpack.c.l.b16 %v763
      %v1992 = vunpack.c.l.b16 %v764
      %v1993 = vunpack.c.h.b16 %v764
      %v1994 = vunpack.c.l.b16 %v765
      %v1995 = vunpack.c.h.b16 %v765
      %v1996 = vunpack.c.l.b16 %v766
      %v1997 = vunpack.c.h.b16 %v766
      %v1998 = vunpack.c.l.b16 %v767
      %v1999 = vunpack.c.h.b16 %v767
      %v2000 = vunpack.c.l.b16 %v768
      %v2001 = vunpack.c.l.b16 %v769
      %v2002 = vunpack.c.h.b16 %v769
      %v2003 = vunpack.c.l.b16 %v770
      %v2004 = vunpack.c.h.b16 %v770
      %v2005 = vunpack.c.l.b16 %v771
      %v2006 = vunpack.c.h.b16 %v771
      %v2007 = vunpack.c.l.b16 %v772
      %v2008 = vunpack.c.h.b16 %v772
      %v2009 = vunpack.c.l.b16 %v773
      %v2010 = vunpack.c.l.b16 %v774
      %v2011 = vunpack.c.h.b16 %v774
      %v2012 = vunpack.c.l.b16 %v775
      %v2013 = vunpack.c.h.b16 %v775
      %v2014 = vunpack.c.l.b16 %v776
      %v2015 = vunpack.c.h.b16 %v776
      %v2016 = vunpack.c.l.b16 %v777
      %v2017 = vunpack.c.h.b16 %v777
      %v2018 = vunpack.c.l.b16 %v778
      %v2019 = vunpack.c.l.b16 %v779
      %v2020 = vunpack.c.h.b16 %v779
      %v2021 = vunpack.c.l.b16 %v780
      %v2022 = vunpack.c.h.b16 %v780
      %v2023 = vunpack.c.l.b16 %v781
      %v2024 = vunpack.c.h.b16 %v781
      %v2025 = vunpack.c.l.b16 %v782
      %v2026 = vunpack.c.h.b16 %v782
      %v2027 = vunpack.c.l.b16 %v783
      %v2028 = vunpack.c.l.b16 %v784
      %v2029 = vunpack.c.h.b16 %v784
      %v2030 = vunpack.c.l.b16 %v785
      %v2031 = vunpack.c.h.b16 %v785
      %v2032 = vunpack.c.l.b16 %v786
      %v2033 = vunpack.c.h.b16 %v786
      %v2034 = vunpack.c.l.b16 %v787
      %v2035 = vunpack.c.h.b16 %v787
      %v2036 = vunpack.c.l.b16 %v788
      %v2037 = vunpack.c.l.b16 %v789
      %v2038 = vunpack.c.h.b16 %v789
      %v2039 = vunpack.c.l.b16 %v790
      %v2040 = vunpack.c.h.b16 %v790
      %v2041 = vunpack.c.l.b16 %v791
      %v2042 = vunpack.c.h.b16 %v791
      %v2043 = vunpack.c.l.b16 %v792
      %v2044 = vunpack.c.h.b16 %v792
      %v2045 = vunpack.c.l.b16 %v793
      %v2046 = vunpack.c.l.b16 %v794
      %v2047 = vunpack.c.h.b16 %v794
      %v2048 = vunpack.c.l.b16 %v795
      %v2049 = vunpack.c.h.b16 %v795
      %v2050 = vunpack.c.l.b16 %v796
      %v2051 = vunpack.c.h.b16 %v796
      %v2052 = vunpack.c.l.b16 %v797
      %v2053 = vunpack.c.h.b16 %v797
      %v2054 = vunpack.c.l.b16 %v798
      %v2055 = vunpack.c.l.b16 %v799
      %v2056 = vunpack.c.h.b16 %v799
      %v2057 = vunpack.c.l.b16 %v800
      %v2058 = vunpack.c.h.b16 %v800
      %v2059 = vunpack.c.l.b16 %v801
      %v2060 = vunpack.c.h.b16 %v801
      %v2061 = vunpack.c.l.b16 %v802
      %v2062 = vunpack.c.h.b16 %v802
      %v2063 = vunpack.c.l.b16 %v803
      %v2064 = vunpack.c.l.b16 %v804
      %v2065 = vunpack.c.h.b16 %v804
      %v2066 = vunpack.c.l.b16 %v805
      %v2067 = vunpack.c.h.b16 %v805
      %v2068 = vunpack.c.l.b16 %v806
      %v2069 = vunpack.c.h.b16 %v806
      %v2070 = vunpack.c.l.b16 %v807
      %v2071 = vunpack.c.h.b16 %v807
      %v2072 = vunpack.c.l.b16 %v808
      %v2073 = vunpack.c.l.b16 %v809
      %v2074 = vunpack.c.h.b16 %v809
      %v2075 = vunpack.c.l.b16 %v810
      %v2076 = vunpack.c.h.b16 %v810
      %v2077 = vunpack.c.l.b16 %v811
      %v2078 = vunpack.c.h.b16 %v811
      %v2079 = vunpack.c.l.b16 %v812
      %v2080 = vunpack.c.h.b16 %v812
      %v2081 = vunpack.c.l.b16 %v813
      %v2082 = vunpack.c.l.b16 %v814
      %v2083 = vunpack.c.h.b16 %v814
      %v2084 = vunpack.c.l.b16 %v815
      %v2085 = vunpack.c.h.b16 %v815
      %v2086 = vunpack.c.l.b16 %v816
      %v2087 = vunpack.c.h.b16 %v816
      %v2088 = vunpack.c.l.b16 %v817
      %v2089 = vunpack.c.h.b16 %v817
      %v2090 = vunpack.c.l.b16 %v818
      %v2091 = vunpack.c.l.b16 %v819
      %v2092 = vunpack.c.h.b16 %v819
      %v2093 = vunpack.c.l.b16 %v820
      %v2094 = vunpack.c.h.b16 %v820
      %v2095 = vunpack.c.l.b16 %v821
      %v2096 = vunpack.c.h.b16 %v821
      %v2097 = vunpack.c.l.b16 %v822
      %v2098 = vunpack.c.h.b16 %v822
      %v2099 = vunpack.c.l.b16 %v823
      %v2100 = vunpack.c.l.b16 %v824
      %v2101 = vunpack.c.h.b16 %v824
      %v2102 = vunpack.c.l.b16 %v825
      %v2103 = vunpack.c.h.b16 %v825
      %v2104 = vunpack.c.l.b16 %v826
      %v2105 = vunpack.c.h.b16 %v826
      %v2106 = vunpack.c.l.b16 %v827
      %v2107 = vunpack.c.h.b16 %v827
      %v2108 = vunpack.c.l.b16 %v828
      %v2109 = vpack.c.b16 %v1542, %v1533
      %v2110 = vpack.c.b16 %v1543, %v1534
      %v2111 = vpack.c.b16 %v1544, %v1535
      %v2112 = vpack.c.b16 %v1545, %v1536
      %v2113 = vpack.c.b16 %v1546, %v1537
      %v2114 = vpack.c.b16 %v1547, %v1538
      %v2115 = vpack.c.b16 %v1548, %v1539
      %v2116 = vpack.c.b16 %v1549, %v1540
      %v2117 = vpack.c.b16 %v1550, %v1541
      %v2118 = vpack.c.b16 %v1560, %v1551
      %v2119 = vpack.c.b16 %v1561, %v1552
      %v2120 = vpack.c.b16 %v1562, %v1553
      %v2121 = vpack.c.b16 %v1563, %v1554
      %v2122 = vpack.c.b16 %v1564, %v1555
      %v2123 = vpack.c.b16 %v1565, %v1556
      %v2124 = vpack.c.b16 %v1566, %v1557
      %v2125 = vpack.c.b16 %v1567, %v1558
      %v2126 = vpack.c.b16 %v1568, %v1559
      %v2127 = vpack.c.b16 %v1578, %v1569
      %v2128 = vpack.c.b16 %v1579, %v1570
      %v2129 = vpack.c.b16 %v1580, %v1571
      %v2130 = vpack.c.b16 %v1581, %v1572
      %v2131 = vpack.c.b16 %v1582, %v1573
      %v2132 = vpack.c.b16 %v1583, %v1574
      %v2133 = vpack.c.b16 %v1584, %v1575
      %v2134 = vpack.c.b16 %v1585, %v1576
      %v2135 = vpack.c.b16 %v1586, %v1577
      %v2136 = vpack.c.b16 %v1596, %v1587
      %v2137 = vpack.c.b16 %v1597, %v1588
      %v2138 = vpack.c.b16 %v1598, %v1589
      %v2139 = vpack.c.b16 %v1599, %v1590
      %v2140 = vpack.c.b16 %v1600, %v1591
      %v2141 = vpack.c.b16 %v1601, %v1592
      %v2142 = vpack.c.b16 %v1602, %v1593
      %v2143 = vpack.c.b16 %v1603, %v1594
      %v2144 = vpack.c.b16 %v1604, %v1595
      %v2145 = vpack.c.b16 %v1614, %v1605
      %v2146 = vpack.c.b16 %v1615, %v1606
      %v2147 = vpack.c.b16 %v1616, %v1607
      %v2148 = vpack.c.b16 %v1617, %v1608
      %v2149 = vpack.c.b16 %v1618, %v1609
      %v2150 = vpack.c.b16 %v1619, %v1610
      %v2151 = vpack.c.b16 %v1620, %v1611
      %v2152 = vpack.c.b16 %v1621, %v1612
      %v2153 = vpack.c.b16 %v1622, %v1613
      %v2154 = vpack.c.b16 %v1632, %v1623
      %v2155 = vpack.c.b16 %v1633, %v1624
      %v2156 = vpack.c.b16 %v1634, %v1625
      %v2157 = vpack.c.b16 %v1635, %v1626
      %v2158 = vpack.c.b16 %v1636, %v1627
      %v2159 = vpack.c.b16 %v1637, %v1628
      %v2160 = vpack.c.b16 %v1638, %v1629
      %v2161 = vpack.c.b16 %v1639, %v1630
      %v2162 = vpack.c.b16 %v1640, %v1631
      %v2163 = vpack.c.b16 %v1650, %v1641
      %v2164 = vpack.c.b16 %v1651, %v1642
      %v2165 = vpack.c.b16 %v1652, %v1643
      %v2166 = vpack.c.b16 %v1653, %v1644
      %v2167 = vpack.c.b16 %v1654, %v1645
      %v2168 = vpack.c.b16 %v1655, %v1646
      %v2169 = vpack.c.b16 %v1656, %v1647
      %v2170 = vpack.c.b16 %v1657, %v1648
      %v2171 = vpack.c.b16 %v1658, %v1649
      %v2172 = vpack.c.b16 %v1668, %v1659
      %v2173 = vpack.c.b16 %v1669, %v1660
      %v2174 = vpack.c.b16 %v1670, %v1661
      %v2175 = vpack.c.b16 %v1671, %v1662
      %v2176 = vpack.c.b16 %v1672, %v1663
      %v2177 = vpack.c.b16 %v1673, %v1664
      %v2178 = vpack.c.b16 %v1674, %v1665
      %v2179 = vpack.c.b16 %v1675, %v1666
      %v2180 = vpack.c.b16 %v1676, %v1667
      %v2181 = vpack.c.b16 %v1686, %v1677
      %v2182 = vpack.c.b16 %v1687, %v1678
      %v2183 = vpack.c.b16 %v1688, %v1679
      %v2184 = vpack.c.b16 %v1689, %v1680
      %v2185 = vpack.c.b16 %v1690, %v1681
      %v2186 = vpack.c.b16 %v1691, %v1682
      %v2187 = vpack.c.b16 %v1692, %v1683
      %v2188 = vpack.c.b16 %v1693, %v1684
      %v2189 = vpack.c.b16 %v1694, %v1685
      %v2190 = vpack.c.b16 %v1704, %v1695
      %v2191 = vpack.c.b16 %v1705, %v1696
      %v2192 = vpack.c.b16 %v1706, %v1697
      %v2193 = vpack.c.b16 %v1707, %v1698
      %v2194 = vpack.c.b16 %v1708, %v1699
      %v2195 = vpack.c.b16 %v1709, %v1700
      %v2196 = vpack.c.b16 %v1710, %v1701
      %v2197 = vpack.c.b16 %v1711, %v1702
      %v2198 = vpack.c.b16 %v1712, %v1703
      %v2199 = vpack.c.b16 %v1722, %v1713
      %v2200 = vpack.c.b16 %v1723, %v1714
      %v2201 = vpack.c.b16 %v1724, %v1715
      %v2202 = vpack.c.b16 %v1725, %v1716
      %v2203 = vpack.c.b16 %v1726, %v1717
      %v2204 = vpack.c.b16 %v1727, %v1718
      %v2205 = vpack.c.b16 %v1728, %v1719
      %v2206 = vpack.c.b16 %v1729, %v1720
      %v2207 = vpack.c.b16 %v1730, %v1721
      %v2208 = vpack.c.b16 %v1740, %v1731
      %v2209 = vpack.c.b16 %v1741, %v1732
      %v2210 = vpack.c.b16 %v1742, %v1733
      %v2211 = vpack.c.b16 %v1743, %v1734
      %v2212 = vpack.c.b16 %v1744, %v1735
      %v2213 = vpack.c.b16 %v1745, %v1736
      %v2214 = vpack.c.b16 %v1746, %v1737
      %v2215 = vpack.c.b16 %v1747, %v1738
      %v2216 = vpack.c.b16 %v1748, %v1739
      %v2217 = vpack.c.b16 %v1758, %v1749
      %v2218 = vpack.c.b16 %v1759, %v1750
      %v2219 = vpack.c.b16 %v1760, %v1751
      %v2220 = vpack.c.b16 %v1761, %v1752
      %v2221 = vpack.c.b16 %v1762, %v1753
      %v2222 = vpack.c.b16 %v1763, %v1754
      %v2223 = vpack.c.b16 %v1764, %v1755
      %v2224 = vpack.c.b16 %v1765, %v1756
      %v2225 = vpack.c.b16 %v1766, %v1757
      %v2226 = vpack.c.b16 %v1776, %v1767
      %v2227 = vpack.c.b16 %v1777, %v1768
      %v2228 = vpack.c.b16 %v1778, %v1769
      %v2229 = vpack.c.b16 %v1779, %v1770
      %v2230 = vpack.c.b16 %v1780, %v1771
      %v2231 = vpack.c.b16 %v1781, %v1772
      %v2232 = vpack.c.b16 %v1782, %v1773
      %v2233 = vpack.c.b16 %v1783, %v1774
      %v2234 = vpack.c.b16 %v1784, %v1775
      %v2235 = vpack.c.b16 %v1794, %v1785
      %v2236 = vpack.c.b16 %v1795, %v1786
      %v2237 = vpack.c.b16 %v1796, %v1787
      %v2238 = vpack.c.b16 %v1797, %v1788
      %v2239 = vpack.c.b16 %v1798, %v1789
      %v2240 = vpack.c.b16 %v1799, %v1790
      %v2241 = vpack.c.b16 %v1800, %v1791
      %v2242 = vpack.c.b16 %v1801, %v1792
      %v2243 = vpack.c.b16 %v1802, %v1793
      %v2244 = vpack.c.b16 %v1812, %v1803
      %v2245 = vpack.c.b16 %v1813, %v1804
      %v2246 = vpack.c.b16 %v1814, %v1805
      %v2247 = vpack.c.b16 %v1815, %v1806
      %v2248 = vpack.c.b16 %v1816, %v1807
      %v2249 = vpack.c.b16 %v1817, %v1808
      %v2250 = vpack.c.b16 %v1818, %v1809
      %v2251 = vpack.c.b16 %v1819, %v1810
      %v2252 = vpack.c.b16 %v1820, %v1811
      %v2253 = vpack.c.b16 %v1830, %v1821
      %v2254 = vpack.c.b16 %v1831, %v1822
      %v2255 = vpack.c.b16 %v1832, %v1823
      %v2256 = vpack.c.b16 %v1833, %v1824
      %v2257 = vpack.c.b16 %v1834, %v1825
      %v2258 = vpack.c.b16 %v1835, %v1826
      %v2259 = vpack.c.b16 %v1836, %v1827
      %v2260 = vpack.c.b16 %v1837, %v1828
      %v2261 = vpack.c.b16 %v1838, %v1829
      %v2262 = vpack.c.b16 %v1848, %v1839
      %v2263 = vpack.c.b16 %v1849, %v1840
      %v2264 = vpack.c.b16 %v1850, %v1841
      %v2265 = vpack.c.b16 %v1851, %v1842
      %v2266 = vpack.c.b16 %v1852, %v1843
      %v2267 = vpack.c.b16 %v1853, %v1844
      %v2268 = vpack.c.b16 %v1854, %v1845
      %v2269 = vpack.c.b16 %v1855, %v1846
      %v2270 = vpack.c.b16 %v1856, %v1847
      %v2271 = vpack.c.b16 %v1866, %v1857
      %v2272 = vpack.c.b16 %v1867, %v1858
      %v2273 = vpack.c.b16 %v1868, %v1859
      %v2274 = vpack.c.b16 %v1869, %v1860
      %v2275 = vpack.c.b16 %v1870, %v1861
      %v2276 = vpack.c.b16 %v1871, %v1862
      %v2277 = vpack.c.b16 %v1872, %v1863
      %v2278 = vpack.c.b16 %v1873, %v1864
      %v2279 = vpack.c.b16 %v1874, %v1865
      %v2280 = vpack.c.b16 %v1884, %v1875
      %v2281 = vpack.c.b16 %v1885, %v1876
      %v2282 = vpack.c.b16 %v1886, %v1877
      %v2283 = vpack.c.b16 %v1887, %v1878
      %v2284 = vpack.c.b16 %v1888, %v1879
      %v2285 = vpack.c.b16 %v1889, %v1880
      %v2286 = vpack.c.b16 %v1890, %v1881
      %v2287 = vpack.c.b16 %v1891, %v1882
      %v2288 = vpack.c.b16 %v1892, %v1883
      %v2289 = vpack.c.b16 %v1902, %v1893
      %v2290 = vpack.c.b16 %v1903, %v1894
      %v2291 = vpack.c.b16 %v1904, %v1895
      %v2292 = vpack.c.b16 %v1905, %v1896
      %v2293 = vpack.c.b16 %v1906, %v1897
      %v2294 = vpack.c.b16 %v1907, %v1898
      %v2295 = vpack.c.b16 %v1908, %v1899
      %v2296 = vpack.c.b16 %v1909, %v1900
      %v2297 = vpack.c.b16 %v1910, %v1901
      %v2298 = vpack.c.b16 %v1920, %v1911
      %v2299 = vpack.c.b16 %v1921, %v1912
      %v2300 = vpack.c.b16 %v1922, %v1913
      %v2301 = vpack.c.b16 %v1923, %v1914
      %v2302 = vpack.c.b16 %v1924, %v1915
      %v2303 = vpack.c.b16 %v1925, %v1916
      %v2304 = vpack.c.b16 %v1926, %v1917
      %v2305 = vpack.c.b16 %v1927, %v1918
      %v2306 = vpack.c.b16 %v1928, %v1919
      %v2307 = vpack.c.b16 %v1938, %v1929
      %v2308 = vpack.c.b16 %v1939, %v1930
      %v2309 = vpack.c.b16 %v1940, %v1931
      %v2310 = vpack.c.b16 %v1941, %v1932
      %v2311 = vpack.c.b16 %v1942, %v1933
      %v2312 = vpack.c.b16 %v1943, %v1934
      %v2313 = vpack.c.b16 %v1944, %v1935
      %v2314 = vpack.c.b16 %v1945, %v1936
      %v2315 = vpack.c.b16 %v1946, %v1937
      %v2316 = vpack.c.b16 %v1956, %v1947
      %v2317 = vpack.c.b16 %v1957, %v1948
      %v2318 = vpack.c.b16 %v1958, %v1949
      %v2319 = vpack.c.b16 %v1959, %v1950
      %v2320 = vpack.c.b16 %v1960, %v1951
      %v2321 = vpack.c.b16 %v1961, %v1952
      %v2322 = vpack.c.b16 %v1962, %v1953
      %v2323 = vpack.c.b16 %v1963, %v1954
      %v2324 = vpack.c.b16 %v1964, %v1955
      %v2325 = vpack.c.b16 %v1974, %v1965
      %v2326 = vpack.c.b16 %v1975, %v1966
      %v2327 = vpack.c.b16 %v1976, %v1967
      %v2328 = vpack.c.b16 %v1977, %v1968
      %v2329 = vpack.c.b16 %v1978, %v1969
      %v2330 = vpack.c.b16 %v1979, %v1970
      %v2331 = vpack.c.b16 %v1980, %v1971
      %v2332 = vpack.c.b16 %v1981, %v1972
      %v2333 = vpack.c.b16 %v1982, %v1973
      %v2334 = vpack.c.b16 %v1992, %v1983
      %v2335 = vpack.c.b16 %v1993, %v1984
      %v2336 = vpack.c.b16 %v1994, %v1985
      %v2337 = vpack.c.b16 %v1995, %v1986
      %v2338 = vpack.c.b16 %v1996, %v1987
      %v2339 = vpack.c.b16 %v1997, %v1988
      %v2340 = vpack.c.b16 %v1998, %v1989
      %v2341 = vpack.c.b16 %v1999, %v1990
      %v2342 = vpack.c.b16 %v2000, %v1991
      %v2343 = vpack.c.b16 %v2010, %v2001
      %v2344 = vpack.c.b16 %v2011, %v2002
      %v2345 = vpack.c.b16 %v2012, %v2003
      %v2346 = vpack.c.b16 %v2013, %v2004
      %v2347 = vpack.c.b16 %v2014, %v2005
      %v2348 = vpack.c.b16 %v2015, %v2006
      %v2349 = vpack.c.b16 %v2016, %v2007
      %v2350 = vpack.c.b16 %v2017, %v2008
      %v2351 = vpack.c.b16 %v2018, %v2009
      %v2352 = vpack.c.b16 %v2028, %v2019
      %v2353 = vpack.c.b16 %v2029, %v2020
      %v2354 = vpack.c.b16 %v2030, %v2021
      %v2355 = vpack.c.b16 %v2031, %v2022
      %v2356 = vpack.c.b16 %v2032, %v2023
      %v2357 = vpack.c.b16 %v2033, %v2024
      %v2358 = vpack.c.b16 %v2034, %v2025
      %v2359 = vpack.c.b16 %v2035, %v2026
      %v2360 = vpack.c.b16 %v2036, %v2027
      %v2361 = vpack.c.b16 %v2046, %v2037
      %v2362 = vpack.c.b16 %v2047, %v2038
      %v2363 = vpack.c.b16 %v2048, %v2039
      %v2364 = vpack.c.b16 %v2049, %v2040
      %v2365 = vpack.c.b16 %v2050, %v2041
      %v2366 = vpack.c.b16 %v2051, %v2042
      %v2367 = vpack.c.b16 %v2052, %v2043
      %v2368 = vpack.c.b16 %v2053, %v2044
      %v2369 = vpack.c.b16 %v2054, %v2045
      %v2370 = vpack.c.b16 %v2064, %v2055
      %v2371 = vpack.c.b16 %v2065, %v2056
      %v2372 = vpack.c.b16 %v2066, %v2057
      %v2373 = vpack.c.b16 %v2067, %v2058
      %v2374 = vpack.c.b16 %v2068, %v2059
      %v2375 = vpack.c.b16 %v2069, %v2060
      %v2376 = vpack.c.b16 %v2070, %v2061
      %v2377 = vpack.c.b16 %v2071, %v2062
      %v2378 = vpack.c.b16 %v2072, %v2063
      %v2379 = vpack.c.b16 %v2082, %v2073
      %v2380 = vpack.c.b16 %v2083, %v2074
      %v2381 = vpack.c.b16 %v2084, %v2075
      %v2382 = vpack.c.b16 %v2085, %v2076
      %v2383 = vpack.c.b16 %v2086, %v2077
      %v2384 = vpack.c.b16 %v2087, %v2078
      %v2385 = vpack.c.b16 %v2088, %v2079
      %v2386 = vpack.c.b16 %v2089, %v2080
      %v2387 = vpack.c.b16 %v2090, %v2081
      %v2388 = vpack.c.b16 %v2100, %v2091
      %v2389 = vpack.c.b16 %v2101, %v2092
      %v2390 = vpack.c.b16 %v2102, %v2093
      %v2391 = vpack.c.b16 %v2103, %v2094
      %v2392 = vpack.c.b16 %v2104, %v2095
      %v2393 = vpack.c.b16 %v2105, %v2096
      %v2394 = vpack.c.b16 %v2106, %v2097
      %v2395 = vpack.c.b16 %v2107, %v2098
      %v2396 = vpack.c.b16 %v2108, %v2099
      %v2789 = vunpack.c.l.b16 %v373
      %v2790 = vunpack.c.h.b16 %v373
      %v2791 = vunpack.c.l.b16 %v374
      %v2792 = vunpack.c.h.b16 %v374
      %v2793 = vunpack.c.l.b16 %v375
      %v2794 = vunpack.c.h.b16 %v375
      %v2795 = vunpack.c.l.b16 %v376
      %v2796 = vunpack.c.h.b16 %v376
      %v2797 = vunpack.c.l.b16 %v377
      %v2798 = vunpack.c.h.b16 %v377
      %v2799 = vunpack.c.l.b16 %v378
      %v2800 = vunpack.c.h.b16 %v378
      %v2801 = vunpack.c.l.b16 %v379
      %v2802 = vunpack.c.h.b16 %v379
      %v2803 = vunpack.c.l.b16 %v380
      %v2804 = vunpack.c.h.b16 %v380
      %v2805 = vunpack.c.l.b16 %v381
      %v2806 = vunpack.c.h.b16 %v381
      %v2807 = vunpack.c.l.b16 %v382
      %v2808 = vunpack.c.h.b16 %v382
      %v2809 = vunpack.c.l.b16 %v383
      %v2810 = vunpack.c.h.b16 %v383
      %v2811 = vunpack.c.l.b16 %v384
      %v2812 = vunpack.c.h.b16 %v384
      %v2813 = vunpack.c.l.b16 %v385
      %v2814 = vunpack.c.h.b16 %v385
      %v2815 = vunpack.c.l.b16 %v386
      %v2816 = vunpack.c.h.b16 %v386
      %v2817 = vunpack.c.l.b16 %v387
      %v2818 = vunpack.c.h.b16 %v387
      %v2819 = vunpack.c.l.b16 %v388
      %v2820 = vunpack.c.h.b16 %v388
      %v2821 = vunpack.c.l.b16 %v389
      %v2822 = vunpack.c.h.b16 %v389
      %v2823 = vunpack.c.l.b16 %v390
      %v2824 = vunpack.c.h.b16 %v390
      %v2825 = vunpack.c.l.b16 %v391
      %v2826 = vunpack.c.h.b16 %v391
      %v2827 = vunpack.c.l.b16 %v392
      %v2828 = vunpack.c.h.b16 %v392
      %v2829 = vunpack.c.l.b16 %v393
      %v2830 = vunpack.c.h.b16 %v393
      %v2831 = vunpack.c.l.b16 %v394
      %v2832 = vunpack.c.h.b16 %v394
      %v2833 = vunpack.c.l.b16 %v395
      %v2834 = vunpack.c.h.b16 %v395
      %v2835 = vunpack.c.l.b16 %v396
      %v2836 = vunpack.c.h.b16 %v396
      %v2837 = vunpack.c.l.b16 %v397
      %v2838 = vunpack.c.h.b16 %v397
      %v2839 = vunpack.c.l.b16 %v398
      %v2840 = vunpack.c.h.b16 %v398
      %v2841 = vunpack.c.l.b16 %v399
      %v2842 = vunpack.c.h.b16 %v399
      %v2843 = vunpack.c.l.b16 %v400
      %v2844 = vunpack.c.h.b16 %v400
      %v2845 = vunpack.c.l.b16 %v401
      %v2846 = vunpack.c.h.b16 %v401
      %v2847 = vunpack.c.l.b16 %v402
      %v2848 = vunpack.c.h.b16 %v402
      %v2849 = vunpack.c.l.b16 %v403
      %v2850 = vunpack.c.h.b16 %v403
      %v2851 = vunpack.c.l.b16 %v404
      %v2852 = vunpack.c.h.b16 %v404
      %v2853 = vunpack.c.l.b16 %v405
      %v2854 = vunpack.c.h.b16 %v405
      %v2855 = vunpack.c.l.b16 %v406
      %v2856 = vunpack.c.h.b16 %v406
      %v2857 = vunpack.c.l.b16 %v407
      %v2858 = vunpack.c.h.b16 %v407
      %v2859 = vunpack.c.l.b16 %v408
      %v2860 = vunpack.c.h.b16 %v408
      %v2861 = vunpack.c.l.b16 %v409
      %v2862 = vunpack.c.h.b16 %v409
      %v2863 = vunpack.c.l.b16 %v410
      %v2864 = vunpack.c.h.b16 %v410
      %v2865 = vunpack.c.l.b16 %v411
      %v2866 = vunpack.c.h.b16 %v411
      %v2867 = vunpack.c.l.b16 %v412
      %v2868 = vunpack.c.h.b16 %v412
      %v2869 = vunpack.c.l.b16 %v413
      %v2870 = vunpack.c.h.b16 %v413
      %v2871 = vunpack.c.l.b16 %v414
      %v2872 = vunpack.c.h.b16 %v414
      %v2873 = vunpack.c.l.b16 %v415
      %v2874 = vunpack.c.h.b16 %v415
      %v2875 = vunpack.c.l.b16 %v416
      %v2876 = vunpack.c.h.b16 %v416
      %v2877 = vunpack.c.l.b16 %v417
      %v2878 = vunpack.c.h.b16 %v417
      %v2879 = vunpack.c.l.b16 %v418
      %v2880 = vunpack.c.h.b16 %v418
      %v2881 = vunpack.c.l.b16 %v419
      %v2882 = vunpack.c.h.b16 %v419
      %v2883 = vunpack.c.l.b16 %v420
      %v2884 = vunpack.c.h.b16 %v420
      %v2885 = vunpack.c.l.b16 %v421
      %v2886 = vunpack.c.h.b16 %v421
      %v2887 = vunpack.c.l.b16 %v422
      %v2888 = vunpack.c.h.b16 %v422
      %v2889 = vunpack.c.l.b16 %v423
      %v2890 = vunpack.c.h.b16 %v423
      %v2891 = vunpack.c.l.b16 %v424
      %v2892 = vunpack.c.h.b16 %v424
      %v2893 = vunpack.c.l.b16 %v425
      %v2894 = vunpack.c.h.b16 %v425
      %v2895 = vunpack.c.l.b16 %v426
      %v2896 = vunpack.c.h.b16 %v426
      %v2897 = vunpack.c.l.b16 %v427
      %v2898 = vunpack.c.h.b16 %v427
      %v2899 = vunpack.c.l.b16 %v428
      %v2900 = vunpack.c.h.b16 %v428
      %v2901 = vunpack.c.l.b16 %v429
      %v2902 = vunpack.c.h.b16 %v429
      %v2903 = vunpack.c.l.b16 %v430
      %v2904 = vunpack.c.h.b16 %v430
      %v2905 = vunpack.c.l.b16 %v431
      %v2906 = vunpack.c.h.b16 %v431
      %v2907 = vunpack.c.l.b16 %v432
      %v2908 = vunpack.c.h.b16 %v432
      %v2909 = vunpack.c.l.b16 %v433
      %v2910 = vunpack.c.h.b16 %v433
      %v2911 = vunpack.c.l.b16 %v434
      %v2912 = vunpack.c.h.b16 %v434
      %v2913 = vunpack.c.l.b16 %v435
      %v2914 = vunpack.c.h.b16 %v435
      %v2915 = vunpack.c.l.b16 %v436
      %v2916 = vunpack.c.h.b16 %v436
      %v2917 = vunpack.c.l.b16 %v437
      %v2918 = vunpack.c.h.b16 %v437
      %v2919 = vunpack.c.l.b16 %v438
      %v2920 = vunpack.c.h.b16 %v438
      %v2921 = vunpack.c.l.b16 %v439
      %v2922 = vunpack.c.h.b16 %v439
      %v2923 = vunpack.c.l.b16 %v440
      %v2924 = vunpack.c.h.b16 %v440
      %v2925 = vunpack.c.l.b16 %v441
      %v2926 = vunpack.c.h.b16 %v441
      %v2927 = vunpack.c.l.b16 %v442
      %v2928 = vunpack.c.h.b16 %v442
      %v2929 = vunpack.c.l.b16 %v443
      %v2930 = vunpack.c.h.b16 %v443
      %v2931 = vunpack.c.l.b16 %v444
      %v2932 = vunpack.c.h.b16 %v444
      %v2933 = vunpack.c.l.b16 %v445
      %v2934 = vunpack.c.h.b16 %v445
      %v2935 = vunpack.c.l.b16 %v446
      %v2936 = vunpack.c.h.b16 %v446
      %v2937 = vunpack.c.l.b16 %v447
      %v2938 = vunpack.c.h.b16 %v447
      %v2939 = vunpack.c.l.b16 %v448
      %v2940 = vunpack.c.h.b16 %v448
      %v2941 = vunpack.c.l.b16 %v449
      %v2942 = vunpack.c.h.b16 %v449
      %v2943 = vunpack.c.l.b16 %v450
      %v2944 = vunpack.c.h.b16 %v450
      %v2945 = vunpack.c.l.b16 %v451
      %v2946 = vunpack.c.h.b16 %v451
      %v2947 = vunpack.c.l.b16 %v452
      %v2948 = vunpack.c.h.b16 %v452
      %v2949 = vunpack.c.l.b16 %v453
      %v2950 = vunpack.c.h.b16 %v453
      %v2951 = vunpack.c.l.b16 %v454
      %v2952 = vunpack.c.h.b16 %v454
      %v2953 = vunpack.c.l.b16 %v455
      %v2954 = vunpack.c.h.b16 %v455
      %v2955 = vunpack.c.l.b16 %v456
      %v2956 = vunpack.c.h.b16 %v456
      %v2957 = vunpack.c.l.b16 %v457
      %v2958 = vunpack.c.h.b16 %v457
      %v2959 = vunpack.c.l.b16 %v458
      %v2960 = vunpack.c.h.b16 %v458
      %v2961 = vunpack.c.l.b16 %v459
      %v2962 = vunpack.c.h.b16 %v459
      %v2963 = vunpack.c.l.b16 %v460
      %v2964 = vunpack.c.h.b16 %v460
      %v2965 = vunpack.c.l.b16 %v461
      %v2966 = vunpack.c.h.b16 %v461
      %v2967 = vunpack.c.l.b16 %v462
      %v2968 = vunpack.c.h.b16 %v462
      %v2969 = vunpack.c.l.b16 %v463
      %v2970 = vunpack.c.h.b16 %v463
      %v2971 = vunpack.c.l.b16 %v464
      %v2972 = vunpack.c.h.b16 %v464
      %v2973 = vunpack.c.l.b16 %v465
      %v2974 = vunpack.c.h.b16 %v465
      %v2975 = vunpack.c.l.b16 %v466
      %v2976 = vunpack.c.h.b16 %v466
      %v2977 = vunpack.c.l.b16 %v467
      %v2978 = vunpack.c.h.b16 %v467
      %v2979 = vunpack.c.l.b16 %v468
      %v2980 = vunpack.c.h.b16 %v468
      %v2981 = vunpack.c.l.b16 %v469
      %v2982 = vunpack.c.h.b16 %v469
      %v2983 = vunpack.c.l.b16 %v470
      %v2984 = vunpack.c.h.b16 %v470
      %v2985 = vunpack.c.l.b16 %v471
      %v2986 = vunpack.c.h.b16 %v471
      %v2987 = vunpack.c.l.b16 %v472
      %v2988 = vunpack.c.h.b16 %v472
      %v2989 = vunpack.c.l.b16 %v473
      %v2990 = vunpack.c.h.b16 %v473
      %v2991 = vunpack.c.l.b16 %v474
      %v2992 = vunpack.c.h.b16 %v474
      %v2993 = vunpack.c.l.b16 %v475
      %v2994 = vunpack.c.h.b16 %v475
      %v2995 = vunpack.c.l.b16 %v476
      %v2996 = vunpack.c.h.b16 %v476
      %v2997 = vunpack.c.l.b16 %v477
      %v2998 = vunpack.c.h.b16 %v477
      %v2999 = vunpack.c.l.b16 %v478
      %v3000 = vunpack.c.h.b16 %v478
      %v3001 = vunpack.c.l.b16 %v479
      %v3002 = vunpack.c.h.b16 %v479
      %v3003 = vunpack.c.l.b16 %v480
      %v3004 = vunpack.c.h.b16 %v480
      %v3005 = vunpack.c.l.b16 %v481
      %v3006 = vunpack.c.h.b16 %v481
      %v3007 = vunpack.c.l.b16 %v482
      %v3008 = vunpack.c.h.b16 %v482
      %v3009 = vunpack.c.l.b16 %v483
      %v3010 = vunpack.c.h.b16 %v483
      %v3011 = vunpack.c.l.b16 %v484
      %v3012 = vunpack.c.h.b16 %v484
      %v3013 = vunpack.c.l.b16 %v485
      %v3014 = vunpack.c.h.b16 %v485
      %v3015 = vunpack.c.l.b16 %v486
      %v3016 = vunpack.c.h.b16 %v486
      %v3017 = vunpack.c.l.b16 %v487
      %v3018 = vunpack.c.h.b16 %v487
      %v3019 = vunpack.c.l.b16 %v488
      %v3020 = vunpack.c.h.b16 %v488
      %v3021 = vunpack.c.l.b16 %v489
      %v3022 = vunpack.c.h.b16 %v489
      %v3023 = vunpack.c.l.b16 %v490
      %v3024 = vunpack.c.h.b16 %v490
      %v3025 = vunpack.c.l.b16 %v491
      %v3026 = vunpack.c.h.b16 %v491
      %v3027 = vunpack.c.l.b16 %v492
      %v3028 = vunpack.c.h.b16 %v492
      %v3029 = vunpack.c.l.b16 %v493
      %v3030 = vunpack.c.h.b16 %v493
      %v3031 = vunpack.c.l.b16 %v494
      %v3032 = vunpack.c.h.b16 %v494
      %v3033 = vunpack.c.l.b16 %v495
      %v3034 = vunpack.c.h.b16 %v495
      %v3035 = vunpack.c.l.b16 %v496
      %v3036 = vunpack.c.h.b16 %v496
      %v3037 = vunpack.c.l.b16 %v497
      %v3038 = vunpack.c.h.b16 %v497
      %v3039 = vunpack.c.l.b16 %v498
      %v3040 = vunpack.c.h.b16 %v498
      %v3041 = vunpack.c.l.b16 %v499
      %v3042 = vunpack.c.h.b16 %v499
      %v3043 = vunpack.c.l.b16 %v500
      %v3044 = vunpack.c.h.b16 %v500
      %v3045 = vunpack.c.l.b16 %v501
      %v3046 = vunpack.c.h.b16 %v501
      %v3047 = vunpack.c.l.b16 %v502
      %v3048 = vunpack.c.h.b16 %v502
      %v3049 = vunpack.c.l.b16 %v503
      %v3050 = vunpack.c.h.b16 %v503
      %v3051 = vunpack.c.l.b16 %v504
      %v3052 = vunpack.c.h.b16 %v504
      %v3053 = vunpack.c.l.b16 %v505
      %v3054 = vunpack.c.h.b16 %v505
      %v3055 = vunpack.c.l.b16 %v506
      %v3056 = vunpack.c.h.b16 %v506
      %v3057 = vunpack.c.l.b16 %v507
      %v3058 = vunpack.c.h.b16 %v507
      %v3059 = vunpack.c.l.b16 %v508
      %v3060 = vunpack.c.h.b16 %v508
      %v3061 = vpack.c.b16 %v2791, %v2789
      %v3062 = vpack.c.b16 %v2792, %v2790
      %v3063 = vpack.c.b16 %v2795, %v2793
      %v3064 = vpack.c.b16 %v2796, %v2794
      %v3065 = vpack.c.b16 %v2799, %v2797
      %v3066 = vpack.c.b16 %v2800, %v2798
      %v3067 = vpack.c.b16 %v2803, %v2801
      %v3068 = vpack.c.b16 %v2804, %v2802
      %v3069 = vpack.c.b16 %v2807, %v2805
      %v3070 = vpack.c.b16 %v2808, %v2806
      %v3071 = vpack.c.b16 %v2811, %v2809
      %v3072 = vpack.c.b16 %v2812, %v2810
      %v3073 = vpack.c.b16 %v2815, %v2813
      %v3074 = vpack.c.b16 %v2816, %v2814
      %v3075 = vpack.c.b16 %v2819, %v2817
      %v3076 = vpack.c.b16 %v2820, %v2818
      %v3077 = vpack.c.b16 %v2823, %v2821
      %v3078 = vpack.c.b16 %v2824, %v2822
      %v3079 = vpack.c.b16 %v2827, %v2825
      %v3080 = vpack.c.b16 %v2828, %v2826
      %v3081 = vpack.c.b16 %v2831, %v2829
      %v3082 = vpack.c.b16 %v2832, %v2830
      %v3083 = vpack.c.b16 %v2835, %v2833
      %v3084 = vpack.c.b16 %v2836, %v2834
      %v3085 = vpack.c.b16 %v2839, %v2837
      %v3086 = vpack.c.b16 %v2840, %v2838
      %v3087 = vpack.c.b16 %v2843, %v2841
      %v3088 = vpack.c.b16 %v2844, %v2842
      %v3089 = vpack.c.b16 %v2847, %v2845
      %v3090 = vpack.c.b16 %v2848, %v2846
      %v3091 = vpack.c.b16 %v2851, %v2849
      %v3092 = vpack.c.b16 %v2852, %v2850
      %v3093 = vpack.c.b16 %v2855, %v2853
      %v3094 = vpack.c.b16 %v2856, %v2854
      %v3095 = vpack.c.b16 %v2859, %v2857
      %v3096 = vpack.c.b16 %v2860, %v2858
      %v3097 = vpack.c.b16 %v2863, %v2861
      %v3098 = vpack.c.b16 %v2864, %v2862
      %v3099 = vpack.c.b16 %v2867, %v2865
      %v3100 = vpack.c.b16 %v2868, %v2866
      %v3101 = vpack.c.b16 %v2871, %v2869
      %v3102 = vpack.c.b16 %v2872, %v2870
      %v3103 = vpack.c.b16 %v2875, %v2873
      %v3104 = vpack.c.b16 %v2876, %v2874
      %v3105 = vpack.c.b16 %v2879, %v2877
      %v3106 = vpack.c.b16 %v2880, %v2878
      %v3107 = vpack.c.b16 %v2883, %v2881
      %v3108 = vpack.c.b16 %v2884, %v2882
      %v3109 = vpack.c.b16 %v2887, %v2885
      %v3110 = vpack.c.b16 %v2888, %v2886
      %v3111 = vpack.c.b16 %v2891, %v2889
      %v3112 = vpack.c.b16 %v2892, %v2890
      %v3113 = vpack.c.b16 %v2895, %v2893
      %v3114 = vpack.c.b16 %v2896, %v2894
      %v3115 = vpack.c.b16 %v2899, %v2897
      %v3116 = vpack.c.b16 %v2900, %v2898
      %v3117 = vpack.c.b16 %v2903, %v2901
      %v3118 = vpack.c.b16 %v2904, %v2902
      %v3119 = vpack.c.b16 %v2907, %v2905
      %v3120 = vpack.c.b16 %v2908, %v2906
      %v3121 = vpack.c.b16 %v2911, %v2909
      %v3122 = vpack.c.b16 %v2912, %v2910
      %v3123 = vpack.c.b16 %v2915, %v2913
      %v3124 = vpack.c.b16 %v2916, %v2914
      %v3125 = vpack.c.b16 %v2919, %v2917
      %v3126 = vpack.c.b16 %v2920, %v2918
      %v3127 = vpack.c.b16 %v2923, %v2921
      %v3128 = vpack.c.b16 %v2924, %v2922
      %v3129 = vpack.c.b16 %v2927, %v2925
      %v3130 = vpack.c.b16 %v2928, %v2926
      %v3131 = vpack.c.b16 %v2931, %v2929
      %v3132 = vpack.c.b16 %v2932, %v2930
      %v3133 = vpack.c.b16 %v2935, %v2933
      %v3134 = vpack.c.b16 %v2936, %v2934
      %v3135 = vpack.c.b16 %v2939, %v2937
      %v3136 = vpack.c.b16 %v2940, %v2938
      %v3137 = vpack.c.b16 %v2943, %v2941
      %v3138 = vpack.c.b16 %v2944, %v2942
      %v3139 = vpack.c.b16 %v2947, %v2945
      %v3140 = vpack.c.b16 %v2948, %v2946
      %v3141 = vpack.c.b16 %v2951, %v2949
      %v3142 = vpack.c.b16 %v2952, %v2950
      %v3143 = vpack.c.b16 %v2955, %v2953
      %v3144 = vpack.c.b16 %v2956, %v2954
      %v3145 = vpack.c.b16 %v2959, %v2957
      %v3146 = vpack.c.b16 %v2960, %v2958
      %v3147 = vpack.c.b16 %v2963, %v2961
      %v3148 = vpack.c.b16 %v2964, %v2962
      %v3149 = vpack.c.b16 %v2967, %v2965
      %v3150 = vpack.c.b16 %v2968, %v2966
      %v3151 = vpack.c.b16 %v2971, %v2969
      %v3152 = vpack.c.b16 %v2972, %v2970
      %v3153 = vpack.c.b16 %v2975, %v2973
      %v3154 = vpack.c.b16 %v2976, %v2974
      %v3155 = vpack.c.b16 %v2979, %v2977
      %v3156 = vpack.c.b16 %v2980, %v2978
      %v3157 = vpack.c.b16 %v2983, %v2981
      %v3158 = vpack.c.b16 %v2984, %v2982
      %v3159 = vpack.c.b16 %v2987, %v2985
      %v3160 = vpack.c.b16 %v2988, %v2986
      %v3161 = vpack.c.b16 %v2991, %v2989
      %v3162 = vpack.c.b16 %v2992, %v2990
      %v3163 = vpack.c.b16 %v2995, %v2993
      %v3164 = vpack.c.b16 %v2996, %v2994
      %v3165 = vpack.c.b16 %v2999, %v2997
      %v3166 = vpack.c.b16 %v3000, %v2998
      %v3167 = vpack.c.b16 %v3003, %v3001
      %v3168 = vpack.c.b16 %v3004, %v3002
      %v3169 = vpack.c.b16 %v3007, %v3005
      %v3170 = vpack.c.b16 %v3008, %v3006
      %v3171 = vpack.c.b16 %v3011, %v3009
      %v3172 = vpack.c.b16 %v3012, %v3010
      %v3173 = vpack.c.b16 %v3015, %v3013
      %v3174 = vpack.c.b16 %v3016, %v3014
      %v3175 = vpack.c.b16 %v3019, %v3017
      %v3176 = vpack.c.b16 %v3020, %v3018
      %v3177 = vpack.c.b16 %v3023, %v3021
      %v3178 = vpack.c.b16 %v3024, %v3022
      %v3179 = vpack.c.b16 %v3027, %v3025
      %v3180 = vpack.c.b16 %v3028, %v3026
      %v3181 = vpack.c.b16 %v3031, %v3029
      %v3182 = vpack.c.b16 %v3032, %v3030
      %v3183 = vpack.c.b16 %v3035, %v3033
      %v3184 = vpack.c.b16 %v3036, %v3034
      %v3185 = vpack.c.b16 %v3039, %v3037
      %v3186 = vpack.c.b16 %v3040, %v3038
      %v3187 = vpack.c.b16 %v3043, %v3041
      %v3188 = vpack.c.b16 %v3044, %v3042
      %v3189 = vpack.c.b16 %v3047, %v3045
      %v3190 = vpack.c.b16 %v3048, %v3046
      %v3191 = vpack.c.b16 %v3051, %v3049
      %v3192 = vpack.c.b16 %v3052, %v3050
      %v3193 = vpack.c.b16 %v3055, %v3053
      %v3194 = vpack.c.b16 %v3056, %v3054
      %v3195 = vpack.c.b16 %v3059, %v3057
      %v3196 = vpack.c.b16 %v3060, %v3058
      %vm3333 = vcmask 523264
      %v3335 = vsel %vm3333, %v2117, 0
      %v3338 = vsel %vm3333, %v2126, 0
      %v3341 = vsel %vm3333, %v2135, 0
      %v3344 = vsel %vm3333, %v2144, 0
      %v3347 = vsel %vm3333, %v2153, 0
      %v3350 = vsel %vm3333, %v2162, 0
      %v3353 = vsel %vm3333, %v2171, 0
      %v3356 = vsel %vm3333, %v2180, 0
      %v3359 = vsel %vm3333, %v2189, 0
      %v3362 = vsel %vm3333, %v2198, 0
      %v3365 = vsel %vm3333, %v2207, 0
      %v3368 = vsel %vm3333, %v2216, 0
      %v3371 = vsel %vm3333, %v2225, 0
      %v3374 = vsel %vm3333, %v2234, 0
      %v3377 = vsel %vm3333, %v2243, 0
      %v3380 = vsel %vm3333, %v2252, 0
      %v3383 = vsel %vm3333, %v2261, 0
      %v3386 = vsel %vm3333, %v2270, 0
      %v3389 = vsel %vm3333, %v2279, 0
      %v3392 = vsel %vm3333, %v2288, 0
      %v3395 = vsel %vm3333, %v2297, 0
      %v3398 = vsel %vm3333, %v2306, 0
      %v3401 = vsel %vm3333, %v2315, 0
      %v3404 = vsel %vm3333, %v2324, 0
      %v3407 = vsel %vm3333, %v2333, 0
      %v3410 = vsel %vm3333, %v2342, 0
      %v3413 = vsel %vm3333, %v2351, 0
      %v3416 = vsel %vm3333, %v2360, 0
      %v3419 = vsel %vm3333, %v2369, 0
      %v3422 = vsel %vm3333, %v2378, 0
      %v3425 = vsel %vm3333, %v2387, 0
      %v3428 = vsel %vm3333, %v2396, 0
      %3430 = vmatpush.bf16.msra.mxu0 %v3075
      %3431 = vmatpush.bf16.msra.mxu0 %v3073
      %3432 = vmatpush.bf16.msra.mxu0 %v3071
      %3433 = vmatpush.bf16.msra.mxu0 %v3069
      %3434 = vmatpush.bf16.msra.mxu0 %v3067
      %3435 = vmatpush.bf16.msra.mxu0 %v3065
      %3436 = vmatpush.bf16.msra.mxu0 %v3063
      %3437 = vmatpush.bf16.msra.mxu0 %v3061
      %3438 = vmatmul.bf16.gmra.mxu0 %v2109
      %v3439 = vpop.f32.mrf.mxu0
      %v3440 = vadd.f32 %v896, %v3439
      %v3441 = vpop.f32.mrf.mxu0
      %v3442 = vadd.f32 %v901, %v3441
      %3443 = vmatmul.bf16.gmra.mxu0 %v2118
      %v3444 = vpop.f32.mrf.mxu0
      %v3445 = vadd.f32 %v906, %v3444
      %v3446 = vpop.f32.mrf.mxu0
      %v3447 = vadd.f32 %v911, %v3446
      %3448 = vmatmul.bf16.gmra.mxu0 %v2127
      %v3449 = vpop.f32.mrf.mxu0
      %v3450 = vadd.f32 %v916, %v3449
      %v3451 = vpop.f32.mrf.mxu0
      %v3452 = vadd.f32 %v921, %v3451
      %3453 = vmatmul.bf16.gmra.mxu0 %v2136
      %v3454 = vpop.f32.mrf.mxu0
      %v3455 = vadd.f32 %v926, %v3454
      %v3456 = vpop.f32.mrf.mxu0
      %v3457 = vadd.f32 %v931, %v3456
      %3458 = vmatmul.bf16.gmra.mxu0 %v2145
      %v3459 = vpop.f32.mrf.mxu0
      %v3460 = vadd.f32 %v936, %v3459
      %v3461 = vpop.f32.mrf.mxu0
      %v3462 = vadd.f32 %v941, %v3461
      %3463 = vmatmul.bf16.gmra.mxu0 %v2154
      %v3464 = vpop.f32.mrf.mxu0
      %v3465 = vadd.f32 %v946, %v3464
      %v3466 = vpop.f32.mrf.mxu0
      %v3467 = vadd.f32 %v951, %v3466
      %3468 = vmatmul.bf16.gmra.mxu0 %v2163
      %v3469 = vpop.f32.mrf.mxu0
      %v3470 = vadd.f32 %v956, %v3469
      %v3471 = vpop.f32.mrf.mxu0
      %v3472 = vadd.f32 %v961, %v3471
      %3473 = vmatmul.bf16.gmra.mxu0 %v2172
      %v3474 = vpop.f32.mrf.mxu0
      %v3475 = vadd.f32 %v966, %v3474
      %v3476 = vpop.f32.mrf.mxu0
      %v3477 = vadd.f32 %v971, %v3476
      %3478 = vmatmul.bf16.gmra.mxu0 %v2181
      %v3479 = vpop.f32.mrf.mxu0
      %v3480 = vadd.f32 %v976, %v3479
      %v3481 = vpop.f32.mrf.mxu0
      %v3482 = vadd.f32 %v981, %v3481
      %3483 = vmatmul.bf16.gmra.mxu0 %v2190
      %v3484 = vpop.f32.mrf.mxu0
      %v3485 = vadd.f32 %v986, %v3484
      %v3486 = vpop.f32.mrf.mxu0
      %v3487 = vadd.f32 %v991, %v3486
      %3488 = vmatmul.bf16.gmra.mxu0 %v2199
      %v3489 = vpop.f32.mrf.mxu0
      %v3490 = vadd.f32 %v996, %v3489
      %v3491 = vpop.f32.mrf.mxu0
      %v3492 = vadd.f32 %v1001, %v3491
      %3493 = vmatmul.bf16.gmra.mxu0 %v2208
      %v3494 = vpop.f32.mrf.mxu0
      %v3495 = vadd.f32 %v1006, %v3494
      %v3496 = vpop.f32.mrf.mxu0
      %v3497 = vadd.f32 %v1011, %v3496
      %3498 = vmatmul.bf16.gmra.mxu0 %v2217
      %v3499 = vpop.f32.mrf.mxu0
      %v3500 = vadd.f32 %v1016, %v3499
      %v3501 = vpop.f32.mrf.mxu0
      %v3502 = vadd.f32 %v1021, %v3501
      %3503 = vmatmul.bf16.gmra.mxu0 %v2226
      %v3504 = vpop.f32.mrf.mxu0
      %v3505 = vadd.f32 %v1026, %v3504
      %v3506 = vpop.f32.mrf.mxu0
      %v3507 = vadd.f32 %v1031, %v3506
      %3508 = vmatmul.bf16.gmra.mxu0 %v2235
      %v3509 = vpop.f32.mrf.mxu0
      %v3510 = vadd.f32 %v1036, %v3509
      %v3511 = vpop.f32.mrf.mxu0
      %v3512 = vadd.f32 %v1041, %v3511
      %3513 = vmatmul.bf16.gmra.mxu0 %v2244
      %v3514 = vpop.f32.mrf.mxu0
      %v3515 = vadd.f32 %v1046, %v3514
      %v3516 = vpop.f32.mrf.mxu0
      %v3517 = vadd.f32 %v1051, %v3516
      %3518 = vmatmul.bf16.gmra.mxu0 %v2253
      %v3519 = vpop.f32.mrf.mxu0
      %v3520 = vadd.f32 %v1056, %v3519
      %v3521 = vpop.f32.mrf.mxu0
      %v3522 = vadd.f32 %v1061, %v3521
      %3523 = vmatmul.bf16.gmra.mxu0 %v2262
      %v3524 = vpop.f32.mrf.mxu0
      %v3525 = vadd.f32 %v1066, %v3524
      %v3526 = vpop.f32.mrf.mxu0
      %v3527 = vadd.f32 %v1071, %v3526
      %3528 = vmatmul.bf16.gmra.mxu0 %v2271
      %v3529 = vpop.f32.mrf.mxu0
      %v3530 = vadd.f32 %v1076, %v3529
      %v3531 = vpop.f32.mrf.mxu0
      %v3532 = vadd.f32 %v1081, %v3531
      %3533 = vmatmul.bf16.gmra.mxu0 %v2280
      %v3534 = vpop.f32.mrf.mxu0
      %v3535 = vadd.f32 %v1086, %v3534
      %v3536 = vpop.f32.mrf.mxu0
      %v3537 = vadd.f32 %v1091, %v3536
      %3538 = vmatmul.bf16.gmra.mxu0 %v2289
      %v3539 = vpop.f32.mrf.mxu0
      %v3540 = vadd.f32 %v1096, %v3539
      %v3541 = vpop.f32.mrf.mxu0
      %v3542 = vadd.f32 %v1101, %v3541
      %3543 = vmatmul.bf16.gmra.mxu0 %v2298
      %v3544 = vpop.f32.mrf.mxu0
      %v3545 = vadd.f32 %v1106, %v3544
      %v3546 = vpop.f32.mrf.mxu0
      %v3547 = vadd.f32 %v1111, %v3546
      %3548 = vmatmul.bf16.gmra.mxu0 %v2307
      %v3549 = vpop.f32.mrf.mxu0
      %v3550 = vadd.f32 %v1116, %v3549
      %v3551 = vpop.f32.mrf.mxu0
      %v3552 = vadd.f32 %v1121, %v3551
      %3553 = vmatmul.bf16.gmra.mxu0 %v2316
      %v3554 = vpop.f32.mrf.mxu0
      %v3555 = vadd.f32 %v1126, %v3554
      %v3556 = vpop.f32.mrf.mxu0
      %v3557 = vadd.f32 %v1131, %v3556
      %3558 = vmatmul.bf16.gmra.mxu0 %v2325
      %v3559 = vpop.f32.mrf.mxu0
      %v3560 = vadd.f32 %v1136, %v3559
      %v3561 = vpop.f32.mrf.mxu0
      %v3562 = vadd.f32 %v1141, %v3561
      %3563 = vmatmul.bf16.gmra.mxu0 %v2334
      %v3564 = vpop.f32.mrf.mxu0
      %v3565 = vadd.f32 %v1146, %v3564
      %v3566 = vpop.f32.mrf.mxu0
      %v3567 = vadd.f32 %v1151, %v3566
      %3568 = vmatmul.bf16.gmra.mxu0 %v2343
      %v3569 = vpop.f32.mrf.mxu0
      %v3570 = vadd.f32 %v1156, %v3569
      %v3571 = vpop.f32.mrf.mxu0
      %v3572 = vadd.f32 %v1161, %v3571
      %3573 = vmatmul.bf16.gmra.mxu0 %v2352
      %v3574 = vpop.f32.mrf.mxu0
      %v3575 = vadd.f32 %v1166, %v3574
      %v3576 = vpop.f32.mrf.mxu0
      %v3577 = vadd.f32 %v1171, %v3576
      %3578 = vmatmul.bf16.gmra.mxu0 %v2361
      %v3579 = vpop.f32.mrf.mxu0
      %v3580 = vadd.f32 %v1176, %v3579
      %v3581 = vpop.f32.mrf.mxu0
      %v3582 = vadd.f32 %v1181, %v3581
      %3583 = vmatmul.bf16.gmra.mxu0 %v2370
      %v3584 = vpop.f32.mrf.mxu0
      %v3585 = vadd.f32 %v1186, %v3584
      %v3586 = vpop.f32.mrf.mxu0
      %v3587 = vadd.f32 %v1191, %v3586
      %3588 = vmatmul.bf16.gmra.mxu0 %v2379
      %v3589 = vpop.f32.mrf.mxu0
      %v3590 = vadd.f32 %v1196, %v3589
      %v3591 = vpop.f32.mrf.mxu0
      %v3592 = vadd.f32 %v1201, %v3591
      %3593 = vmatmul.bf16.gmra.mxu0 %v2388
      %v3594 = vpop.f32.mrf.mxu0
      %v3595 = vadd.f32 %v1206, %v3594
      %v3596 = vpop.f32.mrf.mxu0
      %v3597 = vadd.f32 %v1211, %v3596
      %3598 = vdwg.mxu0
      %3599 = vmatpush.bf16.msra.mxu0 %v3091
      %3600 = vmatpush.bf16.msra.mxu0 %v3089
      %3601 = vmatpush.bf16.msra.mxu0 %v3087
      %3602 = vmatpush.bf16.msra.mxu0 %v3085
      %3603 = vmatpush.bf16.msra.mxu0 %v3083
      %3604 = vmatpush.bf16.msra.mxu0 %v3081
      %3605 = vmatpush.bf16.msra.mxu0 %v3079
      %3606 = vmatpush.bf16.msra.mxu0 %v3077
      %3607 = vmatmul.bf16.gmra.mxu0 %v2110
      %v3608 = vpop.f32.mrf.mxu0
      %v3609 = vadd.f32 %v3440, %v3608
      %v3610 = vpop.f32.mrf.mxu0
      %v3611 = vadd.f32 %v3442, %v3610
      %3612 = vmatmul.bf16.gmra.mxu0 %v2119
      %v3613 = vpop.f32.mrf.mxu0
      %v3614 = vadd.f32 %v3445, %v3613
      %v3615 = vpop.f32.mrf.mxu0
      %v3616 = vadd.f32 %v3447, %v3615
      %3617 = vmatmul.bf16.gmra.mxu0 %v2128
      %v3618 = vpop.f32.mrf.mxu0
      %v3619 = vadd.f32 %v3450, %v3618
      %v3620 = vpop.f32.mrf.mxu0
      %v3621 = vadd.f32 %v3452, %v3620
      %3622 = vmatmul.bf16.gmra.mxu0 %v2137
      %v3623 = vpop.f32.mrf.mxu0
      %v3624 = vadd.f32 %v3455, %v3623
      %v3625 = vpop.f32.mrf.mxu0
      %v3626 = vadd.f32 %v3457, %v3625
      %3627 = vmatmul.bf16.gmra.mxu0 %v2146
      %v3628 = vpop.f32.mrf.mxu0
      %v3629 = vadd.f32 %v3460, %v3628
      %v3630 = vpop.f32.mrf.mxu0
      %v3631 = vadd.f32 %v3462, %v3630
      %3632 = vmatmul.bf16.gmra.mxu0 %v2155
      %v3633 = vpop.f32.mrf.mxu0
      %v3634 = vadd.f32 %v3465, %v3633
      %v3635 = vpop.f32.mrf.mxu0
      %v3636 = vadd.f32 %v3467, %v3635
      %3637 = vmatmul.bf16.gmra.mxu0 %v2164
      %v3638 = vpop.f32.mrf.mxu0
      %v3639 = vadd.f32 %v3470, %v3638
      %v3640 = vpop.f32.mrf.mxu0
      %v3641 = vadd.f32 %v3472, %v3640
      %3642 = vmatmul.bf16.gmra.mxu0 %v2173
      %v3643 = vpop.f32.mrf.mxu0
      %v3644 = vadd.f32 %v3475, %v3643
      %v3645 = vpop.f32.mrf.mxu0
      %v3646 = vadd.f32 %v3477, %v3645
      %3647 = vmatmul.bf16.gmra.mxu0 %v2182
      %v3648 = vpop.f32.mrf.mxu0
      %v3649 = vadd.f32 %v3480, %v3648
      %v3650 = vpop.f32.mrf.mxu0
      %v3651 = vadd.f32 %v3482, %v3650
      %3652 = vmatmul.bf16.gmra.mxu0 %v2191
      %v3653 = vpop.f32.mrf.mxu0
      %v3654 = vadd.f32 %v3485, %v3653
      %v3655 = vpop.f32.mrf.mxu0
      %v3656 = vadd.f32 %v3487, %v3655
      %3657 = vmatmul.bf16.gmra.mxu0 %v2200
      %v3658 = vpop.f32.mrf.mxu0
      %v3659 = vadd.f32 %v3490, %v3658
      %v3660 = vpop.f32.mrf.mxu0
      %v3661 = vadd.f32 %v3492, %v3660
      %3662 = vmatmul.bf16.gmra.mxu0 %v2209
      %v3663 = vpop.f32.mrf.mxu0
      %v3664 = vadd.f32 %v3495, %v3663
      %v3665 = vpop.f32.mrf.mxu0
      %v3666 = vadd.f32 %v3497, %v3665
      %3667 = vmatmul.bf16.gmra.mxu0 %v2218
      %v3668 = vpop.f32.mrf.mxu0
      %v3669 = vadd.f32 %v3500, %v3668
      %v3670 = vpop.f32.mrf.mxu0
      %v3671 = vadd.f32 %v3502, %v3670
      %3672 = vmatmul.bf16.gmra.mxu0 %v2227
      %v3673 = vpop.f32.mrf.mxu0
      %v3674 = vadd.f32 %v3505, %v3673
      %v3675 = vpop.f32.mrf.mxu0
      %v3676 = vadd.f32 %v3507, %v3675
      %3677 = vmatmul.bf16.gmra.mxu0 %v2236
      %v3678 = vpop.f32.mrf.mxu0
      %v3679 = vadd.f32 %v3510, %v3678
      %v3680 = vpop.f32.mrf.mxu0
      %v3681 = vadd.f32 %v3512, %v3680
      %3682 = vmatmul.bf16.gmra.mxu0 %v2245
      %v3683 = vpop.f32.mrf.mxu0
      %v3684 = vadd.f32 %v3515, %v3683
      %v3685 = vpop.f32.mrf.mxu0
      %v3686 = vadd.f32 %v3517, %v3685
      %3687 = vmatmul.bf16.gmra.mxu0 %v2254
      %v3688 = vpop.f32.mrf.mxu0
      %v3689 = vadd.f32 %v3520, %v3688
      %v3690 = vpop.f32.mrf.mxu0
      %v3691 = vadd.f32 %v3522, %v3690
      %3692 = vmatmul.bf16.gmra.mxu0 %v2263
      %v3693 = vpop.f32.mrf.mxu0
      %v3694 = vadd.f32 %v3525, %v3693
      %v3695 = vpop.f32.mrf.mxu0
      %v3696 = vadd.f32 %v3527, %v3695
      %3697 = vmatmul.bf16.gmra.mxu0 %v2272
      %v3698 = vpop.f32.mrf.mxu0
      %v3699 = vadd.f32 %v3530, %v3698
      %v3700 = vpop.f32.mrf.mxu0
      %v3701 = vadd.f32 %v3532, %v3700
      %3702 = vmatmul.bf16.gmra.mxu0 %v2281
      %v3703 = vpop.f32.mrf.mxu0
      %v3704 = vadd.f32 %v3535, %v3703
      %v3705 = vpop.f32.mrf.mxu0
      %v3706 = vadd.f32 %v3537, %v3705
      %3707 = vmatmul.bf16.gmra.mxu0 %v2290
      %v3708 = vpop.f32.mrf.mxu0
      %v3709 = vadd.f32 %v3540, %v3708
      %v3710 = vpop.f32.mrf.mxu0
      %v3711 = vadd.f32 %v3542, %v3710
      %3712 = vmatmul.bf16.gmra.mxu0 %v2299
      %v3713 = vpop.f32.mrf.mxu0
      %v3714 = vadd.f32 %v3545, %v3713
      %v3715 = vpop.f32.mrf.mxu0
      %v3716 = vadd.f32 %v3547, %v3715
      %3717 = vmatmul.bf16.gmra.mxu0 %v2308
      %v3718 = vpop.f32.mrf.mxu0
      %v3719 = vadd.f32 %v3550, %v3718
      %v3720 = vpop.f32.mrf.mxu0
      %v3721 = vadd.f32 %v3552, %v3720
      %3722 = vmatmul.bf16.gmra.mxu0 %v2317
      %v3723 = vpop.f32.mrf.mxu0
      %v3724 = vadd.f32 %v3555, %v3723
      %v3725 = vpop.f32.mrf.mxu0
      %v3726 = vadd.f32 %v3557, %v3725
      %3727 = vmatmul.bf16.gmra.mxu0 %v2326
      %v3728 = vpop.f32.mrf.mxu0
      %v3729 = vadd.f32 %v3560, %v3728
      %v3730 = vpop.f32.mrf.mxu0
      %v3731 = vadd.f32 %v3562, %v3730
      %3732 = vmatmul.bf16.gmra.mxu0 %v2335
      %v3733 = vpop.f32.mrf.mxu0
      %v3734 = vadd.f32 %v3565, %v3733
      %v3735 = vpop.f32.mrf.mxu0
      %v3736 = vadd.f32 %v3567, %v3735
      %3737 = vmatmul.bf16.gmra.mxu0 %v2344
      %v3738 = vpop.f32.mrf.mxu0
      %v3739 = vadd.f32 %v3570, %v3738
      %v3740 = vpop.f32.mrf.mxu0
      %v3741 = vadd.f32 %v3572, %v3740
      %3742 = vmatmul.bf16.gmra.mxu0 %v2353
      %v3743 = vpop.f32.mrf.mxu0
      %v3744 = vadd.f32 %v3575, %v3743
      %v3745 = vpop.f32.mrf.mxu0
      %v3746 = vadd.f32 %v3577, %v3745
      %3747 = vmatmul.bf16.gmra.mxu0 %v2362
      %v3748 = vpop.f32.mrf.mxu0
      %v3749 = vadd.f32 %v3580, %v3748
      %v3750 = vpop.f32.mrf.mxu0
      %v3751 = vadd.f32 %v3582, %v3750
      %3752 = vmatmul.bf16.gmra.mxu0 %v2371
      %v3753 = vpop.f32.mrf.mxu0
      %v3754 = vadd.f32 %v3585, %v3753
      %v3755 = vpop.f32.mrf.mxu0
      %v3756 = vadd.f32 %v3587, %v3755
      %3757 = vmatmul.bf16.gmra.mxu0 %v2380
      %v3758 = vpop.f32.mrf.mxu0
      %v3759 = vadd.f32 %v3590, %v3758
      %v3760 = vpop.f32.mrf.mxu0
      %v3761 = vadd.f32 %v3592, %v3760
      %3762 = vmatmul.bf16.gmra.mxu0 %v2389
      %v3763 = vpop.f32.mrf.mxu0
      %v3764 = vadd.f32 %v3595, %v3763
      %v3765 = vpop.f32.mrf.mxu0
      %v3766 = vadd.f32 %v3597, %v3765
      %3767 = vdwg.mxu0
      %3768 = vmatpush.bf16.msra.mxu0 %v3107
      %3769 = vmatpush.bf16.msra.mxu0 %v3105
      %3770 = vmatpush.bf16.msra.mxu0 %v3103
      %3771 = vmatpush.bf16.msra.mxu0 %v3101
      %3772 = vmatpush.bf16.msra.mxu0 %v3099
      %3773 = vmatpush.bf16.msra.mxu0 %v3097
      %3774 = vmatpush.bf16.msra.mxu0 %v3095
      %3775 = vmatpush.bf16.msra.mxu0 %v3093
      %3776 = vmatmul.bf16.gmra.mxu0 %v2111
      %v3777 = vpop.f32.mrf.mxu0
      %v3778 = vadd.f32 %v3609, %v3777
      %v3779 = vpop.f32.mrf.mxu0
      %v3780 = vadd.f32 %v3611, %v3779
      %3781 = vmatmul.bf16.gmra.mxu0 %v2120
      %v3782 = vpop.f32.mrf.mxu0
      %v3783 = vadd.f32 %v3614, %v3782
      %v3784 = vpop.f32.mrf.mxu0
      %v3785 = vadd.f32 %v3616, %v3784
      %3786 = vmatmul.bf16.gmra.mxu0 %v2129
      %v3787 = vpop.f32.mrf.mxu0
      %v3788 = vadd.f32 %v3619, %v3787
      %v3789 = vpop.f32.mrf.mxu0
      %v3790 = vadd.f32 %v3621, %v3789
      %3791 = vmatmul.bf16.gmra.mxu0 %v2138
      %v3792 = vpop.f32.mrf.mxu0
      %v3793 = vadd.f32 %v3624, %v3792
      %v3794 = vpop.f32.mrf.mxu0
      %v3795 = vadd.f32 %v3626, %v3794
      %3796 = vmatmul.bf16.gmra.mxu0 %v2147
      %v3797 = vpop.f32.mrf.mxu0
      %v3798 = vadd.f32 %v3629, %v3797
      %v3799 = vpop.f32.mrf.mxu0
      %v3800 = vadd.f32 %v3631, %v3799
      %3801 = vmatmul.bf16.gmra.mxu0 %v2156
      %v3802 = vpop.f32.mrf.mxu0
      %v3803 = vadd.f32 %v3634, %v3802
      %v3804 = vpop.f32.mrf.mxu0
      %v3805 = vadd.f32 %v3636, %v3804
      %3806 = vmatmul.bf16.gmra.mxu0 %v2165
      %v3807 = vpop.f32.mrf.mxu0
      %v3808 = vadd.f32 %v3639, %v3807
      %v3809 = vpop.f32.mrf.mxu0
      %v3810 = vadd.f32 %v3641, %v3809
      %3811 = vmatmul.bf16.gmra.mxu0 %v2174
      %v3812 = vpop.f32.mrf.mxu0
      %v3813 = vadd.f32 %v3644, %v3812
      %v3814 = vpop.f32.mrf.mxu0
      %v3815 = vadd.f32 %v3646, %v3814
      %3816 = vmatmul.bf16.gmra.mxu0 %v2183
      %v3817 = vpop.f32.mrf.mxu0
      %v3818 = vadd.f32 %v3649, %v3817
      %v3819 = vpop.f32.mrf.mxu0
      %v3820 = vadd.f32 %v3651, %v3819
      %3821 = vmatmul.bf16.gmra.mxu0 %v2192
      %v3822 = vpop.f32.mrf.mxu0
      %v3823 = vadd.f32 %v3654, %v3822
      %v3824 = vpop.f32.mrf.mxu0
      %v3825 = vadd.f32 %v3656, %v3824
      %3826 = vmatmul.bf16.gmra.mxu0 %v2201
      %v3827 = vpop.f32.mrf.mxu0
      %v3828 = vadd.f32 %v3659, %v3827
      %v3829 = vpop.f32.mrf.mxu0
      %v3830 = vadd.f32 %v3661, %v3829
      %3831 = vmatmul.bf16.gmra.mxu0 %v2210
      %v3832 = vpop.f32.mrf.mxu0
      %v3833 = vadd.f32 %v3664, %v3832
      %v3834 = vpop.f32.mrf.mxu0
      %v3835 = vadd.f32 %v3666, %v3834
      %3836 = vmatmul.bf16.gmra.mxu0 %v2219
      %v3837 = vpop.f32.mrf.mxu0
      %v3838 = vadd.f32 %v3669, %v3837
      %v3839 = vpop.f32.mrf.mxu0
      %v3840 = vadd.f32 %v3671, %v3839
      %3841 = vmatmul.bf16.gmra.mxu0 %v2228
      %v3842 = vpop.f32.mrf.mxu0
      %v3843 = vadd.f32 %v3674, %v3842
      %v3844 = vpop.f32.mrf.mxu0
      %v3845 = vadd.f32 %v3676, %v3844
      %3846 = vmatmul.bf16.gmra.mxu0 %v2237
      %v3847 = vpop.f32.mrf.mxu0
      %v3848 = vadd.f32 %v3679, %v3847
      %v3849 = vpop.f32.mrf.mxu0
      %v3850 = vadd.f32 %v3681, %v3849
      %3851 = vmatmul.bf16.gmra.mxu0 %v2246
      %v3852 = vpop.f32.mrf.mxu0
      %v3853 = vadd.f32 %v3684, %v3852
      %v3854 = vpop.f32.mrf.mxu0
      %v3855 = vadd.f32 %v3686, %v3854
      %3856 = vmatmul.bf16.gmra.mxu0 %v2255
      %v3857 = vpop.f32.mrf.mxu0
      %v3858 = vadd.f32 %v3689, %v3857
      %v3859 = vpop.f32.mrf.mxu0
      %v3860 = vadd.f32 %v3691, %v3859
      %3861 = vmatmul.bf16.gmra.mxu0 %v2264
      %v3862 = vpop.f32.mrf.mxu0
      %v3863 = vadd.f32 %v3694, %v3862
      %v3864 = vpop.f32.mrf.mxu0
      %v3865 = vadd.f32 %v3696, %v3864
      %3866 = vmatmul.bf16.gmra.mxu0 %v2273
      %v3867 = vpop.f32.mrf.mxu0
      %v3868 = vadd.f32 %v3699, %v3867
      %v3869 = vpop.f32.mrf.mxu0
      %v3870 = vadd.f32 %v3701, %v3869
      %3871 = vmatmul.bf16.gmra.mxu0 %v2282
      %v3872 = vpop.f32.mrf.mxu0
      %v3873 = vadd.f32 %v3704, %v3872
      %v3874 = vpop.f32.mrf.mxu0
      %v3875 = vadd.f32 %v3706, %v3874
      %3876 = vmatmul.bf16.gmra.mxu0 %v2291
      %v3877 = vpop.f32.mrf.mxu0
      %v3878 = vadd.f32 %v3709, %v3877
      %v3879 = vpop.f32.mrf.mxu0
      %v3880 = vadd.f32 %v3711, %v3879
      %3881 = vmatmul.bf16.gmra.mxu0 %v2300
      %v3882 = vpop.f32.mrf.mxu0
      %v3883 = vadd.f32 %v3714, %v3882
      %v3884 = vpop.f32.mrf.mxu0
      %v3885 = vadd.f32 %v3716, %v3884
      %3886 = vmatmul.bf16.gmra.mxu0 %v2309
      %v3887 = vpop.f32.mrf.mxu0
      %v3888 = vadd.f32 %v3719, %v3887
      %v3889 = vpop.f32.mrf.mxu0
      %v3890 = vadd.f32 %v3721, %v3889
      %3891 = vmatmul.bf16.gmra.mxu0 %v2318
      %v3892 = vpop.f32.mrf.mxu0
      %v3893 = vadd.f32 %v3724, %v3892
      %v3894 = vpop.f32.mrf.mxu0
      %v3895 = vadd.f32 %v3726, %v3894
      %3896 = vmatmul.bf16.gmra.mxu0 %v2327
      %v3897 = vpop.f32.mrf.mxu0
      %v3898 = vadd.f32 %v3729, %v3897
      %v3899 = vpop.f32.mrf.mxu0
      %v3900 = vadd.f32 %v3731, %v3899
      %3901 = vmatmul.bf16.gmra.mxu0 %v2336
      %v3902 = vpop.f32.mrf.mxu0
      %v3903 = vadd.f32 %v3734, %v3902
      %v3904 = vpop.f32.mrf.mxu0
      %v3905 = vadd.f32 %v3736, %v3904
      %3906 = vmatmul.bf16.gmra.mxu0 %v2345
      %v3907 = vpop.f32.mrf.mxu0
      %v3908 = vadd.f32 %v3739, %v3907
      %v3909 = vpop.f32.mrf.mxu0
      %v3910 = vadd.f32 %v3741, %v3909
      %3911 = vmatmul.bf16.gmra.mxu0 %v2354
      %v3912 = vpop.f32.mrf.mxu0
      %v3913 = vadd.f32 %v3744, %v3912
      %v3914 = vpop.f32.mrf.mxu0
      %v3915 = vadd.f32 %v3746, %v3914
      %3916 = vmatmul.bf16.gmra.mxu0 %v2363
      %v3917 = vpop.f32.mrf.mxu0
      %v3918 = vadd.f32 %v3749, %v3917
      %v3919 = vpop.f32.mrf.mxu0
      %v3920 = vadd.f32 %v3751, %v3919
      %3921 = vmatmul.bf16.gmra.mxu0 %v2372
      %v3922 = vpop.f32.mrf.mxu0
      %v3923 = vadd.f32 %v3754, %v3922
      %v3924 = vpop.f32.mrf.mxu0
      %v3925 = vadd.f32 %v3756, %v3924
      %3926 = vmatmul.bf16.gmra.mxu0 %v2381
      %v3927 = vpop.f32.mrf.mxu0
      %v3928 = vadd.f32 %v3759, %v3927
      %v3929 = vpop.f32.mrf.mxu0
      %v3930 = vadd.f32 %v3761, %v3929
      %3931 = vmatmul.bf16.gmra.mxu0 %v2390
      %v3932 = vpop.f32.mrf.mxu0
      %v3933 = vadd.f32 %v3764, %v3932
      %v3934 = vpop.f32.mrf.mxu0
      %v3935 = vadd.f32 %v3766, %v3934
      %3936 = vdwg.mxu0
      %3937 = vmatpush.bf16.msra.mxu0 %v3123
      %3938 = vmatpush.bf16.msra.mxu0 %v3121
      %3939 = vmatpush.bf16.msra.mxu0 %v3119
      %3940 = vmatpush.bf16.msra.mxu0 %v3117
      %3941 = vmatpush.bf16.msra.mxu0 %v3115
      %3942 = vmatpush.bf16.msra.mxu0 %v3113
      %3943 = vmatpush.bf16.msra.mxu0 %v3111
      %3944 = vmatpush.bf16.msra.mxu0 %v3109
      %3945 = vmatmul.bf16.gmra.mxu0 %v2112
      %v3946 = vpop.f32.mrf.mxu0
      %v3947 = vadd.f32 %v3778, %v3946
      %v3948 = vpop.f32.mrf.mxu0
      %v3949 = vadd.f32 %v3780, %v3948
      %3950 = vmatmul.bf16.gmra.mxu0 %v2121
      %v3951 = vpop.f32.mrf.mxu0
      %v3952 = vadd.f32 %v3783, %v3951
      %v3953 = vpop.f32.mrf.mxu0
      %v3954 = vadd.f32 %v3785, %v3953
      %3955 = vmatmul.bf16.gmra.mxu0 %v2130
      %v3956 = vpop.f32.mrf.mxu0
      %v3957 = vadd.f32 %v3788, %v3956
      %v3958 = vpop.f32.mrf.mxu0
      %v3959 = vadd.f32 %v3790, %v3958
      %3960 = vmatmul.bf16.gmra.mxu0 %v2139
      %v3961 = vpop.f32.mrf.mxu0
      %v3962 = vadd.f32 %v3793, %v3961
      %v3963 = vpop.f32.mrf.mxu0
      %v3964 = vadd.f32 %v3795, %v3963
      %3965 = vmatmul.bf16.gmra.mxu0 %v2148
      %v3966 = vpop.f32.mrf.mxu0
      %v3967 = vadd.f32 %v3798, %v3966
      %v3968 = vpop.f32.mrf.mxu0
      %v3969 = vadd.f32 %v3800, %v3968
      %3970 = vmatmul.bf16.gmra.mxu0 %v2157
      %v3971 = vpop.f32.mrf.mxu0
      %v3972 = vadd.f32 %v3803, %v3971
      %v3973 = vpop.f32.mrf.mxu0
      %v3974 = vadd.f32 %v3805, %v3973
      %3975 = vmatmul.bf16.gmra.mxu0 %v2166
      %v3976 = vpop.f32.mrf.mxu0
      %v3977 = vadd.f32 %v3808, %v3976
      %v3978 = vpop.f32.mrf.mxu0
      %v3979 = vadd.f32 %v3810, %v3978
      %3980 = vmatmul.bf16.gmra.mxu0 %v2175
      %v3981 = vpop.f32.mrf.mxu0
      %v3982 = vadd.f32 %v3813, %v3981
      %v3983 = vpop.f32.mrf.mxu0
      %v3984 = vadd.f32 %v3815, %v3983
      %3985 = vmatmul.bf16.gmra.mxu0 %v2184
      %v3986 = vpop.f32.mrf.mxu0
      %v3987 = vadd.f32 %v3818, %v3986
      %v3988 = vpop.f32.mrf.mxu0
      %v3989 = vadd.f32 %v3820, %v3988
      %3990 = vmatmul.bf16.gmra.mxu0 %v2193
      %v3991 = vpop.f32.mrf.mxu0
      %v3992 = vadd.f32 %v3823, %v3991
      %v3993 = vpop.f32.mrf.mxu0
      %v3994 = vadd.f32 %v3825, %v3993
      %3995 = vmatmul.bf16.gmra.mxu0 %v2202
      %v3996 = vpop.f32.mrf.mxu0
      %v3997 = vadd.f32 %v3828, %v3996
      %v3998 = vpop.f32.mrf.mxu0
      %v3999 = vadd.f32 %v3830, %v3998
      %4000 = vmatmul.bf16.gmra.mxu0 %v2211
      %v4001 = vpop.f32.mrf.mxu0
      %v4002 = vadd.f32 %v3833, %v4001
      %v4003 = vpop.f32.mrf.mxu0
      %v4004 = vadd.f32 %v3835, %v4003
      %4005 = vmatmul.bf16.gmra.mxu0 %v2220
      %v4006 = vpop.f32.mrf.mxu0
      %v4007 = vadd.f32 %v3838, %v4006
      %v4008 = vpop.f32.mrf.mxu0
      %v4009 = vadd.f32 %v3840, %v4008
      %4010 = vmatmul.bf16.gmra.mxu0 %v2229
      %v4011 = vpop.f32.mrf.mxu0
      %v4012 = vadd.f32 %v3843, %v4011
      %v4013 = vpop.f32.mrf.mxu0
      %v4014 = vadd.f32 %v3845, %v4013
      %4015 = vmatmul.bf16.gmra.mxu0 %v2238
      %v4016 = vpop.f32.mrf.mxu0
      %v4017 = vadd.f32 %v3848, %v4016
      %v4018 = vpop.f32.mrf.mxu0
      %v4019 = vadd.f32 %v3850, %v4018
      %4020 = vmatmul.bf16.gmra.mxu0 %v2247
      %v4021 = vpop.f32.mrf.mxu0
      %v4022 = vadd.f32 %v3853, %v4021
      %v4023 = vpop.f32.mrf.mxu0
      %v4024 = vadd.f32 %v3855, %v4023
      %4025 = vmatmul.bf16.gmra.mxu0 %v2256
      %v4026 = vpop.f32.mrf.mxu0
      %v4027 = vadd.f32 %v3858, %v4026
      %v4028 = vpop.f32.mrf.mxu0
      %v4029 = vadd.f32 %v3860, %v4028
      %4030 = vmatmul.bf16.gmra.mxu0 %v2265
      %v4031 = vpop.f32.mrf.mxu0
      %v4032 = vadd.f32 %v3863, %v4031
      %v4033 = vpop.f32.mrf.mxu0
      %v4034 = vadd.f32 %v3865, %v4033
      %4035 = vmatmul.bf16.gmra.mxu0 %v2274
      %v4036 = vpop.f32.mrf.mxu0
      %v4037 = vadd.f32 %v3868, %v4036
      %v4038 = vpop.f32.mrf.mxu0
      %v4039 = vadd.f32 %v3870, %v4038
      %4040 = vmatmul.bf16.gmra.mxu0 %v2283
      %v4041 = vpop.f32.mrf.mxu0
      %v4042 = vadd.f32 %v3873, %v4041
      %v4043 = vpop.f32.mrf.mxu0
      %v4044 = vadd.f32 %v3875, %v4043
      %4045 = vmatmul.bf16.gmra.mxu0 %v2292
      %v4046 = vpop.f32.mrf.mxu0
      %v4047 = vadd.f32 %v3878, %v4046
      %v4048 = vpop.f32.mrf.mxu0
      %v4049 = vadd.f32 %v3880, %v4048
      %4050 = vmatmul.bf16.gmra.mxu0 %v2301
      %v4051 = vpop.f32.mrf.mxu0
      %v4052 = vadd.f32 %v3883, %v4051
      %v4053 = vpop.f32.mrf.mxu0
      %v4054 = vadd.f32 %v3885, %v4053
      %4055 = vmatmul.bf16.gmra.mxu0 %v2310
      %v4056 = vpop.f32.mrf.mxu0
      %v4057 = vadd.f32 %v3888, %v4056
      %v4058 = vpop.f32.mrf.mxu0
      %v4059 = vadd.f32 %v3890, %v4058
      %4060 = vmatmul.bf16.gmra.mxu0 %v2319
      %v4061 = vpop.f32.mrf.mxu0
      %v4062 = vadd.f32 %v3893, %v4061
      %v4063 = vpop.f32.mrf.mxu0
      %v4064 = vadd.f32 %v3895, %v4063
      %4065 = vmatmul.bf16.gmra.mxu0 %v2328
      %v4066 = vpop.f32.mrf.mxu0
      %v4067 = vadd.f32 %v3898, %v4066
      %v4068 = vpop.f32.mrf.mxu0
      %v4069 = vadd.f32 %v3900, %v4068
      %4070 = vmatmul.bf16.gmra.mxu0 %v2337
      %v4071 = vpop.f32.mrf.mxu0
      %v4072 = vadd.f32 %v3903, %v4071
      %v4073 = vpop.f32.mrf.mxu0
      %v4074 = vadd.f32 %v3905, %v4073
      %4075 = vmatmul.bf16.gmra.mxu0 %v2346
      %v4076 = vpop.f32.mrf.mxu0
      %v4077 = vadd.f32 %v3908, %v4076
      %v4078 = vpop.f32.mrf.mxu0
      %v4079 = vadd.f32 %v3910, %v4078
      %4080 = vmatmul.bf16.gmra.mxu0 %v2355
      %v4081 = vpop.f32.mrf.mxu0
      %v4082 = vadd.f32 %v3913, %v4081
      %v4083 = vpop.f32.mrf.mxu0
      %v4084 = vadd.f32 %v3915, %v4083
      %4085 = vmatmul.bf16.gmra.mxu0 %v2364
      %v4086 = vpop.f32.mrf.mxu0
      %v4087 = vadd.f32 %v3918, %v4086
      %v4088 = vpop.f32.mrf.mxu0
      %v4089 = vadd.f32 %v3920, %v4088
      %4090 = vmatmul.bf16.gmra.mxu0 %v2373
      %v4091 = vpop.f32.mrf.mxu0
      %v4092 = vadd.f32 %v3923, %v4091
      %v4093 = vpop.f32.mrf.mxu0
      %v4094 = vadd.f32 %v3925, %v4093
      %4095 = vmatmul.bf16.gmra.mxu0 %v2382
      %v4096 = vpop.f32.mrf.mxu0
      %v4097 = vadd.f32 %v3928, %v4096
      %v4098 = vpop.f32.mrf.mxu0
      %v4099 = vadd.f32 %v3930, %v4098
      %4100 = vmatmul.bf16.gmra.mxu0 %v2391
      %v4101 = vpop.f32.mrf.mxu0
      %v4102 = vadd.f32 %v3933, %v4101
      %v4103 = vpop.f32.mrf.mxu0
      %v4104 = vadd.f32 %v3935, %v4103
      %4105 = vdwg.mxu0
      %4106 = vmatpush.bf16.msra.mxu0 %v3139
      %4107 = vmatpush.bf16.msra.mxu0 %v3137
      %4108 = vmatpush.bf16.msra.mxu0 %v3135
      %4109 = vmatpush.bf16.msra.mxu0 %v3133
      %4110 = vmatpush.bf16.msra.mxu0 %v3131
      %4111 = vmatpush.bf16.msra.mxu0 %v3129
      %4112 = vmatpush.bf16.msra.mxu0 %v3127
      %4113 = vmatpush.bf16.msra.mxu0 %v3125
      %4114 = vmatmul.bf16.gmra.mxu0 %v2113
      %v4115 = vpop.f32.mrf.mxu0
      %v4116 = vadd.f32 %v3947, %v4115
      %v4117 = vpop.f32.mrf.mxu0
      %v4118 = vadd.f32 %v3949, %v4117
      %4119 = vmatmul.bf16.gmra.mxu0 %v2122
      %v4120 = vpop.f32.mrf.mxu0
      %v4121 = vadd.f32 %v3952, %v4120
      %v4122 = vpop.f32.mrf.mxu0
      %v4123 = vadd.f32 %v3954, %v4122
      %4124 = vmatmul.bf16.gmra.mxu0 %v2131
      %v4125 = vpop.f32.mrf.mxu0
      %v4126 = vadd.f32 %v3957, %v4125
      %v4127 = vpop.f32.mrf.mxu0
      %v4128 = vadd.f32 %v3959, %v4127
      %4129 = vmatmul.bf16.gmra.mxu0 %v2140
      %v4130 = vpop.f32.mrf.mxu0
      %v4131 = vadd.f32 %v3962, %v4130
      %v4132 = vpop.f32.mrf.mxu0
      %v4133 = vadd.f32 %v3964, %v4132
      %4134 = vmatmul.bf16.gmra.mxu0 %v2149
      %v4135 = vpop.f32.mrf.mxu0
      %v4136 = vadd.f32 %v3967, %v4135
      %v4137 = vpop.f32.mrf.mxu0
      %v4138 = vadd.f32 %v3969, %v4137
      %4139 = vmatmul.bf16.gmra.mxu0 %v2158
      %v4140 = vpop.f32.mrf.mxu0
      %v4141 = vadd.f32 %v3972, %v4140
      %v4142 = vpop.f32.mrf.mxu0
      %v4143 = vadd.f32 %v3974, %v4142
      %4144 = vmatmul.bf16.gmra.mxu0 %v2167
      %v4145 = vpop.f32.mrf.mxu0
      %v4146 = vadd.f32 %v3977, %v4145
      %v4147 = vpop.f32.mrf.mxu0
      %v4148 = vadd.f32 %v3979, %v4147
      %4149 = vmatmul.bf16.gmra.mxu0 %v2176
      %v4150 = vpop.f32.mrf.mxu0
      %v4151 = vadd.f32 %v3982, %v4150
      %v4152 = vpop.f32.mrf.mxu0
      %v4153 = vadd.f32 %v3984, %v4152
      %4154 = vmatmul.bf16.gmra.mxu0 %v2185
      %v4155 = vpop.f32.mrf.mxu0
      %v4156 = vadd.f32 %v3987, %v4155
      %v4157 = vpop.f32.mrf.mxu0
      %v4158 = vadd.f32 %v3989, %v4157
      %4159 = vmatmul.bf16.gmra.mxu0 %v2194
      %v4160 = vpop.f32.mrf.mxu0
      %v4161 = vadd.f32 %v3992, %v4160
      %v4162 = vpop.f32.mrf.mxu0
      %v4163 = vadd.f32 %v3994, %v4162
      %4164 = vmatmul.bf16.gmra.mxu0 %v2203
      %v4165 = vpop.f32.mrf.mxu0
      %v4166 = vadd.f32 %v3997, %v4165
      %v4167 = vpop.f32.mrf.mxu0
      %v4168 = vadd.f32 %v3999, %v4167
      %4169 = vmatmul.bf16.gmra.mxu0 %v2212
      %v4170 = vpop.f32.mrf.mxu0
      %v4171 = vadd.f32 %v4002, %v4170
      %v4172 = vpop.f32.mrf.mxu0
      %v4173 = vadd.f32 %v4004, %v4172
      %4174 = vmatmul.bf16.gmra.mxu0 %v2221
      %v4175 = vpop.f32.mrf.mxu0
      %v4176 = vadd.f32 %v4007, %v4175
      %v4177 = vpop.f32.mrf.mxu0
      %v4178 = vadd.f32 %v4009, %v4177
      %4179 = vmatmul.bf16.gmra.mxu0 %v2230
      %v4180 = vpop.f32.mrf.mxu0
      %v4181 = vadd.f32 %v4012, %v4180
      %v4182 = vpop.f32.mrf.mxu0
      %v4183 = vadd.f32 %v4014, %v4182
      %4184 = vmatmul.bf16.gmra.mxu0 %v2239
      %v4185 = vpop.f32.mrf.mxu0
      %v4186 = vadd.f32 %v4017, %v4185
      %v4187 = vpop.f32.mrf.mxu0
      %v4188 = vadd.f32 %v4019, %v4187
      %4189 = vmatmul.bf16.gmra.mxu0 %v2248
      %v4190 = vpop.f32.mrf.mxu0
      %v4191 = vadd.f32 %v4022, %v4190
      %v4192 = vpop.f32.mrf.mxu0
      %v4193 = vadd.f32 %v4024, %v4192
      %4194 = vmatmul.bf16.gmra.mxu0 %v2257
      %v4195 = vpop.f32.mrf.mxu0
      %v4196 = vadd.f32 %v4027, %v4195
      %v4197 = vpop.f32.mrf.mxu0
      %v4198 = vadd.f32 %v4029, %v4197
      %4199 = vmatmul.bf16.gmra.mxu0 %v2266
      %v4200 = vpop.f32.mrf.mxu0
      %v4201 = vadd.f32 %v4032, %v4200
      %v4202 = vpop.f32.mrf.mxu0
      %v4203 = vadd.f32 %v4034, %v4202
      %4204 = vmatmul.bf16.gmra.mxu0 %v2275
      %v4205 = vpop.f32.mrf.mxu0
      %v4206 = vadd.f32 %v4037, %v4205
      %v4207 = vpop.f32.mrf.mxu0
      %v4208 = vadd.f32 %v4039, %v4207
      %4209 = vmatmul.bf16.gmra.mxu0 %v2284
      %v4210 = vpop.f32.mrf.mxu0
      %v4211 = vadd.f32 %v4042, %v4210
      %v4212 = vpop.f32.mrf.mxu0
      %v4213 = vadd.f32 %v4044, %v4212
      %4214 = vmatmul.bf16.gmra.mxu0 %v2293
      %v4215 = vpop.f32.mrf.mxu0
      %v4216 = vadd.f32 %v4047, %v4215
      %v4217 = vpop.f32.mrf.mxu0
      %v4218 = vadd.f32 %v4049, %v4217
      %4219 = vmatmul.bf16.gmra.mxu0 %v2302
      %v4220 = vpop.f32.mrf.mxu0
      %v4221 = vadd.f32 %v4052, %v4220
      %v4222 = vpop.f32.mrf.mxu0
      %v4223 = vadd.f32 %v4054, %v4222
      %4224 = vmatmul.bf16.gmra.mxu0 %v2311
      %v4225 = vpop.f32.mrf.mxu0
      %v4226 = vadd.f32 %v4057, %v4225
      %v4227 = vpop.f32.mrf.mxu0
      %v4228 = vadd.f32 %v4059, %v4227
      %4229 = vmatmul.bf16.gmra.mxu0 %v2320
      %v4230 = vpop.f32.mrf.mxu0
      %v4231 = vadd.f32 %v4062, %v4230
      %v4232 = vpop.f32.mrf.mxu0
      %v4233 = vadd.f32 %v4064, %v4232
      %4234 = vmatmul.bf16.gmra.mxu0 %v2329
      %v4235 = vpop.f32.mrf.mxu0
      %v4236 = vadd.f32 %v4067, %v4235
      %v4237 = vpop.f32.mrf.mxu0
      %v4238 = vadd.f32 %v4069, %v4237
      %4239 = vmatmul.bf16.gmra.mxu0 %v2338
      %v4240 = vpop.f32.mrf.mxu0
      %v4241 = vadd.f32 %v4072, %v4240
      %v4242 = vpop.f32.mrf.mxu0
      %v4243 = vadd.f32 %v4074, %v4242
      %4244 = vmatmul.bf16.gmra.mxu0 %v2347
      %v4245 = vpop.f32.mrf.mxu0
      %v4246 = vadd.f32 %v4077, %v4245
      %v4247 = vpop.f32.mrf.mxu0
      %v4248 = vadd.f32 %v4079, %v4247
      %4249 = vmatmul.bf16.gmra.mxu0 %v2356
      %v4250 = vpop.f32.mrf.mxu0
      %v4251 = vadd.f32 %v4082, %v4250
      %v4252 = vpop.f32.mrf.mxu0
      %v4253 = vadd.f32 %v4084, %v4252
      %4254 = vmatmul.bf16.gmra.mxu0 %v2365
      %v4255 = vpop.f32.mrf.mxu0
      %v4256 = vadd.f32 %v4087, %v4255
      %v4257 = vpop.f32.mrf.mxu0
      %v4258 = vadd.f32 %v4089, %v4257
      %4259 = vmatmul.bf16.gmra.mxu0 %v2374
      %v4260 = vpop.f32.mrf.mxu0
      %v4261 = vadd.f32 %v4092, %v4260
      %v4262 = vpop.f32.mrf.mxu0
      %v4263 = vadd.f32 %v4094, %v4262
      %4264 = vmatmul.bf16.gmra.mxu0 %v2383
      %v4265 = vpop.f32.mrf.mxu0
      %v4266 = vadd.f32 %v4097, %v4265
      %v4267 = vpop.f32.mrf.mxu0
      %v4268 = vadd.f32 %v4099, %v4267
      %4269 = vmatmul.bf16.gmra.mxu0 %v2392
      %v4270 = vpop.f32.mrf.mxu0
      %v4271 = vadd.f32 %v4102, %v4270
      %v4272 = vpop.f32.mrf.mxu0
      %v4273 = vadd.f32 %v4104, %v4272
      %4274 = vdwg.mxu0
      %4275 = vmatpush.bf16.msra.mxu0 %v3155
      %4276 = vmatpush.bf16.msra.mxu0 %v3153
      %4277 = vmatpush.bf16.msra.mxu0 %v3151
      %4278 = vmatpush.bf16.msra.mxu0 %v3149
      %4279 = vmatpush.bf16.msra.mxu0 %v3147
      %4280 = vmatpush.bf16.msra.mxu0 %v3145
      %4281 = vmatpush.bf16.msra.mxu0 %v3143
      %4282 = vmatpush.bf16.msra.mxu0 %v3141
      %4283 = vmatmul.bf16.gmra.mxu0 %v2114
      %v4284 = vpop.f32.mrf.mxu0
      %v4285 = vadd.f32 %v4116, %v4284
      %v4286 = vpop.f32.mrf.mxu0
      %v4287 = vadd.f32 %v4118, %v4286
      %4288 = vmatmul.bf16.gmra.mxu0 %v2123
      %v4289 = vpop.f32.mrf.mxu0
      %v4290 = vadd.f32 %v4121, %v4289
      %v4291 = vpop.f32.mrf.mxu0
      %v4292 = vadd.f32 %v4123, %v4291
      %4293 = vmatmul.bf16.gmra.mxu0 %v2132
      %v4294 = vpop.f32.mrf.mxu0
      %v4295 = vadd.f32 %v4126, %v4294
      %v4296 = vpop.f32.mrf.mxu0
      %v4297 = vadd.f32 %v4128, %v4296
      %4298 = vmatmul.bf16.gmra.mxu0 %v2141
      %v4299 = vpop.f32.mrf.mxu0
      %v4300 = vadd.f32 %v4131, %v4299
      %v4301 = vpop.f32.mrf.mxu0
      %v4302 = vadd.f32 %v4133, %v4301
      %4303 = vmatmul.bf16.gmra.mxu0 %v2150
      %v4304 = vpop.f32.mrf.mxu0
      %v4305 = vadd.f32 %v4136, %v4304
      %v4306 = vpop.f32.mrf.mxu0
      %v4307 = vadd.f32 %v4138, %v4306
      %4308 = vmatmul.bf16.gmra.mxu0 %v2159
      %v4309 = vpop.f32.mrf.mxu0
      %v4310 = vadd.f32 %v4141, %v4309
      %v4311 = vpop.f32.mrf.mxu0
      %v4312 = vadd.f32 %v4143, %v4311
      %4313 = vmatmul.bf16.gmra.mxu0 %v2168
      %v4314 = vpop.f32.mrf.mxu0
      %v4315 = vadd.f32 %v4146, %v4314
      %v4316 = vpop.f32.mrf.mxu0
      %v4317 = vadd.f32 %v4148, %v4316
      %4318 = vmatmul.bf16.gmra.mxu0 %v2177
      %v4319 = vpop.f32.mrf.mxu0
      %v4320 = vadd.f32 %v4151, %v4319
      %v4321 = vpop.f32.mrf.mxu0
      %v4322 = vadd.f32 %v4153, %v4321
      %4323 = vmatmul.bf16.gmra.mxu0 %v2186
      %v4324 = vpop.f32.mrf.mxu0
      %v4325 = vadd.f32 %v4156, %v4324
      %v4326 = vpop.f32.mrf.mxu0
      %v4327 = vadd.f32 %v4158, %v4326
      %4328 = vmatmul.bf16.gmra.mxu0 %v2195
      %v4329 = vpop.f32.mrf.mxu0
      %v4330 = vadd.f32 %v4161, %v4329
      %v4331 = vpop.f32.mrf.mxu0
      %v4332 = vadd.f32 %v4163, %v4331
      %4333 = vmatmul.bf16.gmra.mxu0 %v2204
      %v4334 = vpop.f32.mrf.mxu0
      %v4335 = vadd.f32 %v4166, %v4334
      %v4336 = vpop.f32.mrf.mxu0
      %v4337 = vadd.f32 %v4168, %v4336
      %4338 = vmatmul.bf16.gmra.mxu0 %v2213
      %v4339 = vpop.f32.mrf.mxu0
      %v4340 = vadd.f32 %v4171, %v4339
      %v4341 = vpop.f32.mrf.mxu0
      %v4342 = vadd.f32 %v4173, %v4341
      %4343 = vmatmul.bf16.gmra.mxu0 %v2222
      %v4344 = vpop.f32.mrf.mxu0
      %v4345 = vadd.f32 %v4176, %v4344
      %v4346 = vpop.f32.mrf.mxu0
      %v4347 = vadd.f32 %v4178, %v4346
      %4348 = vmatmul.bf16.gmra.mxu0 %v2231
      %v4349 = vpop.f32.mrf.mxu0
      %v4350 = vadd.f32 %v4181, %v4349
      %v4351 = vpop.f32.mrf.mxu0
      %v4352 = vadd.f32 %v4183, %v4351
      %4353 = vmatmul.bf16.gmra.mxu0 %v2240
      %v4354 = vpop.f32.mrf.mxu0
      %v4355 = vadd.f32 %v4186, %v4354
      %v4356 = vpop.f32.mrf.mxu0
      %v4357 = vadd.f32 %v4188, %v4356
      %4358 = vmatmul.bf16.gmra.mxu0 %v2249
      %v4359 = vpop.f32.mrf.mxu0
      %v4360 = vadd.f32 %v4191, %v4359
      %v4361 = vpop.f32.mrf.mxu0
      %v4362 = vadd.f32 %v4193, %v4361
      %4363 = vmatmul.bf16.gmra.mxu0 %v2258
      %v4364 = vpop.f32.mrf.mxu0
      %v4365 = vadd.f32 %v4196, %v4364
      %v4366 = vpop.f32.mrf.mxu0
      %v4367 = vadd.f32 %v4198, %v4366
      %4368 = vmatmul.bf16.gmra.mxu0 %v2267
      %v4369 = vpop.f32.mrf.mxu0
      %v4370 = vadd.f32 %v4201, %v4369
      %v4371 = vpop.f32.mrf.mxu0
      %v4372 = vadd.f32 %v4203, %v4371
      %4373 = vmatmul.bf16.gmra.mxu0 %v2276
      %v4374 = vpop.f32.mrf.mxu0
      %v4375 = vadd.f32 %v4206, %v4374
      %v4376 = vpop.f32.mrf.mxu0
      %v4377 = vadd.f32 %v4208, %v4376
      %4378 = vmatmul.bf16.gmra.mxu0 %v2285
      %v4379 = vpop.f32.mrf.mxu0
      %v4380 = vadd.f32 %v4211, %v4379
      %v4381 = vpop.f32.mrf.mxu0
      %v4382 = vadd.f32 %v4213, %v4381
      %4383 = vmatmul.bf16.gmra.mxu0 %v2294
      %v4384 = vpop.f32.mrf.mxu0
      %v4385 = vadd.f32 %v4216, %v4384
      %v4386 = vpop.f32.mrf.mxu0
      %v4387 = vadd.f32 %v4218, %v4386
      %4388 = vmatmul.bf16.gmra.mxu0 %v2303
      %v4389 = vpop.f32.mrf.mxu0
      %v4390 = vadd.f32 %v4221, %v4389
      %v4391 = vpop.f32.mrf.mxu0
      %v4392 = vadd.f32 %v4223, %v4391
      %4393 = vmatmul.bf16.gmra.mxu0 %v2312
      %v4394 = vpop.f32.mrf.mxu0
      %v4395 = vadd.f32 %v4226, %v4394
      %v4396 = vpop.f32.mrf.mxu0
      %v4397 = vadd.f32 %v4228, %v4396
      %4398 = vmatmul.bf16.gmra.mxu0 %v2321
      %v4399 = vpop.f32.mrf.mxu0
      %v4400 = vadd.f32 %v4231, %v4399
      %v4401 = vpop.f32.mrf.mxu0
      %v4402 = vadd.f32 %v4233, %v4401
      %4403 = vmatmul.bf16.gmra.mxu0 %v2330
      %v4404 = vpop.f32.mrf.mxu0
      %v4405 = vadd.f32 %v4236, %v4404
      %v4406 = vpop.f32.mrf.mxu0
      %v4407 = vadd.f32 %v4238, %v4406
      %4408 = vmatmul.bf16.gmra.mxu0 %v2339
      %v4409 = vpop.f32.mrf.mxu0
      %v4410 = vadd.f32 %v4241, %v4409
      %v4411 = vpop.f32.mrf.mxu0
      %v4412 = vadd.f32 %v4243, %v4411
      %4413 = vmatmul.bf16.gmra.mxu0 %v2348
      %v4414 = vpop.f32.mrf.mxu0
      %v4415 = vadd.f32 %v4246, %v4414
      %v4416 = vpop.f32.mrf.mxu0
      %v4417 = vadd.f32 %v4248, %v4416
      %4418 = vmatmul.bf16.gmra.mxu0 %v2357
      %v4419 = vpop.f32.mrf.mxu0
      %v4420 = vadd.f32 %v4251, %v4419
      %v4421 = vpop.f32.mrf.mxu0
      %v4422 = vadd.f32 %v4253, %v4421
      %4423 = vmatmul.bf16.gmra.mxu0 %v2366
      %v4424 = vpop.f32.mrf.mxu0
      %v4425 = vadd.f32 %v4256, %v4424
      %v4426 = vpop.f32.mrf.mxu0
      %v4427 = vadd.f32 %v4258, %v4426
      %4428 = vmatmul.bf16.gmra.mxu0 %v2375
      %v4429 = vpop.f32.mrf.mxu0
      %v4430 = vadd.f32 %v4261, %v4429
      %v4431 = vpop.f32.mrf.mxu0
      %v4432 = vadd.f32 %v4263, %v4431
      %4433 = vmatmul.bf16.gmra.mxu0 %v2384
      %v4434 = vpop.f32.mrf.mxu0
      %v4435 = vadd.f32 %v4266, %v4434
      %v4436 = vpop.f32.mrf.mxu0
      %v4437 = vadd.f32 %v4268, %v4436
      %4438 = vmatmul.bf16.gmra.mxu0 %v2393
      %v4439 = vpop.f32.mrf.mxu0
      %v4440 = vadd.f32 %v4271, %v4439
      %v4441 = vpop.f32.mrf.mxu0
      %v4442 = vadd.f32 %v4273, %v4441
      %4443 = vdwg.mxu0
      %4444 = vmatpush.bf16.msra.mxu0 %v3171
      %4445 = vmatpush.bf16.msra.mxu0 %v3169
      %4446 = vmatpush.bf16.msra.mxu0 %v3167
      %4447 = vmatpush.bf16.msra.mxu0 %v3165
      %4448 = vmatpush.bf16.msra.mxu0 %v3163
      %4449 = vmatpush.bf16.msra.mxu0 %v3161
      %4450 = vmatpush.bf16.msra.mxu0 %v3159
      %4451 = vmatpush.bf16.msra.mxu0 %v3157
      %4452 = vmatmul.bf16.gmra.mxu0 %v2115
      %v4453 = vpop.f32.mrf.mxu0
      %v4454 = vadd.f32 %v4285, %v4453
      %v4455 = vpop.f32.mrf.mxu0
      %v4456 = vadd.f32 %v4287, %v4455
      %4457 = vmatmul.bf16.gmra.mxu0 %v2124
      %v4458 = vpop.f32.mrf.mxu0
      %v4459 = vadd.f32 %v4290, %v4458
      %v4460 = vpop.f32.mrf.mxu0
      %v4461 = vadd.f32 %v4292, %v4460
      %4462 = vmatmul.bf16.gmra.mxu0 %v2133
      %v4463 = vpop.f32.mrf.mxu0
      %v4464 = vadd.f32 %v4295, %v4463
      %v4465 = vpop.f32.mrf.mxu0
      %v4466 = vadd.f32 %v4297, %v4465
      %4467 = vmatmul.bf16.gmra.mxu0 %v2142
      %v4468 = vpop.f32.mrf.mxu0
      %v4469 = vadd.f32 %v4300, %v4468
      %v4470 = vpop.f32.mrf.mxu0
      %v4471 = vadd.f32 %v4302, %v4470
      %4472 = vmatmul.bf16.gmra.mxu0 %v2151
      %v4473 = vpop.f32.mrf.mxu0
      %v4474 = vadd.f32 %v4305, %v4473
      %v4475 = vpop.f32.mrf.mxu0
      %v4476 = vadd.f32 %v4307, %v4475
      %4477 = vmatmul.bf16.gmra.mxu0 %v2160
      %v4478 = vpop.f32.mrf.mxu0
      %v4479 = vadd.f32 %v4310, %v4478
      %v4480 = vpop.f32.mrf.mxu0
      %v4481 = vadd.f32 %v4312, %v4480
      %4482 = vmatmul.bf16.gmra.mxu0 %v2169
      %v4483 = vpop.f32.mrf.mxu0
      %v4484 = vadd.f32 %v4315, %v4483
      %v4485 = vpop.f32.mrf.mxu0
      %v4486 = vadd.f32 %v4317, %v4485
      %4487 = vmatmul.bf16.gmra.mxu0 %v2178
      %v4488 = vpop.f32.mrf.mxu0
      %v4489 = vadd.f32 %v4320, %v4488
      %v4490 = vpop.f32.mrf.mxu0
      %v4491 = vadd.f32 %v4322, %v4490
      %4492 = vmatmul.bf16.gmra.mxu0 %v2187
      %v4493 = vpop.f32.mrf.mxu0
      %v4494 = vadd.f32 %v4325, %v4493
      %v4495 = vpop.f32.mrf.mxu0
      %v4496 = vadd.f32 %v4327, %v4495
      %4497 = vmatmul.bf16.gmra.mxu0 %v2196
      %v4498 = vpop.f32.mrf.mxu0
      %v4499 = vadd.f32 %v4330, %v4498
      %v4500 = vpop.f32.mrf.mxu0
      %v4501 = vadd.f32 %v4332, %v4500
      %4502 = vmatmul.bf16.gmra.mxu0 %v2205
      %v4503 = vpop.f32.mrf.mxu0
      %v4504 = vadd.f32 %v4335, %v4503
      %v4505 = vpop.f32.mrf.mxu0
      %v4506 = vadd.f32 %v4337, %v4505
      %4507 = vmatmul.bf16.gmra.mxu0 %v2214
      %v4508 = vpop.f32.mrf.mxu0
      %v4509 = vadd.f32 %v4340, %v4508
      %v4510 = vpop.f32.mrf.mxu0
      %v4511 = vadd.f32 %v4342, %v4510
      %4512 = vmatmul.bf16.gmra.mxu0 %v2223
      %v4513 = vpop.f32.mrf.mxu0
      %v4514 = vadd.f32 %v4345, %v4513
      %v4515 = vpop.f32.mrf.mxu0
      %v4516 = vadd.f32 %v4347, %v4515
      %4517 = vmatmul.bf16.gmra.mxu0 %v2232
      %v4518 = vpop.f32.mrf.mxu0
      %v4519 = vadd.f32 %v4350, %v4518
      %v4520 = vpop.f32.mrf.mxu0
      %v4521 = vadd.f32 %v4352, %v4520
      %4522 = vmatmul.bf16.gmra.mxu0 %v2241
      %v4523 = vpop.f32.mrf.mxu0
      %v4524 = vadd.f32 %v4355, %v4523
      %v4525 = vpop.f32.mrf.mxu0
      %v4526 = vadd.f32 %v4357, %v4525
      %4527 = vmatmul.bf16.gmra.mxu0 %v2250
      %v4528 = vpop.f32.mrf.mxu0
      %v4529 = vadd.f32 %v4360, %v4528
      %v4530 = vpop.f32.mrf.mxu0
      %v4531 = vadd.f32 %v4362, %v4530
      %4532 = vmatmul.bf16.gmra.mxu0 %v2259
      %v4533 = vpop.f32.mrf.mxu0
      %v4534 = vadd.f32 %v4365, %v4533
      %v4535 = vpop.f32.mrf.mxu0
      %v4536 = vadd.f32 %v4367, %v4535
      %4537 = vmatmul.bf16.gmra.mxu0 %v2268
      %v4538 = vpop.f32.mrf.mxu0
      %v4539 = vadd.f32 %v4370, %v4538
      %v4540 = vpop.f32.mrf.mxu0
      %v4541 = vadd.f32 %v4372, %v4540
      %4542 = vmatmul.bf16.gmra.mxu0 %v2277
      %v4543 = vpop.f32.mrf.mxu0
      %v4544 = vadd.f32 %v4375, %v4543
      %v4545 = vpop.f32.mrf.mxu0
      %v4546 = vadd.f32 %v4377, %v4545
      %4547 = vmatmul.bf16.gmra.mxu0 %v2286
      %v4548 = vpop.f32.mrf.mxu0
      %v4549 = vadd.f32 %v4380, %v4548
      %v4550 = vpop.f32.mrf.mxu0
      %v4551 = vadd.f32 %v4382, %v4550
      %4552 = vmatmul.bf16.gmra.mxu0 %v2295
      %v4553 = vpop.f32.mrf.mxu0
      %v4554 = vadd.f32 %v4385, %v4553
      %v4555 = vpop.f32.mrf.mxu0
      %v4556 = vadd.f32 %v4387, %v4555
      %4557 = vmatmul.bf16.gmra.mxu0 %v2304
      %v4558 = vpop.f32.mrf.mxu0
      %v4559 = vadd.f32 %v4390, %v4558
      %v4560 = vpop.f32.mrf.mxu0
      %v4561 = vadd.f32 %v4392, %v4560
      %4562 = vmatmul.bf16.gmra.mxu0 %v2313
      %v4563 = vpop.f32.mrf.mxu0
      %v4564 = vadd.f32 %v4395, %v4563
      %v4565 = vpop.f32.mrf.mxu0
      %v4566 = vadd.f32 %v4397, %v4565
      %4567 = vmatmul.bf16.gmra.mxu0 %v2322
      %v4568 = vpop.f32.mrf.mxu0
      %v4569 = vadd.f32 %v4400, %v4568
      %v4570 = vpop.f32.mrf.mxu0
      %v4571 = vadd.f32 %v4402, %v4570
      %4572 = vmatmul.bf16.gmra.mxu0 %v2331
      %v4573 = vpop.f32.mrf.mxu0
      %v4574 = vadd.f32 %v4405, %v4573
      %v4575 = vpop.f32.mrf.mxu0
      %v4576 = vadd.f32 %v4407, %v4575
      %4577 = vmatmul.bf16.gmra.mxu0 %v2340
      %v4578 = vpop.f32.mrf.mxu0
      %v4579 = vadd.f32 %v4410, %v4578
      %v4580 = vpop.f32.mrf.mxu0
      %v4581 = vadd.f32 %v4412, %v4580
      %4582 = vmatmul.bf16.gmra.mxu0 %v2349
      %v4583 = vpop.f32.mrf.mxu0
      %v4584 = vadd.f32 %v4415, %v4583
      %v4585 = vpop.f32.mrf.mxu0
      %v4586 = vadd.f32 %v4417, %v4585
      %4587 = vmatmul.bf16.gmra.mxu0 %v2358
      %v4588 = vpop.f32.mrf.mxu0
      %v4589 = vadd.f32 %v4420, %v4588
      %v4590 = vpop.f32.mrf.mxu0
      %v4591 = vadd.f32 %v4422, %v4590
      %4592 = vmatmul.bf16.gmra.mxu0 %v2367
      %v4593 = vpop.f32.mrf.mxu0
      %v4594 = vadd.f32 %v4425, %v4593
      %v4595 = vpop.f32.mrf.mxu0
      %v4596 = vadd.f32 %v4427, %v4595
      %4597 = vmatmul.bf16.gmra.mxu0 %v2376
      %v4598 = vpop.f32.mrf.mxu0
      %v4599 = vadd.f32 %v4430, %v4598
      %v4600 = vpop.f32.mrf.mxu0
      %v4601 = vadd.f32 %v4432, %v4600
      %4602 = vmatmul.bf16.gmra.mxu0 %v2385
      %v4603 = vpop.f32.mrf.mxu0
      %v4604 = vadd.f32 %v4435, %v4603
      %v4605 = vpop.f32.mrf.mxu0
      %v4606 = vadd.f32 %v4437, %v4605
      %4607 = vmatmul.bf16.gmra.mxu0 %v2394
      %v4608 = vpop.f32.mrf.mxu0
      %v4609 = vadd.f32 %v4440, %v4608
      %v4610 = vpop.f32.mrf.mxu0
      %v4611 = vadd.f32 %v4442, %v4610
      %4612 = vdwg.mxu0
      %4613 = vmatpush.bf16.msra.mxu0 %v3187
      %4614 = vmatpush.bf16.msra.mxu0 %v3185
      %4615 = vmatpush.bf16.msra.mxu0 %v3183
      %4616 = vmatpush.bf16.msra.mxu0 %v3181
      %4617 = vmatpush.bf16.msra.mxu0 %v3179
      %4618 = vmatpush.bf16.msra.mxu0 %v3177
      %4619 = vmatpush.bf16.msra.mxu0 %v3175
      %4620 = vmatpush.bf16.msra.mxu0 %v3173
      %4621 = vmatmul.bf16.gmra.mxu0 %v2116
      %v4622 = vpop.f32.mrf.mxu0
      %v4623 = vadd.f32 %v4454, %v4622
      %v4624 = vpop.f32.mrf.mxu0
      %v4625 = vadd.f32 %v4456, %v4624
      %4626 = vmatmul.bf16.gmra.mxu0 %v2125
      %v4627 = vpop.f32.mrf.mxu0
      %v4628 = vadd.f32 %v4459, %v4627
      %v4629 = vpop.f32.mrf.mxu0
      %v4630 = vadd.f32 %v4461, %v4629
      %4631 = vmatmul.bf16.gmra.mxu0 %v2134
      %v4632 = vpop.f32.mrf.mxu0
      %v4633 = vadd.f32 %v4464, %v4632
      %v4634 = vpop.f32.mrf.mxu0
      %v4635 = vadd.f32 %v4466, %v4634
      %4636 = vmatmul.bf16.gmra.mxu0 %v2143
      %v4637 = vpop.f32.mrf.mxu0
      %v4638 = vadd.f32 %v4469, %v4637
      %v4639 = vpop.f32.mrf.mxu0
      %v4640 = vadd.f32 %v4471, %v4639
      %4641 = vmatmul.bf16.gmra.mxu0 %v2152
      %v4642 = vpop.f32.mrf.mxu0
      %v4643 = vadd.f32 %v4474, %v4642
      %v4644 = vpop.f32.mrf.mxu0
      %v4645 = vadd.f32 %v4476, %v4644
      %4646 = vmatmul.bf16.gmra.mxu0 %v2161
      %v4647 = vpop.f32.mrf.mxu0
      %v4648 = vadd.f32 %v4479, %v4647
      %v4649 = vpop.f32.mrf.mxu0
      %v4650 = vadd.f32 %v4481, %v4649
      %4651 = vmatmul.bf16.gmra.mxu0 %v2170
      %v4652 = vpop.f32.mrf.mxu0
      %v4653 = vadd.f32 %v4484, %v4652
      %v4654 = vpop.f32.mrf.mxu0
      %v4655 = vadd.f32 %v4486, %v4654
      %4656 = vmatmul.bf16.gmra.mxu0 %v2179
      %v4657 = vpop.f32.mrf.mxu0
      %v4658 = vadd.f32 %v4489, %v4657
      %v4659 = vpop.f32.mrf.mxu0
      %v4660 = vadd.f32 %v4491, %v4659
      %4661 = vmatmul.bf16.gmra.mxu0 %v2188
      %v4662 = vpop.f32.mrf.mxu0
      %v4663 = vadd.f32 %v4494, %v4662
      %v4664 = vpop.f32.mrf.mxu0
      %v4665 = vadd.f32 %v4496, %v4664
      %4666 = vmatmul.bf16.gmra.mxu0 %v2197
      %v4667 = vpop.f32.mrf.mxu0
      %v4668 = vadd.f32 %v4499, %v4667
      %v4669 = vpop.f32.mrf.mxu0
      %v4670 = vadd.f32 %v4501, %v4669
      %4671 = vmatmul.bf16.gmra.mxu0 %v2206
      %v4672 = vpop.f32.mrf.mxu0
      %v4673 = vadd.f32 %v4504, %v4672
      %v4674 = vpop.f32.mrf.mxu0
      %v4675 = vadd.f32 %v4506, %v4674
      %4676 = vmatmul.bf16.gmra.mxu0 %v2215
      %v4677 = vpop.f32.mrf.mxu0
      %v4678 = vadd.f32 %v4509, %v4677
      %v4679 = vpop.f32.mrf.mxu0
      %v4680 = vadd.f32 %v4511, %v4679
      %4681 = vmatmul.bf16.gmra.mxu0 %v2224
      %v4682 = vpop.f32.mrf.mxu0
      %v4683 = vadd.f32 %v4514, %v4682
      %v4684 = vpop.f32.mrf.mxu0
      %v4685 = vadd.f32 %v4516, %v4684
      %4686 = vmatmul.bf16.gmra.mxu0 %v2233
      %v4687 = vpop.f32.mrf.mxu0
      %v4688 = vadd.f32 %v4519, %v4687
      %v4689 = vpop.f32.mrf.mxu0
      %v4690 = vadd.f32 %v4521, %v4689
      %4691 = vmatmul.bf16.gmra.mxu0 %v2242
      %v4692 = vpop.f32.mrf.mxu0
      %v4693 = vadd.f32 %v4524, %v4692
      %v4694 = vpop.f32.mrf.mxu0
      %v4695 = vadd.f32 %v4526, %v4694
      %4696 = vmatmul.bf16.gmra.mxu0 %v2251
      %v4697 = vpop.f32.mrf.mxu0
      %v4698 = vadd.f32 %v4529, %v4697
      %v4699 = vpop.f32.mrf.mxu0
      %v4700 = vadd.f32 %v4531, %v4699
      %4701 = vmatmul.bf16.gmra.mxu0 %v2260
      %v4702 = vpop.f32.mrf.mxu0
      %v4703 = vadd.f32 %v4534, %v4702
      %v4704 = vpop.f32.mrf.mxu0
      %v4705 = vadd.f32 %v4536, %v4704
      %4706 = vmatmul.bf16.gmra.mxu0 %v2269
      %v4707 = vpop.f32.mrf.mxu0
      %v4708 = vadd.f32 %v4539, %v4707
      %v4709 = vpop.f32.mrf.mxu0
      %v4710 = vadd.f32 %v4541, %v4709
      %4711 = vmatmul.bf16.gmra.mxu0 %v2278
      %v4712 = vpop.f32.mrf.mxu0
      %v4713 = vadd.f32 %v4544, %v4712
      %v4714 = vpop.f32.mrf.mxu0
      %v4715 = vadd.f32 %v4546, %v4714
      %4716 = vmatmul.bf16.gmra.mxu0 %v2287
      %v4717 = vpop.f32.mrf.mxu0
      %v4718 = vadd.f32 %v4549, %v4717
      %v4719 = vpop.f32.mrf.mxu0
      %v4720 = vadd.f32 %v4551, %v4719
      %4721 = vmatmul.bf16.gmra.mxu0 %v2296
      %v4722 = vpop.f32.mrf.mxu0
      %v4723 = vadd.f32 %v4554, %v4722
      %v4724 = vpop.f32.mrf.mxu0
      %v4725 = vadd.f32 %v4556, %v4724
      %4726 = vmatmul.bf16.gmra.mxu0 %v2305
      %v4727 = vpop.f32.mrf.mxu0
      %v4728 = vadd.f32 %v4559, %v4727
      %v4729 = vpop.f32.mrf.mxu0
      %v4730 = vadd.f32 %v4561, %v4729
      %4731 = vmatmul.bf16.gmra.mxu0 %v2314
      %v4732 = vpop.f32.mrf.mxu0
      %v4733 = vadd.f32 %v4564, %v4732
      %v4734 = vpop.f32.mrf.mxu0
      %v4735 = vadd.f32 %v4566, %v4734
      %4736 = vmatmul.bf16.gmra.mxu0 %v2323
      %v4737 = vpop.f32.mrf.mxu0
      %v4738 = vadd.f32 %v4569, %v4737
      %v4739 = vpop.f32.mrf.mxu0
      %v4740 = vadd.f32 %v4571, %v4739
      %4741 = vmatmul.bf16.gmra.mxu0 %v2332
      %v4742 = vpop.f32.mrf.mxu0
      %v4743 = vadd.f32 %v4574, %v4742
      %v4744 = vpop.f32.mrf.mxu0
      %v4745 = vadd.f32 %v4576, %v4744
      %4746 = vmatmul.bf16.gmra.mxu0 %v2341
      %v4747 = vpop.f32.mrf.mxu0
      %v4748 = vadd.f32 %v4579, %v4747
      %v4749 = vpop.f32.mrf.mxu0
      %v4750 = vadd.f32 %v4581, %v4749
      %4751 = vmatmul.bf16.gmra.mxu0 %v2350
      %v4752 = vpop.f32.mrf.mxu0
      %v4753 = vadd.f32 %v4584, %v4752
      %v4754 = vpop.f32.mrf.mxu0
      %v4755 = vadd.f32 %v4586, %v4754
      %4756 = vmatmul.bf16.gmra.mxu0 %v2359
      %v4757 = vpop.f32.mrf.mxu0
      %v4758 = vadd.f32 %v4589, %v4757
      %v4759 = vpop.f32.mrf.mxu0
      %v4760 = vadd.f32 %v4591, %v4759
      %4761 = vmatmul.bf16.gmra.mxu0 %v2368
      %v4762 = vpop.f32.mrf.mxu0
      %v4763 = vadd.f32 %v4594, %v4762
      %v4764 = vpop.f32.mrf.mxu0
      %v4765 = vadd.f32 %v4596, %v4764
      %4766 = vmatmul.bf16.gmra.mxu0 %v2377
      %v4767 = vpop.f32.mrf.mxu0
      %v4768 = vadd.f32 %v4599, %v4767
      %v4769 = vpop.f32.mrf.mxu0
      %v4770 = vadd.f32 %v4601, %v4769
      %4771 = vmatmul.bf16.gmra.mxu0 %v2386
      %v4772 = vpop.f32.mrf.mxu0
      %v4773 = vadd.f32 %v4604, %v4772
      %v4774 = vpop.f32.mrf.mxu0
      %v4775 = vadd.f32 %v4606, %v4774
      %4776 = vmatmul.bf16.gmra.mxu0 %v2395
      %v4777 = vpop.f32.mrf.mxu0
      %v4778 = vadd.f32 %v4609, %v4777
      %v4779 = vpop.f32.mrf.mxu0
      %v4780 = vadd.f32 %v4611, %v4779
      %4781 = vdwg.mxu0
      %4782 = vmatpush.bf16.msra.mxu0 0
      %4783 = vmatpush.bf16.msra.mxu0 0
      %4784 = vmatpush.bf16.msra.mxu0 0
      %4785 = vmatpush.bf16.msra.mxu0 0
      %4786 = vmatpush.bf16.msra.mxu0 %v3195
      %4787 = vmatpush.bf16.msra.mxu0 %v3193
      %4788 = vmatpush.bf16.msra.mxu0 %v3191
      %4789 = vmatpush.bf16.msra.mxu0 %v3189
      %4790 = vmatmul.bf16.gmra.mxu0 %v3335
      %v4791 = vpop.f32.mrf.mxu0
      %v4792 = vadd.f32 %v4623, %v4791
      %v4793 = vpop.f32.mrf.mxu0
      %v4794 = vadd.f32 %v4625, %v4793
      %4795 = vmatmul.bf16.gmra.mxu0 %v3338
      %v4796 = vpop.f32.mrf.mxu0
      %v4797 = vadd.f32 %v4628, %v4796
      %v4798 = vpop.f32.mrf.mxu0
      %v4799 = vadd.f32 %v4630, %v4798
      %4800 = vmatmul.bf16.gmra.mxu0 %v3341
      %v4801 = vpop.f32.mrf.mxu0
      %v4802 = vadd.f32 %v4633, %v4801
      %v4803 = vpop.f32.mrf.mxu0
      %v4804 = vadd.f32 %v4635, %v4803
      %4805 = vmatmul.bf16.gmra.mxu0 %v3344
      %v4806 = vpop.f32.mrf.mxu0
      %v4807 = vadd.f32 %v4638, %v4806
      %v4808 = vpop.f32.mrf.mxu0
      %v4809 = vadd.f32 %v4640, %v4808
      %4810 = vmatmul.bf16.gmra.mxu0 %v3347
      %v4811 = vpop.f32.mrf.mxu0
      %v4812 = vadd.f32 %v4643, %v4811
      %v4813 = vpop.f32.mrf.mxu0
      %v4814 = vadd.f32 %v4645, %v4813
      %4815 = vmatmul.bf16.gmra.mxu0 %v3350
      %v4816 = vpop.f32.mrf.mxu0
      %v4817 = vadd.f32 %v4648, %v4816
      %v4818 = vpop.f32.mrf.mxu0
      %v4819 = vadd.f32 %v4650, %v4818
      %4820 = vmatmul.bf16.gmra.mxu0 %v3353
      %v4821 = vpop.f32.mrf.mxu0
      %v4822 = vadd.f32 %v4653, %v4821
      %v4823 = vpop.f32.mrf.mxu0
      %v4824 = vadd.f32 %v4655, %v4823
      %4825 = vmatmul.bf16.gmra.mxu0 %v3356
      %v4826 = vpop.f32.mrf.mxu0
      %v4827 = vadd.f32 %v4658, %v4826
      %v4828 = vpop.f32.mrf.mxu0
      %v4829 = vadd.f32 %v4660, %v4828
      %4830 = vmatmul.bf16.gmra.mxu0 %v3359
      %v4831 = vpop.f32.mrf.mxu0
      %v4832 = vadd.f32 %v4663, %v4831
      %v4833 = vpop.f32.mrf.mxu0
      %v4834 = vadd.f32 %v4665, %v4833
      %4835 = vmatmul.bf16.gmra.mxu0 %v3362
      %v4836 = vpop.f32.mrf.mxu0
      %v4837 = vadd.f32 %v4668, %v4836
      %v4838 = vpop.f32.mrf.mxu0
      %v4839 = vadd.f32 %v4670, %v4838
      %4840 = vmatmul.bf16.gmra.mxu0 %v3365
      %v4841 = vpop.f32.mrf.mxu0
      %v4842 = vadd.f32 %v4673, %v4841
      %v4843 = vpop.f32.mrf.mxu0
      %v4844 = vadd.f32 %v4675, %v4843
      %4845 = vmatmul.bf16.gmra.mxu0 %v3368
      %v4846 = vpop.f32.mrf.mxu0
      %v4847 = vadd.f32 %v4678, %v4846
      %v4848 = vpop.f32.mrf.mxu0
      %v4849 = vadd.f32 %v4680, %v4848
      %4850 = vmatmul.bf16.gmra.mxu0 %v3371
      %v4851 = vpop.f32.mrf.mxu0
      %v4852 = vadd.f32 %v4683, %v4851
      %v4853 = vpop.f32.mrf.mxu0
      %v4854 = vadd.f32 %v4685, %v4853
      %4855 = vmatmul.bf16.gmra.mxu0 %v3374
      %v4856 = vpop.f32.mrf.mxu0
      %v4857 = vadd.f32 %v4688, %v4856
      %v4858 = vpop.f32.mrf.mxu0
      %v4859 = vadd.f32 %v4690, %v4858
      %4860 = vmatmul.bf16.gmra.mxu0 %v3377
      %v4861 = vpop.f32.mrf.mxu0
      %v4862 = vadd.f32 %v4693, %v4861
      %v4863 = vpop.f32.mrf.mxu0
      %v4864 = vadd.f32 %v4695, %v4863
      %4865 = vmatmul.bf16.gmra.mxu0 %v3380
      %v4866 = vpop.f32.mrf.mxu0
      %v4867 = vadd.f32 %v4698, %v4866
      %v4868 = vpop.f32.mrf.mxu0
      %v4869 = vadd.f32 %v4700, %v4868
      %4870 = vmatmul.bf16.gmra.mxu0 %v3383
      %v4871 = vpop.f32.mrf.mxu0
      %v4872 = vadd.f32 %v4703, %v4871
      %v4873 = vpop.f32.mrf.mxu0
      %v4874 = vadd.f32 %v4705, %v4873
      %4875 = vmatmul.bf16.gmra.mxu0 %v3386
      %v4876 = vpop.f32.mrf.mxu0
      %v4877 = vadd.f32 %v4708, %v4876
      %v4878 = vpop.f32.mrf.mxu0
      %v4879 = vadd.f32 %v4710, %v4878
      %4880 = vmatmul.bf16.gmra.mxu0 %v3389
      %v4881 = vpop.f32.mrf.mxu0
      %v4882 = vadd.f32 %v4713, %v4881
      %v4883 = vpop.f32.mrf.mxu0
      %v4884 = vadd.f32 %v4715, %v4883
      %4885 = vmatmul.bf16.gmra.mxu0 %v3392
      %v4886 = vpop.f32.mrf.mxu0
      %v4887 = vadd.f32 %v4718, %v4886
      %v4888 = vpop.f32.mrf.mxu0
      %v4889 = vadd.f32 %v4720, %v4888
      %4890 = vmatmul.bf16.gmra.mxu0 %v3395
      %v4891 = vpop.f32.mrf.mxu0
      %v4892 = vadd.f32 %v4723, %v4891
      %v4893 = vpop.f32.mrf.mxu0
      %v4894 = vadd.f32 %v4725, %v4893
      %4895 = vmatmul.bf16.gmra.mxu0 %v3398
      %v4896 = vpop.f32.mrf.mxu0
      %v4897 = vadd.f32 %v4728, %v4896
      %v4898 = vpop.f32.mrf.mxu0
      %v4899 = vadd.f32 %v4730, %v4898
      %4900 = vmatmul.bf16.gmra.mxu0 %v3401
      %v4901 = vpop.f32.mrf.mxu0
      %v4902 = vadd.f32 %v4733, %v4901
      %v4903 = vpop.f32.mrf.mxu0
      %v4904 = vadd.f32 %v4735, %v4903
      %4905 = vmatmul.bf16.gmra.mxu0 %v3404
      %v4906 = vpop.f32.mrf.mxu0
      %v4907 = vadd.f32 %v4738, %v4906
      %v4908 = vpop.f32.mrf.mxu0
      %v4909 = vadd.f32 %v4740, %v4908
      %4910 = vmatmul.bf16.gmra.mxu0 %v3407
      %v4911 = vpop.f32.mrf.mxu0
      %v4912 = vadd.f32 %v4743, %v4911
      %v4913 = vpop.f32.mrf.mxu0
      %v4914 = vadd.f32 %v4745, %v4913
      %4915 = vmatmul.bf16.gmra.mxu0 %v3410
      %v4916 = vpop.f32.mrf.mxu0
      %v4917 = vadd.f32 %v4748, %v4916
      %v4918 = vpop.f32.mrf.mxu0
      %v4919 = vadd.f32 %v4750, %v4918
      %4920 = vmatmul.bf16.gmra.mxu0 %v3413
      %v4921 = vpop.f32.mrf.mxu0
      %v4922 = vadd.f32 %v4753, %v4921
      %v4923 = vpop.f32.mrf.mxu0
      %v4924 = vadd.f32 %v4755, %v4923
      %4925 = vmatmul.bf16.gmra.mxu0 %v3416
      %v4926 = vpop.f32.mrf.mxu0
      %v4927 = vadd.f32 %v4758, %v4926
      %v4928 = vpop.f32.mrf.mxu0
      %v4929 = vadd.f32 %v4760, %v4928
      %4930 = vmatmul.bf16.gmra.mxu0 %v3419
      %v4931 = vpop.f32.mrf.mxu0
      %v4932 = vadd.f32 %v4763, %v4931
      %v4933 = vpop.f32.mrf.mxu0
      %v4934 = vadd.f32 %v4765, %v4933
      %4935 = vmatmul.bf16.gmra.mxu0 %v3422
      %v4936 = vpop.f32.mrf.mxu0
      %v4937 = vadd.f32 %v4768, %v4936
      %v4938 = vpop.f32.mrf.mxu0
      %v4939 = vadd.f32 %v4770, %v4938
      %4940 = vmatmul.bf16.gmra.mxu0 %v3425
      %v4941 = vpop.f32.mrf.mxu0
      %v4942 = vadd.f32 %v4773, %v4941
      %v4943 = vpop.f32.mrf.mxu0
      %v4944 = vadd.f32 %v4775, %v4943
      %4945 = vmatmul.bf16.gmra.mxu0 %v3428
      %v4946 = vpop.f32.mrf.mxu0
      %v4947 = vadd.f32 %v4778, %v4946
      %v4948 = vpop.f32.mrf.mxu0
      %v4949 = vadd.f32 %v4780, %v4948
      %4950 = vdwg.mxu0
      %4951 = vmatpush.bf16.msra.mxu0 %v3076
      %4952 = vmatpush.bf16.msra.mxu0 %v3074
      %4953 = vmatpush.bf16.msra.mxu0 %v3072
      %4954 = vmatpush.bf16.msra.mxu0 %v3070
      %4955 = vmatpush.bf16.msra.mxu0 %v3068
      %4956 = vmatpush.bf16.msra.mxu0 %v3066
      %4957 = vmatpush.bf16.msra.mxu0 %v3064
      %4958 = vmatpush.bf16.msra.mxu0 %v3062
      %4959 = vmatmul.bf16.gmra.mxu0 %v2109
      %v4960 = vpop.f32.mrf.mxu0
      %v4961 = vadd.f32 %v896, %v4960
      %v4962 = vpop.f32.mrf.mxu0
      %v4963 = vadd.f32 %v901, %v4962
      %4964 = vmatmul.bf16.gmra.mxu0 %v2118
      %v4965 = vpop.f32.mrf.mxu0
      %v4966 = vadd.f32 %v906, %v4965
      %v4967 = vpop.f32.mrf.mxu0
      %v4968 = vadd.f32 %v911, %v4967
      %4969 = vmatmul.bf16.gmra.mxu0 %v2127
      %v4970 = vpop.f32.mrf.mxu0
      %v4971 = vadd.f32 %v916, %v4970
      %v4972 = vpop.f32.mrf.mxu0
      %v4973 = vadd.f32 %v921, %v4972
      %4974 = vmatmul.bf16.gmra.mxu0 %v2136
      %v4975 = vpop.f32.mrf.mxu0
      %v4976 = vadd.f32 %v926, %v4975
      %v4977 = vpop.f32.mrf.mxu0
      %v4978 = vadd.f32 %v931, %v4977
      %4979 = vmatmul.bf16.gmra.mxu0 %v2145
      %v4980 = vpop.f32.mrf.mxu0
      %v4981 = vadd.f32 %v936, %v4980
      %v4982 = vpop.f32.mrf.mxu0
      %v4983 = vadd.f32 %v941, %v4982
      %4984 = vmatmul.bf16.gmra.mxu0 %v2154
      %v4985 = vpop.f32.mrf.mxu0
      %v4986 = vadd.f32 %v946, %v4985
      %v4987 = vpop.f32.mrf.mxu0
      %v4988 = vadd.f32 %v951, %v4987
      %4989 = vmatmul.bf16.gmra.mxu0 %v2163
      %v4990 = vpop.f32.mrf.mxu0
      %v4991 = vadd.f32 %v956, %v4990
      %v4992 = vpop.f32.mrf.mxu0
      %v4993 = vadd.f32 %v961, %v4992
      %4994 = vmatmul.bf16.gmra.mxu0 %v2172
      %v4995 = vpop.f32.mrf.mxu0
      %v4996 = vadd.f32 %v966, %v4995
      %v4997 = vpop.f32.mrf.mxu0
      %v4998 = vadd.f32 %v971, %v4997
      %4999 = vmatmul.bf16.gmra.mxu0 %v2181
      %v5000 = vpop.f32.mrf.mxu0
      %v5001 = vadd.f32 %v976, %v5000
      %v5002 = vpop.f32.mrf.mxu0
      %v5003 = vadd.f32 %v981, %v5002
      %5004 = vmatmul.bf16.gmra.mxu0 %v2190
      %v5005 = vpop.f32.mrf.mxu0
      %v5006 = vadd.f32 %v986, %v5005
      %v5007 = vpop.f32.mrf.mxu0
      %v5008 = vadd.f32 %v991, %v5007
      %5009 = vmatmul.bf16.gmra.mxu0 %v2199
      %v5010 = vpop.f32.mrf.mxu0
      %v5011 = vadd.f32 %v996, %v5010
      %v5012 = vpop.f32.mrf.mxu0
      %v5013 = vadd.f32 %v1001, %v5012
      %5014 = vmatmul.bf16.gmra.mxu0 %v2208
      %v5015 = vpop.f32.mrf.mxu0
      %v5016 = vadd.f32 %v1006, %v5015
      %v5017 = vpop.f32.mrf.mxu0
      %v5018 = vadd.f32 %v1011, %v5017
      %5019 = vmatmul.bf16.gmra.mxu0 %v2217
      %v5020 = vpop.f32.mrf.mxu0
      %v5021 = vadd.f32 %v1016, %v5020
      %v5022 = vpop.f32.mrf.mxu0
      %v5023 = vadd.f32 %v1021, %v5022
      %5024 = vmatmul.bf16.gmra.mxu0 %v2226
      %v5025 = vpop.f32.mrf.mxu0
      %v5026 = vadd.f32 %v1026, %v5025
      %v5027 = vpop.f32.mrf.mxu0
      %v5028 = vadd.f32 %v1031, %v5027
      %5029 = vmatmul.bf16.gmra.mxu0 %v2235
      %v5030 = vpop.f32.mrf.mxu0
      %v5031 = vadd.f32 %v1036, %v5030
      %v5032 = vpop.f32.mrf.mxu0
      %v5033 = vadd.f32 %v1041, %v5032
      %5034 = vmatmul.bf16.gmra.mxu0 %v2244
      %v5035 = vpop.f32.mrf.mxu0
      %v5036 = vadd.f32 %v1046, %v5035
      %v5037 = vpop.f32.mrf.mxu0
      %v5038 = vadd.f32 %v1051, %v5037
      %5039 = vmatmul.bf16.gmra.mxu0 %v2253
      %v5040 = vpop.f32.mrf.mxu0
      %v5041 = vadd.f32 %v1056, %v5040
      %v5042 = vpop.f32.mrf.mxu0
      %v5043 = vadd.f32 %v1061, %v5042
      %5044 = vmatmul.bf16.gmra.mxu0 %v2262
      %v5045 = vpop.f32.mrf.mxu0
      %v5046 = vadd.f32 %v1066, %v5045
      %v5047 = vpop.f32.mrf.mxu0
      %v5048 = vadd.f32 %v1071, %v5047
      %5049 = vmatmul.bf16.gmra.mxu0 %v2271
      %v5050 = vpop.f32.mrf.mxu0
      %v5051 = vadd.f32 %v1076, %v5050
      %v5052 = vpop.f32.mrf.mxu0
      %v5053 = vadd.f32 %v1081, %v5052
      %5054 = vmatmul.bf16.gmra.mxu0 %v2280
      %v5055 = vpop.f32.mrf.mxu0
      %v5056 = vadd.f32 %v1086, %v5055
      %v5057 = vpop.f32.mrf.mxu0
      %v5058 = vadd.f32 %v1091, %v5057
      %5059 = vmatmul.bf16.gmra.mxu0 %v2289
      %v5060 = vpop.f32.mrf.mxu0
      %v5061 = vadd.f32 %v1096, %v5060
      %v5062 = vpop.f32.mrf.mxu0
      %v5063 = vadd.f32 %v1101, %v5062
      %5064 = vmatmul.bf16.gmra.mxu0 %v2298
      %v5065 = vpop.f32.mrf.mxu0
      %v5066 = vadd.f32 %v1106, %v5065
      %v5067 = vpop.f32.mrf.mxu0
      %v5068 = vadd.f32 %v1111, %v5067
      %5069 = vmatmul.bf16.gmra.mxu0 %v2307
      %v5070 = vpop.f32.mrf.mxu0
      %v5071 = vadd.f32 %v1116, %v5070
      %v5072 = vpop.f32.mrf.mxu0
      %v5073 = vadd.f32 %v1121, %v5072
      %5074 = vmatmul.bf16.gmra.mxu0 %v2316
      %v5075 = vpop.f32.mrf.mxu0
      %v5076 = vadd.f32 %v1126, %v5075
      %v5077 = vpop.f32.mrf.mxu0
      %v5078 = vadd.f32 %v1131, %v5077
      %5079 = vmatmul.bf16.gmra.mxu0 %v2325
      %v5080 = vpop.f32.mrf.mxu0
      %v5081 = vadd.f32 %v1136, %v5080
      %v5082 = vpop.f32.mrf.mxu0
      %v5083 = vadd.f32 %v1141, %v5082
      %5084 = vmatmul.bf16.gmra.mxu0 %v2334
      %v5085 = vpop.f32.mrf.mxu0
      %v5086 = vadd.f32 %v1146, %v5085
      %v5087 = vpop.f32.mrf.mxu0
      %v5088 = vadd.f32 %v1151, %v5087
      %5089 = vmatmul.bf16.gmra.mxu0 %v2343
      %v5090 = vpop.f32.mrf.mxu0
      %v5091 = vadd.f32 %v1156, %v5090
      %v5092 = vpop.f32.mrf.mxu0
      %v5093 = vadd.f32 %v1161, %v5092
      %5094 = vmatmul.bf16.gmra.mxu0 %v2352
      %v5095 = vpop.f32.mrf.mxu0
      %v5096 = vadd.f32 %v1166, %v5095
      %v5097 = vpop.f32.mrf.mxu0
      %v5098 = vadd.f32 %v1171, %v5097
      %5099 = vmatmul.bf16.gmra.mxu0 %v2361
      %v5100 = vpop.f32.mrf.mxu0
      %v5101 = vadd.f32 %v1176, %v5100
      %v5102 = vpop.f32.mrf.mxu0
      %v5103 = vadd.f32 %v1181, %v5102
      %5104 = vmatmul.bf16.gmra.mxu0 %v2370
      %v5105 = vpop.f32.mrf.mxu0
      %v5106 = vadd.f32 %v1186, %v5105
      %v5107 = vpop.f32.mrf.mxu0
      %v5108 = vadd.f32 %v1191, %v5107
      %5109 = vmatmul.bf16.gmra.mxu0 %v2379
      %v5110 = vpop.f32.mrf.mxu0
      %v5111 = vadd.f32 %v1196, %v5110
      %v5112 = vpop.f32.mrf.mxu0
      %v5113 = vadd.f32 %v1201, %v5112
      %5114 = vmatmul.bf16.gmra.mxu0 %v2388
      %v5115 = vpop.f32.mrf.mxu0
      %v5116 = vadd.f32 %v1206, %v5115
      %v5117 = vpop.f32.mrf.mxu0
      %v5118 = vadd.f32 %v1211, %v5117
      %5119 = vdwg.mxu0
      %5120 = vmatpush.bf16.msra.mxu0 %v3092
      %5121 = vmatpush.bf16.msra.mxu0 %v3090
      %5122 = vmatpush.bf16.msra.mxu0 %v3088
      %5123 = vmatpush.bf16.msra.mxu0 %v3086
      %5124 = vmatpush.bf16.msra.mxu0 %v3084
      %5125 = vmatpush.bf16.msra.mxu0 %v3082
      %5126 = vmatpush.bf16.msra.mxu0 %v3080
      %5127 = vmatpush.bf16.msra.mxu0 %v3078
      %5128 = vmatmul.bf16.gmra.mxu0 %v2110
      %v5129 = vpop.f32.mrf.mxu0
      %v5130 = vadd.f32 %v4961, %v5129
      %v5131 = vpop.f32.mrf.mxu0
      %v5132 = vadd.f32 %v4963, %v5131
      %5133 = vmatmul.bf16.gmra.mxu0 %v2119
      %v5134 = vpop.f32.mrf.mxu0
      %v5135 = vadd.f32 %v4966, %v5134
      %v5136 = vpop.f32.mrf.mxu0
      %v5137 = vadd.f32 %v4968, %v5136
      %5138 = vmatmul.bf16.gmra.mxu0 %v2128
      %v5139 = vpop.f32.mrf.mxu0
      %v5140 = vadd.f32 %v4971, %v5139
      %v5141 = vpop.f32.mrf.mxu0
      %v5142 = vadd.f32 %v4973, %v5141
      %5143 = vmatmul.bf16.gmra.mxu0 %v2137
      %v5144 = vpop.f32.mrf.mxu0
      %v5145 = vadd.f32 %v4976, %v5144
      %v5146 = vpop.f32.mrf.mxu0
      %v5147 = vadd.f32 %v4978, %v5146
      %5148 = vmatmul.bf16.gmra.mxu0 %v2146
      %v5149 = vpop.f32.mrf.mxu0
      %v5150 = vadd.f32 %v4981, %v5149
      %v5151 = vpop.f32.mrf.mxu0
      %v5152 = vadd.f32 %v4983, %v5151
      %5153 = vmatmul.bf16.gmra.mxu0 %v2155
      %v5154 = vpop.f32.mrf.mxu0
      %v5155 = vadd.f32 %v4986, %v5154
      %v5156 = vpop.f32.mrf.mxu0
      %v5157 = vadd.f32 %v4988, %v5156
      %5158 = vmatmul.bf16.gmra.mxu0 %v2164
      %v5159 = vpop.f32.mrf.mxu0
      %v5160 = vadd.f32 %v4991, %v5159
      %v5161 = vpop.f32.mrf.mxu0
      %v5162 = vadd.f32 %v4993, %v5161
      %5163 = vmatmul.bf16.gmra.mxu0 %v2173
      %v5164 = vpop.f32.mrf.mxu0
      %v5165 = vadd.f32 %v4996, %v5164
      %v5166 = vpop.f32.mrf.mxu0
      %v5167 = vadd.f32 %v4998, %v5166
      %5168 = vmatmul.bf16.gmra.mxu0 %v2182
      %v5169 = vpop.f32.mrf.mxu0
      %v5170 = vadd.f32 %v5001, %v5169
      %v5171 = vpop.f32.mrf.mxu0
      %v5172 = vadd.f32 %v5003, %v5171
      %5173 = vmatmul.bf16.gmra.mxu0 %v2191
      %v5174 = vpop.f32.mrf.mxu0
      %v5175 = vadd.f32 %v5006, %v5174
      %v5176 = vpop.f32.mrf.mxu0
      %v5177 = vadd.f32 %v5008, %v5176
      %5178 = vmatmul.bf16.gmra.mxu0 %v2200
      %v5179 = vpop.f32.mrf.mxu0
      %v5180 = vadd.f32 %v5011, %v5179
      %v5181 = vpop.f32.mrf.mxu0
      %v5182 = vadd.f32 %v5013, %v5181
      %5183 = vmatmul.bf16.gmra.mxu0 %v2209
      %v5184 = vpop.f32.mrf.mxu0
      %v5185 = vadd.f32 %v5016, %v5184
      %v5186 = vpop.f32.mrf.mxu0
      %v5187 = vadd.f32 %v5018, %v5186
      %5188 = vmatmul.bf16.gmra.mxu0 %v2218
      %v5189 = vpop.f32.mrf.mxu0
      %v5190 = vadd.f32 %v5021, %v5189
      %v5191 = vpop.f32.mrf.mxu0
      %v5192 = vadd.f32 %v5023, %v5191
      %5193 = vmatmul.bf16.gmra.mxu0 %v2227
      %v5194 = vpop.f32.mrf.mxu0
      %v5195 = vadd.f32 %v5026, %v5194
      %v5196 = vpop.f32.mrf.mxu0
      %v5197 = vadd.f32 %v5028, %v5196
      %5198 = vmatmul.bf16.gmra.mxu0 %v2236
      %v5199 = vpop.f32.mrf.mxu0
      %v5200 = vadd.f32 %v5031, %v5199
      %v5201 = vpop.f32.mrf.mxu0
      %v5202 = vadd.f32 %v5033, %v5201
      %5203 = vmatmul.bf16.gmra.mxu0 %v2245
      %v5204 = vpop.f32.mrf.mxu0
      %v5205 = vadd.f32 %v5036, %v5204
      %v5206 = vpop.f32.mrf.mxu0
      %v5207 = vadd.f32 %v5038, %v5206
      %5208 = vmatmul.bf16.gmra.mxu0 %v2254
      %v5209 = vpop.f32.mrf.mxu0
      %v5210 = vadd.f32 %v5041, %v5209
      %v5211 = vpop.f32.mrf.mxu0
      %v5212 = vadd.f32 %v5043, %v5211
      %5213 = vmatmul.bf16.gmra.mxu0 %v2263
      %v5214 = vpop.f32.mrf.mxu0
      %v5215 = vadd.f32 %v5046, %v5214
      %v5216 = vpop.f32.mrf.mxu0
      %v5217 = vadd.f32 %v5048, %v5216
      %5218 = vmatmul.bf16.gmra.mxu0 %v2272
      %v5219 = vpop.f32.mrf.mxu0
      %v5220 = vadd.f32 %v5051, %v5219
      %v5221 = vpop.f32.mrf.mxu0
      %v5222 = vadd.f32 %v5053, %v5221
      %5223 = vmatmul.bf16.gmra.mxu0 %v2281
      %v5224 = vpop.f32.mrf.mxu0
      %v5225 = vadd.f32 %v5056, %v5224
      %v5226 = vpop.f32.mrf.mxu0
      %v5227 = vadd.f32 %v5058, %v5226
      %5228 = vmatmul.bf16.gmra.mxu0 %v2290
      %v5229 = vpop.f32.mrf.mxu0
      %v5230 = vadd.f32 %v5061, %v5229
      %v5231 = vpop.f32.mrf.mxu0
      %v5232 = vadd.f32 %v5063, %v5231
      %5233 = vmatmul.bf16.gmra.mxu0 %v2299
      %v5234 = vpop.f32.mrf.mxu0
      %v5235 = vadd.f32 %v5066, %v5234
      %v5236 = vpop.f32.mrf.mxu0
      %v5237 = vadd.f32 %v5068, %v5236
      %5238 = vmatmul.bf16.gmra.mxu0 %v2308
      %v5239 = vpop.f32.mrf.mxu0
      %v5240 = vadd.f32 %v5071, %v5239
      %v5241 = vpop.f32.mrf.mxu0
      %v5242 = vadd.f32 %v5073, %v5241
      %5243 = vmatmul.bf16.gmra.mxu0 %v2317
      %v5244 = vpop.f32.mrf.mxu0
      %v5245 = vadd.f32 %v5076, %v5244
      %v5246 = vpop.f32.mrf.mxu0
      %v5247 = vadd.f32 %v5078, %v5246
      %5248 = vmatmul.bf16.gmra.mxu0 %v2326
      %v5249 = vpop.f32.mrf.mxu0
      %v5250 = vadd.f32 %v5081, %v5249
      %v5251 = vpop.f32.mrf.mxu0
      %v5252 = vadd.f32 %v5083, %v5251
      %5253 = vmatmul.bf16.gmra.mxu0 %v2335
      %v5254 = vpop.f32.mrf.mxu0
      %v5255 = vadd.f32 %v5086, %v5254
      %v5256 = vpop.f32.mrf.mxu0
      %v5257 = vadd.f32 %v5088, %v5256
      %5258 = vmatmul.bf16.gmra.mxu0 %v2344
      %v5259 = vpop.f32.mrf.mxu0
      %v5260 = vadd.f32 %v5091, %v5259
      %v5261 = vpop.f32.mrf.mxu0
      %v5262 = vadd.f32 %v5093, %v5261
      %5263 = vmatmul.bf16.gmra.mxu0 %v2353
      %v5264 = vpop.f32.mrf.mxu0
      %v5265 = vadd.f32 %v5096, %v5264
      %v5266 = vpop.f32.mrf.mxu0
      %v5267 = vadd.f32 %v5098, %v5266
      %5268 = vmatmul.bf16.gmra.mxu0 %v2362
      %v5269 = vpop.f32.mrf.mxu0
      %v5270 = vadd.f32 %v5101, %v5269
      %v5271 = vpop.f32.mrf.mxu0
      %v5272 = vadd.f32 %v5103, %v5271
      %5273 = vmatmul.bf16.gmra.mxu0 %v2371
      %v5274 = vpop.f32.mrf.mxu0
      %v5275 = vadd.f32 %v5106, %v5274
      %v5276 = vpop.f32.mrf.mxu0
      %v5277 = vadd.f32 %v5108, %v5276
      %5278 = vmatmul.bf16.gmra.mxu0 %v2380
      %v5279 = vpop.f32.mrf.mxu0
      %v5280 = vadd.f32 %v5111, %v5279
      %v5281 = vpop.f32.mrf.mxu0
      %v5282 = vadd.f32 %v5113, %v5281
      %5283 = vmatmul.bf16.gmra.mxu0 %v2389
      %v5284 = vpop.f32.mrf.mxu0
      %v5285 = vadd.f32 %v5116, %v5284
      %v5286 = vpop.f32.mrf.mxu0
      %v5287 = vadd.f32 %v5118, %v5286
      %5288 = vdwg.mxu0
      %5289 = vmatpush.bf16.msra.mxu0 %v3108
      %5290 = vmatpush.bf16.msra.mxu0 %v3106
      %5291 = vmatpush.bf16.msra.mxu0 %v3104
      %5292 = vmatpush.bf16.msra.mxu0 %v3102
      %5293 = vmatpush.bf16.msra.mxu0 %v3100
      %5294 = vmatpush.bf16.msra.mxu0 %v3098
      %5295 = vmatpush.bf16.msra.mxu0 %v3096
      %5296 = vmatpush.bf16.msra.mxu0 %v3094
      %5297 = vmatmul.bf16.gmra.mxu0 %v2111
      %v5298 = vpop.f32.mrf.mxu0
      %v5299 = vadd.f32 %v5130, %v5298
      %v5300 = vpop.f32.mrf.mxu0
      %v5301 = vadd.f32 %v5132, %v5300
      %5302 = vmatmul.bf16.gmra.mxu0 %v2120
      %v5303 = vpop.f32.mrf.mxu0
      %v5304 = vadd.f32 %v5135, %v5303
      %v5305 = vpop.f32.mrf.mxu0
      %v5306 = vadd.f32 %v5137, %v5305
      %5307 = vmatmul.bf16.gmra.mxu0 %v2129
      %v5308 = vpop.f32.mrf.mxu0
      %v5309 = vadd.f32 %v5140, %v5308
      %v5310 = vpop.f32.mrf.mxu0
      %v5311 = vadd.f32 %v5142, %v5310
      %5312 = vmatmul.bf16.gmra.mxu0 %v2138
      %v5313 = vpop.f32.mrf.mxu0
      %v5314 = vadd.f32 %v5145, %v5313
      %v5315 = vpop.f32.mrf.mxu0
      %v5316 = vadd.f32 %v5147, %v5315
      %5317 = vmatmul.bf16.gmra.mxu0 %v2147
      %v5318 = vpop.f32.mrf.mxu0
      %v5319 = vadd.f32 %v5150, %v5318
      %v5320 = vpop.f32.mrf.mxu0
      %v5321 = vadd.f32 %v5152, %v5320
      %5322 = vmatmul.bf16.gmra.mxu0 %v2156
      %v5323 = vpop.f32.mrf.mxu0
      %v5324 = vadd.f32 %v5155, %v5323
      %v5325 = vpop.f32.mrf.mxu0
      %v5326 = vadd.f32 %v5157, %v5325
      %5327 = vmatmul.bf16.gmra.mxu0 %v2165
      %v5328 = vpop.f32.mrf.mxu0
      %v5329 = vadd.f32 %v5160, %v5328
      %v5330 = vpop.f32.mrf.mxu0
      %v5331 = vadd.f32 %v5162, %v5330
      %5332 = vmatmul.bf16.gmra.mxu0 %v2174
      %v5333 = vpop.f32.mrf.mxu0
      %v5334 = vadd.f32 %v5165, %v5333
      %v5335 = vpop.f32.mrf.mxu0
      %v5336 = vadd.f32 %v5167, %v5335
      %5337 = vmatmul.bf16.gmra.mxu0 %v2183
      %v5338 = vpop.f32.mrf.mxu0
      %v5339 = vadd.f32 %v5170, %v5338
      %v5340 = vpop.f32.mrf.mxu0
      %v5341 = vadd.f32 %v5172, %v5340
      %5342 = vmatmul.bf16.gmra.mxu0 %v2192
      %v5343 = vpop.f32.mrf.mxu0
      %v5344 = vadd.f32 %v5175, %v5343
      %v5345 = vpop.f32.mrf.mxu0
      %v5346 = vadd.f32 %v5177, %v5345
      %5347 = vmatmul.bf16.gmra.mxu0 %v2201
      %v5348 = vpop.f32.mrf.mxu0
      %v5349 = vadd.f32 %v5180, %v5348
      %v5350 = vpop.f32.mrf.mxu0
      %v5351 = vadd.f32 %v5182, %v5350
      %5352 = vmatmul.bf16.gmra.mxu0 %v2210
      %v5353 = vpop.f32.mrf.mxu0
      %v5354 = vadd.f32 %v5185, %v5353
      %v5355 = vpop.f32.mrf.mxu0
      %v5356 = vadd.f32 %v5187, %v5355
      %5357 = vmatmul.bf16.gmra.mxu0 %v2219
      %v5358 = vpop.f32.mrf.mxu0
      %v5359 = vadd.f32 %v5190, %v5358
      %v5360 = vpop.f32.mrf.mxu0
      %v5361 = vadd.f32 %v5192, %v5360
      %5362 = vmatmul.bf16.gmra.mxu0 %v2228
      %v5363 = vpop.f32.mrf.mxu0
      %v5364 = vadd.f32 %v5195, %v5363
      %v5365 = vpop.f32.mrf.mxu0
      %v5366 = vadd.f32 %v5197, %v5365
      %5367 = vmatmul.bf16.gmra.mxu0 %v2237
      %v5368 = vpop.f32.mrf.mxu0
      %v5369 = vadd.f32 %v5200, %v5368
      %v5370 = vpop.f32.mrf.mxu0
      %v5371 = vadd.f32 %v5202, %v5370
      %5372 = vmatmul.bf16.gmra.mxu0 %v2246
      %v5373 = vpop.f32.mrf.mxu0
      %v5374 = vadd.f32 %v5205, %v5373
      %v5375 = vpop.f32.mrf.mxu0
      %v5376 = vadd.f32 %v5207, %v5375
      %5377 = vmatmul.bf16.gmra.mxu0 %v2255
      %v5378 = vpop.f32.mrf.mxu0
      %v5379 = vadd.f32 %v5210, %v5378
      %v5380 = vpop.f32.mrf.mxu0
      %v5381 = vadd.f32 %v5212, %v5380
      %5382 = vmatmul.bf16.gmra.mxu0 %v2264
      %v5383 = vpop.f32.mrf.mxu0
      %v5384 = vadd.f32 %v5215, %v5383
      %v5385 = vpop.f32.mrf.mxu0
      %v5386 = vadd.f32 %v5217, %v5385
      %5387 = vmatmul.bf16.gmra.mxu0 %v2273
      %v5388 = vpop.f32.mrf.mxu0
      %v5389 = vadd.f32 %v5220, %v5388
      %v5390 = vpop.f32.mrf.mxu0
      %v5391 = vadd.f32 %v5222, %v5390
      %5392 = vmatmul.bf16.gmra.mxu0 %v2282
      %v5393 = vpop.f32.mrf.mxu0
      %v5394 = vadd.f32 %v5225, %v5393
      %v5395 = vpop.f32.mrf.mxu0
      %v5396 = vadd.f32 %v5227, %v5395
      %5397 = vmatmul.bf16.gmra.mxu0 %v2291
      %v5398 = vpop.f32.mrf.mxu0
      %v5399 = vadd.f32 %v5230, %v5398
      %v5400 = vpop.f32.mrf.mxu0
      %v5401 = vadd.f32 %v5232, %v5400
      %5402 = vmatmul.bf16.gmra.mxu0 %v2300
      %v5403 = vpop.f32.mrf.mxu0
      %v5404 = vadd.f32 %v5235, %v5403
      %v5405 = vpop.f32.mrf.mxu0
      %v5406 = vadd.f32 %v5237, %v5405
      %5407 = vmatmul.bf16.gmra.mxu0 %v2309
      %v5408 = vpop.f32.mrf.mxu0
      %v5409 = vadd.f32 %v5240, %v5408
      %v5410 = vpop.f32.mrf.mxu0
      %v5411 = vadd.f32 %v5242, %v5410
      %5412 = vmatmul.bf16.gmra.mxu0 %v2318
      %v5413 = vpop.f32.mrf.mxu0
      %v5414 = vadd.f32 %v5245, %v5413
      %v5415 = vpop.f32.mrf.mxu0
      %v5416 = vadd.f32 %v5247, %v5415
      %5417 = vmatmul.bf16.gmra.mxu0 %v2327
      %v5418 = vpop.f32.mrf.mxu0
      %v5419 = vadd.f32 %v5250, %v5418
      %v5420 = vpop.f32.mrf.mxu0
      %v5421 = vadd.f32 %v5252, %v5420
      %5422 = vmatmul.bf16.gmra.mxu0 %v2336
      %v5423 = vpop.f32.mrf.mxu0
      %v5424 = vadd.f32 %v5255, %v5423
      %v5425 = vpop.f32.mrf.mxu0
      %v5426 = vadd.f32 %v5257, %v5425
      %5427 = vmatmul.bf16.gmra.mxu0 %v2345
      %v5428 = vpop.f32.mrf.mxu0
      %v5429 = vadd.f32 %v5260, %v5428
      %v5430 = vpop.f32.mrf.mxu0
      %v5431 = vadd.f32 %v5262, %v5430
      %5432 = vmatmul.bf16.gmra.mxu0 %v2354
      %v5433 = vpop.f32.mrf.mxu0
      %v5434 = vadd.f32 %v5265, %v5433
      %v5435 = vpop.f32.mrf.mxu0
      %v5436 = vadd.f32 %v5267, %v5435
      %5437 = vmatmul.bf16.gmra.mxu0 %v2363
      %v5438 = vpop.f32.mrf.mxu0
      %v5439 = vadd.f32 %v5270, %v5438
      %v5440 = vpop.f32.mrf.mxu0
      %v5441 = vadd.f32 %v5272, %v5440
      %5442 = vmatmul.bf16.gmra.mxu0 %v2372
      %v5443 = vpop.f32.mrf.mxu0
      %v5444 = vadd.f32 %v5275, %v5443
      %v5445 = vpop.f32.mrf.mxu0
      %v5446 = vadd.f32 %v5277, %v5445
      %5447 = vmatmul.bf16.gmra.mxu0 %v2381
      %v5448 = vpop.f32.mrf.mxu0
      %v5449 = vadd.f32 %v5280, %v5448
      %v5450 = vpop.f32.mrf.mxu0
      %v5451 = vadd.f32 %v5282, %v5450
      %5452 = vmatmul.bf16.gmra.mxu0 %v2390
      %v5453 = vpop.f32.mrf.mxu0
      %v5454 = vadd.f32 %v5285, %v5453
      %v5455 = vpop.f32.mrf.mxu0
      %v5456 = vadd.f32 %v5287, %v5455
      %5457 = vdwg.mxu0
      %5458 = vmatpush.bf16.msra.mxu0 %v3124
      %5459 = vmatpush.bf16.msra.mxu0 %v3122
      %5460 = vmatpush.bf16.msra.mxu0 %v3120
      %5461 = vmatpush.bf16.msra.mxu0 %v3118
      %5462 = vmatpush.bf16.msra.mxu0 %v3116
      %5463 = vmatpush.bf16.msra.mxu0 %v3114
      %5464 = vmatpush.bf16.msra.mxu0 %v3112
      %5465 = vmatpush.bf16.msra.mxu0 %v3110
      %5466 = vmatmul.bf16.gmra.mxu0 %v2112
      %v5467 = vpop.f32.mrf.mxu0
      %v5468 = vadd.f32 %v5299, %v5467
      %v5469 = vpop.f32.mrf.mxu0
      %v5470 = vadd.f32 %v5301, %v5469
      %5471 = vmatmul.bf16.gmra.mxu0 %v2121
      %v5472 = vpop.f32.mrf.mxu0
      %v5473 = vadd.f32 %v5304, %v5472
      %v5474 = vpop.f32.mrf.mxu0
      %v5475 = vadd.f32 %v5306, %v5474
      %5476 = vmatmul.bf16.gmra.mxu0 %v2130
      %v5477 = vpop.f32.mrf.mxu0
      %v5478 = vadd.f32 %v5309, %v5477
      %v5479 = vpop.f32.mrf.mxu0
      %v5480 = vadd.f32 %v5311, %v5479
      %5481 = vmatmul.bf16.gmra.mxu0 %v2139
      %v5482 = vpop.f32.mrf.mxu0
      %v5483 = vadd.f32 %v5314, %v5482
      %v5484 = vpop.f32.mrf.mxu0
      %v5485 = vadd.f32 %v5316, %v5484
      %5486 = vmatmul.bf16.gmra.mxu0 %v2148
      %v5487 = vpop.f32.mrf.mxu0
      %v5488 = vadd.f32 %v5319, %v5487
      %v5489 = vpop.f32.mrf.mxu0
      %v5490 = vadd.f32 %v5321, %v5489
      %5491 = vmatmul.bf16.gmra.mxu0 %v2157
      %v5492 = vpop.f32.mrf.mxu0
      %v5493 = vadd.f32 %v5324, %v5492
      %v5494 = vpop.f32.mrf.mxu0
      %v5495 = vadd.f32 %v5326, %v5494
      %5496 = vmatmul.bf16.gmra.mxu0 %v2166
      %v5497 = vpop.f32.mrf.mxu0
      %v5498 = vadd.f32 %v5329, %v5497
      %v5499 = vpop.f32.mrf.mxu0
      %v5500 = vadd.f32 %v5331, %v5499
      %5501 = vmatmul.bf16.gmra.mxu0 %v2175
      %v5502 = vpop.f32.mrf.mxu0
      %v5503 = vadd.f32 %v5334, %v5502
      %v5504 = vpop.f32.mrf.mxu0
      %v5505 = vadd.f32 %v5336, %v5504
      %5506 = vmatmul.bf16.gmra.mxu0 %v2184
      %v5507 = vpop.f32.mrf.mxu0
      %v5508 = vadd.f32 %v5339, %v5507
      %v5509 = vpop.f32.mrf.mxu0
      %v5510 = vadd.f32 %v5341, %v5509
      %5511 = vmatmul.bf16.gmra.mxu0 %v2193
      %v5512 = vpop.f32.mrf.mxu0
      %v5513 = vadd.f32 %v5344, %v5512
      %v5514 = vpop.f32.mrf.mxu0
      %v5515 = vadd.f32 %v5346, %v5514
      %5516 = vmatmul.bf16.gmra.mxu0 %v2202
      %v5517 = vpop.f32.mrf.mxu0
      %v5518 = vadd.f32 %v5349, %v5517
      %v5519 = vpop.f32.mrf.mxu0
      %v5520 = vadd.f32 %v5351, %v5519
      %5521 = vmatmul.bf16.gmra.mxu0 %v2211
      %v5522 = vpop.f32.mrf.mxu0
      %v5523 = vadd.f32 %v5354, %v5522
      %v5524 = vpop.f32.mrf.mxu0
      %v5525 = vadd.f32 %v5356, %v5524
      %5526 = vmatmul.bf16.gmra.mxu0 %v2220
      %v5527 = vpop.f32.mrf.mxu0
      %v5528 = vadd.f32 %v5359, %v5527
      %v5529 = vpop.f32.mrf.mxu0
      %v5530 = vadd.f32 %v5361, %v5529
      %5531 = vmatmul.bf16.gmra.mxu0 %v2229
      %v5532 = vpop.f32.mrf.mxu0
      %v5533 = vadd.f32 %v5364, %v5532
      %v5534 = vpop.f32.mrf.mxu0
      %v5535 = vadd.f32 %v5366, %v5534
      %5536 = vmatmul.bf16.gmra.mxu0 %v2238
      %v5537 = vpop.f32.mrf.mxu0
      %v5538 = vadd.f32 %v5369, %v5537
      %v5539 = vpop.f32.mrf.mxu0
      %v5540 = vadd.f32 %v5371, %v5539
      %5541 = vmatmul.bf16.gmra.mxu0 %v2247
      %v5542 = vpop.f32.mrf.mxu0
      %v5543 = vadd.f32 %v5374, %v5542
      %v5544 = vpop.f32.mrf.mxu0
      %v5545 = vadd.f32 %v5376, %v5544
      %5546 = vmatmul.bf16.gmra.mxu0 %v2256
      %v5547 = vpop.f32.mrf.mxu0
      %v5548 = vadd.f32 %v5379, %v5547
      %v5549 = vpop.f32.mrf.mxu0
      %v5550 = vadd.f32 %v5381, %v5549
      %5551 = vmatmul.bf16.gmra.mxu0 %v2265
      %v5552 = vpop.f32.mrf.mxu0
      %v5553 = vadd.f32 %v5384, %v5552
      %v5554 = vpop.f32.mrf.mxu0
      %v5555 = vadd.f32 %v5386, %v5554
      %5556 = vmatmul.bf16.gmra.mxu0 %v2274
      %v5557 = vpop.f32.mrf.mxu0
      %v5558 = vadd.f32 %v5389, %v5557
      %v5559 = vpop.f32.mrf.mxu0
      %v5560 = vadd.f32 %v5391, %v5559
      %5561 = vmatmul.bf16.gmra.mxu0 %v2283
      %v5562 = vpop.f32.mrf.mxu0
      %v5563 = vadd.f32 %v5394, %v5562
      %v5564 = vpop.f32.mrf.mxu0
      %v5565 = vadd.f32 %v5396, %v5564
      %5566 = vmatmul.bf16.gmra.mxu0 %v2292
      %v5567 = vpop.f32.mrf.mxu0
      %v5568 = vadd.f32 %v5399, %v5567
      %v5569 = vpop.f32.mrf.mxu0
      %v5570 = vadd.f32 %v5401, %v5569
      %5571 = vmatmul.bf16.gmra.mxu0 %v2301
      %v5572 = vpop.f32.mrf.mxu0
      %v5573 = vadd.f32 %v5404, %v5572
      %v5574 = vpop.f32.mrf.mxu0
      %v5575 = vadd.f32 %v5406, %v5574
      %5576 = vmatmul.bf16.gmra.mxu0 %v2310
      %v5577 = vpop.f32.mrf.mxu0
      %v5578 = vadd.f32 %v5409, %v5577
      %v5579 = vpop.f32.mrf.mxu0
      %v5580 = vadd.f32 %v5411, %v5579
      %5581 = vmatmul.bf16.gmra.mxu0 %v2319
      %v5582 = vpop.f32.mrf.mxu0
      %v5583 = vadd.f32 %v5414, %v5582
      %v5584 = vpop.f32.mrf.mxu0
      %v5585 = vadd.f32 %v5416, %v5584
      %5586 = vmatmul.bf16.gmra.mxu0 %v2328
      %v5587 = vpop.f32.mrf.mxu0
      %v5588 = vadd.f32 %v5419, %v5587
      %v5589 = vpop.f32.mrf.mxu0
      %v5590 = vadd.f32 %v5421, %v5589
      %5591 = vmatmul.bf16.gmra.mxu0 %v2337
      %v5592 = vpop.f32.mrf.mxu0
      %v5593 = vadd.f32 %v5424, %v5592
      %v5594 = vpop.f32.mrf.mxu0
      %v5595 = vadd.f32 %v5426, %v5594
      %5596 = vmatmul.bf16.gmra.mxu0 %v2346
      %v5597 = vpop.f32.mrf.mxu0
      %v5598 = vadd.f32 %v5429, %v5597
      %v5599 = vpop.f32.mrf.mxu0
      %v5600 = vadd.f32 %v5431, %v5599
      %5601 = vmatmul.bf16.gmra.mxu0 %v2355
      %v5602 = vpop.f32.mrf.mxu0
      %v5603 = vadd.f32 %v5434, %v5602
      %v5604 = vpop.f32.mrf.mxu0
      %v5605 = vadd.f32 %v5436, %v5604
      %5606 = vmatmul.bf16.gmra.mxu0 %v2364
      %v5607 = vpop.f32.mrf.mxu0
      %v5608 = vadd.f32 %v5439, %v5607
      %v5609 = vpop.f32.mrf.mxu0
      %v5610 = vadd.f32 %v5441, %v5609
      %5611 = vmatmul.bf16.gmra.mxu0 %v2373
      %v5612 = vpop.f32.mrf.mxu0
      %v5613 = vadd.f32 %v5444, %v5612
      %v5614 = vpop.f32.mrf.mxu0
      %v5615 = vadd.f32 %v5446, %v5614
      %5616 = vmatmul.bf16.gmra.mxu0 %v2382
      %v5617 = vpop.f32.mrf.mxu0
      %v5618 = vadd.f32 %v5449, %v5617
      %v5619 = vpop.f32.mrf.mxu0
      %v5620 = vadd.f32 %v5451, %v5619
      %5621 = vmatmul.bf16.gmra.mxu0 %v2391
      %v5622 = vpop.f32.mrf.mxu0
      %v5623 = vadd.f32 %v5454, %v5622
      %v5624 = vpop.f32.mrf.mxu0
      %v5625 = vadd.f32 %v5456, %v5624
      %5626 = vdwg.mxu0
      %5627 = vmatpush.bf16.msra.mxu0 %v3140
      %5628 = vmatpush.bf16.msra.mxu0 %v3138
      %5629 = vmatpush.bf16.msra.mxu0 %v3136
      %5630 = vmatpush.bf16.msra.mxu0 %v3134
      %5631 = vmatpush.bf16.msra.mxu0 %v3132
      %5632 = vmatpush.bf16.msra.mxu0 %v3130
      %5633 = vmatpush.bf16.msra.mxu0 %v3128
      %5634 = vmatpush.bf16.msra.mxu0 %v3126
      %5635 = vmatmul.bf16.gmra.mxu0 %v2113
      %v5636 = vpop.f32.mrf.mxu0
      %v5637 = vadd.f32 %v5468, %v5636
      %v5638 = vpop.f32.mrf.mxu0
      %v5639 = vadd.f32 %v5470, %v5638
      %5640 = vmatmul.bf16.gmra.mxu0 %v2122
      %v5641 = vpop.f32.mrf.mxu0
      %v5642 = vadd.f32 %v5473, %v5641
      %v5643 = vpop.f32.mrf.mxu0
      %v5644 = vadd.f32 %v5475, %v5643
      %5645 = vmatmul.bf16.gmra.mxu0 %v2131
      %v5646 = vpop.f32.mrf.mxu0
      %v5647 = vadd.f32 %v5478, %v5646
      %v5648 = vpop.f32.mrf.mxu0
      %v5649 = vadd.f32 %v5480, %v5648
      %5650 = vmatmul.bf16.gmra.mxu0 %v2140
      %v5651 = vpop.f32.mrf.mxu0
      %v5652 = vadd.f32 %v5483, %v5651
      %v5653 = vpop.f32.mrf.mxu0
      %v5654 = vadd.f32 %v5485, %v5653
      %5655 = vmatmul.bf16.gmra.mxu0 %v2149
      %v5656 = vpop.f32.mrf.mxu0
      %v5657 = vadd.f32 %v5488, %v5656
      %v5658 = vpop.f32.mrf.mxu0
      %v5659 = vadd.f32 %v5490, %v5658
      %5660 = vmatmul.bf16.gmra.mxu0 %v2158
      %v5661 = vpop.f32.mrf.mxu0
      %v5662 = vadd.f32 %v5493, %v5661
      %v5663 = vpop.f32.mrf.mxu0
      %v5664 = vadd.f32 %v5495, %v5663
      %5665 = vmatmul.bf16.gmra.mxu0 %v2167
      %v5666 = vpop.f32.mrf.mxu0
      %v5667 = vadd.f32 %v5498, %v5666
      %v5668 = vpop.f32.mrf.mxu0
      %v5669 = vadd.f32 %v5500, %v5668
      %5670 = vmatmul.bf16.gmra.mxu0 %v2176
      %v5671 = vpop.f32.mrf.mxu0
      %v5672 = vadd.f32 %v5503, %v5671
      %v5673 = vpop.f32.mrf.mxu0
      %v5674 = vadd.f32 %v5505, %v5673
      %5675 = vmatmul.bf16.gmra.mxu0 %v2185
      %v5676 = vpop.f32.mrf.mxu0
      %v5677 = vadd.f32 %v5508, %v5676
      %v5678 = vpop.f32.mrf.mxu0
      %v5679 = vadd.f32 %v5510, %v5678
      %5680 = vmatmul.bf16.gmra.mxu0 %v2194
      %v5681 = vpop.f32.mrf.mxu0
      %v5682 = vadd.f32 %v5513, %v5681
      %v5683 = vpop.f32.mrf.mxu0
      %v5684 = vadd.f32 %v5515, %v5683
      %5685 = vmatmul.bf16.gmra.mxu0 %v2203
      %v5686 = vpop.f32.mrf.mxu0
      %v5687 = vadd.f32 %v5518, %v5686
      %v5688 = vpop.f32.mrf.mxu0
      %v5689 = vadd.f32 %v5520, %v5688
      %5690 = vmatmul.bf16.gmra.mxu0 %v2212
      %v5691 = vpop.f32.mrf.mxu0
      %v5692 = vadd.f32 %v5523, %v5691
      %v5693 = vpop.f32.mrf.mxu0
      %v5694 = vadd.f32 %v5525, %v5693
      %5695 = vmatmul.bf16.gmra.mxu0 %v2221
      %v5696 = vpop.f32.mrf.mxu0
      %v5697 = vadd.f32 %v5528, %v5696
      %v5698 = vpop.f32.mrf.mxu0
      %v5699 = vadd.f32 %v5530, %v5698
      %5700 = vmatmul.bf16.gmra.mxu0 %v2230
      %v5701 = vpop.f32.mrf.mxu0
      %v5702 = vadd.f32 %v5533, %v5701
      %v5703 = vpop.f32.mrf.mxu0
      %v5704 = vadd.f32 %v5535, %v5703
      %5705 = vmatmul.bf16.gmra.mxu0 %v2239
      %v5706 = vpop.f32.mrf.mxu0
      %v5707 = vadd.f32 %v5538, %v5706
      %v5708 = vpop.f32.mrf.mxu0
      %v5709 = vadd.f32 %v5540, %v5708
      %5710 = vmatmul.bf16.gmra.mxu0 %v2248
      %v5711 = vpop.f32.mrf.mxu0
      %v5712 = vadd.f32 %v5543, %v5711
      %v5713 = vpop.f32.mrf.mxu0
      %v5714 = vadd.f32 %v5545, %v5713
      %5715 = vmatmul.bf16.gmra.mxu0 %v2257
      %v5716 = vpop.f32.mrf.mxu0
      %v5717 = vadd.f32 %v5548, %v5716
      %v5718 = vpop.f32.mrf.mxu0
      %v5719 = vadd.f32 %v5550, %v5718
      %5720 = vmatmul.bf16.gmra.mxu0 %v2266
      %v5721 = vpop.f32.mrf.mxu0
      %v5722 = vadd.f32 %v5553, %v5721
      %v5723 = vpop.f32.mrf.mxu0
      %v5724 = vadd.f32 %v5555, %v5723
      %5725 = vmatmul.bf16.gmra.mxu0 %v2275
      %v5726 = vpop.f32.mrf.mxu0
      %v5727 = vadd.f32 %v5558, %v5726
      %v5728 = vpop.f32.mrf.mxu0
      %v5729 = vadd.f32 %v5560, %v5728
      %5730 = vmatmul.bf16.gmra.mxu0 %v2284
      %v5731 = vpop.f32.mrf.mxu0
      %v5732 = vadd.f32 %v5563, %v5731
      %v5733 = vpop.f32.mrf.mxu0
      %v5734 = vadd.f32 %v5565, %v5733
      %5735 = vmatmul.bf16.gmra.mxu0 %v2293
      %v5736 = vpop.f32.mrf.mxu0
      %v5737 = vadd.f32 %v5568, %v5736
      %v5738 = vpop.f32.mrf.mxu0
      %v5739 = vadd.f32 %v5570, %v5738
      %5740 = vmatmul.bf16.gmra.mxu0 %v2302
      %v5741 = vpop.f32.mrf.mxu0
      %v5742 = vadd.f32 %v5573, %v5741
      %v5743 = vpop.f32.mrf.mxu0
      %v5744 = vadd.f32 %v5575, %v5743
      %5745 = vmatmul.bf16.gmra.mxu0 %v2311
      %v5746 = vpop.f32.mrf.mxu0
      %v5747 = vadd.f32 %v5578, %v5746
      %v5748 = vpop.f32.mrf.mxu0
      %v5749 = vadd.f32 %v5580, %v5748
      %5750 = vmatmul.bf16.gmra.mxu0 %v2320
      %v5751 = vpop.f32.mrf.mxu0
      %v5752 = vadd.f32 %v5583, %v5751
      %v5753 = vpop.f32.mrf.mxu0
      %v5754 = vadd.f32 %v5585, %v5753
      %5755 = vmatmul.bf16.gmra.mxu0 %v2329
      %v5756 = vpop.f32.mrf.mxu0
      %v5757 = vadd.f32 %v5588, %v5756
      %v5758 = vpop.f32.mrf.mxu0
      %v5759 = vadd.f32 %v5590, %v5758
      %5760 = vmatmul.bf16.gmra.mxu0 %v2338
      %v5761 = vpop.f32.mrf.mxu0
      %v5762 = vadd.f32 %v5593, %v5761
      %v5763 = vpop.f32.mrf.mxu0
      %v5764 = vadd.f32 %v5595, %v5763
      %5765 = vmatmul.bf16.gmra.mxu0 %v2347
      %v5766 = vpop.f32.mrf.mxu0
      %v5767 = vadd.f32 %v5598, %v5766
      %v5768 = vpop.f32.mrf.mxu0
      %v5769 = vadd.f32 %v5600, %v5768
      %5770 = vmatmul.bf16.gmra.mxu0 %v2356
      %v5771 = vpop.f32.mrf.mxu0
      %v5772 = vadd.f32 %v5603, %v5771
      %v5773 = vpop.f32.mrf.mxu0
      %v5774 = vadd.f32 %v5605, %v5773
      %5775 = vmatmul.bf16.gmra.mxu0 %v2365
      %v5776 = vpop.f32.mrf.mxu0
      %v5777 = vadd.f32 %v5608, %v5776
      %v5778 = vpop.f32.mrf.mxu0
      %v5779 = vadd.f32 %v5610, %v5778
      %5780 = vmatmul.bf16.gmra.mxu0 %v2374
      %v5781 = vpop.f32.mrf.mxu0
      %v5782 = vadd.f32 %v5613, %v5781
      %v5783 = vpop.f32.mrf.mxu0
      %v5784 = vadd.f32 %v5615, %v5783
      %5785 = vmatmul.bf16.gmra.mxu0 %v2383
      %v5786 = vpop.f32.mrf.mxu0
      %v5787 = vadd.f32 %v5618, %v5786
      %v5788 = vpop.f32.mrf.mxu0
      %v5789 = vadd.f32 %v5620, %v5788
      %5790 = vmatmul.bf16.gmra.mxu0 %v2392
      %v5791 = vpop.f32.mrf.mxu0
      %v5792 = vadd.f32 %v5623, %v5791
      %v5793 = vpop.f32.mrf.mxu0
      %v5794 = vadd.f32 %v5625, %v5793
      %5795 = vdwg.mxu0
      %5796 = vmatpush.bf16.msra.mxu0 %v3156
      %5797 = vmatpush.bf16.msra.mxu0 %v3154
      %5798 = vmatpush.bf16.msra.mxu0 %v3152
      %5799 = vmatpush.bf16.msra.mxu0 %v3150
      %5800 = vmatpush.bf16.msra.mxu0 %v3148
      %5801 = vmatpush.bf16.msra.mxu0 %v3146
      %5802 = vmatpush.bf16.msra.mxu0 %v3144
      %5803 = vmatpush.bf16.msra.mxu0 %v3142
      %5804 = vmatmul.bf16.gmra.mxu0 %v2114
      %v5805 = vpop.f32.mrf.mxu0
      %v5806 = vadd.f32 %v5637, %v5805
      %v5807 = vpop.f32.mrf.mxu0
      %v5808 = vadd.f32 %v5639, %v5807
      %5809 = vmatmul.bf16.gmra.mxu0 %v2123
      %v5810 = vpop.f32.mrf.mxu0
      %v5811 = vadd.f32 %v5642, %v5810
      %v5812 = vpop.f32.mrf.mxu0
      %v5813 = vadd.f32 %v5644, %v5812
      %5814 = vmatmul.bf16.gmra.mxu0 %v2132
      %v5815 = vpop.f32.mrf.mxu0
      %v5816 = vadd.f32 %v5647, %v5815
      %v5817 = vpop.f32.mrf.mxu0
      %v5818 = vadd.f32 %v5649, %v5817
      %5819 = vmatmul.bf16.gmra.mxu0 %v2141
      %v5820 = vpop.f32.mrf.mxu0
      %v5821 = vadd.f32 %v5652, %v5820
      %v5822 = vpop.f32.mrf.mxu0
      %v5823 = vadd.f32 %v5654, %v5822
      %5824 = vmatmul.bf16.gmra.mxu0 %v2150
      %v5825 = vpop.f32.mrf.mxu0
      %v5826 = vadd.f32 %v5657, %v5825
      %v5827 = vpop.f32.mrf.mxu0
      %v5828 = vadd.f32 %v5659, %v5827
      %5829 = vmatmul.bf16.gmra.mxu0 %v2159
      %v5830 = vpop.f32.mrf.mxu0
      %v5831 = vadd.f32 %v5662, %v5830
      %v5832 = vpop.f32.mrf.mxu0
      %v5833 = vadd.f32 %v5664, %v5832
      %5834 = vmatmul.bf16.gmra.mxu0 %v2168
      %v5835 = vpop.f32.mrf.mxu0
      %v5836 = vadd.f32 %v5667, %v5835
      %v5837 = vpop.f32.mrf.mxu0
      %v5838 = vadd.f32 %v5669, %v5837
      %5839 = vmatmul.bf16.gmra.mxu0 %v2177
      %v5840 = vpop.f32.mrf.mxu0
      %v5841 = vadd.f32 %v5672, %v5840
      %v5842 = vpop.f32.mrf.mxu0
      %v5843 = vadd.f32 %v5674, %v5842
      %5844 = vmatmul.bf16.gmra.mxu0 %v2186
      %v5845 = vpop.f32.mrf.mxu0
      %v5846 = vadd.f32 %v5677, %v5845
      %v5847 = vpop.f32.mrf.mxu0
      %v5848 = vadd.f32 %v5679, %v5847
      %5849 = vmatmul.bf16.gmra.mxu0 %v2195
      %v5850 = vpop.f32.mrf.mxu0
      %v5851 = vadd.f32 %v5682, %v5850
      %v5852 = vpop.f32.mrf.mxu0
      %v5853 = vadd.f32 %v5684, %v5852
      %5854 = vmatmul.bf16.gmra.mxu0 %v2204
      %v5855 = vpop.f32.mrf.mxu0
      %v5856 = vadd.f32 %v5687, %v5855
      %v5857 = vpop.f32.mrf.mxu0
      %v5858 = vadd.f32 %v5689, %v5857
      %5859 = vmatmul.bf16.gmra.mxu0 %v2213
      %v5860 = vpop.f32.mrf.mxu0
      %v5861 = vadd.f32 %v5692, %v5860
      %v5862 = vpop.f32.mrf.mxu0
      %v5863 = vadd.f32 %v5694, %v5862
      %5864 = vmatmul.bf16.gmra.mxu0 %v2222
      %v5865 = vpop.f32.mrf.mxu0
      %v5866 = vadd.f32 %v5697, %v5865
      %v5867 = vpop.f32.mrf.mxu0
      %v5868 = vadd.f32 %v5699, %v5867
      %5869 = vmatmul.bf16.gmra.mxu0 %v2231
      %v5870 = vpop.f32.mrf.mxu0
      %v5871 = vadd.f32 %v5702, %v5870
      %v5872 = vpop.f32.mrf.mxu0
      %v5873 = vadd.f32 %v5704, %v5872
      %5874 = vmatmul.bf16.gmra.mxu0 %v2240
      %v5875 = vpop.f32.mrf.mxu0
      %v5876 = vadd.f32 %v5707, %v5875
      %v5877 = vpop.f32.mrf.mxu0
      %v5878 = vadd.f32 %v5709, %v5877
      %5879 = vmatmul.bf16.gmra.mxu0 %v2249
      %v5880 = vpop.f32.mrf.mxu0
      %v5881 = vadd.f32 %v5712, %v5880
      %v5882 = vpop.f32.mrf.mxu0
      %v5883 = vadd.f32 %v5714, %v5882
      %5884 = vmatmul.bf16.gmra.mxu0 %v2258
      %v5885 = vpop.f32.mrf.mxu0
      %v5886 = vadd.f32 %v5717, %v5885
      %v5887 = vpop.f32.mrf.mxu0
      %v5888 = vadd.f32 %v5719, %v5887
      %5889 = vmatmul.bf16.gmra.mxu0 %v2267
      %v5890 = vpop.f32.mrf.mxu0
      %v5891 = vadd.f32 %v5722, %v5890
      %v5892 = vpop.f32.mrf.mxu0
      %v5893 = vadd.f32 %v5724, %v5892
      %5894 = vmatmul.bf16.gmra.mxu0 %v2276
      %v5895 = vpop.f32.mrf.mxu0
      %v5896 = vadd.f32 %v5727, %v5895
      %v5897 = vpop.f32.mrf.mxu0
      %v5898 = vadd.f32 %v5729, %v5897
      %5899 = vmatmul.bf16.gmra.mxu0 %v2285
      %v5900 = vpop.f32.mrf.mxu0
      %v5901 = vadd.f32 %v5732, %v5900
      %v5902 = vpop.f32.mrf.mxu0
      %v5903 = vadd.f32 %v5734, %v5902
      %5904 = vmatmul.bf16.gmra.mxu0 %v2294
      %v5905 = vpop.f32.mrf.mxu0
      %v5906 = vadd.f32 %v5737, %v5905
      %v5907 = vpop.f32.mrf.mxu0
      %v5908 = vadd.f32 %v5739, %v5907
      %5909 = vmatmul.bf16.gmra.mxu0 %v2303
      %v5910 = vpop.f32.mrf.mxu0
      %v5911 = vadd.f32 %v5742, %v5910
      %v5912 = vpop.f32.mrf.mxu0
      %v5913 = vadd.f32 %v5744, %v5912
      %5914 = vmatmul.bf16.gmra.mxu0 %v2312
      %v5915 = vpop.f32.mrf.mxu0
      %v5916 = vadd.f32 %v5747, %v5915
      %v5917 = vpop.f32.mrf.mxu0
      %v5918 = vadd.f32 %v5749, %v5917
      %5919 = vmatmul.bf16.gmra.mxu0 %v2321
      %v5920 = vpop.f32.mrf.mxu0
      %v5921 = vadd.f32 %v5752, %v5920
      %v5922 = vpop.f32.mrf.mxu0
      %v5923 = vadd.f32 %v5754, %v5922
      %5924 = vmatmul.bf16.gmra.mxu0 %v2330
      %v5925 = vpop.f32.mrf.mxu0
      %v5926 = vadd.f32 %v5757, %v5925
      %v5927 = vpop.f32.mrf.mxu0
      %v5928 = vadd.f32 %v5759, %v5927
      %5929 = vmatmul.bf16.gmra.mxu0 %v2339
      %v5930 = vpop.f32.mrf.mxu0
      %v5931 = vadd.f32 %v5762, %v5930
      %v5932 = vpop.f32.mrf.mxu0
      %v5933 = vadd.f32 %v5764, %v5932
      %5934 = vmatmul.bf16.gmra.mxu0 %v2348
      %v5935 = vpop.f32.mrf.mxu0
      %v5936 = vadd.f32 %v5767, %v5935
      %v5937 = vpop.f32.mrf.mxu0
      %v5938 = vadd.f32 %v5769, %v5937
      %5939 = vmatmul.bf16.gmra.mxu0 %v2357
      %v5940 = vpop.f32.mrf.mxu0
      %v5941 = vadd.f32 %v5772, %v5940
      %v5942 = vpop.f32.mrf.mxu0
      %v5943 = vadd.f32 %v5774, %v5942
      %5944 = vmatmul.bf16.gmra.mxu0 %v2366
      %v5945 = vpop.f32.mrf.mxu0
      %v5946 = vadd.f32 %v5777, %v5945
      %v5947 = vpop.f32.mrf.mxu0
      %v5948 = vadd.f32 %v5779, %v5947
      %5949 = vmatmul.bf16.gmra.mxu0 %v2375
      %v5950 = vpop.f32.mrf.mxu0
      %v5951 = vadd.f32 %v5782, %v5950
      %v5952 = vpop.f32.mrf.mxu0
      %v5953 = vadd.f32 %v5784, %v5952
      %5954 = vmatmul.bf16.gmra.mxu0 %v2384
      %v5955 = vpop.f32.mrf.mxu0
      %v5956 = vadd.f32 %v5787, %v5955
      %v5957 = vpop.f32.mrf.mxu0
      %v5958 = vadd.f32 %v5789, %v5957
      %5959 = vmatmul.bf16.gmra.mxu0 %v2393
      %v5960 = vpop.f32.mrf.mxu0
      %v5961 = vadd.f32 %v5792, %v5960
      %v5962 = vpop.f32.mrf.mxu0
      %v5963 = vadd.f32 %v5794, %v5962
      %5964 = vdwg.mxu0
      %5965 = vmatpush.bf16.msra.mxu0 %v3172
      %5966 = vmatpush.bf16.msra.mxu0 %v3170
      %5967 = vmatpush.bf16.msra.mxu0 %v3168
      %5968 = vmatpush.bf16.msra.mxu0 %v3166
      %5969 = vmatpush.bf16.msra.mxu0 %v3164
      %5970 = vmatpush.bf16.msra.mxu0 %v3162
      %5971 = vmatpush.bf16.msra.mxu0 %v3160
      %5972 = vmatpush.bf16.msra.mxu0 %v3158
      %5973 = vmatmul.bf16.gmra.mxu0 %v2115
      %v5974 = vpop.f32.mrf.mxu0
      %v5975 = vadd.f32 %v5806, %v5974
      %v5976 = vpop.f32.mrf.mxu0
      %v5977 = vadd.f32 %v5808, %v5976
      %5978 = vmatmul.bf16.gmra.mxu0 %v2124
      %v5979 = vpop.f32.mrf.mxu0
      %v5980 = vadd.f32 %v5811, %v5979
      %v5981 = vpop.f32.mrf.mxu0
      %v5982 = vadd.f32 %v5813, %v5981
      %5983 = vmatmul.bf16.gmra.mxu0 %v2133
      %v5984 = vpop.f32.mrf.mxu0
      %v5985 = vadd.f32 %v5816, %v5984
      %v5986 = vpop.f32.mrf.mxu0
      %v5987 = vadd.f32 %v5818, %v5986
      %5988 = vmatmul.bf16.gmra.mxu0 %v2142
      %v5989 = vpop.f32.mrf.mxu0
      %v5990 = vadd.f32 %v5821, %v5989
      %v5991 = vpop.f32.mrf.mxu0
      %v5992 = vadd.f32 %v5823, %v5991
      %5993 = vmatmul.bf16.gmra.mxu0 %v2151
      %v5994 = vpop.f32.mrf.mxu0
      %v5995 = vadd.f32 %v5826, %v5994
      %v5996 = vpop.f32.mrf.mxu0
      %v5997 = vadd.f32 %v5828, %v5996
      %5998 = vmatmul.bf16.gmra.mxu0 %v2160
      %v5999 = vpop.f32.mrf.mxu0
      %v6000 = vadd.f32 %v5831, %v5999
      %v6001 = vpop.f32.mrf.mxu0
      %v6002 = vadd.f32 %v5833, %v6001
      %6003 = vmatmul.bf16.gmra.mxu0 %v2169
      %v6004 = vpop.f32.mrf.mxu0
      %v6005 = vadd.f32 %v5836, %v6004
      %v6006 = vpop.f32.mrf.mxu0
      %v6007 = vadd.f32 %v5838, %v6006
      %6008 = vmatmul.bf16.gmra.mxu0 %v2178
      %v6009 = vpop.f32.mrf.mxu0
      %v6010 = vadd.f32 %v5841, %v6009
      %v6011 = vpop.f32.mrf.mxu0
      %v6012 = vadd.f32 %v5843, %v6011
      %6013 = vmatmul.bf16.gmra.mxu0 %v2187
      %v6014 = vpop.f32.mrf.mxu0
      %v6015 = vadd.f32 %v5846, %v6014
      %v6016 = vpop.f32.mrf.mxu0
      %v6017 = vadd.f32 %v5848, %v6016
      %6018 = vmatmul.bf16.gmra.mxu0 %v2196
      %v6019 = vpop.f32.mrf.mxu0
      %v6020 = vadd.f32 %v5851, %v6019
      %v6021 = vpop.f32.mrf.mxu0
      %v6022 = vadd.f32 %v5853, %v6021
      %6023 = vmatmul.bf16.gmra.mxu0 %v2205
      %v6024 = vpop.f32.mrf.mxu0
      %v6025 = vadd.f32 %v5856, %v6024
      %v6026 = vpop.f32.mrf.mxu0
      %v6027 = vadd.f32 %v5858, %v6026
      %6028 = vmatmul.bf16.gmra.mxu0 %v2214
      %v6029 = vpop.f32.mrf.mxu0
      %v6030 = vadd.f32 %v5861, %v6029
      %v6031 = vpop.f32.mrf.mxu0
      %v6032 = vadd.f32 %v5863, %v6031
      %6033 = vmatmul.bf16.gmra.mxu0 %v2223
      %v6034 = vpop.f32.mrf.mxu0
      %v6035 = vadd.f32 %v5866, %v6034
      %v6036 = vpop.f32.mrf.mxu0
      %v6037 = vadd.f32 %v5868, %v6036
      %6038 = vmatmul.bf16.gmra.mxu0 %v2232
      %v6039 = vpop.f32.mrf.mxu0
      %v6040 = vadd.f32 %v5871, %v6039
      %v6041 = vpop.f32.mrf.mxu0
      %v6042 = vadd.f32 %v5873, %v6041
      %6043 = vmatmul.bf16.gmra.mxu0 %v2241
      %v6044 = vpop.f32.mrf.mxu0
      %v6045 = vadd.f32 %v5876, %v6044
      %v6046 = vpop.f32.mrf.mxu0
      %v6047 = vadd.f32 %v5878, %v6046
      %6048 = vmatmul.bf16.gmra.mxu0 %v2250
      %v6049 = vpop.f32.mrf.mxu0
      %v6050 = vadd.f32 %v5881, %v6049
      %v6051 = vpop.f32.mrf.mxu0
      %v6052 = vadd.f32 %v5883, %v6051
      %6053 = vmatmul.bf16.gmra.mxu0 %v2259
      %v6054 = vpop.f32.mrf.mxu0
      %v6055 = vadd.f32 %v5886, %v6054
      %v6056 = vpop.f32.mrf.mxu0
      %v6057 = vadd.f32 %v5888, %v6056
      %6058 = vmatmul.bf16.gmra.mxu0 %v2268
      %v6059 = vpop.f32.mrf.mxu0
      %v6060 = vadd.f32 %v5891, %v6059
      %v6061 = vpop.f32.mrf.mxu0
      %v6062 = vadd.f32 %v5893, %v6061
      %6063 = vmatmul.bf16.gmra.mxu0 %v2277
      %v6064 = vpop.f32.mrf.mxu0
      %v6065 = vadd.f32 %v5896, %v6064
      %v6066 = vpop.f32.mrf.mxu0
      %v6067 = vadd.f32 %v5898, %v6066
      %6068 = vmatmul.bf16.gmra.mxu0 %v2286
      %v6069 = vpop.f32.mrf.mxu0
      %v6070 = vadd.f32 %v5901, %v6069
      %v6071 = vpop.f32.mrf.mxu0
      %v6072 = vadd.f32 %v5903, %v6071
      %6073 = vmatmul.bf16.gmra.mxu0 %v2295
      %v6074 = vpop.f32.mrf.mxu0
      %v6075 = vadd.f32 %v5906, %v6074
      %v6076 = vpop.f32.mrf.mxu0
      %v6077 = vadd.f32 %v5908, %v6076
      %6078 = vmatmul.bf16.gmra.mxu0 %v2304
      %v6079 = vpop.f32.mrf.mxu0
      %v6080 = vadd.f32 %v5911, %v6079
      %v6081 = vpop.f32.mrf.mxu0
      %v6082 = vadd.f32 %v5913, %v6081
      %6083 = vmatmul.bf16.gmra.mxu0 %v2313
      %v6084 = vpop.f32.mrf.mxu0
      %v6085 = vadd.f32 %v5916, %v6084
      %v6086 = vpop.f32.mrf.mxu0
      %v6087 = vadd.f32 %v5918, %v6086
      %6088 = vmatmul.bf16.gmra.mxu0 %v2322
      %v6089 = vpop.f32.mrf.mxu0
      %v6090 = vadd.f32 %v5921, %v6089
      %v6091 = vpop.f32.mrf.mxu0
      %v6092 = vadd.f32 %v5923, %v6091
      %6093 = vmatmul.bf16.gmra.mxu0 %v2331
      %v6094 = vpop.f32.mrf.mxu0
      %v6095 = vadd.f32 %v5926, %v6094
      %v6096 = vpop.f32.mrf.mxu0
      %v6097 = vadd.f32 %v5928, %v6096
      %6098 = vmatmul.bf16.gmra.mxu0 %v2340
      %v6099 = vpop.f32.mrf.mxu0
      %v6100 = vadd.f32 %v5931, %v6099
      %v6101 = vpop.f32.mrf.mxu0
      %v6102 = vadd.f32 %v5933, %v6101
      %6103 = vmatmul.bf16.gmra.mxu0 %v2349
      %v6104 = vpop.f32.mrf.mxu0
      %v6105 = vadd.f32 %v5936, %v6104
      %v6106 = vpop.f32.mrf.mxu0
      %v6107 = vadd.f32 %v5938, %v6106
      %6108 = vmatmul.bf16.gmra.mxu0 %v2358
      %v6109 = vpop.f32.mrf.mxu0
      %v6110 = vadd.f32 %v5941, %v6109
      %v6111 = vpop.f32.mrf.mxu0
      %v6112 = vadd.f32 %v5943, %v6111
      %6113 = vmatmul.bf16.gmra.mxu0 %v2367
      %v6114 = vpop.f32.mrf.mxu0
      %v6115 = vadd.f32 %v5946, %v6114
      %v6116 = vpop.f32.mrf.mxu0
      %v6117 = vadd.f32 %v5948, %v6116
      %6118 = vmatmul.bf16.gmra.mxu0 %v2376
      %v6119 = vpop.f32.mrf.mxu0
      %v6120 = vadd.f32 %v5951, %v6119
      %v6121 = vpop.f32.mrf.mxu0
      %v6122 = vadd.f32 %v5953, %v6121
      %6123 = vmatmul.bf16.gmra.mxu0 %v2385
      %v6124 = vpop.f32.mrf.mxu0
      %v6125 = vadd.f32 %v5956, %v6124
      %v6126 = vpop.f32.mrf.mxu0
      %v6127 = vadd.f32 %v5958, %v6126
      %6128 = vmatmul.bf16.gmra.mxu0 %v2394
      %v6129 = vpop.f32.mrf.mxu0
      %v6130 = vadd.f32 %v5961, %v6129
      %v6131 = vpop.f32.mrf.mxu0
      %v6132 = vadd.f32 %v5963, %v6131
      %6133 = vdwg.mxu0
      %6134 = vmatpush.bf16.msra.mxu0 %v3188
      %6135 = vmatpush.bf16.msra.mxu0 %v3186
      %6136 = vmatpush.bf16.msra.mxu0 %v3184
      %6137 = vmatpush.bf16.msra.mxu0 %v3182
      %6138 = vmatpush.bf16.msra.mxu0 %v3180
      %6139 = vmatpush.bf16.msra.mxu0 %v3178
      %6140 = vmatpush.bf16.msra.mxu0 %v3176
      %6141 = vmatpush.bf16.msra.mxu0 %v3174
      %6142 = vmatmul.bf16.gmra.mxu0 %v2116
      %v6143 = vpop.f32.mrf.mxu0
      %v6144 = vadd.f32 %v5975, %v6143
      %v6145 = vpop.f32.mrf.mxu0
      %v6146 = vadd.f32 %v5977, %v6145
      %6147 = vmatmul.bf16.gmra.mxu0 %v2125
      %v6148 = vpop.f32.mrf.mxu0
      %v6149 = vadd.f32 %v5980, %v6148
      %v6150 = vpop.f32.mrf.mxu0
      %v6151 = vadd.f32 %v5982, %v6150
      %6152 = vmatmul.bf16.gmra.mxu0 %v2134
      %v6153 = vpop.f32.mrf.mxu0
      %v6154 = vadd.f32 %v5985, %v6153
      %v6155 = vpop.f32.mrf.mxu0
      %v6156 = vadd.f32 %v5987, %v6155
      %6157 = vmatmul.bf16.gmra.mxu0 %v2143
      %v6158 = vpop.f32.mrf.mxu0
      %v6159 = vadd.f32 %v5990, %v6158
      %v6160 = vpop.f32.mrf.mxu0
      %v6161 = vadd.f32 %v5992, %v6160
      %6162 = vmatmul.bf16.gmra.mxu0 %v2152
      %v6163 = vpop.f32.mrf.mxu0
      %v6164 = vadd.f32 %v5995, %v6163
      %v6165 = vpop.f32.mrf.mxu0
      %v6166 = vadd.f32 %v5997, %v6165
      %6167 = vmatmul.bf16.gmra.mxu0 %v2161
      %v6168 = vpop.f32.mrf.mxu0
      %v6169 = vadd.f32 %v6000, %v6168
      %v6170 = vpop.f32.mrf.mxu0
      %v6171 = vadd.f32 %v6002, %v6170
      %6172 = vmatmul.bf16.gmra.mxu0 %v2170
      %v6173 = vpop.f32.mrf.mxu0
      %v6174 = vadd.f32 %v6005, %v6173
      %v6175 = vpop.f32.mrf.mxu0
      %v6176 = vadd.f32 %v6007, %v6175
      %6177 = vmatmul.bf16.gmra.mxu0 %v2179
      %v6178 = vpop.f32.mrf.mxu0
      %v6179 = vadd.f32 %v6010, %v6178
      %v6180 = vpop.f32.mrf.mxu0
      %v6181 = vadd.f32 %v6012, %v6180
      %6182 = vmatmul.bf16.gmra.mxu0 %v2188
      %v6183 = vpop.f32.mrf.mxu0
      %v6184 = vadd.f32 %v6015, %v6183
      %v6185 = vpop.f32.mrf.mxu0
      %v6186 = vadd.f32 %v6017, %v6185
      %6187 = vmatmul.bf16.gmra.mxu0 %v2197
      %v6188 = vpop.f32.mrf.mxu0
      %v6189 = vadd.f32 %v6020, %v6188
      %v6190 = vpop.f32.mrf.mxu0
      %v6191 = vadd.f32 %v6022, %v6190
      %6192 = vmatmul.bf16.gmra.mxu0 %v2206
      %v6193 = vpop.f32.mrf.mxu0
      %v6194 = vadd.f32 %v6025, %v6193
      %v6195 = vpop.f32.mrf.mxu0
      %v6196 = vadd.f32 %v6027, %v6195
      %6197 = vmatmul.bf16.gmra.mxu0 %v2215
      %v6198 = vpop.f32.mrf.mxu0
      %v6199 = vadd.f32 %v6030, %v6198
      %v6200 = vpop.f32.mrf.mxu0
      %v6201 = vadd.f32 %v6032, %v6200
      %6202 = vmatmul.bf16.gmra.mxu0 %v2224
      %v6203 = vpop.f32.mrf.mxu0
      %v6204 = vadd.f32 %v6035, %v6203
      %v6205 = vpop.f32.mrf.mxu0
      %v6206 = vadd.f32 %v6037, %v6205
      %6207 = vmatmul.bf16.gmra.mxu0 %v2233
      %v6208 = vpop.f32.mrf.mxu0
      %v6209 = vadd.f32 %v6040, %v6208
      %v6210 = vpop.f32.mrf.mxu0
      %v6211 = vadd.f32 %v6042, %v6210
      %6212 = vmatmul.bf16.gmra.mxu0 %v2242
      %v6213 = vpop.f32.mrf.mxu0
      %v6214 = vadd.f32 %v6045, %v6213
      %v6215 = vpop.f32.mrf.mxu0
      %v6216 = vadd.f32 %v6047, %v6215
      %6217 = vmatmul.bf16.gmra.mxu0 %v2251
      %v6218 = vpop.f32.mrf.mxu0
      %v6219 = vadd.f32 %v6050, %v6218
      %v6220 = vpop.f32.mrf.mxu0
      %v6221 = vadd.f32 %v6052, %v6220
      %6222 = vmatmul.bf16.gmra.mxu0 %v2260
      %v6223 = vpop.f32.mrf.mxu0
      %v6224 = vadd.f32 %v6055, %v6223
      %v6225 = vpop.f32.mrf.mxu0
      %v6226 = vadd.f32 %v6057, %v6225
      %6227 = vmatmul.bf16.gmra.mxu0 %v2269
      %v6228 = vpop.f32.mrf.mxu0
      %v6229 = vadd.f32 %v6060, %v6228
      %v6230 = vpop.f32.mrf.mxu0
      %v6231 = vadd.f32 %v6062, %v6230
      %6232 = vmatmul.bf16.gmra.mxu0 %v2278
      %v6233 = vpop.f32.mrf.mxu0
      %v6234 = vadd.f32 %v6065, %v6233
      %v6235 = vpop.f32.mrf.mxu0
      %v6236 = vadd.f32 %v6067, %v6235
      %6237 = vmatmul.bf16.gmra.mxu0 %v2287
      %v6238 = vpop.f32.mrf.mxu0
      %v6239 = vadd.f32 %v6070, %v6238
      %v6240 = vpop.f32.mrf.mxu0
      %v6241 = vadd.f32 %v6072, %v6240
      %6242 = vmatmul.bf16.gmra.mxu0 %v2296
      %v6243 = vpop.f32.mrf.mxu0
      %v6244 = vadd.f32 %v6075, %v6243
      %v6245 = vpop.f32.mrf.mxu0
      %v6246 = vadd.f32 %v6077, %v6245
      %6247 = vmatmul.bf16.gmra.mxu0 %v2305
      %v6248 = vpop.f32.mrf.mxu0
      %v6249 = vadd.f32 %v6080, %v6248
      %v6250 = vpop.f32.mrf.mxu0
      %v6251 = vadd.f32 %v6082, %v6250
      %6252 = vmatmul.bf16.gmra.mxu0 %v2314
      %v6253 = vpop.f32.mrf.mxu0
      %v6254 = vadd.f32 %v6085, %v6253
      %v6255 = vpop.f32.mrf.mxu0
      %v6256 = vadd.f32 %v6087, %v6255
      %6257 = vmatmul.bf16.gmra.mxu0 %v2323
      %v6258 = vpop.f32.mrf.mxu0
      %v6259 = vadd.f32 %v6090, %v6258
      %v6260 = vpop.f32.mrf.mxu0
      %v6261 = vadd.f32 %v6092, %v6260
      %6262 = vmatmul.bf16.gmra.mxu0 %v2332
      %v6263 = vpop.f32.mrf.mxu0
      %v6264 = vadd.f32 %v6095, %v6263
      %v6265 = vpop.f32.mrf.mxu0
      %v6266 = vadd.f32 %v6097, %v6265
      %6267 = vmatmul.bf16.gmra.mxu0 %v2341
      %v6268 = vpop.f32.mrf.mxu0
      %v6269 = vadd.f32 %v6100, %v6268
      %v6270 = vpop.f32.mrf.mxu0
      %v6271 = vadd.f32 %v6102, %v6270
      %6272 = vmatmul.bf16.gmra.mxu0 %v2350
      %v6273 = vpop.f32.mrf.mxu0
      %v6274 = vadd.f32 %v6105, %v6273
      %v6275 = vpop.f32.mrf.mxu0
      %v6276 = vadd.f32 %v6107, %v6275
      %6277 = vmatmul.bf16.gmra.mxu0 %v2359
      %v6278 = vpop.f32.mrf.mxu0
      %v6279 = vadd.f32 %v6110, %v6278
      %v6280 = vpop.f32.mrf.mxu0
      %v6281 = vadd.f32 %v6112, %v6280
      %6282 = vmatmul.bf16.gmra.mxu0 %v2368
      %v6283 = vpop.f32.mrf.mxu0
      %v6284 = vadd.f32 %v6115, %v6283
      %v6285 = vpop.f32.mrf.mxu0
      %v6286 = vadd.f32 %v6117, %v6285
      %6287 = vmatmul.bf16.gmra.mxu0 %v2377
      %v6288 = vpop.f32.mrf.mxu0
      %v6289 = vadd.f32 %v6120, %v6288
      %v6290 = vpop.f32.mrf.mxu0
      %v6291 = vadd.f32 %v6122, %v6290
      %6292 = vmatmul.bf16.gmra.mxu0 %v2386
      %v6293 = vpop.f32.mrf.mxu0
      %v6294 = vadd.f32 %v6125, %v6293
      %v6295 = vpop.f32.mrf.mxu0
      %v6296 = vadd.f32 %v6127, %v6295
      %6297 = vmatmul.bf16.gmra.mxu0 %v2395
      %v6298 = vpop.f32.mrf.mxu0
      %v6299 = vadd.f32 %v6130, %v6298
      %v6300 = vpop.f32.mrf.mxu0
      %v6301 = vadd.f32 %v6132, %v6300
      %6302 = vdwg.mxu0
      %6303 = vmatpush.bf16.msra.mxu0 0
      %6304 = vmatpush.bf16.msra.mxu0 0
      %6305 = vmatpush.bf16.msra.mxu0 0
      %6306 = vmatpush.bf16.msra.mxu0 0
      %6307 = vmatpush.bf16.msra.mxu0 %v3196
      %6308 = vmatpush.bf16.msra.mxu0 %v3194
      %6309 = vmatpush.bf16.msra.mxu0 %v3192
      %6310 = vmatpush.bf16.msra.mxu0 %v3190
      %6311 = vmatmul.bf16.gmra.mxu0 %v3335
      %v6312 = vpop.f32.mrf.mxu0
      %v6313 = vadd.f32 %v6144, %v6312
      %v6314 = vpop.f32.mrf.mxu0
      %v6315 = vadd.f32 %v6146, %v6314
      %6316 = vmatmul.bf16.gmra.mxu0 %v3338
      %v6317 = vpop.f32.mrf.mxu0
      %v6318 = vadd.f32 %v6149, %v6317
      %v6319 = vpop.f32.mrf.mxu0
      %v6320 = vadd.f32 %v6151, %v6319
      %6321 = vmatmul.bf16.gmra.mxu0 %v3341
      %v6322 = vpop.f32.mrf.mxu0
      %v6323 = vadd.f32 %v6154, %v6322
      %v6324 = vpop.f32.mrf.mxu0
      %v6325 = vadd.f32 %v6156, %v6324
      %6326 = vmatmul.bf16.gmra.mxu0 %v3344
      %v6327 = vpop.f32.mrf.mxu0
      %v6328 = vadd.f32 %v6159, %v6327
      %v6329 = vpop.f32.mrf.mxu0
      %v6330 = vadd.f32 %v6161, %v6329
      %6331 = vmatmul.bf16.gmra.mxu0 %v3347
      %v6332 = vpop.f32.mrf.mxu0
      %v6333 = vadd.f32 %v6164, %v6332
      %v6334 = vpop.f32.mrf.mxu0
      %v6335 = vadd.f32 %v6166, %v6334
      %6336 = vmatmul.bf16.gmra.mxu0 %v3350
      %v6337 = vpop.f32.mrf.mxu0
      %v6338 = vadd.f32 %v6169, %v6337
      %v6339 = vpop.f32.mrf.mxu0
      %v6340 = vadd.f32 %v6171, %v6339
      %6341 = vmatmul.bf16.gmra.mxu0 %v3353
      %v6342 = vpop.f32.mrf.mxu0
      %v6343 = vadd.f32 %v6174, %v6342
      %v6344 = vpop.f32.mrf.mxu0
      %v6345 = vadd.f32 %v6176, %v6344
      %6346 = vmatmul.bf16.gmra.mxu0 %v3356
      %v6347 = vpop.f32.mrf.mxu0
      %v6348 = vadd.f32 %v6179, %v6347
      %v6349 = vpop.f32.mrf.mxu0
      %v6350 = vadd.f32 %v6181, %v6349
      %6351 = vmatmul.bf16.gmra.mxu0 %v3359
      %v6352 = vpop.f32.mrf.mxu0
      %v6353 = vadd.f32 %v6184, %v6352
      %v6354 = vpop.f32.mrf.mxu0
      %v6355 = vadd.f32 %v6186, %v6354
      %6356 = vmatmul.bf16.gmra.mxu0 %v3362
      %v6357 = vpop.f32.mrf.mxu0
      %v6358 = vadd.f32 %v6189, %v6357
      %v6359 = vpop.f32.mrf.mxu0
      %v6360 = vadd.f32 %v6191, %v6359
      %6361 = vmatmul.bf16.gmra.mxu0 %v3365
      %v6362 = vpop.f32.mrf.mxu0
      %v6363 = vadd.f32 %v6194, %v6362
      %v6364 = vpop.f32.mrf.mxu0
      %v6365 = vadd.f32 %v6196, %v6364
      %6366 = vmatmul.bf16.gmra.mxu0 %v3368
      %v6367 = vpop.f32.mrf.mxu0
      %v6368 = vadd.f32 %v6199, %v6367
      %v6369 = vpop.f32.mrf.mxu0
      %v6370 = vadd.f32 %v6201, %v6369
      %6371 = vmatmul.bf16.gmra.mxu0 %v3371
      %v6372 = vpop.f32.mrf.mxu0
      %v6373 = vadd.f32 %v6204, %v6372
      %v6374 = vpop.f32.mrf.mxu0
      %v6375 = vadd.f32 %v6206, %v6374
      %6376 = vmatmul.bf16.gmra.mxu0 %v3374
      %v6377 = vpop.f32.mrf.mxu0
      %v6378 = vadd.f32 %v6209, %v6377
      %v6379 = vpop.f32.mrf.mxu0
      %v6380 = vadd.f32 %v6211, %v6379
      %6381 = vmatmul.bf16.gmra.mxu0 %v3377
      %v6382 = vpop.f32.mrf.mxu0
      %v6383 = vadd.f32 %v6214, %v6382
      %v6384 = vpop.f32.mrf.mxu0
      %v6385 = vadd.f32 %v6216, %v6384
      %6386 = vmatmul.bf16.gmra.mxu0 %v3380
      %v6387 = vpop.f32.mrf.mxu0
      %v6388 = vadd.f32 %v6219, %v6387
      %v6389 = vpop.f32.mrf.mxu0
      %v6390 = vadd.f32 %v6221, %v6389
      %6391 = vmatmul.bf16.gmra.mxu0 %v3383
      %v6392 = vpop.f32.mrf.mxu0
      %v6393 = vadd.f32 %v6224, %v6392
      %v6394 = vpop.f32.mrf.mxu0
      %v6395 = vadd.f32 %v6226, %v6394
      %6396 = vmatmul.bf16.gmra.mxu0 %v3386
      %v6397 = vpop.f32.mrf.mxu0
      %v6398 = vadd.f32 %v6229, %v6397
      %v6399 = vpop.f32.mrf.mxu0
      %v6400 = vadd.f32 %v6231, %v6399
      %6401 = vmatmul.bf16.gmra.mxu0 %v3389
      %v6402 = vpop.f32.mrf.mxu0
      %v6403 = vadd.f32 %v6234, %v6402
      %v6404 = vpop.f32.mrf.mxu0
      %v6405 = vadd.f32 %v6236, %v6404
      %6406 = vmatmul.bf16.gmra.mxu0 %v3392
      %v6407 = vpop.f32.mrf.mxu0
      %v6408 = vadd.f32 %v6239, %v6407
      %v6409 = vpop.f32.mrf.mxu0
      %v6410 = vadd.f32 %v6241, %v6409
      %6411 = vmatmul.bf16.gmra.mxu0 %v3395
      %v6412 = vpop.f32.mrf.mxu0
      %v6413 = vadd.f32 %v6244, %v6412
      %v6414 = vpop.f32.mrf.mxu0
      %v6415 = vadd.f32 %v6246, %v6414
      %6416 = vmatmul.bf16.gmra.mxu0 %v3398
      %v6417 = vpop.f32.mrf.mxu0
      %v6418 = vadd.f32 %v6249, %v6417
      %v6419 = vpop.f32.mrf.mxu0
      %v6420 = vadd.f32 %v6251, %v6419
      %6421 = vmatmul.bf16.gmra.mxu0 %v3401
      %v6422 = vpop.f32.mrf.mxu0
      %v6423 = vadd.f32 %v6254, %v6422
      %v6424 = vpop.f32.mrf.mxu0
      %v6425 = vadd.f32 %v6256, %v6424
      %6426 = vmatmul.bf16.gmra.mxu0 %v3404
      %v6427 = vpop.f32.mrf.mxu0
      %v6428 = vadd.f32 %v6259, %v6427
      %v6429 = vpop.f32.mrf.mxu0
      %v6430 = vadd.f32 %v6261, %v6429
      %6431 = vmatmul.bf16.gmra.mxu0 %v3407
      %v6432 = vpop.f32.mrf.mxu0
      %v6433 = vadd.f32 %v6264, %v6432
      %v6434 = vpop.f32.mrf.mxu0
      %v6435 = vadd.f32 %v6266, %v6434
      %6436 = vmatmul.bf16.gmra.mxu0 %v3410
      %v6437 = vpop.f32.mrf.mxu0
      %v6438 = vadd.f32 %v6269, %v6437
      %v6439 = vpop.f32.mrf.mxu0
      %v6440 = vadd.f32 %v6271, %v6439
      %6441 = vmatmul.bf16.gmra.mxu0 %v3413
      %v6442 = vpop.f32.mrf.mxu0
      %v6443 = vadd.f32 %v6274, %v6442
      %v6444 = vpop.f32.mrf.mxu0
      %v6445 = vadd.f32 %v6276, %v6444
      %6446 = vmatmul.bf16.gmra.mxu0 %v3416
      %v6447 = vpop.f32.mrf.mxu0
      %v6448 = vadd.f32 %v6279, %v6447
      %v6449 = vpop.f32.mrf.mxu0
      %v6450 = vadd.f32 %v6281, %v6449
      %6451 = vmatmul.bf16.gmra.mxu0 %v3419
      %v6452 = vpop.f32.mrf.mxu0
      %v6453 = vadd.f32 %v6284, %v6452
      %v6454 = vpop.f32.mrf.mxu0
      %v6455 = vadd.f32 %v6286, %v6454
      %6456 = vmatmul.bf16.gmra.mxu0 %v3422
      %v6457 = vpop.f32.mrf.mxu0
      %v6458 = vadd.f32 %v6289, %v6457
      %v6459 = vpop.f32.mrf.mxu0
      %v6460 = vadd.f32 %v6291, %v6459
      %6461 = vmatmul.bf16.gmra.mxu0 %v3425
      %v6462 = vpop.f32.mrf.mxu0
      %v6463 = vadd.f32 %v6294, %v6462
      %v6464 = vpop.f32.mrf.mxu0
      %v6465 = vadd.f32 %v6296, %v6464
      %6466 = vmatmul.bf16.gmra.mxu0 %v3428
      %v6467 = vpop.f32.mrf.mxu0
      %v6468 = vadd.f32 %v6299, %v6467
      %v6469 = vpop.f32.mrf.mxu0
      %v6470 = vadd.f32 %v6301, %v6469
      %6471 = vdwg.mxu0
      %v6472 = vmax.f32 %v4792, 0.0
      %v6473 = vmax.f32 %v6313, 0.0
      %v6474 = vmax.f32 %v4794, 0.0
      %v6475 = vmax.f32 %v6315, 0.0
      %v6476 = vmax.f32 %v4797, 0.0
      %v6477 = vmax.f32 %v6318, 0.0
      %v6478 = vmax.f32 %v4799, 0.0
      %v6479 = vmax.f32 %v6320, 0.0
      %v6480 = vmax.f32 %v4802, 0.0
      %v6481 = vmax.f32 %v6323, 0.0
      %v6482 = vmax.f32 %v4804, 0.0
      %v6483 = vmax.f32 %v6325, 0.0
      %v6484 = vmax.f32 %v4807, 0.0
      %v6485 = vmax.f32 %v6328, 0.0
      %v6486 = vmax.f32 %v4809, 0.0
      %v6487 = vmax.f32 %v6330, 0.0
      %v6488 = vmax.f32 %v4812, 0.0
      %v6489 = vmax.f32 %v6333, 0.0
      %v6490 = vmax.f32 %v4814, 0.0
      %v6491 = vmax.f32 %v6335, 0.0
      %v6492 = vmax.f32 %v4817, 0.0
      %v6493 = vmax.f32 %v6338, 0.0
      %v6494 = vmax.f32 %v4819, 0.0
      %v6495 = vmax.f32 %v6340, 0.0
      %v6496 = vmax.f32 %v4822, 0.0
      %v6497 = vmax.f32 %v6343, 0.0
      %v6498 = vmax.f32 %v4824, 0.0
      %v6499 = vmax.f32 %v6345, 0.0
      %v6500 = vmax.f32 %v4827, 0.0
      %v6501 = vmax.f32 %v6348, 0.0
      %v6502 = vmax.f32 %v4829, 0.0
      %v6503 = vmax.f32 %v6350, 0.0
      %v6504 = vmax.f32 %v4832, 0.0
      %v6505 = vmax.f32 %v6353, 0.0
      %v6506 = vmax.f32 %v4834, 0.0
      %v6507 = vmax.f32 %v6355, 0.0
      %v6508 = vmax.f32 %v4837, 0.0
      %v6509 = vmax.f32 %v6358, 0.0
      %v6510 = vmax.f32 %v4839, 0.0
      %v6511 = vmax.f32 %v6360, 0.0
      %v6512 = vmax.f32 %v4842, 0.0
      %v6513 = vmax.f32 %v6363, 0.0
      %v6514 = vmax.f32 %v4844, 0.0
      %v6515 = vmax.f32 %v6365, 0.0
      %v6516 = vmax.f32 %v4847, 0.0
      %v6517 = vmax.f32 %v6368, 0.0
      %v6518 = vmax.f32 %v4849, 0.0
      %v6519 = vmax.f32 %v6370, 0.0
      %v6520 = vmax.f32 %v4852, 0.0
      %v6521 = vmax.f32 %v6373, 0.0
      %v6522 = vmax.f32 %v4854, 0.0
      %v6523 = vmax.f32 %v6375, 0.0
      %v6524 = vmax.f32 %v4857, 0.0
      %v6525 = vmax.f32 %v6378, 0.0
      %v6526 = vmax.f32 %v4859, 0.0
      %v6527 = vmax.f32 %v6380, 0.0
      %v6528 = vmax.f32 %v4862, 0.0
      %v6529 = vmax.f32 %v6383, 0.0
      %v6530 = vmax.f32 %v4864, 0.0
      %v6531 = vmax.f32 %v6385, 0.0
      %v6532 = vmax.f32 %v4867, 0.0
      %v6533 = vmax.f32 %v6388, 0.0
      %v6534 = vmax.f32 %v4869, 0.0
      %v6535 = vmax.f32 %v6390, 0.0
      %v6536 = vmax.f32 %v4872, 0.0
      %v6537 = vmax.f32 %v6393, 0.0
      %v6538 = vmax.f32 %v4874, 0.0
      %v6539 = vmax.f32 %v6395, 0.0
      %v6540 = vmax.f32 %v4877, 0.0
      %v6541 = vmax.f32 %v6398, 0.0
      %v6542 = vmax.f32 %v4879, 0.0
      %v6543 = vmax.f32 %v6400, 0.0
      %v6544 = vmax.f32 %v4882, 0.0
      %v6545 = vmax.f32 %v6403, 0.0
      %v6546 = vmax.f32 %v4884, 0.0
      %v6547 = vmax.f32 %v6405, 0.0
      %v6548 = vmax.f32 %v4887, 0.0
      %v6549 = vmax.f32 %v6408, 0.0
      %v6550 = vmax.f32 %v4889, 0.0
      %v6551 = vmax.f32 %v6410, 0.0
      %v6552 = vmax.f32 %v4892, 0.0
      %v6553 = vmax.f32 %v6413, 0.0
      %v6554 = vmax.f32 %v4894, 0.0
      %v6555 = vmax.f32 %v6415, 0.0
      %v6556 = vmax.f32 %v4897, 0.0
      %v6557 = vmax.f32 %v6418, 0.0
      %v6558 = vmax.f32 %v4899, 0.0
      %v6559 = vmax.f32 %v6420, 0.0
      %v6560 = vmax.f32 %v4902, 0.0
      %v6561 = vmax.f32 %v6423, 0.0
      %v6562 = vmax.f32 %v4904, 0.0
      %v6563 = vmax.f32 %v6425, 0.0
      %v6564 = vmax.f32 %v4907, 0.0
      %v6565 = vmax.f32 %v6428, 0.0
      %v6566 = vmax.f32 %v4909, 0.0
      %v6567 = vmax.f32 %v6430, 0.0
      %v6568 = vmax.f32 %v4912, 0.0
      %v6569 = vmax.f32 %v6433, 0.0
      %v6570 = vmax.f32 %v4914, 0.0
      %v6571 = vmax.f32 %v6435, 0.0
      %v6572 = vmax.f32 %v4917, 0.0
      %v6573 = vmax.f32 %v6438, 0.0
      %v6574 = vmax.f32 %v4919, 0.0
      %v6575 = vmax.f32 %v6440, 0.0
      %v6576 = vmax.f32 %v4922, 0.0
      %v6577 = vmax.f32 %v6443, 0.0
      %v6578 = vmax.f32 %v4924, 0.0
      %v6579 = vmax.f32 %v6445, 0.0
      %v6580 = vmax.f32 %v4927, 0.0
      %v6581 = vmax.f32 %v6448, 0.0
      %v6582 = vmax.f32 %v4929, 0.0
      %v6583 = vmax.f32 %v6450, 0.0
      %v6584 = vmax.f32 %v4932, 0.0
      %v6585 = vmax.f32 %v6453, 0.0
      %v6586 = vmax.f32 %v4934, 0.0
      %v6587 = vmax.f32 %v6455, 0.0
      %v6588 = vmax.f32 %v4937, 0.0
      %v6589 = vmax.f32 %v6458, 0.0
      %v6590 = vmax.f32 %v4939, 0.0
      %v6591 = vmax.f32 %v6460, 0.0
      %v6592 = vmax.f32 %v4942, 0.0
      %v6593 = vmax.f32 %v6463, 0.0
      %v6594 = vmax.f32 %v4944, 0.0
      %v6595 = vmax.f32 %v6465, 0.0
      %v6596 = vmax.f32 %v4947, 0.0
      %v6597 = vmax.f32 %v6468, 0.0
      %v6598 = vmax.f32 %v4949, 0.0
      %v6599 = vmax.f32 %v6470, 0.0
      %v6600 = vld [vmem:[%s3] sm:$0xff]
      %v6601 = vld [vmem:[%s3 + $0x8] sm:$0xff]
      %v6602 = vld [vmem:[%s3 + $0x10] sm:$0xff]
      %v6603 = vld [vmem:[%s3 + $0x18] sm:$0xff]
      %v6604 = vld [vmem:[%s3 + $0x20] sm:$0xff]
      %v6605 = vld [vmem:[%s3 + $0x28] sm:$0xff]
      %v6606 = vld [vmem:[%s3 + $0x30] sm:$0xff]
      %v6607 = vld [vmem:[%s3 + $0x38] sm:$0xff]
      %v6608 = vld [vmem:[%s3 + $0x40] sm:$0xff]
      %v6609 = vld [vmem:[%s3 + $0x48] sm:$0xff]
      %v6610 = vld [vmem:[%s3 + $0x50] sm:$0xff]
      %v6611 = vld [vmem:[%s3 + $0x58] sm:$0xff]
      %v6612 = vld [vmem:[%s3 + $0x60] sm:$0xff]
      %v6613 = vld [vmem:[%s3 + $0x68] sm:$0xff]
      %v6614 = vld [vmem:[%s3 + $0x70] sm:$0xff]
      %v6615 = vld [vmem:[%s3 + $0x78] sm:$0xff]
      %v6616 = vld [vmem:[%s3 + $0x80] sm:$0xff]
      %v6617 = vld [vmem:[%s3 + $0x88] sm:$0xff]
      %v6618 = vld [vmem:[%s3 + $0x90] sm:$0xff]
      %v6619 = vld [vmem:[%s3 + $0x98] sm:$0xff]
      %v6620 = vld [vmem:[%s3 + $0xa0] sm:$0xff]
      %v6621 = vld [vmem:[%s3 + $0xa8] sm:$0xff]
      %v6622 = vld [vmem:[%s3 + $0xb0] sm:$0xff]
      %v6623 = vld [vmem:[%s3 + $0xb8] sm:$0xff]
      %v6624 = vld [vmem:[%s3 + $0xc0] sm:$0xff]
      %v6625 = vld [vmem:[%s3 + $0xc8] sm:$0xff]
      %v6626 = vld [vmem:[%s3 + $0xd0] sm:$0xff]
      %v6627 = vld [vmem:[%s3 + $0xd8] sm:$0xff]
      %v6628 = vld [vmem:[%s3 + $0xe0] sm:$0xff]
      %v6629 = vld [vmem:[%s3 + $0xe8] sm:$0xff]
      %v6630 = vld [vmem:[%s3 + $0xf0] sm:$0xff]
      %v6631 = vld [vmem:[%s3 + $0xf8] sm:$0xff]
      %v6632 = vld [vmem:[%s3 + $0x100] sm:$0xff]
      %v6633 = vld [vmem:[%s3 + $0x108] sm:$0xff]
      %v6634 = vld [vmem:[%s3 + $0x110] sm:$0xff]
      %v6635 = vld [vmem:[%s3 + $0x118] sm:$0xff]
      %v6636 = vld [vmem:[%s3 + $0x120] sm:$0xff]
      %v6637 = vld [vmem:[%s3 + $0x128] sm:$0xff]
      %v6638 = vld [vmem:[%s3 + $0x130] sm:$0xff]
      %v6639 = vld [vmem:[%s3 + $0x138] sm:$0xff]
      %v6640 = vld [vmem:[%s3 + $0x140] sm:$0xff]
      %v6641 = vld [vmem:[%s3 + $0x148] sm:$0xff]
      %v6642 = vld [vmem:[%s3 + $0x150] sm:$0xff]
      %v6643 = vld [vmem:[%s3 + $0x158] sm:$0xff]
      %v6644 = vld [vmem:[%s3 + $0x160] sm:$0xff]
      %v6645 = vld [vmem:[%s3 + $0x168] sm:$0xff]
      %v6646 = vld [vmem:[%s3 + $0x170] sm:$0xff]
      %v6647 = vld [vmem:[%s3 + $0x178] sm:$0xff]
      %v6648 = vld [vmem:[%s3 + $0x180] sm:$0xff]
      %v6649 = vld [vmem:[%s3 + $0x188] sm:$0xff]
      %v6650 = vld [vmem:[%s3 + $0x190] sm:$0xff]
      %v6651 = vld [vmem:[%s3 + $0x198] sm:$0xff]
      %v6652 = vld [vmem:[%s3 + $0x1a0] sm:$0xff]
      %v6653 = vld [vmem:[%s3 + $0x1a8] sm:$0xff]
      %v6654 = vld [vmem:[%s3 + $0x1b0] sm:$0xff]
      %v6655 = vld [vmem:[%s3 + $0x1b8] sm:$0xff]
      %v6656 = vld [vmem:[%s3 + $0x1c0] sm:$0xff]
      %v6657 = vld [vmem:[%s3 + $0x1c8] sm:$0xff]
      %v6658 = vld [vmem:[%s3 + $0x1d0] sm:$0xff]
      %v6659 = vld [vmem:[%s3 + $0x1d8] sm:$0xff]
      %v6660 = vld [vmem:[%s3 + $0x1e0] sm:$0xff]
      %v6661 = vld [vmem:[%s3 + $0x1e8] sm:$0xff]
      %v6662 = vld [vmem:[%s3 + $0x1f0] sm:$0xff]
      %v6663 = vld [vmem:[%s3 + $0x1f8] sm:$0xff]
      %v6664 = vpack.c.bf16 %v6474, %v6472
      %v6665 = vpack.c.bf16 %v6475, %v6473
      %v6666 = vpack.c.bf16 %v6478, %v6476
      %v6667 = vpack.c.bf16 %v6479, %v6477
      %v6668 = vpack.c.bf16 %v6482, %v6480
      %v6669 = vpack.c.bf16 %v6483, %v6481
      %v6670 = vpack.c.bf16 %v6486, %v6484
      %v6671 = vpack.c.bf16 %v6487, %v6485
      %v6672 = vpack.c.bf16 %v6490, %v6488
      %v6673 = vpack.c.bf16 %v6491, %v6489
      %v6674 = vpack.c.bf16 %v6494, %v6492
      %v6675 = vpack.c.bf16 %v6495, %v6493
      %v6676 = vpack.c.bf16 %v6498, %v6496
      %v6677 = vpack.c.bf16 %v6499, %v6497
      %v6678 = vpack.c.bf16 %v6502, %v6500
      %v6679 = vpack.c.bf16 %v6503, %v6501
      %v6680 = vpack.c.bf16 %v6506, %v6504
      %v6681 = vpack.c.bf16 %v6507, %v6505
      %v6682 = vpack.c.bf16 %v6510, %v6508
      %v6683 = vpack.c.bf16 %v6511, %v6509
      %v6684 = vpack.c.bf16 %v6514, %v6512
      %v6685 = vpack.c.bf16 %v6515, %v6513
      %v6686 = vpack.c.bf16 %v6518, %v6516
      %v6687 = vpack.c.bf16 %v6519, %v6517
      %v6688 = vpack.c.bf16 %v6522, %v6520
      %v6689 = vpack.c.bf16 %v6523, %v6521
      %v6690 = vpack.c.bf16 %v6526, %v6524
      %v6691 = vpack.c.bf16 %v6527, %v6525
      %v6692 = vpack.c.bf16 %v6530, %v6528
      %v6693 = vpack.c.bf16 %v6531, %v6529
      %v6694 = vpack.c.bf16 %v6534, %v6532
      %v6695 = vpack.c.bf16 %v6535, %v6533
      %v6696 = vpack.c.bf16 %v6538, %v6536
      %v6697 = vpack.c.bf16 %v6539, %v6537
      %v6698 = vpack.c.bf16 %v6542, %v6540
      %v6699 = vpack.c.bf16 %v6543, %v6541
      %v6700 = vpack.c.bf16 %v6546, %v6544
      %v6701 = vpack.c.bf16 %v6547, %v6545
      %v6702 = vpack.c.bf16 %v6550, %v6548
      %v6703 = vpack.c.bf16 %v6551, %v6549
      %v6704 = vpack.c.bf16 %v6554, %v6552
      %v6705 = vpack.c.bf16 %v6555, %v6553
      %v6706 = vpack.c.bf16 %v6558, %v6556
      %v6707 = vpack.c.bf16 %v6559, %v6557
      %v6708 = vpack.c.bf16 %v6562, %v6560
      %v6709 = vpack.c.bf16 %v6563, %v6561
      %v6710 = vpack.c.bf16 %v6566, %v6564
      %v6711 = vpack.c.bf16 %v6567, %v6565
      %v6712 = vpack.c.bf16 %v6570, %v6568
      %v6713 = vpack.c.bf16 %v6571, %v6569
      %v6714 = vpack.c.bf16 %v6574, %v6572
      %v6715 = vpack.c.bf16 %v6575, %v6573
      %v6716 = vpack.c.bf16 %v6578, %v6576
      %v6717 = vpack.c.bf16 %v6579, %v6577
      %v6718 = vpack.c.bf16 %v6582, %v6580
      %v6719 = vpack.c.bf16 %v6583, %v6581
      %v6720 = vpack.c.bf16 %v6586, %v6584
      %v6721 = vpack.c.bf16 %v6587, %v6585
      %v6722 = vpack.c.bf16 %v6590, %v6588
      %v6723 = vpack.c.bf16 %v6591, %v6589
      %v6724 = vpack.c.bf16 %v6594, %v6592
      %v6725 = vpack.c.bf16 %v6595, %v6593
      %v6726 = vpack.c.bf16 %v6598, %v6596
      %v6727 = vpack.c.bf16 %v6599, %v6597
      %v6728 = vld [vmem:[%s4] sm:$0xff]
      %v6729 = vld [vmem:[%s4 + $0x8] sm:$0xff]
      %v6730 = vld [vmem:[%s4 + $0x10] sm:$0xff]
      %v6731 = vld [vmem:[%s4 + $0x18] sm:$0xff]
      %v6732 = vld [vmem:[%s4 + $0x20] sm:$0xff]
      %v6733 = vld [vmem:[%s4 + $0x28] sm:$0xff]
      %v6734 = vld [vmem:[%s4 + $0x30] sm:$0xff]
      %v6735 = vld [vmem:[%s4 + $0x38] sm:$0xff]
      %v6736 = vld [vmem:[%s4 + $0x40] sm:$0xff]
      %v6737 = vld [vmem:[%s4 + $0x48] sm:$0xff]
      %v6738 = vld [vmem:[%s4 + $0x50] sm:$0xff]
      %v6739 = vld [vmem:[%s4 + $0x58] sm:$0xff]
      %v6740 = vld [vmem:[%s4 + $0x60] sm:$0xff]
      %v6741 = vld [vmem:[%s4 + $0x68] sm:$0xff]
      %v6742 = vld [vmem:[%s4 + $0x70] sm:$0xff]
      %v6743 = vld [vmem:[%s4 + $0x78] sm:$0xff]
      %v6744 = vld [vmem:[%s4 + $0x80] sm:$0xff]
      %v6745 = vld [vmem:[%s4 + $0x88] sm:$0xff]
      %v6746 = vld [vmem:[%s4 + $0x90] sm:$0xff]
      %v6747 = vld [vmem:[%s4 + $0x98] sm:$0xff]
      %v6748 = vld [vmem:[%s4 + $0xa0] sm:$0xff]
      %v6749 = vld [vmem:[%s4 + $0xa8] sm:$0xff]
      %v6750 = vld [vmem:[%s4 + $0xb0] sm:$0xff]
      %v6751 = vld [vmem:[%s4 + $0xb8] sm:$0xff]
      %v6752 = vld [vmem:[%s4 + $0xc0] sm:$0xff]
      %v6753 = vld [vmem:[%s4 + $0xc8] sm:$0xff]
      %v6754 = vld [vmem:[%s4 + $0xd0] sm:$0xff]
      %v6755 = vld [vmem:[%s4 + $0xd8] sm:$0xff]
      %v6756 = vld [vmem:[%s4 + $0xe0] sm:$0xff]
      %v6757 = vld [vmem:[%s4 + $0xe8] sm:$0xff]
      %v6758 = vld [vmem:[%s4 + $0xf0] sm:$0xff]
      %v6759 = vld [vmem:[%s4 + $0xf8] sm:$0xff]
      %6761 = vset.pattern.permute.xlu0 0
      %6762 = vperm.xlu0 %6761, %v6728
      %v6763 = vpop.permute.xlu0 %6762
      %6766 = vset.pattern.permute.xlu0 0
      %6767 = vperm.xlu0 %6766, %v6729
      %v6768 = vpop.permute.xlu0 %6767
      %6771 = vset.pattern.permute.xlu0 0
      %6772 = vperm.xlu0 %6771, %v6730
      %v6773 = vpop.permute.xlu0 %6772
      %6776 = vset.pattern.permute.xlu0 0
      %6777 = vperm.xlu0 %6776, %v6731
      %v6778 = vpop.permute.xlu0 %6777
      %6781 = vset.pattern.permute.xlu0 0
      %6782 = vperm.xlu0 %6781, %v6732
      %v6783 = vpop.permute.xlu0 %6782
      %6786 = vset.pattern.permute.xlu0 0
      %6787 = vperm.xlu0 %6786, %v6733
      %v6788 = vpop.permute.xlu0 %6787
      %6791 = vset.pattern.permute.xlu0 0
      %6792 = vperm.xlu0 %6791, %v6734
      %v6793 = vpop.permute.xlu0 %6792
      %6796 = vset.pattern.permute.xlu0 0
      %6797 = vperm.xlu0 %6796, %v6735
      %v6798 = vpop.permute.xlu0 %6797
      %6801 = vset.pattern.permute.xlu0 0
      %6802 = vperm.xlu0 %6801, %v6736
      %v6803 = vpop.permute.xlu0 %6802
      %6806 = vset.pattern.permute.xlu0 0
      %6807 = vperm.xlu0 %6806, %v6737
      %v6808 = vpop.permute.xlu0 %6807
      %6811 = vset.pattern.permute.xlu0 0
      %6812 = vperm.xlu0 %6811, %v6738
      %v6813 = vpop.permute.xlu0 %6812
      %6816 = vset.pattern.permute.xlu0 0
      %6817 = vperm.xlu0 %6816, %v6739
      %v6818 = vpop.permute.xlu0 %6817
      %6821 = vset.pattern.permute.xlu0 0
      %6822 = vperm.xlu0 %6821, %v6740
      %v6823 = vpop.permute.xlu0 %6822
      %6826 = vset.pattern.permute.xlu0 0
      %6827 = vperm.xlu0 %6826, %v6741
      %v6828 = vpop.permute.xlu0 %6827
      %6831 = vset.pattern.permute.xlu0 0
      %6832 = vperm.xlu0 %6831, %v6742
      %v6833 = vpop.permute.xlu0 %6832
      %6836 = vset.pattern.permute.xlu0 0
      %6837 = vperm.xlu0 %6836, %v6743
      %v6838 = vpop.permute.xlu0 %6837
      %6841 = vset.pattern.permute.xlu0 0
      %6842 = vperm.xlu0 %6841, %v6744
      %v6843 = vpop.permute.xlu0 %6842
      %6846 = vset.pattern.permute.xlu0 0
      %6847 = vperm.xlu0 %6846, %v6745
      %v6848 = vpop.permute.xlu0 %6847
      %6851 = vset.pattern.permute.xlu0 0
      %6852 = vperm.xlu0 %6851, %v6746
      %v6853 = vpop.permute.xlu0 %6852
      %6856 = vset.pattern.permute.xlu0 0
      %6857 = vperm.xlu0 %6856, %v6747
      %v6858 = vpop.permute.xlu0 %6857
      %6861 = vset.pattern.permute.xlu0 0
      %6862 = vperm.xlu0 %6861, %v6748
      %v6863 = vpop.permute.xlu0 %6862
      %6866 = vset.pattern.permute.xlu0 0
      %6867 = vperm.xlu0 %6866, %v6749
      %v6868 = vpop.permute.xlu0 %6867
      %6871 = vset.pattern.permute.xlu0 0
      %6872 = vperm.xlu0 %6871, %v6750
      %v6873 = vpop.permute.xlu0 %6872
      %6876 = vset.pattern.permute.xlu0 0
      %6877 = vperm.xlu0 %6876, %v6751
      %v6878 = vpop.permute.xlu0 %6877
      %6881 = vset.pattern.permute.xlu0 0
      %6882 = vperm.xlu0 %6881, %v6752
      %v6883 = vpop.permute.xlu0 %6882
      %6886 = vset.pattern.permute.xlu0 0
      %6887 = vperm.xlu0 %6886, %v6753
      %v6888 = vpop.permute.xlu0 %6887
      %6891 = vset.pattern.permute.xlu0 0
      %6892 = vperm.xlu0 %6891, %v6754
      %v6893 = vpop.permute.xlu0 %6892
      %6896 = vset.pattern.permute.xlu0 0
      %6897 = vperm.xlu0 %6896, %v6755
      %v6898 = vpop.permute.xlu0 %6897
      %6901 = vset.pattern.permute.xlu0 0
      %6902 = vperm.xlu0 %6901, %v6756
      %v6903 = vpop.permute.xlu0 %6902
      %6906 = vset.pattern.permute.xlu0 0
      %6907 = vperm.xlu0 %6906, %v6757
      %v6908 = vpop.permute.xlu0 %6907
      %6911 = vset.pattern.permute.xlu0 0
      %6912 = vperm.xlu0 %6911, %v6758
      %v6913 = vpop.permute.xlu0 %6912
      %6916 = vset.pattern.permute.xlu0 0
      %6917 = vperm.xlu0 %6916, %v6759
      %v6918 = vpop.permute.xlu0 %6917
      %v6984 = vunpack.c.l.b16 %v6600
      %v6985 = vunpack.c.h.b16 %v6600
      %v6986 = vunpack.c.l.b16 %v6601
      %v6987 = vunpack.c.h.b16 %v6601
      %v6988 = vunpack.c.l.b16 %v6602
      %v6989 = vunpack.c.h.b16 %v6602
      %v6990 = vunpack.c.l.b16 %v6603
      %v6991 = vunpack.c.h.b16 %v6603
      %v6992 = vunpack.c.l.b16 %v6604
      %v6993 = vunpack.c.h.b16 %v6604
      %v6994 = vunpack.c.l.b16 %v6605
      %v6995 = vunpack.c.h.b16 %v6605
      %v6996 = vunpack.c.l.b16 %v6606
      %v6997 = vunpack.c.h.b16 %v6606
      %v6998 = vunpack.c.l.b16 %v6607
      %v6999 = vunpack.c.h.b16 %v6607
      %v7000 = vunpack.c.l.b16 %v6608
      %v7001 = vunpack.c.h.b16 %v6608
      %v7002 = vunpack.c.l.b16 %v6609
      %v7003 = vunpack.c.h.b16 %v6609
      %v7004 = vunpack.c.l.b16 %v6610
      %v7005 = vunpack.c.h.b16 %v6610
      %v7006 = vunpack.c.l.b16 %v6611
      %v7007 = vunpack.c.h.b16 %v6611
      %v7008 = vunpack.c.l.b16 %v6612
      %v7009 = vunpack.c.h.b16 %v6612
      %v7010 = vunpack.c.l.b16 %v6613
      %v7011 = vunpack.c.h.b16 %v6613
      %v7012 = vunpack.c.l.b16 %v6614
      %v7013 = vunpack.c.h.b16 %v6614
      %v7014 = vunpack.c.l.b16 %v6615
      %v7015 = vunpack.c.h.b16 %v6615
      %v7016 = vunpack.c.l.b16 %v6616
      %v7017 = vunpack.c.h.b16 %v6616
      %v7018 = vunpack.c.l.b16 %v6617
      %v7019 = vunpack.c.h.b16 %v6617
      %v7020 = vunpack.c.l.b16 %v6618
      %v7021 = vunpack.c.h.b16 %v6618
      %v7022 = vunpack.c.l.b16 %v6619
      %v7023 = vunpack.c.h.b16 %v6619
      %v7024 = vunpack.c.l.b16 %v6620
      %v7025 = vunpack.c.h.b16 %v6620
      %v7026 = vunpack.c.l.b16 %v6621
      %v7027 = vunpack.c.h.b16 %v6621
      %v7028 = vunpack.c.l.b16 %v6622
      %v7029 = vunpack.c.h.b16 %v6622
      %v7030 = vunpack.c.l.b16 %v6623
      %v7031 = vunpack.c.h.b16 %v6623
      %v7032 = vunpack.c.l.b16 %v6624
      %v7033 = vunpack.c.h.b16 %v6624
      %v7034 = vunpack.c.l.b16 %v6625
      %v7035 = vunpack.c.h.b16 %v6625
      %v7036 = vunpack.c.l.b16 %v6626
      %v7037 = vunpack.c.h.b16 %v6626
      %v7038 = vunpack.c.l.b16 %v6627
      %v7039 = vunpack.c.h.b16 %v6627
      %v7040 = vunpack.c.l.b16 %v6628
      %v7041 = vunpack.c.h.b16 %v6628
      %v7042 = vunpack.c.l.b16 %v6629
      %v7043 = vunpack.c.h.b16 %v6629
      %v7044 = vunpack.c.l.b16 %v6630
      %v7045 = vunpack.c.h.b16 %v6630
      %v7046 = vunpack.c.l.b16 %v6631
      %v7047 = vunpack.c.h.b16 %v6631
      %v7048 = vunpack.c.l.b16 %v6632
      %v7049 = vunpack.c.h.b16 %v6632
      %v7050 = vunpack.c.l.b16 %v6633
      %v7051 = vunpack.c.h.b16 %v6633
      %v7052 = vunpack.c.l.b16 %v6634
      %v7053 = vunpack.c.h.b16 %v6634
      %v7054 = vunpack.c.l.b16 %v6635
      %v7055 = vunpack.c.h.b16 %v6635
      %v7056 = vunpack.c.l.b16 %v6636
      %v7057 = vunpack.c.h.b16 %v6636
      %v7058 = vunpack.c.l.b16 %v6637
      %v7059 = vunpack.c.h.b16 %v6637
      %v7060 = vunpack.c.l.b16 %v6638
      %v7061 = vunpack.c.h.b16 %v6638
      %v7062 = vunpack.c.l.b16 %v6639
      %v7063 = vunpack.c.h.b16 %v6639
      %v7064 = vunpack.c.l.b16 %v6640
      %v7065 = vunpack.c.h.b16 %v6640
      %v7066 = vunpack.c.l.b16 %v6641
      %v7067 = vunpack.c.h.b16 %v6641
      %v7068 = vunpack.c.l.b16 %v6642
      %v7069 = vunpack.c.h.b16 %v6642
      %v7070 = vunpack.c.l.b16 %v6643
      %v7071 = vunpack.c.h.b16 %v6643
      %v7072 = vunpack.c.l.b16 %v6644
      %v7073 = vunpack.c.h.b16 %v6644
      %v7074 = vunpack.c.l.b16 %v6645
      %v7075 = vunpack.c.h.b16 %v6645
      %v7076 = vunpack.c.l.b16 %v6646
      %v7077 = vunpack.c.h.b16 %v6646
      %v7078 = vunpack.c.l.b16 %v6647
      %v7079 = vunpack.c.h.b16 %v6647
      %v7080 = vunpack.c.l.b16 %v6648
      %v7081 = vunpack.c.h.b16 %v6648
      %v7082 = vunpack.c.l.b16 %v6649
      %v7083 = vunpack.c.h.b16 %v6649
      %v7084 = vunpack.c.l.b16 %v6650
      %v7085 = vunpack.c.h.b16 %v6650
      %v7086 = vunpack.c.l.b16 %v6651
      %v7087 = vunpack.c.h.b16 %v6651
      %v7088 = vunpack.c.l.b16 %v6652
      %v7089 = vunpack.c.h.b16 %v6652
      %v7090 = vunpack.c.l.b16 %v6653
      %v7091 = vunpack.c.h.b16 %v6653
      %v7092 = vunpack.c.l.b16 %v6654
      %v7093 = vunpack.c.h.b16 %v6654
      %v7094 = vunpack.c.l.b16 %v6655
      %v7095 = vunpack.c.h.b16 %v6655
      %v7096 = vunpack.c.l.b16 %v6656
      %v7097 = vunpack.c.h.b16 %v6656
      %v7098 = vunpack.c.l.b16 %v6657
      %v7099 = vunpack.c.h.b16 %v6657
      %v7100 = vunpack.c.l.b16 %v6658
      %v7101 = vunpack.c.h.b16 %v6658
      %v7102 = vunpack.c.l.b16 %v6659
      %v7103 = vunpack.c.h.b16 %v6659
      %v7104 = vunpack.c.l.b16 %v6660
      %v7105 = vunpack.c.h.b16 %v6660
      %v7106 = vunpack.c.l.b16 %v6661
      %v7107 = vunpack.c.h.b16 %v6661
      %v7108 = vunpack.c.l.b16 %v6662
      %v7109 = vunpack.c.h.b16 %v6662
      %v7110 = vunpack.c.l.b16 %v6663
      %v7111 = vunpack.c.h.b16 %v6663
      %v7112 = vpack.c.b16 %v6988, %v6984
      %v7113 = vpack.c.b16 %v6989, %v6985
      %v7114 = vpack.c.b16 %v6990, %v6986
      %v7115 = vpack.c.b16 %v6991, %v6987
      %v7116 = vpack.c.b16 %v6996, %v6992
      %v7117 = vpack.c.b16 %v6997, %v6993
      %v7118 = vpack.c.b16 %v6998, %v6994
      %v7119 = vpack.c.b16 %v6999, %v6995
      %v7120 = vpack.c.b16 %v7004, %v7000
      %v7121 = vpack.c.b16 %v7005, %v7001
      %v7122 = vpack.c.b16 %v7006, %v7002
      %v7123 = vpack.c.b16 %v7007, %v7003
      %v7124 = vpack.c.b16 %v7012, %v7008
      %v7125 = vpack.c.b16 %v7013, %v7009
      %v7126 = vpack.c.b16 %v7014, %v7010
      %v7127 = vpack.c.b16 %v7015, %v7011
      %v7128 = vpack.c.b16 %v7020, %v7016
      %v7129 = vpack.c.b16 %v7021, %v7017
      %v7130 = vpack.c.b16 %v7022, %v7018
      %v7131 = vpack.c.b16 %v7023, %v7019
      %v7132 = vpack.c.b16 %v7028, %v7024
      %v7133 = vpack.c.b16 %v7029, %v7025
      %v7134 = vpack.c.b16 %v7030, %v7026
      %v7135 = vpack.c.b16 %v7031, %v7027
      %v7136 = vpack.c.b16 %v7036, %v7032
      %v7137 = vpack.c.b16 %v7037, %v7033
      %v7138 = vpack.c.b16 %v7038, %v7034
      %v7139 = vpack.c.b16 %v7039, %v7035
      %v7140 = vpack.c.b16 %v7044, %v7040
      %v7141 = vpack.c.b16 %v7045, %v7041
      %v7142 = vpack.c.b16 %v7046, %v7042
      %v7143 = vpack.c.b16 %v7047, %v7043
      %v7144 = vpack.c.b16 %v7052, %v7048
      %v7145 = vpack.c.b16 %v7053, %v7049
      %v7146 = vpack.c.b16 %v7054, %v7050
      %v7147 = vpack.c.b16 %v7055, %v7051
      %v7148 = vpack.c.b16 %v7060, %v7056
      %v7149 = vpack.c.b16 %v7061, %v7057
      %v7150 = vpack.c.b16 %v7062, %v7058
      %v7151 = vpack.c.b16 %v7063, %v7059
      %v7152 = vpack.c.b16 %v7068, %v7064
      %v7153 = vpack.c.b16 %v7069, %v7065
      %v7154 = vpack.c.b16 %v7070, %v7066
      %v7155 = vpack.c.b16 %v7071, %v7067
      %v7156 = vpack.c.b16 %v7076, %v7072
      %v7157 = vpack.c.b16 %v7077, %v7073
      %v7158 = vpack.c.b16 %v7078, %v7074
      %v7159 = vpack.c.b16 %v7079, %v7075
      %v7160 = vpack.c.b16 %v7084, %v7080
      %v7161 = vpack.c.b16 %v7085, %v7081
      %v7162 = vpack.c.b16 %v7086, %v7082
      %v7163 = vpack.c.b16 %v7087, %v7083
      %v7164 = vpack.c.b16 %v7092, %v7088
      %v7165 = vpack.c.b16 %v7093, %v7089
      %v7166 = vpack.c.b16 %v7094, %v7090
      %v7167 = vpack.c.b16 %v7095, %v7091
      %v7168 = vpack.c.b16 %v7100, %v7096
      %v7169 = vpack.c.b16 %v7101, %v7097
      %v7170 = vpack.c.b16 %v7102, %v7098
      %v7171 = vpack.c.b16 %v7103, %v7099
      %v7172 = vpack.c.b16 %v7108, %v7104
      %v7173 = vpack.c.b16 %v7109, %v7105
      %v7174 = vpack.c.b16 %v7110, %v7106
      %v7175 = vpack.c.b16 %v7111, %v7107
      %7240 = vmatpush.bf16.msra.mxu0 %v6678
      %7241 = vmatpush.bf16.msra.mxu0 %v6676
      %7242 = vmatpush.bf16.msra.mxu0 %v6674
      %7243 = vmatpush.bf16.msra.mxu0 %v6672
      %7244 = vmatpush.bf16.msra.mxu0 %v6670
      %7245 = vmatpush.bf16.msra.mxu0 %v6668
      %7246 = vmatpush.bf16.msra.mxu0 %v6666
      %7247 = vmatpush.bf16.msra.mxu0 %v6664
      %7248 = vmatmul.bf16.gmra.mxu0 %v7112
      %v7249 = vpop.f32.mrf.mxu0
      %v7250 = vadd.f32 %v6763, %v7249
      %v7251 = vpop.f32.mrf.mxu0
      %v7252 = vadd.f32 %v6768, %v7251
      %7253 = vmatmul.bf16.gmra.mxu0 %v7116
      %v7254 = vpop.f32.mrf.mxu0
      %v7255 = vadd.f32 %v6773, %v7254
      %v7256 = vpop.f32.mrf.mxu0
      %v7257 = vadd.f32 %v6778, %v7256
      %7258 = vmatmul.bf16.gmra.mxu0 %v7120
      %v7259 = vpop.f32.mrf.mxu0
      %v7260 = vadd.f32 %v6783, %v7259
      %v7261 = vpop.f32.mrf.mxu0
      %v7262 = vadd.f32 %v6788, %v7261
      %7263 = vmatmul.bf16.gmra.mxu0 %v7124
      %v7264 = vpop.f32.mrf.mxu0
      %v7265 = vadd.f32 %v6793, %v7264
      %v7266 = vpop.f32.mrf.mxu0
      %v7267 = vadd.f32 %v6798, %v7266
      %7268 = vmatmul.bf16.gmra.mxu0 %v7128
      %v7269 = vpop.f32.mrf.mxu0
      %v7270 = vadd.f32 %v6803, %v7269
      %v7271 = vpop.f32.mrf.mxu0
      %v7272 = vadd.f32 %v6808, %v7271
      %7273 = vmatmul.bf16.gmra.mxu0 %v7132
      %v7274 = vpop.f32.mrf.mxu0
      %v7275 = vadd.f32 %v6813, %v7274
      %v7276 = vpop.f32.mrf.mxu0
      %v7277 = vadd.f32 %v6818, %v7276
      %7278 = vmatmul.bf16.gmra.mxu0 %v7136
      %v7279 = vpop.f32.mrf.mxu0
      %v7280 = vadd.f32 %v6823, %v7279
      %v7281 = vpop.f32.mrf.mxu0
      %v7282 = vadd.f32 %v6828, %v7281
      %7283 = vmatmul.bf16.gmra.mxu0 %v7140
      %v7284 = vpop.f32.mrf.mxu0
      %v7285 = vadd.f32 %v6833, %v7284
      %v7286 = vpop.f32.mrf.mxu0
      %v7287 = vadd.f32 %v6838, %v7286
      %7288 = vmatmul.bf16.gmra.mxu0 %v7144
      %v7289 = vpop.f32.mrf.mxu0
      %v7290 = vadd.f32 %v6843, %v7289
      %v7291 = vpop.f32.mrf.mxu0
      %v7292 = vadd.f32 %v6848, %v7291
      %7293 = vmatmul.bf16.gmra.mxu0 %v7148
      %v7294 = vpop.f32.mrf.mxu0
      %v7295 = vadd.f32 %v6853, %v7294
      %v7296 = vpop.f32.mrf.mxu0
      %v7297 = vadd.f32 %v6858, %v7296
      %7298 = vmatmul.bf16.gmra.mxu0 %v7152
      %v7299 = vpop.f32.mrf.mxu0
      %v7300 = vadd.f32 %v6863, %v7299
      %v7301 = vpop.f32.mrf.mxu0
      %v7302 = vadd.f32 %v6868, %v7301
      %7303 = vmatmul.bf16.gmra.mxu0 %v7156
      %v7304 = vpop.f32.mrf.mxu0
      %v7305 = vadd.f32 %v6873, %v7304
      %v7306 = vpop.f32.mrf.mxu0
      %v7307 = vadd.f32 %v6878, %v7306
      %7308 = vmatmul.bf16.gmra.mxu0 %v7160
      %v7309 = vpop.f32.mrf.mxu0
      %v7310 = vadd.f32 %v6883, %v7309
      %v7311 = vpop.f32.mrf.mxu0
      %v7312 = vadd.f32 %v6888, %v7311
      %7313 = vmatmul.bf16.gmra.mxu0 %v7164
      %v7314 = vpop.f32.mrf.mxu0
      %v7315 = vadd.f32 %v6893, %v7314
      %v7316 = vpop.f32.mrf.mxu0
      %v7317 = vadd.f32 %v6898, %v7316
      %7318 = vmatmul.bf16.gmra.mxu0 %v7168
      %v7319 = vpop.f32.mrf.mxu0
      %v7320 = vadd.f32 %v6903, %v7319
      %v7321 = vpop.f32.mrf.mxu0
      %v7322 = vadd.f32 %v6908, %v7321
      %7323 = vmatmul.bf16.gmra.mxu0 %v7172
      %v7324 = vpop.f32.mrf.mxu0
      %v7325 = vadd.f32 %v6913, %v7324
      %v7326 = vpop.f32.mrf.mxu0
      %v7327 = vadd.f32 %v6918, %v7326
      %7328 = vdwg.mxu0
      %7329 = vmatpush.bf16.msra.mxu0 %v6694
      %7330 = vmatpush.bf16.msra.mxu0 %v6692
      %7331 = vmatpush.bf16.msra.mxu0 %v6690
      %7332 = vmatpush.bf16.msra.mxu0 %v6688
      %7333 = vmatpush.bf16.msra.mxu0 %v6686
      %7334 = vmatpush.bf16.msra.mxu0 %v6684
      %7335 = vmatpush.bf16.msra.mxu0 %v6682
      %7336 = vmatpush.bf16.msra.mxu0 %v6680
      %7337 = vmatmul.bf16.gmra.mxu0 %v7113
      %v7338 = vpop.f32.mrf.mxu0
      %v7339 = vadd.f32 %v7250, %v7338
      %v7340 = vpop.f32.mrf.mxu0
      %v7341 = vadd.f32 %v7252, %v7340
      %7342 = vmatmul.bf16.gmra.mxu0 %v7117
      %v7343 = vpop.f32.mrf.mxu0
      %v7344 = vadd.f32 %v7255, %v7343
      %v7345 = vpop.f32.mrf.mxu0
      %v7346 = vadd.f32 %v7257, %v7345
      %7347 = vmatmul.bf16.gmra.mxu0 %v7121
      %v7348 = vpop.f32.mrf.mxu0
      %v7349 = vadd.f32 %v7260, %v7348
      %v7350 = vpop.f32.mrf.mxu0
      %v7351 = vadd.f32 %v7262, %v7350
      %7352 = vmatmul.bf16.gmra.mxu0 %v7125
      %v7353 = vpop.f32.mrf.mxu0
      %v7354 = vadd.f32 %v7265, %v7353
      %v7355 = vpop.f32.mrf.mxu0
      %v7356 = vadd.f32 %v7267, %v7355
      %7357 = vmatmul.bf16.gmra.mxu0 %v7129
      %v7358 = vpop.f32.mrf.mxu0
      %v7359 = vadd.f32 %v7270, %v7358
      %v7360 = vpop.f32.mrf.mxu0
      %v7361 = vadd.f32 %v7272, %v7360
      %7362 = vmatmul.bf16.gmra.mxu0 %v7133
      %v7363 = vpop.f32.mrf.mxu0
      %v7364 = vadd.f32 %v7275, %v7363
      %v7365 = vpop.f32.mrf.mxu0
      %v7366 = vadd.f32 %v7277, %v7365
      %7367 = vmatmul.bf16.gmra.mxu0 %v7137
      %v7368 = vpop.f32.mrf.mxu0
      %v7369 = vadd.f32 %v7280, %v7368
      %v7370 = vpop.f32.mrf.mxu0
      %v7371 = vadd.f32 %v7282, %v7370
      %7372 = vmatmul.bf16.gmra.mxu0 %v7141
      %v7373 = vpop.f32.mrf.mxu0
      %v7374 = vadd.f32 %v7285, %v7373
      %v7375 = vpop.f32.mrf.mxu0
      %v7376 = vadd.f32 %v7287, %v7375
      %7377 = vmatmul.bf16.gmra.mxu0 %v7145
      %v7378 = vpop.f32.mrf.mxu0
      %v7379 = vadd.f32 %v7290, %v7378
      %v7380 = vpop.f32.mrf.mxu0
      %v7381 = vadd.f32 %v7292, %v7380
      %7382 = vmatmul.bf16.gmra.mxu0 %v7149
      %v7383 = vpop.f32.mrf.mxu0
      %v7384 = vadd.f32 %v7295, %v7383
      %v7385 = vpop.f32.mrf.mxu0
      %v7386 = vadd.f32 %v7297, %v7385
      %7387 = vmatmul.bf16.gmra.mxu0 %v7153
      %v7388 = vpop.f32.mrf.mxu0
      %v7389 = vadd.f32 %v7300, %v7388
      %v7390 = vpop.f32.mrf.mxu0
      %v7391 = vadd.f32 %v7302, %v7390
      %7392 = vmatmul.bf16.gmra.mxu0 %v7157
      %v7393 = vpop.f32.mrf.mxu0
      %v7394 = vadd.f32 %v7305, %v7393
      %v7395 = vpop.f32.mrf.mxu0
      %v7396 = vadd.f32 %v7307, %v7395
      %7397 = vmatmul.bf16.gmra.mxu0 %v7161
      %v7398 = vpop.f32.mrf.mxu0
      %v7399 = vadd.f32 %v7310, %v7398
      %v7400 = vpop.f32.mrf.mxu0
      %v7401 = vadd.f32 %v7312, %v7400
      %7402 = vmatmul.bf16.gmra.mxu0 %v7165
      %v7403 = vpop.f32.mrf.mxu0
      %v7404 = vadd.f32 %v7315, %v7403
      %v7405 = vpop.f32.mrf.mxu0
      %v7406 = vadd.f32 %v7317, %v7405
      %7407 = vmatmul.bf16.gmra.mxu0 %v7169
      %v7408 = vpop.f32.mrf.mxu0
      %v7409 = vadd.f32 %v7320, %v7408
      %v7410 = vpop.f32.mrf.mxu0
      %v7411 = vadd.f32 %v7322, %v7410
      %7412 = vmatmul.bf16.gmra.mxu0 %v7173
      %v7413 = vpop.f32.mrf.mxu0
      %v7414 = vadd.f32 %v7325, %v7413
      %v7415 = vpop.f32.mrf.mxu0
      %v7416 = vadd.f32 %v7327, %v7415
      %7417 = vdwg.mxu0
      %7418 = vmatpush.bf16.msra.mxu0 %v6710
      %7419 = vmatpush.bf16.msra.mxu0 %v6708
      %7420 = vmatpush.bf16.msra.mxu0 %v6706
      %7421 = vmatpush.bf16.msra.mxu0 %v6704
      %7422 = vmatpush.bf16.msra.mxu0 %v6702
      %7423 = vmatpush.bf16.msra.mxu0 %v6700
      %7424 = vmatpush.bf16.msra.mxu0 %v6698
      %7425 = vmatpush.bf16.msra.mxu0 %v6696
      %7426 = vmatmul.bf16.gmra.mxu0 %v7114
      %v7427 = vpop.f32.mrf.mxu0
      %v7428 = vadd.f32 %v7339, %v7427
      %v7429 = vpop.f32.mrf.mxu0
      %v7430 = vadd.f32 %v7341, %v7429
      %7431 = vmatmul.bf16.gmra.mxu0 %v7118
      %v7432 = vpop.f32.mrf.mxu0
      %v7433 = vadd.f32 %v7344, %v7432
      %v7434 = vpop.f32.mrf.mxu0
      %v7435 = vadd.f32 %v7346, %v7434
      %7436 = vmatmul.bf16.gmra.mxu0 %v7122
      %v7437 = vpop.f32.mrf.mxu0
      %v7438 = vadd.f32 %v7349, %v7437
      %v7439 = vpop.f32.mrf.mxu0
      %v7440 = vadd.f32 %v7351, %v7439
      %7441 = vmatmul.bf16.gmra.mxu0 %v7126
      %v7442 = vpop.f32.mrf.mxu0
      %v7443 = vadd.f32 %v7354, %v7442
      %v7444 = vpop.f32.mrf.mxu0
      %v7445 = vadd.f32 %v7356, %v7444
      %7446 = vmatmul.bf16.gmra.mxu0 %v7130
      %v7447 = vpop.f32.mrf.mxu0
      %v7448 = vadd.f32 %v7359, %v7447
      %v7449 = vpop.f32.mrf.mxu0
      %v7450 = vadd.f32 %v7361, %v7449
      %7451 = vmatmul.bf16.gmra.mxu0 %v7134
      %v7452 = vpop.f32.mrf.mxu0
      %v7453 = vadd.f32 %v7364, %v7452
      %v7454 = vpop.f32.mrf.mxu0
      %v7455 = vadd.f32 %v7366, %v7454
      %7456 = vmatmul.bf16.gmra.mxu0 %v7138
      %v7457 = vpop.f32.mrf.mxu0
      %v7458 = vadd.f32 %v7369, %v7457
      %v7459 = vpop.f32.mrf.mxu0
      %v7460 = vadd.f32 %v7371, %v7459
      %7461 = vmatmul.bf16.gmra.mxu0 %v7142
      %v7462 = vpop.f32.mrf.mxu0
      %v7463 = vadd.f32 %v7374, %v7462
      %v7464 = vpop.f32.mrf.mxu0
      %v7465 = vadd.f32 %v7376, %v7464
      %7466 = vmatmul.bf16.gmra.mxu0 %v7146
      %v7467 = vpop.f32.mrf.mxu0
      %v7468 = vadd.f32 %v7379, %v7467
      %v7469 = vpop.f32.mrf.mxu0
      %v7470 = vadd.f32 %v7381, %v7469
      %7471 = vmatmul.bf16.gmra.mxu0 %v7150
      %v7472 = vpop.f32.mrf.mxu0
      %v7473 = vadd.f32 %v7384, %v7472
      %v7474 = vpop.f32.mrf.mxu0
      %v7475 = vadd.f32 %v7386, %v7474
      %7476 = vmatmul.bf16.gmra.mxu0 %v7154
      %v7477 = vpop.f32.mrf.mxu0
      %v7478 = vadd.f32 %v7389, %v7477
      %v7479 = vpop.f32.mrf.mxu0
      %v7480 = vadd.f32 %v7391, %v7479
      %7481 = vmatmul.bf16.gmra.mxu0 %v7158
      %v7482 = vpop.f32.mrf.mxu0
      %v7483 = vadd.f32 %v7394, %v7482
      %v7484 = vpop.f32.mrf.mxu0
      %v7485 = vadd.f32 %v7396, %v7484
      %7486 = vmatmul.bf16.gmra.mxu0 %v7162
      %v7487 = vpop.f32.mrf.mxu0
      %v7488 = vadd.f32 %v7399, %v7487
      %v7489 = vpop.f32.mrf.mxu0
      %v7490 = vadd.f32 %v7401, %v7489
      %7491 = vmatmul.bf16.gmra.mxu0 %v7166
      %v7492 = vpop.f32.mrf.mxu0
      %v7493 = vadd.f32 %v7404, %v7492
      %v7494 = vpop.f32.mrf.mxu0
      %v7495 = vadd.f32 %v7406, %v7494
      %7496 = vmatmul.bf16.gmra.mxu0 %v7170
      %v7497 = vpop.f32.mrf.mxu0
      %v7498 = vadd.f32 %v7409, %v7497
      %v7499 = vpop.f32.mrf.mxu0
      %v7500 = vadd.f32 %v7411, %v7499
      %7501 = vmatmul.bf16.gmra.mxu0 %v7174
      %v7502 = vpop.f32.mrf.mxu0
      %v7503 = vadd.f32 %v7414, %v7502
      %v7504 = vpop.f32.mrf.mxu0
      %v7505 = vadd.f32 %v7416, %v7504
      %7506 = vdwg.mxu0
      %7507 = vmatpush.bf16.msra.mxu0 %v6726
      %7508 = vmatpush.bf16.msra.mxu0 %v6724
      %7509 = vmatpush.bf16.msra.mxu0 %v6722
      %7510 = vmatpush.bf16.msra.mxu0 %v6720
      %7511 = vmatpush.bf16.msra.mxu0 %v6718
      %7512 = vmatpush.bf16.msra.mxu0 %v6716
      %7513 = vmatpush.bf16.msra.mxu0 %v6714
      %7514 = vmatpush.bf16.msra.mxu0 %v6712
      %7515 = vmatmul.bf16.gmra.mxu0 %v7115
      %v7516 = vpop.f32.mrf.mxu0
      %v7517 = vadd.f32 %v7428, %v7516
      %v7518 = vpop.f32.mrf.mxu0
      %v7519 = vadd.f32 %v7430, %v7518
      %7520 = vmatmul.bf16.gmra.mxu0 %v7119
      %v7521 = vpop.f32.mrf.mxu0
      %v7522 = vadd.f32 %v7433, %v7521
      %v7523 = vpop.f32.mrf.mxu0
      %v7524 = vadd.f32 %v7435, %v7523
      %7525 = vmatmul.bf16.gmra.mxu0 %v7123
      %v7526 = vpop.f32.mrf.mxu0
      %v7527 = vadd.f32 %v7438, %v7526
      %v7528 = vpop.f32.mrf.mxu0
      %v7529 = vadd.f32 %v7440, %v7528
      %7530 = vmatmul.bf16.gmra.mxu0 %v7127
      %v7531 = vpop.f32.mrf.mxu0
      %v7532 = vadd.f32 %v7443, %v7531
      %v7533 = vpop.f32.mrf.mxu0
      %v7534 = vadd.f32 %v7445, %v7533
      %7535 = vmatmul.bf16.gmra.mxu0 %v7131
      %v7536 = vpop.f32.mrf.mxu0
      %v7537 = vadd.f32 %v7448, %v7536
      %v7538 = vpop.f32.mrf.mxu0
      %v7539 = vadd.f32 %v7450, %v7538
      %7540 = vmatmul.bf16.gmra.mxu0 %v7135
      %v7541 = vpop.f32.mrf.mxu0
      %v7542 = vadd.f32 %v7453, %v7541
      %v7543 = vpop.f32.mrf.mxu0
      %v7544 = vadd.f32 %v7455, %v7543
      %7545 = vmatmul.bf16.gmra.mxu0 %v7139
      %v7546 = vpop.f32.mrf.mxu0
      %v7547 = vadd.f32 %v7458, %v7546
      %v7548 = vpop.f32.mrf.mxu0
      %v7549 = vadd.f32 %v7460, %v7548
      %7550 = vmatmul.bf16.gmra.mxu0 %v7143
      %v7551 = vpop.f32.mrf.mxu0
      %v7552 = vadd.f32 %v7463, %v7551
      %v7553 = vpop.f32.mrf.mxu0
      %v7554 = vadd.f32 %v7465, %v7553
      %7555 = vmatmul.bf16.gmra.mxu0 %v7147
      %v7556 = vpop.f32.mrf.mxu0
      %v7557 = vadd.f32 %v7468, %v7556
      %v7558 = vpop.f32.mrf.mxu0
      %v7559 = vadd.f32 %v7470, %v7558
      %7560 = vmatmul.bf16.gmra.mxu0 %v7151
      %v7561 = vpop.f32.mrf.mxu0
      %v7562 = vadd.f32 %v7473, %v7561
      %v7563 = vpop.f32.mrf.mxu0
      %v7564 = vadd.f32 %v7475, %v7563
      %7565 = vmatmul.bf16.gmra.mxu0 %v7155
      %v7566 = vpop.f32.mrf.mxu0
      %v7567 = vadd.f32 %v7478, %v7566
      %v7568 = vpop.f32.mrf.mxu0
      %v7569 = vadd.f32 %v7480, %v7568
      %7570 = vmatmul.bf16.gmra.mxu0 %v7159
      %v7571 = vpop.f32.mrf.mxu0
      %v7572 = vadd.f32 %v7483, %v7571
      %v7573 = vpop.f32.mrf.mxu0
      %v7574 = vadd.f32 %v7485, %v7573
      %7575 = vmatmul.bf16.gmra.mxu0 %v7163
      %v7576 = vpop.f32.mrf.mxu0
      %v7577 = vadd.f32 %v7488, %v7576
      %v7578 = vpop.f32.mrf.mxu0
      %v7579 = vadd.f32 %v7490, %v7578
      %7580 = vmatmul.bf16.gmra.mxu0 %v7167
      %v7581 = vpop.f32.mrf.mxu0
      %v7582 = vadd.f32 %v7493, %v7581
      %v7583 = vpop.f32.mrf.mxu0
      %v7584 = vadd.f32 %v7495, %v7583
      %7585 = vmatmul.bf16.gmra.mxu0 %v7171
      %v7586 = vpop.f32.mrf.mxu0
      %v7587 = vadd.f32 %v7498, %v7586
      %v7588 = vpop.f32.mrf.mxu0
      %v7589 = vadd.f32 %v7500, %v7588
      %7590 = vmatmul.bf16.gmra.mxu0 %v7175
      %v7591 = vpop.f32.mrf.mxu0
      %v7592 = vadd.f32 %v7503, %v7591
      %v7593 = vpop.f32.mrf.mxu0
      %v7594 = vadd.f32 %v7505, %v7593
      %7595 = vdwg.mxu0
      %7596 = vmatpush.bf16.msra.mxu0 %v6679
      %7597 = vmatpush.bf16.msra.mxu0 %v6677
      %7598 = vmatpush.bf16.msra.mxu0 %v6675
      %7599 = vmatpush.bf16.msra.mxu0 %v6673
      %7600 = vmatpush.bf16.msra.mxu0 %v6671
      %7601 = vmatpush.bf16.msra.mxu0 %v6669
      %7602 = vmatpush.bf16.msra.mxu0 %v6667
      %7603 = vmatpush.bf16.msra.mxu0 %v6665
      %7604 = vmatmul.bf16.gmra.mxu0 %v7112
      %v7605 = vpop.f32.mrf.mxu0
      %v7606 = vadd.f32 %v6763, %v7605
      %v7607 = vpop.f32.mrf.mxu0
      %v7608 = vadd.f32 %v6768, %v7607
      %7609 = vmatmul.bf16.gmra.mxu0 %v7116
      %v7610 = vpop.f32.mrf.mxu0
      %v7611 = vadd.f32 %v6773, %v7610
      %v7612 = vpop.f32.mrf.mxu0
      %v7613 = vadd.f32 %v6778, %v7612
      %7614 = vmatmul.bf16.gmra.mxu0 %v7120
      %v7615 = vpop.f32.mrf.mxu0
      %v7616 = vadd.f32 %v6783, %v7615
      %v7617 = vpop.f32.mrf.mxu0
      %v7618 = vadd.f32 %v6788, %v7617
      %7619 = vmatmul.bf16.gmra.mxu0 %v7124
      %v7620 = vpop.f32.mrf.mxu0
      %v7621 = vadd.f32 %v6793, %v7620
      %v7622 = vpop.f32.mrf.mxu0
      %v7623 = vadd.f32 %v6798, %v7622
      %7624 = vmatmul.bf16.gmra.mxu0 %v7128
      %v7625 = vpop.f32.mrf.mxu0
      %v7626 = vadd.f32 %v6803, %v7625
      %v7627 = vpop.f32.mrf.mxu0
      %v7628 = vadd.f32 %v6808, %v7627
      %7629 = vmatmul.bf16.gmra.mxu0 %v7132
      %v7630 = vpop.f32.mrf.mxu0
      %v7631 = vadd.f32 %v6813, %v7630
      %v7632 = vpop.f32.mrf.mxu0
      %v7633 = vadd.f32 %v6818, %v7632
      %7634 = vmatmul.bf16.gmra.mxu0 %v7136
      %v7635 = vpop.f32.mrf.mxu0
      %v7636 = vadd.f32 %v6823, %v7635
      %v7637 = vpop.f32.mrf.mxu0
      %v7638 = vadd.f32 %v6828, %v7637
      %7639 = vmatmul.bf16.gmra.mxu0 %v7140
      %v7640 = vpop.f32.mrf.mxu0
      %v7641 = vadd.f32 %v6833, %v7640
      %v7642 = vpop.f32.mrf.mxu0
      %v7643 = vadd.f32 %v6838, %v7642
      %7644 = vmatmul.bf16.gmra.mxu0 %v7144
      %v7645 = vpop.f32.mrf.mxu0
      %v7646 = vadd.f32 %v6843, %v7645
      %v7647 = vpop.f32.mrf.mxu0
      %v7648 = vadd.f32 %v6848, %v7647
      %7649 = vmatmul.bf16.gmra.mxu0 %v7148
      %v7650 = vpop.f32.mrf.mxu0
      %v7651 = vadd.f32 %v6853, %v7650
      %v7652 = vpop.f32.mrf.mxu0
      %v7653 = vadd.f32 %v6858, %v7652
      %7654 = vmatmul.bf16.gmra.mxu0 %v7152
      %v7655 = vpop.f32.mrf.mxu0
      %v7656 = vadd.f32 %v6863, %v7655
      %v7657 = vpop.f32.mrf.mxu0
      %v7658 = vadd.f32 %v6868, %v7657
      %7659 = vmatmul.bf16.gmra.mxu0 %v7156
      %v7660 = vpop.f32.mrf.mxu0
      %v7661 = vadd.f32 %v6873, %v7660
      %v7662 = vpop.f32.mrf.mxu0
      %v7663 = vadd.f32 %v6878, %v7662
      %7664 = vmatmul.bf16.gmra.mxu0 %v7160
      %v7665 = vpop.f32.mrf.mxu0
      %v7666 = vadd.f32 %v6883, %v7665
      %v7667 = vpop.f32.mrf.mxu0
      %v7668 = vadd.f32 %v6888, %v7667
      %7669 = vmatmul.bf16.gmra.mxu0 %v7164
      %v7670 = vpop.f32.mrf.mxu0
      %v7671 = vadd.f32 %v6893, %v7670
      %v7672 = vpop.f32.mrf.mxu0
      %v7673 = vadd.f32 %v6898, %v7672
      %7674 = vmatmul.bf16.gmra.mxu0 %v7168
      %v7675 = vpop.f32.mrf.mxu0
      %v7676 = vadd.f32 %v6903, %v7675
      %v7677 = vpop.f32.mrf.mxu0
      %v7678 = vadd.f32 %v6908, %v7677
      %7679 = vmatmul.bf16.gmra.mxu0 %v7172
      %v7680 = vpop.f32.mrf.mxu0
      %v7681 = vadd.f32 %v6913, %v7680
      %v7682 = vpop.f32.mrf.mxu0
      %v7683 = vadd.f32 %v6918, %v7682
      %7684 = vdwg.mxu0
      %7685 = vmatpush.bf16.msra.mxu0 %v6695
      %7686 = vmatpush.bf16.msra.mxu0 %v6693
      %7687 = vmatpush.bf16.msra.mxu0 %v6691
      %7688 = vmatpush.bf16.msra.mxu0 %v6689
      %7689 = vmatpush.bf16.msra.mxu0 %v6687
      %7690 = vmatpush.bf16.msra.mxu0 %v6685
      %7691 = vmatpush.bf16.msra.mxu0 %v6683
      %7692 = vmatpush.bf16.msra.mxu0 %v6681
      %7693 = vmatmul.bf16.gmra.mxu0 %v7113
      %v7694 = vpop.f32.mrf.mxu0
      %v7695 = vadd.f32 %v7606, %v7694
      %v7696 = vpop.f32.mrf.mxu0
      %v7697 = vadd.f32 %v7608, %v7696
      %7698 = vmatmul.bf16.gmra.mxu0 %v7117
      %v7699 = vpop.f32.mrf.mxu0
      %v7700 = vadd.f32 %v7611, %v7699
      %v7701 = vpop.f32.mrf.mxu0
      %v7702 = vadd.f32 %v7613, %v7701
      %7703 = vmatmul.bf16.gmra.mxu0 %v7121
      %v7704 = vpop.f32.mrf.mxu0
      %v7705 = vadd.f32 %v7616, %v7704
      %v7706 = vpop.f32.mrf.mxu0
      %v7707 = vadd.f32 %v7618, %v7706
      %7708 = vmatmul.bf16.gmra.mxu0 %v7125
      %v7709 = vpop.f32.mrf.mxu0
      %v7710 = vadd.f32 %v7621, %v7709
      %v7711 = vpop.f32.mrf.mxu0
      %v7712 = vadd.f32 %v7623, %v7711
      %7713 = vmatmul.bf16.gmra.mxu0 %v7129
      %v7714 = vpop.f32.mrf.mxu0
      %v7715 = vadd.f32 %v7626, %v7714
      %v7716 = vpop.f32.mrf.mxu0
      %v7717 = vadd.f32 %v7628, %v7716
      %7718 = vmatmul.bf16.gmra.mxu0 %v7133
      %v7719 = vpop.f32.mrf.mxu0
      %v7720 = vadd.f32 %v7631, %v7719
      %v7721 = vpop.f32.mrf.mxu0
      %v7722 = vadd.f32 %v7633, %v7721
      %7723 = vmatmul.bf16.gmra.mxu0 %v7137
      %v7724 = vpop.f32.mrf.mxu0
      %v7725 = vadd.f32 %v7636, %v7724
      %v7726 = vpop.f32.mrf.mxu0
      %v7727 = vadd.f32 %v7638, %v7726
      %7728 = vmatmul.bf16.gmra.mxu0 %v7141
      %v7729 = vpop.f32.mrf.mxu0
      %v7730 = vadd.f32 %v7641, %v7729
      %v7731 = vpop.f32.mrf.mxu0
      %v7732 = vadd.f32 %v7643, %v7731
      %7733 = vmatmul.bf16.gmra.mxu0 %v7145
      %v7734 = vpop.f32.mrf.mxu0
      %v7735 = vadd.f32 %v7646, %v7734
      %v7736 = vpop.f32.mrf.mxu0
      %v7737 = vadd.f32 %v7648, %v7736
      %7738 = vmatmul.bf16.gmra.mxu0 %v7149
      %v7739 = vpop.f32.mrf.mxu0
      %v7740 = vadd.f32 %v7651, %v7739
      %v7741 = vpop.f32.mrf.mxu0
      %v7742 = vadd.f32 %v7653, %v7741
      %7743 = vmatmul.bf16.gmra.mxu0 %v7153
      %v7744 = vpop.f32.mrf.mxu0
      %v7745 = vadd.f32 %v7656, %v7744
      %v7746 = vpop.f32.mrf.mxu0
      %v7747 = vadd.f32 %v7658, %v7746
      %7748 = vmatmul.bf16.gmra.mxu0 %v7157
      %v7749 = vpop.f32.mrf.mxu0
      %v7750 = vadd.f32 %v7661, %v7749
      %v7751 = vpop.f32.mrf.mxu0
      %v7752 = vadd.f32 %v7663, %v7751
      %7753 = vmatmul.bf16.gmra.mxu0 %v7161
      %v7754 = vpop.f32.mrf.mxu0
      %v7755 = vadd.f32 %v7666, %v7754
      %v7756 = vpop.f32.mrf.mxu0
      %v7757 = vadd.f32 %v7668, %v7756
      %7758 = vmatmul.bf16.gmra.mxu0 %v7165
      %v7759 = vpop.f32.mrf.mxu0
      %v7760 = vadd.f32 %v7671, %v7759
      %v7761 = vpop.f32.mrf.mxu0
      %v7762 = vadd.f32 %v7673, %v7761
      %7763 = vmatmul.bf16.gmra.mxu0 %v7169
      %v7764 = vpop.f32.mrf.mxu0
      %v7765 = vadd.f32 %v7676, %v7764
      %v7766 = vpop.f32.mrf.mxu0
      %v7767 = vadd.f32 %v7678, %v7766
      %7768 = vmatmul.bf16.gmra.mxu0 %v7173
      %v7769 = vpop.f32.mrf.mxu0
      %v7770 = vadd.f32 %v7681, %v7769
      %v7771 = vpop.f32.mrf.mxu0
      %v7772 = vadd.f32 %v7683, %v7771
      %7773 = vdwg.mxu0
      %7774 = vmatpush.bf16.msra.mxu0 %v6711
      %7775 = vmatpush.bf16.msra.mxu0 %v6709
      %7776 = vmatpush.bf16.msra.mxu0 %v6707
      %7777 = vmatpush.bf16.msra.mxu0 %v6705
      %7778 = vmatpush.bf16.msra.mxu0 %v6703
      %7779 = vmatpush.bf16.msra.mxu0 %v6701
      %7780 = vmatpush.bf16.msra.mxu0 %v6699
      %7781 = vmatpush.bf16.msra.mxu0 %v6697
      %7782 = vmatmul.bf16.gmra.mxu0 %v7114
      %v7783 = vpop.f32.mrf.mxu0
      %v7784 = vadd.f32 %v7695, %v7783
      %v7785 = vpop.f32.mrf.mxu0
      %v7786 = vadd.f32 %v7697, %v7785
      %7787 = vmatmul.bf16.gmra.mxu0 %v7118
      %v7788 = vpop.f32.mrf.mxu0
      %v7789 = vadd.f32 %v7700, %v7788
      %v7790 = vpop.f32.mrf.mxu0
      %v7791 = vadd.f32 %v7702, %v7790
      %7792 = vmatmul.bf16.gmra.mxu0 %v7122
      %v7793 = vpop.f32.mrf.mxu0
      %v7794 = vadd.f32 %v7705, %v7793
      %v7795 = vpop.f32.mrf.mxu0
      %v7796 = vadd.f32 %v7707, %v7795
      %7797 = vmatmul.bf16.gmra.mxu0 %v7126
      %v7798 = vpop.f32.mrf.mxu0
      %v7799 = vadd.f32 %v7710, %v7798
      %v7800 = vpop.f32.mrf.mxu0
      %v7801 = vadd.f32 %v7712, %v7800
      %7802 = vmatmul.bf16.gmra.mxu0 %v7130
      %v7803 = vpop.f32.mrf.mxu0
      %v7804 = vadd.f32 %v7715, %v7803
      %v7805 = vpop.f32.mrf.mxu0
      %v7806 = vadd.f32 %v7717, %v7805
      %7807 = vmatmul.bf16.gmra.mxu0 %v7134
      %v7808 = vpop.f32.mrf.mxu0
      %v7809 = vadd.f32 %v7720, %v7808
      %v7810 = vpop.f32.mrf.mxu0
      %v7811 = vadd.f32 %v7722, %v7810
      %7812 = vmatmul.bf16.gmra.mxu0 %v7138
      %v7813 = vpop.f32.mrf.mxu0
      %v7814 = vadd.f32 %v7725, %v7813
      %v7815 = vpop.f32.mrf.mxu0
      %v7816 = vadd.f32 %v7727, %v7815
      %7817 = vmatmul.bf16.gmra.mxu0 %v7142
      %v7818 = vpop.f32.mrf.mxu0
      %v7819 = vadd.f32 %v7730, %v7818
      %v7820 = vpop.f32.mrf.mxu0
      %v7821 = vadd.f32 %v7732, %v7820
      %7822 = vmatmul.bf16.gmra.mxu0 %v7146
      %v7823 = vpop.f32.mrf.mxu0
      %v7824 = vadd.f32 %v7735, %v7823
      %v7825 = vpop.f32.mrf.mxu0
      %v7826 = vadd.f32 %v7737, %v7825
      %7827 = vmatmul.bf16.gmra.mxu0 %v7150
      %v7828 = vpop.f32.mrf.mxu0
      %v7829 = vadd.f32 %v7740, %v7828
      %v7830 = vpop.f32.mrf.mxu0
      %v7831 = vadd.f32 %v7742, %v7830
      %7832 = vmatmul.bf16.gmra.mxu0 %v7154
      %v7833 = vpop.f32.mrf.mxu0
      %v7834 = vadd.f32 %v7745, %v7833
      %v7835 = vpop.f32.mrf.mxu0
      %v7836 = vadd.f32 %v7747, %v7835
      %7837 = vmatmul.bf16.gmra.mxu0 %v7158
      %v7838 = vpop.f32.mrf.mxu0
      %v7839 = vadd.f32 %v7750, %v7838
      %v7840 = vpop.f32.mrf.mxu0
      %v7841 = vadd.f32 %v7752, %v7840
      %7842 = vmatmul.bf16.gmra.mxu0 %v7162
      %v7843 = vpop.f32.mrf.mxu0
      %v7844 = vadd.f32 %v7755, %v7843
      %v7845 = vpop.f32.mrf.mxu0
      %v7846 = vadd.f32 %v7757, %v7845
      %7847 = vmatmul.bf16.gmra.mxu0 %v7166
      %v7848 = vpop.f32.mrf.mxu0
      %v7849 = vadd.f32 %v7760, %v7848
      %v7850 = vpop.f32.mrf.mxu0
      %v7851 = vadd.f32 %v7762, %v7850
      %7852 = vmatmul.bf16.gmra.mxu0 %v7170
      %v7853 = vpop.f32.mrf.mxu0
      %v7854 = vadd.f32 %v7765, %v7853
      %v7855 = vpop.f32.mrf.mxu0
      %v7856 = vadd.f32 %v7767, %v7855
      %7857 = vmatmul.bf16.gmra.mxu0 %v7174
      %v7858 = vpop.f32.mrf.mxu0
      %v7859 = vadd.f32 %v7770, %v7858
      %v7860 = vpop.f32.mrf.mxu0
      %v7861 = vadd.f32 %v7772, %v7860
      %7862 = vdwg.mxu0
      %7863 = vmatpush.bf16.msra.mxu0 %v6727
      %7864 = vmatpush.bf16.msra.mxu0 %v6725
      %7865 = vmatpush.bf16.msra.mxu0 %v6723
      %7866 = vmatpush.bf16.msra.mxu0 %v6721
      %7867 = vmatpush.bf16.msra.mxu0 %v6719
      %7868 = vmatpush.bf16.msra.mxu0 %v6717
      %7869 = vmatpush.bf16.msra.mxu0 %v6715
      %7870 = vmatpush.bf16.msra.mxu0 %v6713
      %7871 = vmatmul.bf16.gmra.mxu0 %v7115
      %v7872 = vpop.f32.mrf.mxu0
      %v7873 = vadd.f32 %v7784, %v7872
      %v7874 = vpop.f32.mrf.mxu0
      %v7875 = vadd.f32 %v7786, %v7874
      %7876 = vmatmul.bf16.gmra.mxu0 %v7119
      %v7877 = vpop.f32.mrf.mxu0
      %v7878 = vadd.f32 %v7789, %v7877
      %v7879 = vpop.f32.mrf.mxu0
      %v7880 = vadd.f32 %v7791, %v7879
      %7881 = vmatmul.bf16.gmra.mxu0 %v7123
      %v7882 = vpop.f32.mrf.mxu0
      %v7883 = vadd.f32 %v7794, %v7882
      %v7884 = vpop.f32.mrf.mxu0
      %v7885 = vadd.f32 %v7796, %v7884
      %7886 = vmatmul.bf16.gmra.mxu0 %v7127
      %v7887 = vpop.f32.mrf.mxu0
      %v7888 = vadd.f32 %v7799, %v7887
      %v7889 = vpop.f32.mrf.mxu0
      %v7890 = vadd.f32 %v7801, %v7889
      %7891 = vmatmul.bf16.gmra.mxu0 %v7131
      %v7892 = vpop.f32.mrf.mxu0
      %v7893 = vadd.f32 %v7804, %v7892
      %v7894 = vpop.f32.mrf.mxu0
      %v7895 = vadd.f32 %v7806, %v7894
      %7896 = vmatmul.bf16.gmra.mxu0 %v7135
      %v7897 = vpop.f32.mrf.mxu0
      %v7898 = vadd.f32 %v7809, %v7897
      %v7899 = vpop.f32.mrf.mxu0
      %v7900 = vadd.f32 %v7811, %v7899
      %7901 = vmatmul.bf16.gmra.mxu0 %v7139
      %v7902 = vpop.f32.mrf.mxu0
      %v7903 = vadd.f32 %v7814, %v7902
      %v7904 = vpop.f32.mrf.mxu0
      %v7905 = vadd.f32 %v7816, %v7904
      %7906 = vmatmul.bf16.gmra.mxu0 %v7143
      %v7907 = vpop.f32.mrf.mxu0
      %v7908 = vadd.f32 %v7819, %v7907
      %v7909 = vpop.f32.mrf.mxu0
      %v7910 = vadd.f32 %v7821, %v7909
      %7911 = vmatmul.bf16.gmra.mxu0 %v7147
      %v7912 = vpop.f32.mrf.mxu0
      %v7913 = vadd.f32 %v7824, %v7912
      %v7914 = vpop.f32.mrf.mxu0
      %v7915 = vadd.f32 %v7826, %v7914
      %7916 = vmatmul.bf16.gmra.mxu0 %v7151
      %v7917 = vpop.f32.mrf.mxu0
      %v7918 = vadd.f32 %v7829, %v7917
      %v7919 = vpop.f32.mrf.mxu0
      %v7920 = vadd.f32 %v7831, %v7919
      %7921 = vmatmul.bf16.gmra.mxu0 %v7155
      %v7922 = vpop.f32.mrf.mxu0
      %v7923 = vadd.f32 %v7834, %v7922
      %v7924 = vpop.f32.mrf.mxu0
      %v7925 = vadd.f32 %v7836, %v7924
      %7926 = vmatmul.bf16.gmra.mxu0 %v7159
      %v7927 = vpop.f32.mrf.mxu0
      %v7928 = vadd.f32 %v7839, %v7927
      %v7929 = vpop.f32.mrf.mxu0
      %v7930 = vadd.f32 %v7841, %v7929
      %7931 = vmatmul.bf16.gmra.mxu0 %v7163
      %v7932 = vpop.f32.mrf.mxu0
      %v7933 = vadd.f32 %v7844, %v7932
      %v7934 = vpop.f32.mrf.mxu0
      %v7935 = vadd.f32 %v7846, %v7934
      %7936 = vmatmul.bf16.gmra.mxu0 %v7167
      %v7937 = vpop.f32.mrf.mxu0
      %v7938 = vadd.f32 %v7849, %v7937
      %v7939 = vpop.f32.mrf.mxu0
      %v7940 = vadd.f32 %v7851, %v7939
      %7941 = vmatmul.bf16.gmra.mxu0 %v7171
      %v7942 = vpop.f32.mrf.mxu0
      %v7943 = vadd.f32 %v7854, %v7942
      %v7944 = vpop.f32.mrf.mxu0
      %v7945 = vadd.f32 %v7856, %v7944
      %7946 = vmatmul.bf16.gmra.mxu0 %v7175
      %v7947 = vpop.f32.mrf.mxu0
      %v7948 = vadd.f32 %v7859, %v7947
      %v7949 = vpop.f32.mrf.mxu0
      %v7950 = vadd.f32 %v7861, %v7949
      %7951 = vdwg.mxu0
      %v7952 = vmax.f32 %v7517, 0.0
      %v7953 = vmax.f32 %v7873, 0.0
      %v7954 = vmax.f32 %v7519, 0.0
      %v7955 = vmax.f32 %v7875, 0.0
      %v7956 = vmax.f32 %v7522, 0.0
      %v7957 = vmax.f32 %v7878, 0.0
      %v7958 = vmax.f32 %v7524, 0.0
      %v7959 = vmax.f32 %v7880, 0.0
      %v7960 = vmax.f32 %v7527, 0.0
      %v7961 = vmax.f32 %v7883, 0.0
      %v7962 = vmax.f32 %v7529, 0.0
      %v7963 = vmax.f32 %v7885, 0.0
      %v7964 = vmax.f32 %v7532, 0.0
      %v7965 = vmax.f32 %v7888, 0.0
      %v7966 = vmax.f32 %v7534, 0.0
      %v7967 = vmax.f32 %v7890, 0.0
      %v7968 = vmax.f32 %v7537, 0.0
      %v7969 = vmax.f32 %v7893, 0.0
      %v7970 = vmax.f32 %v7539, 0.0
      %v7971 = vmax.f32 %v7895, 0.0
      %v7972 = vmax.f32 %v7542, 0.0
      %v7973 = vmax.f32 %v7898, 0.0
      %v7974 = vmax.f32 %v7544, 0.0
      %v7975 = vmax.f32 %v7900, 0.0
      %v7976 = vmax.f32 %v7547, 0.0
      %v7977 = vmax.f32 %v7903, 0.0
      %v7978 = vmax.f32 %v7549, 0.0
      %v7979 = vmax.f32 %v7905, 0.0
      %v7980 = vmax.f32 %v7552, 0.0
      %v7981 = vmax.f32 %v7908, 0.0
      %v7982 = vmax.f32 %v7554, 0.0
      %v7983 = vmax.f32 %v7910, 0.0
      %v7984 = vmax.f32 %v7557, 0.0
      %v7985 = vmax.f32 %v7913, 0.0
      %v7986 = vmax.f32 %v7559, 0.0
      %v7987 = vmax.f32 %v7915, 0.0
      %v7988 = vmax.f32 %v7562, 0.0
      %v7989 = vmax.f32 %v7918, 0.0
      %v7990 = vmax.f32 %v7564, 0.0
      %v7991 = vmax.f32 %v7920, 0.0
      %v7992 = vmax.f32 %v7567, 0.0
      %v7993 = vmax.f32 %v7923, 0.0
      %v7994 = vmax.f32 %v7569, 0.0
      %v7995 = vmax.f32 %v7925, 0.0
      %v7996 = vmax.f32 %v7572, 0.0
      %v7997 = vmax.f32 %v7928, 0.0
      %v7998 = vmax.f32 %v7574, 0.0
      %v7999 = vmax.f32 %v7930, 0.0
      %v8000 = vmax.f32 %v7577, 0.0
      %v8001 = vmax.f32 %v7933, 0.0
      %v8002 = vmax.f32 %v7579, 0.0
      %v8003 = vmax.f32 %v7935, 0.0
      %v8004 = vmax.f32 %v7582, 0.0
      %v8005 = vmax.f32 %v7938, 0.0
      %v8006 = vmax.f32 %v7584, 0.0
      %v8007 = vmax.f32 %v7940, 0.0
      %v8008 = vmax.f32 %v7587, 0.0
      %v8009 = vmax.f32 %v7943, 0.0
      %v8010 = vmax.f32 %v7589, 0.0
      %v8011 = vmax.f32 %v7945, 0.0
      %v8012 = vmax.f32 %v7592, 0.0
      %v8013 = vmax.f32 %v7948, 0.0
      %v8014 = vmax.f32 %v7594, 0.0
      %v8015 = vmax.f32 %v7950, 0.0
      %v8016 = vld [vmem:[%s5] sm:$0xff]
      %v8017 = vld [vmem:[%s5 + $0x8] sm:$0xff]
      %v8018 = vld [vmem:[%s5 + $0x10] sm:$0xff]
      %v8019 = vld [vmem:[%s5 + $0x18] sm:$0xff]
      %v8020 = vld [vmem:[%s5 + $0x20] sm:$0xff]
      %v8021 = vld [vmem:[%s5 + $0x28] sm:$0xff]
      %v8022 = vld [vmem:[%s5 + $0x30] sm:$0xff]
      %v8023 = vld [vmem:[%s5 + $0x38] sm:$0xff]
      %v8024 = vld [vmem:[%s5 + $0x40] sm:$0xff]
      %v8025 = vld [vmem:[%s5 + $0x48] sm:$0xff]
      %v8026 = vld [vmem:[%s5 + $0x50] sm:$0xff]
      %v8027 = vld [vmem:[%s5 + $0x58] sm:$0xff]
      %v8028 = vld [vmem:[%s5 + $0x60] sm:$0xff]
      %v8029 = vld [vmem:[%s5 + $0x68] sm:$0xff]
      %v8030 = vld [vmem:[%s5 + $0x70] sm:$0xff]
      %v8031 = vld [vmem:[%s5 + $0x78] sm:$0xff]
      %v8032 = vpack.c.bf16 %v7954, %v7952
      %v8033 = vpack.c.bf16 %v7955, %v7953
      %v8034 = vpack.c.bf16 %v7958, %v7956
      %v8035 = vpack.c.bf16 %v7959, %v7957
      %v8036 = vpack.c.bf16 %v7962, %v7960
      %v8037 = vpack.c.bf16 %v7963, %v7961
      %v8038 = vpack.c.bf16 %v7966, %v7964
      %v8039 = vpack.c.bf16 %v7967, %v7965
      %v8040 = vpack.c.bf16 %v7970, %v7968
      %v8041 = vpack.c.bf16 %v7971, %v7969
      %v8042 = vpack.c.bf16 %v7974, %v7972
      %v8043 = vpack.c.bf16 %v7975, %v7973
      %v8044 = vpack.c.bf16 %v7978, %v7976
      %v8045 = vpack.c.bf16 %v7979, %v7977
      %v8046 = vpack.c.bf16 %v7982, %v7980
      %v8047 = vpack.c.bf16 %v7983, %v7981
      %v8048 = vpack.c.bf16 %v7986, %v7984
      %v8049 = vpack.c.bf16 %v7987, %v7985
      %v8050 = vpack.c.bf16 %v7990, %v7988
      %v8051 = vpack.c.bf16 %v7991, %v7989
      %v8052 = vpack.c.bf16 %v7994, %v7992
      %v8053 = vpack.c.bf16 %v7995, %v7993
      %v8054 = vpack.c.bf16 %v7998, %v7996
      %v8055 = vpack.c.bf16 %v7999, %v7997
      %v8056 = vpack.c.bf16 %v8002, %v8000
      %v8057 = vpack.c.bf16 %v8003, %v8001
      %v8058 = vpack.c.bf16 %v8006, %v8004
      %v8059 = vpack.c.bf16 %v8007, %v8005
      %v8060 = vpack.c.bf16 %v8010, %v8008
      %v8061 = vpack.c.bf16 %v8011, %v8009
      %v8062 = vpack.c.bf16 %v8014, %v8012
      %v8063 = vpack.c.bf16 %v8015, %v8013
      %v8064 = vld [vmem:[%s6] sm:$0xff]
      %v8065 = vld [vmem:[%s6 + $0x8] sm:$0xff]
      %v8066 = vld [vmem:[%s6 + $0x10] sm:$0xff]
      %v8067 = vld [vmem:[%s6 + $0x18] sm:$0xff]
      %v8068 = vld [vmem:[%s6 + $0x20] sm:$0xff]
      %v8069 = vld [vmem:[%s6 + $0x28] sm:$0xff]
      %v8070 = vld [vmem:[%s6 + $0x30] sm:$0xff]
      %v8071 = vld [vmem:[%s6 + $0x38] sm:$0xff]
      %v8072 = vld [vmem:[%s6 + $0x40] sm:$0xff]
      %v8073 = vld [vmem:[%s6 + $0x48] sm:$0xff]
      %v8074 = vld [vmem:[%s6 + $0x50] sm:$0xff]
      %v8075 = vld [vmem:[%s6 + $0x58] sm:$0xff]
      %v8076 = vld [vmem:[%s6 + $0x60] sm:$0xff]
      %v8077 = vld [vmem:[%s6 + $0x68] sm:$0xff]
      %v8078 = vld [vmem:[%s6 + $0x70] sm:$0xff]
      %v8079 = vld [vmem:[%s6 + $0x78] sm:$0xff]
      %8081 = vset.pattern.permute.xlu0 0
      %8082 = vperm.xlu0 %8081, %v8064
      %v8083 = vpop.permute.xlu0 %8082
      %8086 = vset.pattern.permute.xlu0 0
      %8087 = vperm.xlu0 %8086, %v8065
      %v8088 = vpop.permute.xlu0 %8087
      %8091 = vset.pattern.permute.xlu0 0
      %8092 = vperm.xlu0 %8091, %v8066
      %v8093 = vpop.permute.xlu0 %8092
      %8096 = vset.pattern.permute.xlu0 0
      %8097 = vperm.xlu0 %8096, %v8067
      %v8098 = vpop.permute.xlu0 %8097
      %8101 = vset.pattern.permute.xlu0 0
      %8102 = vperm.xlu0 %8101, %v8068
      %v8103 = vpop.permute.xlu0 %8102
      %8106 = vset.pattern.permute.xlu0 0
      %8107 = vperm.xlu0 %8106, %v8069
      %v8108 = vpop.permute.xlu0 %8107
      %8111 = vset.pattern.permute.xlu0 0
      %8112 = vperm.xlu0 %8111, %v8070
      %v8113 = vpop.permute.xlu0 %8112
      %8116 = vset.pattern.permute.xlu0 0
      %8117 = vperm.xlu0 %8116, %v8071
      %v8118 = vpop.permute.xlu0 %8117
      %8121 = vset.pattern.permute.xlu0 0
      %8122 = vperm.xlu0 %8121, %v8072
      %v8123 = vpop.permute.xlu0 %8122
      %8126 = vset.pattern.permute.xlu0 0
      %8127 = vperm.xlu0 %8126, %v8073
      %v8128 = vpop.permute.xlu0 %8127
      %8131 = vset.pattern.permute.xlu0 0
      %8132 = vperm.xlu0 %8131, %v8074
      %v8133 = vpop.permute.xlu0 %8132
      %8136 = vset.pattern.permute.xlu0 0
      %8137 = vperm.xlu0 %8136, %v8075
      %v8138 = vpop.permute.xlu0 %8137
      %8141 = vset.pattern.permute.xlu0 0
      %8142 = vperm.xlu0 %8141, %v8076
      %v8143 = vpop.permute.xlu0 %8142
      %8146 = vset.pattern.permute.xlu0 0
      %8147 = vperm.xlu0 %8146, %v8077
      %v8148 = vpop.permute.xlu0 %8147
      %8151 = vset.pattern.permute.xlu0 0
      %8152 = vperm.xlu0 %8151, %v8078
      %v8153 = vpop.permute.xlu0 %8152
      %8156 = vset.pattern.permute.xlu0 0
      %8157 = vperm.xlu0 %8156, %v8079
      %v8158 = vpop.permute.xlu0 %8157
      %v8176 = vunpack.c.l.b16 %v8016
      %v8177 = vunpack.c.h.b16 %v8016
      %v8178 = vunpack.c.l.b16 %v8017
      %v8179 = vunpack.c.h.b16 %v8017
      %v8180 = vunpack.c.l.b16 %v8018
      %v8181 = vunpack.c.h.b16 %v8018
      %v8182 = vunpack.c.l.b16 %v8019
      %v8183 = vunpack.c.h.b16 %v8019
      %v8184 = vunpack.c.l.b16 %v8020
      %v8185 = vunpack.c.h.b16 %v8020
      %v8186 = vunpack.c.l.b16 %v8021
      %v8187 = vunpack.c.h.b16 %v8021
      %v8188 = vunpack.c.l.b16 %v8022
      %v8189 = vunpack.c.h.b16 %v8022
      %v8190 = vunpack.c.l.b16 %v8023
      %v8191 = vunpack.c.h.b16 %v8023
      %v8192 = vunpack.c.l.b16 %v8024
      %v8193 = vunpack.c.h.b16 %v8024
      %v8194 = vunpack.c.l.b16 %v8025
      %v8195 = vunpack.c.h.b16 %v8025
      %v8196 = vunpack.c.l.b16 %v8026
      %v8197 = vunpack.c.h.b16 %v8026
      %v8198 = vunpack.c.l.b16 %v8027
      %v8199 = vunpack.c.h.b16 %v8027
      %v8200 = vunpack.c.l.b16 %v8028
      %v8201 = vunpack.c.h.b16 %v8028
      %v8202 = vunpack.c.l.b16 %v8029
      %v8203 = vunpack.c.h.b16 %v8029
      %v8204 = vunpack.c.l.b16 %v8030
      %v8205 = vunpack.c.h.b16 %v8030
      %v8206 = vunpack.c.l.b16 %v8031
      %v8207 = vunpack.c.h.b16 %v8031
      %v8208 = vpack.c.b16 %v8178, %v8176
      %v8209 = vpack.c.b16 %v8179, %v8177
      %v8210 = vpack.c.b16 %v8182, %v8180
      %v8211 = vpack.c.b16 %v8183, %v8181
      %v8212 = vpack.c.b16 %v8186, %v8184
      %v8213 = vpack.c.b16 %v8187, %v8185
      %v8214 = vpack.c.b16 %v8190, %v8188
      %v8215 = vpack.c.b16 %v8191, %v8189
      %v8216 = vpack.c.b16 %v8194, %v8192
      %v8217 = vpack.c.b16 %v8195, %v8193
      %v8218 = vpack.c.b16 %v8198, %v8196
      %v8219 = vpack.c.b16 %v8199, %v8197
      %v8220 = vpack.c.b16 %v8202, %v8200
      %v8221 = vpack.c.b16 %v8203, %v8201
      %v8222 = vpack.c.b16 %v8206, %v8204
      %v8223 = vpack.c.b16 %v8207, %v8205
      %8240 = vmatpush.bf16.msra.mxu0 %v8046
      %8241 = vmatpush.bf16.msra.mxu0 %v8044
      %8242 = vmatpush.bf16.msra.mxu0 %v8042
      %8243 = vmatpush.bf16.msra.mxu0 %v8040
      %8244 = vmatpush.bf16.msra.mxu0 %v8038
      %8245 = vmatpush.bf16.msra.mxu0 %v8036
      %8246 = vmatpush.bf16.msra.mxu0 %v8034
      %8247 = vmatpush.bf16.msra.mxu0 %v8032
      %8248 = vmatmul.bf16.gmra.mxu0 %v8208
      %v8249 = vpop.f32.mrf.mxu0
      %v8250 = vadd.f32 %v8083, %v8249
      %v8251 = vpop.f32.mrf.mxu0
      %v8252 = vadd.f32 %v8088, %v8251
      %8253 = vmatmul.bf16.gmra.mxu0 %v8210
      %v8254 = vpop.f32.mrf.mxu0
      %v8255 = vadd.f32 %v8093, %v8254
      %v8256 = vpop.f32.mrf.mxu0
      %v8257 = vadd.f32 %v8098, %v8256
      %8258 = vmatmul.bf16.gmra.mxu0 %v8212
      %v8259 = vpop.f32.mrf.mxu0
      %v8260 = vadd.f32 %v8103, %v8259
      %v8261 = vpop.f32.mrf.mxu0
      %v8262 = vadd.f32 %v8108, %v8261
      %8263 = vmatmul.bf16.gmra.mxu0 %v8214
      %v8264 = vpop.f32.mrf.mxu0
      %v8265 = vadd.f32 %v8113, %v8264
      %v8266 = vpop.f32.mrf.mxu0
      %v8267 = vadd.f32 %v8118, %v8266
      %8268 = vmatmul.bf16.gmra.mxu0 %v8216
      %v8269 = vpop.f32.mrf.mxu0
      %v8270 = vadd.f32 %v8123, %v8269
      %v8271 = vpop.f32.mrf.mxu0
      %v8272 = vadd.f32 %v8128, %v8271
      %8273 = vmatmul.bf16.gmra.mxu0 %v8218
      %v8274 = vpop.f32.mrf.mxu0
      %v8275 = vadd.f32 %v8133, %v8274
      %v8276 = vpop.f32.mrf.mxu0
      %v8277 = vadd.f32 %v8138, %v8276
      %8278 = vmatmul.bf16.gmra.mxu0 %v8220
      %v8279 = vpop.f32.mrf.mxu0
      %v8280 = vadd.f32 %v8143, %v8279
      %v8281 = vpop.f32.mrf.mxu0
      %v8282 = vadd.f32 %v8148, %v8281
      %8283 = vmatmul.bf16.gmra.mxu0 %v8222
      %v8284 = vpop.f32.mrf.mxu0
      %v8285 = vadd.f32 %v8153, %v8284
      %v8286 = vpop.f32.mrf.mxu0
      %v8287 = vadd.f32 %v8158, %v8286
      %8288 = vdwg.mxu0
      %8289 = vmatpush.bf16.msra.mxu0 %v8062
      %8290 = vmatpush.bf16.msra.mxu0 %v8060
      %8291 = vmatpush.bf16.msra.mxu0 %v8058
      %8292 = vmatpush.bf16.msra.mxu0 %v8056
      %8293 = vmatpush.bf16.msra.mxu0 %v8054
      %8294 = vmatpush.bf16.msra.mxu0 %v8052
      %8295 = vmatpush.bf16.msra.mxu0 %v8050
      %8296 = vmatpush.bf16.msra.mxu0 %v8048
      %8297 = vmatmul.bf16.gmra.mxu0 %v8209
      %v8298 = vpop.f32.mrf.mxu0
      %v8299 = vadd.f32 %v8250, %v8298
      %v8300 = vpop.f32.mrf.mxu0
      %v8301 = vadd.f32 %v8252, %v8300
      %8302 = vmatmul.bf16.gmra.mxu0 %v8211
      %v8303 = vpop.f32.mrf.mxu0
      %v8304 = vadd.f32 %v8255, %v8303
      %v8305 = vpop.f32.mrf.mxu0
      %v8306 = vadd.f32 %v8257, %v8305
      %8307 = vmatmul.bf16.gmra.mxu0 %v8213
      %v8308 = vpop.f32.mrf.mxu0
      %v8309 = vadd.f32 %v8260, %v8308
      %v8310 = vpop.f32.mrf.mxu0
      %v8311 = vadd.f32 %v8262, %v8310
      %8312 = vmatmul.bf16.gmra.mxu0 %v8215
      %v8313 = vpop.f32.mrf.mxu0
      %v8314 = vadd.f32 %v8265, %v8313
      %v8315 = vpop.f32.mrf.mxu0
      %v8316 = vadd.f32 %v8267, %v8315
      %8317 = vmatmul.bf16.gmra.mxu0 %v8217
      %v8318 = vpop.f32.mrf.mxu0
      %v8319 = vadd.f32 %v8270, %v8318
      %v8320 = vpop.f32.mrf.mxu0
      %v8321 = vadd.f32 %v8272, %v8320
      %8322 = vmatmul.bf16.gmra.mxu0 %v8219
      %v8323 = vpop.f32.mrf.mxu0
      %v8324 = vadd.f32 %v8275, %v8323
      %v8325 = vpop.f32.mrf.mxu0
      %v8326 = vadd.f32 %v8277, %v8325
      %8327 = vmatmul.bf16.gmra.mxu0 %v8221
      %v8328 = vpop.f32.mrf.mxu0
      %v8329 = vadd.f32 %v8280, %v8328
      %v8330 = vpop.f32.mrf.mxu0
      %v8331 = vadd.f32 %v8282, %v8330
      %8332 = vmatmul.bf16.gmra.mxu0 %v8223
      %v8333 = vpop.f32.mrf.mxu0
      %v8334 = vadd.f32 %v8285, %v8333
      %v8335 = vpop.f32.mrf.mxu0
      %v8336 = vadd.f32 %v8287, %v8335
      %8337 = vdwg.mxu0
      %8338 = vmatpush.bf16.msra.mxu0 %v8047
      %8339 = vmatpush.bf16.msra.mxu0 %v8045
      %8340 = vmatpush.bf16.msra.mxu0 %v8043
      %8341 = vmatpush.bf16.msra.mxu0 %v8041
      %8342 = vmatpush.bf16.msra.mxu0 %v8039
      %8343 = vmatpush.bf16.msra.mxu0 %v8037
      %8344 = vmatpush.bf16.msra.mxu0 %v8035
      %8345 = vmatpush.bf16.msra.mxu0 %v8033
      %8346 = vmatmul.bf16.gmra.mxu0 %v8208
      %v8347 = vpop.f32.mrf.mxu0
      %v8348 = vadd.f32 %v8083, %v8347
      %v8349 = vpop.f32.mrf.mxu0
      %v8350 = vadd.f32 %v8088, %v8349
      %8351 = vmatmul.bf16.gmra.mxu0 %v8210
      %v8352 = vpop.f32.mrf.mxu0
      %v8353 = vadd.f32 %v8093, %v8352
      %v8354 = vpop.f32.mrf.mxu0
      %v8355 = vadd.f32 %v8098, %v8354
      %8356 = vmatmul.bf16.gmra.mxu0 %v8212
      %v8357 = vpop.f32.mrf.mxu0
      %v8358 = vadd.f32 %v8103, %v8357
      %v8359 = vpop.f32.mrf.mxu0
      %v8360 = vadd.f32 %v8108, %v8359
      %8361 = vmatmul.bf16.gmra.mxu0 %v8214
      %v8362 = vpop.f32.mrf.mxu0
      %v8363 = vadd.f32 %v8113, %v8362
      %v8364 = vpop.f32.mrf.mxu0
      %v8365 = vadd.f32 %v8118, %v8364
      %8366 = vmatmul.bf16.gmra.mxu0 %v8216
      %v8367 = vpop.f32.mrf.mxu0
      %v8368 = vadd.f32 %v8123, %v8367
      %v8369 = vpop.f32.mrf.mxu0
      %v8370 = vadd.f32 %v8128, %v8369
      %8371 = vmatmul.bf16.gmra.mxu0 %v8218
      %v8372 = vpop.f32.mrf.mxu0
      %v8373 = vadd.f32 %v8133, %v8372
      %v8374 = vpop.f32.mrf.mxu0
      %v8375 = vadd.f32 %v8138, %v8374
      %8376 = vmatmul.bf16.gmra.mxu0 %v8220
      %v8377 = vpop.f32.mrf.mxu0
      %v8378 = vadd.f32 %v8143, %v8377
      %v8379 = vpop.f32.mrf.mxu0
      %v8380 = vadd.f32 %v8148, %v8379
      %8381 = vmatmul.bf16.gmra.mxu0 %v8222
      %v8382 = vpop.f32.mrf.mxu0
      %v8383 = vadd.f32 %v8153, %v8382
      %v8384 = vpop.f32.mrf.mxu0
      %v8385 = vadd.f32 %v8158, %v8384
      %8386 = vdwg.mxu0
      %8387 = vmatpush.bf16.msra.mxu0 %v8063
      %8388 = vmatpush.bf16.msra.mxu0 %v8061
      %8389 = vmatpush.bf16.msra.mxu0 %v8059
      %8390 = vmatpush.bf16.msra.mxu0 %v8057
      %8391 = vmatpush.bf16.msra.mxu0 %v8055
      %8392 = vmatpush.bf16.msra.mxu0 %v8053
      %8393 = vmatpush.bf16.msra.mxu0 %v8051
      %8394 = vmatpush.bf16.msra.mxu0 %v8049
      %8395 = vmatmul.bf16.gmra.mxu0 %v8209
      %v8396 = vpop.f32.mrf.mxu0
      %v8397 = vadd.f32 %v8348, %v8396
      %v8398 = vpop.f32.mrf.mxu0
      %v8399 = vadd.f32 %v8350, %v8398
      %8400 = vmatmul.bf16.gmra.mxu0 %v8211
      %v8401 = vpop.f32.mrf.mxu0
      %v8402 = vadd.f32 %v8353, %v8401
      %v8403 = vpop.f32.mrf.mxu0
      %v8404 = vadd.f32 %v8355, %v8403
      %8405 = vmatmul.bf16.gmra.mxu0 %v8213
      %v8406 = vpop.f32.mrf.mxu0
      %v8407 = vadd.f32 %v8358, %v8406
      %v8408 = vpop.f32.mrf.mxu0
      %v8409 = vadd.f32 %v8360, %v8408
      %8410 = vmatmul.bf16.gmra.mxu0 %v8215
      %v8411 = vpop.f32.mrf.mxu0
      %v8412 = vadd.f32 %v8363, %v8411
      %v8413 = vpop.f32.mrf.mxu0
      %v8414 = vadd.f32 %v8365, %v8413
      %8415 = vmatmul.bf16.gmra.mxu0 %v8217
      %v8416 = vpop.f32.mrf.mxu0
      %v8417 = vadd.f32 %v8368, %v8416
      %v8418 = vpop.f32.mrf.mxu0
      %v8419 = vadd.f32 %v8370, %v8418
      %8420 = vmatmul.bf16.gmra.mxu0 %v8219
      %v8421 = vpop.f32.mrf.mxu0
      %v8422 = vadd.f32 %v8373, %v8421
      %v8423 = vpop.f32.mrf.mxu0
      %v8424 = vadd.f32 %v8375, %v8423
      %8425 = vmatmul.bf16.gmra.mxu0 %v8221
      %v8426 = vpop.f32.mrf.mxu0
      %v8427 = vadd.f32 %v8378, %v8426
      %v8428 = vpop.f32.mrf.mxu0
      %v8429 = vadd.f32 %v8380, %v8428
      %8430 = vmatmul.bf16.gmra.mxu0 %v8223
      %v8431 = vpop.f32.mrf.mxu0
      %v8432 = vadd.f32 %v8383, %v8431
      %v8433 = vpop.f32.mrf.mxu0
      %v8434 = vadd.f32 %v8385, %v8433
      %8435 = vdwg.mxu0
      %v8436 = vmax.f32 %v8299, 0.0
      %v8437 = vmax.f32 %v8397, 0.0
      %v8438 = vmax.f32 %v8301, 0.0
      %v8439 = vmax.f32 %v8399, 0.0
      %v8440 = vmax.f32 %v8304, 0.0
      %v8441 = vmax.f32 %v8402, 0.0
      %v8442 = vmax.f32 %v8306, 0.0
      %v8443 = vmax.f32 %v8404, 0.0
      %v8444 = vmax.f32 %v8309, 0.0
      %v8445 = vmax.f32 %v8407, 0.0
      %v8446 = vmax.f32 %v8311, 0.0
      %v8447 = vmax.f32 %v8409, 0.0
      %v8448 = vmax.f32 %v8314, 0.0
      %v8449 = vmax.f32 %v8412, 0.0
      %v8450 = vmax.f32 %v8316, 0.0
      %v8451 = vmax.f32 %v8414, 0.0
      %v8452 = vmax.f32 %v8319, 0.0
      %v8453 = vmax.f32 %v8417, 0.0
      %v8454 = vmax.f32 %v8321, 0.0
      %v8455 = vmax.f32 %v8419, 0.0
      %v8456 = vmax.f32 %v8324, 0.0
      %v8457 = vmax.f32 %v8422, 0.0
      %v8458 = vmax.f32 %v8326, 0.0
      %v8459 = vmax.f32 %v8424, 0.0
      %v8460 = vmax.f32 %v8329, 0.0
      %v8461 = vmax.f32 %v8427, 0.0
      %v8462 = vmax.f32 %v8331, 0.0
      %v8463 = vmax.f32 %v8429, 0.0
      %v8464 = vmax.f32 %v8334, 0.0
      %v8465 = vmax.f32 %v8432, 0.0
      %v8466 = vmax.f32 %v8336, 0.0
      %v8467 = vmax.f32 %v8434, 0.0
      %v8468 = vld [vmem:[%s7] sm:$0xf]
      %v8469 = vld [vmem:[%s7 + $0x4] sm:$0x7]
      %v8470 = vpack.c.bf16 %v8438, %v8436
      %v8471 = vpack.c.bf16 %v8439, %v8437
      %v8472 = vpack.c.bf16 %v8442, %v8440
      %v8473 = vpack.c.bf16 %v8443, %v8441
      %v8474 = vpack.c.bf16 %v8446, %v8444
      %v8475 = vpack.c.bf16 %v8447, %v8445
      %v8476 = vpack.c.bf16 %v8450, %v8448
      %v8477 = vpack.c.bf16 %v8451, %v8449
      %v8478 = vpack.c.bf16 %v8454, %v8452
      %v8479 = vpack.c.bf16 %v8455, %v8453
      %v8480 = vpack.c.bf16 %v8458, %v8456
      %v8481 = vpack.c.bf16 %v8459, %v8457
      %v8482 = vpack.c.bf16 %v8462, %v8460
      %v8483 = vpack.c.bf16 %v8463, %v8461
      %v8484 = vpack.c.bf16 %v8466, %v8464
      %v8485 = vpack.c.bf16 %v8467, %v8465
      %v8486 = vld [vmem:[%s8] sm:$0xff]
      %v8487 = vld [vmem:[%s8 + $0x8] sm:$0x1f]
      %8489 = vset.pattern.permute.xlu0 0
      %8490 = vperm.xlu0 %8489, %v8486
      %v8491 = vpop.permute.xlu0 %8490
      %8494 = vset.pattern.permute.xlu0 0
      %8495 = vperm.xlu0 %8494, %v8487
      %v8496 = vpop.permute.xlu0 %8495
      %v8500 = vunpack.c.l.b16 %v8468
      %v8501 = vunpack.c.l.b16 %v8469
      %v8502 = vpack.c.b16 %v8501, %v8500
      %8504 = vmatpush.bf16.msra.mxu0 %v8484
      %8505 = vmatpush.bf16.msra.mxu0 %v8482
      %8506 = vmatpush.bf16.msra.mxu0 %v8480
      %8507 = vmatpush.bf16.msra.mxu0 %v8478
      %8508 = vmatpush.bf16.msra.mxu0 %v8476
      %8509 = vmatpush.bf16.msra.mxu0 %v8474
      %8510 = vmatpush.bf16.msra.mxu0 %v8472
      %8511 = vmatpush.bf16.msra.mxu0 %v8470
      %8512 = vmatmul.bf16.gmra.mxu0 %v8502
      %v8513 = vpop.f32.mrf.mxu0
      %v8514 = vadd.f32 %v8491, %v8513
      %v8515 = vpop.f32.mrf.mxu0
      %v8516 = vadd.f32 %v8496, %v8515
      %8517 = vdwg.mxu0
      %8518 = vmatpush.bf16.msra.mxu0 %v8485
      %8519 = vmatpush.bf16.msra.mxu0 %v8483
      %8520 = vmatpush.bf16.msra.mxu0 %v8481
      %8521 = vmatpush.bf16.msra.mxu0 %v8479
      %8522 = vmatpush.bf16.msra.mxu0 %v8477
      %8523 = vmatpush.bf16.msra.mxu0 %v8475
      %8524 = vmatpush.bf16.msra.mxu0 %v8473
      %8525 = vmatpush.bf16.msra.mxu0 %v8471
      %8526 = vmatmul.bf16.gmra.mxu0 %v8502
      %v8527 = vpop.f32.mrf.mxu0
      %v8528 = vadd.f32 %v8491, %v8527
      %v8529 = vpop.f32.mrf.mxu0
      %v8530 = vadd.f32 %v8496, %v8529
      %8531 = vdwg.mxu0
      %8532 = vst [vmem:[%s370] sm:$0xff] %v8514
      %8533 = vst [vmem:[%s370 + $0x8] sm:$0xff] %v8528
      %8534 = vst [vmem:[%s370 + $0x10] sm:$0x1f] %v8516
      %8535 = vst [vmem:[%s370 + $0x18] sm:$0x1f] %v8530
      %s8536 = smul.u32 2, %s25
      %p8537 = scmp.lt.s32.totalorder %s24, 1
      %s8538 = scalar_select %p8537, %s24, 1
      %p8539 = scmp.lt.s32.totalorder %s8536, 1
      %s8540 = scalar_select %p8539, %s8536, 1
      %s8541 = smul.addr %s8538, 4
      %s8542 = sadd.s32 %s8540, %s8541
      %s8543 = smul.addr %s8542, 8
      %s8544 = scalar_lea.vmem %s9, %s8543
      // Predicated region
      $region57: #{_forward.1} parent=55 // pred_check
        %p8545 = pneg %p248
      $region58: #{_forward.1} parent=55 // pred_check_branch
        %8547 = sbr.rel (%p8545) target = $region60
      $region59: #{_forward.1} parent=55 // pred_region
        %s8548 = smul.u32 2, %s25
      $region60: #{_forward.1} parent=55 // pred_fallthru
        _
    $region56: #{_forward.1} parent=5 // pred_fallthru
      _
    %p8549 = scmp.le.s32.totalorder 2, %s15
    // Predicated region
    $region61: #{_forward.1} parent=5 // pred_check
      %p8550 = pneg %p8549
    $region62: #{_forward.1} parent=5 // pred_check_branch
      %8552 = sbr.rel (%p8550) target = $region64
    $region63: #{_forward.1} parent=5 // pred_region
      %s8553 = ssub.s32 %s15, 2
      // Predicated region
      $region65: #{_forward.1} parent=63 // pred_check
        %p8554 = pneg %p254
      $region66: #{_forward.1} parent=63 // pred_check_branch
        %8556 = sbr.rel (%p8554) target = $region68
      $region67: #{_forward.1} parent=63 // pred_region
        %s8557 = smul.u32 2, %s27
        %p8558 = scmp.lt.s32.totalorder %s26, 1
        %s8559 = scalar_select %p8558, %s26, 1
        %p8560 = scmp.lt.s32.totalorder %s8557, 1
        %s8561 = scalar_select %p8560, %s8557, 1
        %s8562 = smul.addr %s8559, 4
        %s8563 = sadd.s32 %s8561, %s8562
        %s8564 = smul.addr %s8563, 8
        %s8565 = scalar_lea.vmem %s9, %s8564
      $region68: #{_forward.1} parent=63 // pred_fallthru
        _
    $region64: #{_forward.1} parent=5 // pred_fallthru
      _
  $region6: #{_forward.1} parent=0 // loop_footer
    %s19 = sadd.s32 1, %s15
  $region7: #{_forward.1} parent=0 // loop_footer_branch
    %14 = sbr.rel target = $region3
  $region8: #{_forward.1} parent=0 // loop_exit
    _

</llo_original>
